<compile_context>
chip_gen: v7x
topology: tpu7x:2x2x1
jax: 0.10.0
libtpu: 0.0.40
codegen_flags: <defaults>
</compile_context>

<pallas_src>
import functools

import jax
import jax.numpy as jnp
from jax.experimental import pallas as pl
from jax.experimental.pallas import tpu as pltpu


def _aspp_kernel(xpad_ref, w_ref, b_ref, o_ref, *, rates, TH, W, Cin, maxr):
    # xpad_ref: (1, Cin, Hp, Wp)  whole padded image for batch n (stays resident
    #                             across the inner spatial-tile grid axis)
    # w_ref   : (Cout, R*9*Cin)   bf16, columns ordered (r, ky, kx, cin)
    # b_ref   : (Cout, 1)         f32, biases pre-summed over rates
    # o_ref   : (1, Cout, TH*W)   lane-dense output tile
    t = pl.program_id(1)
    row0 = pl.multiple_of(t * TH, TH)

    # One dynamic (sublane-offset) load of the halo row-band for this tile;
    # every per-tap slice below is static.
    band = xpad_ref[0, :, pl.ds(row0, TH + 2 * maxr), :]      # (Cin, TH+2*maxr, Wp)

    taps = []
    for rate in rates:                 # static python loops -> unrolled at trace time
        off = maxr - rate
        for ky in range(3):
            y0 = off + ky * rate
            for kx in range(3):
                x0 = off + kx * rate
                taps.append(band[:, y0:y0 + TH, x0:x0 + W])   # (Cin, TH, W)

    # im2col slab: K = R*9*Cin contraction rows, TH*W lane-dense columns.
    patches = jnp.concatenate(taps, axis=0).reshape(-1, TH * W)
    patches = patches.astype(jnp.bfloat16)

    acc = jnp.dot(w_ref[...], patches,
                  preferred_element_type=jnp.float32)          # (Cout, TH*W) f32
    acc = acc + b_ref[...]                                     # single bias add
    o_ref[0] = acc.astype(o_ref.dtype)


def _pick_tile_h(H, W, K, Cout, *, slab_budget_bytes=4 << 20):
    """Largest row-tile TH dividing H such that:
       - the (K+Cout) x (TH*W) f32 working slab stays well under VMEM, and
       - TH*W is a multiple of 128 (or TH == H, i.e. the full last dim),
    maximizing output lane width per grid step."""
    for th in range(H, 0, -1):
        if H % th:
            continue
        lane_ok = (th == H) or ((th * W) % 128 == 0)
        if not lane_ok:
            continue
        if (K + Cout) * th * W * 4 <= slab_budget_bytes:
            return th
    return 1 if (W % 128 == 0) else H   # last resort: keep BlockSpec legal


def aspp_forward(x_nchw, weights, biases, rates, *, tile_h=None):
    """x_nchw: (N, Cin, H, W) f32. weights: (R,3,3,Cin,Cout). biases: (R,Cout)."""
    N, Cin, H, W = x_nchw.shape
    R, _, _, _, Cout = weights.shape
    maxr = max(rates)
    K = R * 9 * Cin

    if tile_h is None:
        TH = _pick_tile_h(H, W, K, Cout)
    else:
        TH = tile_h
        # Keep the out BlockSpec legal: block last-dim must be a multiple of 128
        # or equal the full H*W extent.
        if (H % TH != 0) or (TH != H and (TH * W) % 128 != 0):
            TH = H
    T = H // TH
    Hp, Wp = H + 2 * maxr, W + 2 * maxr

    # Single zero-pad in the kernel-native spatial-minor layout (no transpose).
    xpad = jnp.pad(x_nchw, ((0, 0), (0, 0), (maxr, maxr), (maxr, maxr)))

    # Fuse all rates/taps into one weight matrix; bf16 for full-rate MXU, f32 accum.
    w_mat = jnp.transpose(weights, (4, 0, 1, 2, 3)).reshape(Cout, K).astype(jnp.bfloat16)
    b_sum = jnp.sum(biases, axis=0).reshape(Cout, 1).astype(jnp.float32)

    kernel = functools.partial(_aspp_kernel, rates=tuple(rates), TH=TH, W=W,
                               Cin=Cin, maxr=maxr)

    cost = pl.CostEstimate(
        flops=2 * N * Cout * K * H * W,
        transcendentals=0,
        bytes_accessed=(xpad.size * 4 + w_mat.size * 2
                        + b_sum.size * 4 + N * Cout * H * W * 4),
    )

    # NOTE: the input block is the whole padded image per batch element, which is
    # tiny at these channel counts (Cin*Hp*Wp*4 B, double-buffered). For very large
    # Cin/H*W the input would need halo-band DMA (pl.ANY + make_async_copy) to
    # bound VMEM, especially on v7x (64 MiB/TC).
    out_flat = pl.pallas_call(
        kernel,
        out_shape=jax.ShapeDtypeStruct((N, Cout, H * W), x_nchw.dtype),
        grid_spec=pltpu.PrefetchScalarGridSpec(
            num_scalar_prefetch=0,
            grid=(N, T),
            in_specs=[
                pl.BlockSpec((1, Cin, Hp, Wp), lambda n, t: (n, 0, 0, 0)),
                pl.BlockSpec((Cout, K), lambda n, t: (0, 0)),
                pl.BlockSpec((Cout, 1), lambda n, t: (0, 0)),
            ],
            out_specs=pl.BlockSpec((1, Cout, TH * W), lambda n, t: (n, 0, t)),
        ),
        compiler_params=pltpu.CompilerParams(
            dimension_semantics=("parallel", "parallel")),
        cost_estimate=cost,
    )(xpad, w_mat, b_sum)

    # Reshape only — already in PyTorch's NCHW convention.
    return out_flat.reshape(N, Cout, H, W)


def aspp_reference(x_nchw, weights, biases, rates):
    """Pure-JAX reference mirroring the PyTorch forward (sum of dilated convs)."""
    out = None
    for r_idx, rate in enumerate(rates):
        # weights[r]: (3,3,Cin,Cout) -> OIHW (Cout,Cin,3,3) for NCHW conv.
        w_oihw = jnp.transpose(weights[r_idx], (3, 2, 0, 1))
        y = jax.lax.conv_general_dilated(
            x_nchw, w_oihw,
            window_strides=(1, 1),
            padding=((rate, rate), (rate, rate)),
            rhs_dilation=(rate, rate),
            dimension_numbers=("NCHW", "OIHW", "NCHW"),
        ) + biases[r_idx][None, :, None, None]
        out = y if out is None else out + y
    return out


if __name__ == "__main__":
    # Small shapes consistent with the module: batch=2, in_ch=4, out_ch=4, 16x16.
    N, Cin, Cout, H, W = 2, 4, 4, 16, 16
    rates = (1, 2, 3, 4)
    R = len(rates)

    key = jax.random.PRNGKey(0)
    kx, kw = jax.random.split(key)
    x = jax.random.normal(kx, (N, Cin, H, W), dtype=jnp.float32)

    # Deterministic param init matching nn.init.normal_(std=0.01) / constant_(bias, 0).
    weights = 0.01 * jax.random.normal(kw, (R, 3, 3, Cin, Cout), dtype=jnp.float32)
    biases = jnp.zeros((R, Cout), dtype=jnp.float32)

    out = jax.block_until_ready(aspp_forward(x, weights, biases, rates))
    ref = jax.block_until_ready(aspp_reference(x, weights, biases, rates))

    assert out.shape == (N, Cout, H, W)
    # bf16 MXU inputs with f32 accumulation => slightly looser atol than pure f32.
    assert jnp.allclose(out, ref, rtol=2e-2, atol=5e-3), float(jnp.max(jnp.abs(out - ref)))

    print("KERNEL_OK")
</pallas_src>

<mosaic_0001>
module attributes {stable_mosaic.version = 11 : i64} {
  func.func @_aspp_kernel(%arg0: i32, %arg1: i32, %arg2: memref<1x4x24x24xf32, #tpu.memory_space<vmem>>, %arg3: memref<4x144xbf16, #tpu.memory_space<vmem>>, %arg4: memref<4x1xf32, #tpu.memory_space<vmem>>, %arg5: memref<1x4x256xf32, #tpu.memory_space<vmem>>) attributes {dimension_semantics = [#tpu.dimension_semantics<parallel>, #tpu.dimension_semantics<parallel>], iteration_bounds = array<i64: 2, 1>, scalar_prefetch = 0 : i64, scratch_operands = 0 : i64, tpu.core_type = #tpu.core_type<tc>, window_params = [{transform_indices = @transform_0, window_bounds = array<i64: 1, 4, 24, 24>}, {pipeline_mode = #tpu.pipeline_mode<synchronous>, transform_indices = @transform_1, window_bounds = array<i64: 4, 144>}, {pipeline_mode = #tpu.pipeline_mode<synchronous>, transform_indices = @transform_2, window_bounds = array<i64: 4, 1>}, {transform_indices = @transform_3, window_bounds = array<i64: 1, 4, 256>}]} {
    %c16_i32 = arith.constant 16 : i32
    %0 = arith.muli %arg1, %c16_i32 : i32
    %1 = tpu.assume_multiple %0, 16 : i32
    %c0 = arith.constant 0 : index
    %c0_0 = arith.constant 0 : index
    %2 = arith.index_cast %1 : i32 to index
    %c0_1 = arith.constant 0 : index
    %3 = vector.load %arg2[%c0, %c0_0, %2, %c0_1] : memref<1x4x24x24xf32, #tpu.memory_space<vmem>>, vector<1x4x24x24xf32>
    %4 = vector.shape_cast %3 : vector<1x4x24x24xf32> to vector<4x24x24xf32>
    %5 = vector.extract_strided_slice %4 {offsets = [0, 3, 3], sizes = [4, 16, 16], strides = [1, 1, 1]} : vector<4x24x24xf32> to vector<4x16x16xf32>
    %6 = vector.extract_strided_slice %4 {offsets = [0, 3, 4], sizes = [4, 16, 16], strides = [1, 1, 1]} : vector<4x24x24xf32> to vector<4x16x16xf32>
    %7 = vector.extract_strided_slice %4 {offsets = [0, 3, 5], sizes = [4, 16, 16], strides = [1, 1, 1]} : vector<4x24x24xf32> to vector<4x16x16xf32>
    %8 = vector.extract_strided_slice %4 {offsets = [0, 4, 3], sizes = [4, 16, 16], strides = [1, 1, 1]} : vector<4x24x24xf32> to vector<4x16x16xf32>
    %9 = vector.extract_strided_slice %4 {offsets = [0, 4, 4], sizes = [4, 16, 16], strides = [1, 1, 1]} : vector<4x24x24xf32> to vector<4x16x16xf32>
    %10 = vector.extract_strided_slice %4 {offsets = [0, 4, 5], sizes = [4, 16, 16], strides = [1, 1, 1]} : vector<4x24x24xf32> to vector<4x16x16xf32>
    %11 = vector.extract_strided_slice %4 {offsets = [0, 5, 3], sizes = [4, 16, 16], strides = [1, 1, 1]} : vector<4x24x24xf32> to vector<4x16x16xf32>
    %12 = vector.extract_strided_slice %4 {offsets = [0, 5, 4], sizes = [4, 16, 16], strides = [1, 1, 1]} : vector<4x24x24xf32> to vector<4x16x16xf32>
    %13 = vector.extract_strided_slice %4 {offsets = [0, 5, 5], sizes = [4, 16, 16], strides = [1, 1, 1]} : vector<4x24x24xf32> to vector<4x16x16xf32>
    %14 = vector.extract_strided_slice %4 {offsets = [0, 2, 2], sizes = [4, 16, 16], strides = [1, 1, 1]} : vector<4x24x24xf32> to vector<4x16x16xf32>
    %15 = vector.extract_strided_slice %4 {offsets = [0, 2, 4], sizes = [4, 16, 16], strides = [1, 1, 1]} : vector<4x24x24xf32> to vector<4x16x16xf32>
    %16 = vector.extract_strided_slice %4 {offsets = [0, 2, 6], sizes = [4, 16, 16], strides = [1, 1, 1]} : vector<4x24x24xf32> to vector<4x16x16xf32>
    %17 = vector.extract_strided_slice %4 {offsets = [0, 4, 2], sizes = [4, 16, 16], strides = [1, 1, 1]} : vector<4x24x24xf32> to vector<4x16x16xf32>
    %18 = vector.extract_strided_slice %4 {offsets = [0, 4, 4], sizes = [4, 16, 16], strides = [1, 1, 1]} : vector<4x24x24xf32> to vector<4x16x16xf32>
    %19 = vector.extract_strided_slice %4 {offsets = [0, 4, 6], sizes = [4, 16, 16], strides = [1, 1, 1]} : vector<4x24x24xf32> to vector<4x16x16xf32>
    %20 = vector.extract_strided_slice %4 {offsets = [0, 6, 2], sizes = [4, 16, 16], strides = [1, 1, 1]} : vector<4x24x24xf32> to vector<4x16x16xf32>
    %21 = vector.extract_strided_slice %4 {offsets = [0, 6, 4], sizes = [4, 16, 16], strides = [1, 1, 1]} : vector<4x24x24xf32> to vector<4x16x16xf32>
    %22 = vector.extract_strided_slice %4 {offsets = [0, 6, 6], sizes = [4, 16, 16], strides = [1, 1, 1]} : vector<4x24x24xf32> to vector<4x16x16xf32>
    %23 = vector.extract_strided_slice %4 {offsets = [0, 1, 1], sizes = [4, 16, 16], strides = [1, 1, 1]} : vector<4x24x24xf32> to vector<4x16x16xf32>
    %24 = vector.extract_strided_slice %4 {offsets = [0, 1, 4], sizes = [4, 16, 16], strides = [1, 1, 1]} : vector<4x24x24xf32> to vector<4x16x16xf32>
    %25 = vector.extract_strided_slice %4 {offsets = [0, 1, 7], sizes = [4, 16, 16], strides = [1, 1, 1]} : vector<4x24x24xf32> to vector<4x16x16xf32>
    %26 = vector.extract_strided_slice %4 {offsets = [0, 4, 1], sizes = [4, 16, 16], strides = [1, 1, 1]} : vector<4x24x24xf32> to vector<4x16x16xf32>
    %27 = vector.extract_strided_slice %4 {offsets = [0, 4, 4], sizes = [4, 16, 16], strides = [1, 1, 1]} : vector<4x24x24xf32> to vector<4x16x16xf32>
    %28 = vector.extract_strided_slice %4 {offsets = [0, 4, 7], sizes = [4, 16, 16], strides = [1, 1, 1]} : vector<4x24x24xf32> to vector<4x16x16xf32>
    %29 = vector.extract_strided_slice %4 {offsets = [0, 7, 1], sizes = [4, 16, 16], strides = [1, 1, 1]} : vector<4x24x24xf32> to vector<4x16x16xf32>
    %30 = vector.extract_strided_slice %4 {offsets = [0, 7, 4], sizes = [4, 16, 16], strides = [1, 1, 1]} : vector<4x24x24xf32> to vector<4x16x16xf32>
    %31 = vector.extract_strided_slice %4 {offsets = [0, 7, 7], sizes = [4, 16, 16], strides = [1, 1, 1]} : vector<4x24x24xf32> to vector<4x16x16xf32>
    %32 = vector.extract_strided_slice %4 {offsets = [0, 0, 0], sizes = [4, 16, 16], strides = [1, 1, 1]} : vector<4x24x24xf32> to vector<4x16x16xf32>
    %33 = vector.extract_strided_slice %4 {offsets = [0, 0, 4], sizes = [4, 16, 16], strides = [1, 1, 1]} : vector<4x24x24xf32> to vector<4x16x16xf32>
    %34 = vector.extract_strided_slice %4 {offsets = [0, 0, 8], sizes = [4, 16, 16], strides = [1, 1, 1]} : vector<4x24x24xf32> to vector<4x16x16xf32>
    %35 = vector.extract_strided_slice %4 {offsets = [0, 4, 0], sizes = [4, 16, 16], strides = [1, 1, 1]} : vector<4x24x24xf32> to vector<4x16x16xf32>
    %36 = vector.extract_strided_slice %4 {offsets = [0, 4, 4], sizes = [4, 16, 16], strides = [1, 1, 1]} : vector<4x24x24xf32> to vector<4x16x16xf32>
    %37 = vector.extract_strided_slice %4 {offsets = [0, 4, 8], sizes = [4, 16, 16], strides = [1, 1, 1]} : vector<4x24x24xf32> to vector<4x16x16xf32>
    %38 = vector.extract_strided_slice %4 {offsets = [0, 8, 0], sizes = [4, 16, 16], strides = [1, 1, 1]} : vector<4x24x24xf32> to vector<4x16x16xf32>
    %39 = vector.extract_strided_slice %4 {offsets = [0, 8, 4], sizes = [4, 16, 16], strides = [1, 1, 1]} : vector<4x24x24xf32> to vector<4x16x16xf32>
    %40 = vector.extract_strided_slice %4 {offsets = [0, 8, 8], sizes = [4, 16, 16], strides = [1, 1, 1]} : vector<4x24x24xf32> to vector<4x16x16xf32>
    %41 = tpu.concatenate %5, %6, %7, %8, %9, %10, %11, %12, %13, %14, %15, %16, %17, %18, %19, %20 in 0 : vector<4x16x16xf32>, vector<4x16x16xf32>, vector<4x16x16xf32>, vector<4x16x16xf32>, vector<4x16x16xf32>, vector<4x16x16xf32>, vector<4x16x16xf32>, vector<4x16x16xf32>, vector<4x16x16xf32>, vector<4x16x16xf32>, vector<4x16x16xf32>, vector<4x16x16xf32>, vector<4x16x16xf32>, vector<4x16x16xf32>, vector<4x16x16xf32>, vector<4x16x16xf32> -> vector<64x16x16xf32>
    %42 = tpu.concatenate %21, %22, %23, %24, %25, %26, %27, %28, %29, %30, %31, %32, %33, %34, %35, %36 in 0 : vector<4x16x16xf32>, vector<4x16x16xf32>, vector<4x16x16xf32>, vector<4x16x16xf32>, vector<4x16x16xf32>, vector<4x16x16xf32>, vector<4x16x16xf32>, vector<4x16x16xf32>, vector<4x16x16xf32>, vector<4x16x16xf32>, vector<4x16x16xf32>, vector<4x16x16xf32>, vector<4x16x16xf32>, vector<4x16x16xf32>, vector<4x16x16xf32>, vector<4x16x16xf32> -> vector<64x16x16xf32>
    %43 = tpu.concatenate %37, %38, %39, %40 in 0 : vector<4x16x16xf32>, vector<4x16x16xf32>, vector<4x16x16xf32>, vector<4x16x16xf32> -> vector<16x16x16xf32>
    %44 = tpu.concatenate %41, %42, %43 in 0 : vector<64x16x16xf32>, vector<64x16x16xf32>, vector<16x16x16xf32> -> vector<144x16x16xf32>
    %45 = vector.shape_cast %44 : vector<144x16x16xf32> to vector<144x256xf32>
    %46 = arith.truncf %45 : vector<144x256xf32> to vector<144x256xbf16>
    %c0_2 = arith.constant 0 : index
    %c0_3 = arith.constant 0 : index
    %47 = vector.load %arg3[%c0_2, %c0_3] : memref<4x144xbf16, #tpu.memory_space<vmem>>, vector<4x144xbf16>
    %cst = arith.constant dense<0.000000e+00> : vector<4x256xf32>
    %48 = tpu.matmul %47, %46, %cst {dimension_numbers = #tpu.dot_dimension_numbers<[1], [0], [0], [1], [0, 0, 1, 1], [], []>} : vector<4x144xbf16>, vector<144x256xbf16>, vector<4x256xf32> -> vector<4x256xf32>
    %c0_4 = arith.constant 0 : index
    %c0_5 = arith.constant 0 : index
    %49 = vector.load %arg4[%c0_4, %c0_5] : memref<4x1xf32, #tpu.memory_space<vmem>>, vector<4x1xf32>
    %50 = vector.broadcast %49 : vector<4x1xf32> to vector<4x256xf32>
    %51 = arith.addf %48, %50 : vector<4x256xf32>
    %c0_6 = arith.constant 0 : index
    %c0_7 = arith.constant 0 : index
    %c0_8 = arith.constant 0 : index
    %52 = vector.load %arg5[%c0_6, %c0_7, %c0_8] : memref<1x4x256xf32, #tpu.memory_space<vmem>>, vector<1x4x256xf32>
    %53 = vector.shape_cast %52 : vector<1x4x256xf32> to vector<4x256xf32>
    %54 = vector.shape_cast %51 : vector<4x256xf32> to vector<1x4x256xf32>
    tpu.vector_store %arg5[%c0_6, %c0_7, %c0_8], %54 {strides = array<i32>} : memref<1x4x256xf32, #tpu.memory_space<vmem>>, vector<1x4x256xf32>,
    return
  }
  func.func @transform_0(%arg0: i32, %arg1: i32) -> (i32, i32, i32, i32) {
    %c0_i32 = arith.constant 0 : i32
    %c0_i32_0 = arith.constant 0 : i32
    %c0_i32_1 = arith.constant 0 : i32
    %c0_i32_2 = arith.constant 0 : i32
    return %arg0, %c0_i32, %c0_i32_0, %c0_i32_1 : i32, i32, i32, i32
  }
  func.func @transform_1(%arg0: i32, %arg1: i32) -> (i32, i32) {
    %c0_i32 = arith.constant 0 : i32
    %c0_i32_0 = arith.constant 0 : i32
    %c0_i32_1 = arith.constant 0 : i32
    return %c0_i32, %c0_i32_0 : i32, i32
  }
  func.func @transform_2(%arg0: i32, %arg1: i32) -> (i32, i32) {
    %c0_i32 = arith.constant 0 : i32
    %c0_i32_0 = arith.constant 0 : i32
    %c0_i32_1 = arith.constant 0 : i32
    return %c0_i32, %c0_i32_0 : i32, i32
  }
  func.func @transform_3(%arg0: i32, %arg1: i32) -> (i32, i32, i32) {
    %c0_i32 = arith.constant 0 : i32
    %c0_i32_0 = arith.constant 0 : i32
    return %arg0, %c0_i32, %arg1 : i32, i32, i32
  }
}

</mosaic_0001>

<llo_original>
// kernel: tpu_custom_call.1
$region0: #{tpu_custom_call.1}
  #allocation0 [shape = 'u32[]', space=smem, size = 0x4, offset = 0x4, fixed_abs, tag = 'smem constant byte address 0x4 - core index']
  #allocation1 [shape = 'u32[144,128]{1,0:T(1,128)}', space=vmem, size = 0x12000, scoped, tag = 'internal scratch']
  %s0 = inlined_call_operand.hbm [shape: f32[2,4,24,24], index: 0, kind: input, shape index: {}]
  %s1 = inlined_call_operand.vmem [shape: bf16[4,144], index: 1, kind: input, shape index: {}]
  %s2 = inlined_call_operand.vmem [shape: f32[4,1], index: 2, kind: input, shape index: {}]
  %s3 = inlined_call_operand.hbm [shape: f32[2,4,256], index: 3, kind: output, shape index: {}]
  %s4 = sld [smem:[#allocation0]]
  $region49: #{tpu_custom_call.1} parent=0
    _
  %s6 = ssub.s32 1, %s4
  %s7 = scalar_select 0, %s6, %s4
  $region1: #{tpu_custom_call.1} parent=0
    #allocation2 [shape = 'u8[98304]{0}', space=vmem, size = 0x18000, scoped, tag = 'input window, operand 0']
    #allocation3 [shape = 's32[2]{0}', space=sflag, size = 0x8, scoped, tag = 'scoped memory for tpu_custom_call.1']
    #allocation4 [shape = 's32[2]{0}', space=sflag, size = 0x8, scoped, tag = 'scoped memory for tpu_custom_call.1']
    #allocation5 [shape = 'u8[8192]{0}', space=vmem, size = 0x2000, scoped, tag = 'output window, operand 0']
    %8 = vsyncpa [#allocation3], 0
    %s9 = scalar_lea.sflag [#allocation3], 1
    %10 = vsyncpa %s9, 0
    %11 = vsyncpa [#allocation4], 0
    %s12 = scalar_lea.sflag [#allocation4], 1
    %13 = vsyncpa %s12, 0
    loop: start=0, step=1, limit=4
    $region2: #{tpu_custom_call.1} parent=1 // loop_pre_header
      _
    $region3: #{tpu_custom_call.1} parent=1 // loop_header
      %s15 = sphi 0, %s19
      %p16 = scmp.ge.s32.totalorder %s15, 4
      %s22 = sphi 0, %s34
      %s23 = sphi 0, %s30
      %s24 = sphi 0, %s22
      %s25 = sphi 0, %s23
      %s26 = sphi 0, %s24
      %s27 = sphi 0, %s25
      %s37 = sphi 0, %s39
      %s40 = sphi 0, %s37
      %s41 = sphi 0, %s40
      %s57 = sphi 0, %s41
      %s61 = sphi 0, %s61
      %s63 = sphi 0, %s61
      %s64 = sphi 0, %s63
      %s78 = sphi 0, %s64
      %s82 = sphi 0, %s82
      %s84 = sphi 0, %s82
      %s85 = sphi 0, %s84
      %s99 = sphi 0, %s85
      %s107 = sphi 0, %s109
      %s110 = sphi 0, %s107
      %s111 = sphi 0, %s110
      %s127 = sphi 0, %s111
    $region4: #{tpu_custom_call.1} parent=1 // loop_header_branch
      %18 = sbr.rel (%p16) target = $region8
    $region5: #{tpu_custom_call.1} parent=1 // loop_body
      %s20 = ssub.s32 %s15, 1
      %s21 = ssub.s32 %s15, 2
      %s28 = sadd.s32 1, %s23
      %p29 = scmp.ge.s32.totalorder %s28, 1
      %s30 = scalar_select %p29, 0, %s28
      %s31 = sadd.s32 1, %s22
      %s32 = scalar_select %p29, %s31, %s22
      %p33 = scmp.ge.s32.totalorder %s32, 2
      %s34 = scalar_select %p33, 0, %s32
      %s35 = ssub.s32 %s22, %s34
      %p36 = scmp.eq.s32.totalorder %s35, 0
      %s38 = sadd.s32 %s37, 1
      %s39 = scalar_select %p36, %s37, %s38
      %p42 = pneg %p36
      %p43 = scmp.eq.s32.totalorder %s15, 1
      %p44 = por %p42, %p43
      %p45 = scmp.ne.s32.totalorder %s37, %s40
      %p46 = scmp.eq.s32.totalorder %s15, 0
      %p47 = por %p45, %p46
      %p48 = scmp.ne.s32.totalorder %s37, %s40
      %p49 = scmp.eq.s32.totalorder %s20, 1
      %p50 = por %p48, %p49
      %p51 = scmp.ne.s32.totalorder %s40, %s41
      %p52 = scmp.eq.s32.totalorder %s20, 0
      %p53 = por %p51, %p52
      %p54 = scmp.ne.s32.totalorder %s40, %s41
      %p55 = scmp.eq.s32.totalorder %s21, 1
      %p56 = por %p54, %p55
      %p58 = scmp.ne.s32.totalorder %s41, %s57
      %p59 = scmp.eq.s32.totalorder %s21, 0
      %p60 = por %p58, %p59
      %s62 = sadd.s32 %s61, 1
      %p65 = scmp.eq.s32.totalorder %s15, 1
      %p66 = scmp.ne.s32.totalorder %s61, %s63
      %p67 = scmp.eq.s32.totalorder %s15, 0
      %p68 = por %p66, %p67
      %p69 = scmp.ne.s32.totalorder %s61, %s63
      %p70 = scmp.eq.s32.totalorder %s20, 1
      %p71 = por %p69, %p70
      %p72 = scmp.ne.s32.totalorder %s63, %s64
      %p73 = scmp.eq.s32.totalorder %s20, 0
      %p74 = por %p72, %p73
      %p75 = scmp.ne.s32.totalorder %s63, %s64
      %p76 = scmp.eq.s32.totalorder %s21, 1
      %p77 = por %p75, %p76
      %p79 = scmp.ne.s32.totalorder %s64, %s78
      %p80 = scmp.eq.s32.totalorder %s21, 0
      %p81 = por %p79, %p80
      %s83 = sadd.s32 %s82, 1
      %p86 = scmp.eq.s32.totalorder %s15, 1
      %p87 = scmp.ne.s32.totalorder %s82, %s84
      %p88 = scmp.eq.s32.totalorder %s15, 0
      %p89 = por %p87, %p88
      %p90 = scmp.ne.s32.totalorder %s82, %s84
      %p91 = scmp.eq.s32.totalorder %s20, 1
      %p92 = por %p90, %p91
      %p93 = scmp.ne.s32.totalorder %s84, %s85
      %p94 = scmp.eq.s32.totalorder %s20, 0
      %p95 = por %p93, %p94
      %p96 = scmp.ne.s32.totalorder %s84, %s85
      %p97 = scmp.eq.s32.totalorder %s21, 1
      %p98 = por %p96, %p97
      %p100 = scmp.ne.s32.totalorder %s85, %s99
      %p101 = scmp.eq.s32.totalorder %s21, 0
      %p102 = por %p100, %p101
      %s103 = ssub.s32 %s22, %s34
      %s104 = ssub.s32 %s23, %s30
      %s105 = sor.u32 %s103, %s104
      %p106 = scmp.eq.s32.totalorder %s105, 0
      %s108 = sadd.s32 %s107, 1
      %s109 = scalar_select %p106, %s107, %s108
      %p112 = pneg %p106
      %p113 = scmp.eq.s32.totalorder %s15, 1
      %p114 = por %p112, %p113
      %p115 = scmp.ne.s32.totalorder %s107, %s110
      %p116 = scmp.eq.s32.totalorder %s15, 0
      %p117 = por %p115, %p116
      %p118 = scmp.ne.s32.totalorder %s107, %s110
      %p119 = scmp.eq.s32.totalorder %s20, 1
      %p120 = por %p118, %p119
      %p121 = scmp.ne.s32.totalorder %s110, %s111
      %p122 = scmp.eq.s32.totalorder %s20, 0
      %p123 = por %p121, %p122
      %p124 = scmp.ne.s32.totalorder %s110, %s111
      %p125 = scmp.eq.s32.totalorder %s21, 1
      %p126 = por %p124, %p125
      %p128 = scmp.ne.s32.totalorder %s111, %s127
      %p129 = scmp.eq.s32.totalorder %s21, 0
      %p130 = por %p128, %p129
      %p131 = scmp.le.s32.totalorder 1, %s15
      %p132 = scmp.lt.s32.totalorder %s15, 3
      %p133 = pnand %p131, %p132
      %p134 = pneg %p133
      // Predicated region
      $region9: #{tpu_custom_call.1} parent=5 // pred_check
        _
      $region10: #{tpu_custom_call.1} parent=5 // pred_check_branch
        %136 = sbr.rel (%p133) target = $region12
      $region11: #{tpu_custom_call.1} parent=5 // pred_region
        %s137 = ssub.s32 %s15, 1
        // Predicated region
        $region13: #{tpu_custom_call.1} parent=11 // pred_check
          %p138 = pneg %p74
        $region14: #{tpu_custom_call.1} parent=11 // pred_check_branch
          %140 = sbr.rel (%p138) target = $region16
        $region15: #{tpu_custom_call.1} parent=11 // pred_region
          _
        $region16: #{tpu_custom_call.1} parent=11 // pred_fallthru
          _
        // Predicated region
        $region17: #{tpu_custom_call.1} parent=11 // pred_check
          %p141 = pneg %p95
        $region18: #{tpu_custom_call.1} parent=11 // pred_check_branch
          %143 = sbr.rel (%p141) target = $region20
        $region19: #{tpu_custom_call.1} parent=11 // pred_region
          _
        $region20: #{tpu_custom_call.1} parent=11 // pred_fallthru
          _
      $region12: #{tpu_custom_call.1} parent=5 // pred_fallthru
        _
      %p144 = scmp.lt.s32.totalorder %s15, 2
      // Predicated region
      $region21: #{tpu_custom_call.1} parent=5 // pred_check
        %p145 = pneg %p144
      $region22: #{tpu_custom_call.1} parent=5 // pred_check_branch
        %147 = sbr.rel (%p145) target = $region24
      $region23: #{tpu_custom_call.1} parent=5 // pred_region
        // Predicated region
        $region25: #{tpu_custom_call.1} parent=23 // pred_check
          %p148 = pneg %p47
        $region26: #{tpu_custom_call.1} parent=23 // pred_check_branch
          %150 = sbr.rel (%p148) target = $region28
        $region27: #{tpu_custom_call.1} parent=23 // pred_region
          %s151 = sand.u32 %s37, 1
          %s152 = scalar_lea.sflag [#allocation3], %s151
          %s153 = sand.u32 %s37, 1
          %s154 = smul.addr %s153, 96
          %s155 = scalar_lea.vmem [#allocation2], %s154
          %s157 = ssub.s32 1536, 1536
          %158 = vsyncadd %s152, %s157
          %s159 = smul.addr %s22, 12
          %s160 = smul.addr %s159, 128
          %s161 = scalar_lea.hbm %s0, %s160
          %s162 = sshll.u32 %s155, 4
          %s163 = int_to_ptr.vmem [resolvable:$true] %s162
          %168 = dma.hbm_to_vmem [thread:$0]  %s161, 1536, %s163, %s152, 128, 128, 8
        $region28: #{tpu_custom_call.1} parent=23 // pred_fallthru
          _
      $region24: #{tpu_custom_call.1} parent=5 // pred_fallthru
        _
      %p169 = scmp.le.s32.totalorder 1, %s15
      %p170 = scmp.lt.s32.totalorder %s15, 3
      %p171 = pnand %p169, %p170
      %p172 = pneg %p171
      // Predicated region
      $region29: #{tpu_custom_call.1} parent=5 // pred_check
        _
      $region30: #{tpu_custom_call.1} parent=5 // pred_check_branch
        %174 = sbr.rel (%p171) target = $region32
      $region31: #{tpu_custom_call.1} parent=5 // pred_region
        %s175 = ssub.s32 %s15, 1
        %s176 = sand.u32 %s40, 1
        %s177 = scalar_lea.sflag [#allocation3], %s176
        %s178 = sand.u32 %s40, 1
        %s179 = smul.addr %s178, 96
        %s180 = scalar_lea.vmem [#allocation2], %s179
        // Predicated region
        $region33: #{tpu_custom_call.1} parent=31 // pred_check
          %p181 = pneg %p53
        $region34: #{tpu_custom_call.1} parent=31 // pred_check_branch
          %183 = sbr.rel (%p181) target = $region36
        $region35: #{tpu_custom_call.1} parent=31 // pred_region
          %184 = dma.done %s177, 1536
        $region36: #{tpu_custom_call.1} parent=31 // pred_fallthru
          _
        %s185 = sand.u32 %s40, 1
        %s186 = scalar_lea.sflag [#allocation3], %s185
        %s187 = sand.u32 %s40, 1
        %s188 = smul.addr %s187, 96
        %s189 = scalar_lea.vmem [#allocation2], %s188
        %p190 = pneg %p53
        %p191 = pneg %p50
        %p192 = pneg %p74
        %p193 = pneg %p71
        %p194 = pneg %p95
        %p195 = pneg %p92
        %p196 = pneg %p123
        %p197 = pneg %p120
        %s198 = sand.u32 %s110, 1
        %s199 = scalar_lea.sflag [#allocation4], %s198
        %s200 = sand.u32 %s110, 1
        %s201 = smul.addr %s200, 8
        %s202 = scalar_lea.vmem [#allocation5], %s201
        %s203 = smul.u32 2, %s25
        %s205 = smul.u32 %s25, 16
        %s206 = scalar_lea.vmem %s180, %s205 [#allocation2]
        %v207 = vld [vmem:[%s206] sm:$0xff]
        %v208 = vld [vmem:[%s206 + $0x8] sm:$0xff]
        %v209 = vld [vmem:[%s206 + $0x10] sm:$0xff]
        %v210 = vld [vmem:[%s206 + $0x18] sm:$0xff]
        %v211 = vld [vmem:[%s206 + $0x20] sm:$0xff]
        %v212 = vld [vmem:[%s206 + $0x28] sm:$0xff]
        %v213 = vld [vmem:[%s206 + $0x30] sm:$0xff]
        %v214 = vld [vmem:[%s206 + $0x38] sm:$0xff]
        %v215 = vld [vmem:[%s206 + $0x40] sm:$0xff]
        %v216 = vld [vmem:[%s206 + $0x48] sm:$0xff]
        %v217 = vld [vmem:[%s206 + $0x50] sm:$0xff]
        %v218 = vld [vmem:[%s206 + $0x58] sm:$0xff]
        %231 = vrot.lane.b32.xlu0 %v207, 127
        %v232 = vpop.permute.xlu0 %231
        %233 = vrot.lane.b32.xlu0 %v208, 127
        %v234 = vpop.permute.xlu0 %233
        %235 = vrot.lane.b32.xlu0 %v209, 127
        %v236 = vpop.permute.xlu0 %235
        %237 = vrot.lane.b32.xlu0 %v210, 127
        %v238 = vpop.permute.xlu0 %237
        %239 = vrot.lane.b32.xlu0 %v211, 127
        %v240 = vpop.permute.xlu0 %239
        %241 = vrot.lane.b32.xlu0 %v212, 127
        %v242 = vpop.permute.xlu0 %241
        %243 = vrot.lane.b32.xlu0 %v213, 127
        %v244 = vpop.permute.xlu0 %243
        %245 = vrot.lane.b32.xlu0 %v214, 127
        %v246 = vpop.permute.xlu0 %245
        %247 = vrot.lane.b32.xlu0 %v215, 127
        %v248 = vpop.permute.xlu0 %247
        %249 = vrot.lane.b32.xlu0 %v216, 127
        %v250 = vpop.permute.xlu0 %249
        %251 = vrot.lane.b32.xlu0 %v217, 127
        %v252 = vpop.permute.xlu0 %251
        %253 = vrot.lane.b32.xlu0 %v218, 127
        %v254 = vpop.permute.xlu0 %253
        %255 = vrot.lane.b32.xlu0 %v207, 126
        %v256 = vpop.permute.xlu0 %255
        %257 = vrot.lane.b32.xlu0 %v208, 126
        %v258 = vpop.permute.xlu0 %257
        %259 = vrot.lane.b32.xlu0 %v209, 126
        %v260 = vpop.permute.xlu0 %259
        %261 = vrot.lane.b32.xlu0 %v210, 126
        %v262 = vpop.permute.xlu0 %261
        %263 = vrot.lane.b32.xlu0 %v211, 126
        %v264 = vpop.permute.xlu0 %263
        %265 = vrot.lane.b32.xlu0 %v212, 126
        %v266 = vpop.permute.xlu0 %265
        %267 = vrot.lane.b32.xlu0 %v213, 126
        %v268 = vpop.permute.xlu0 %267
        %269 = vrot.lane.b32.xlu0 %v214, 126
        %v270 = vpop.permute.xlu0 %269
        %271 = vrot.lane.b32.xlu0 %v215, 126
        %v272 = vpop.permute.xlu0 %271
        %273 = vrot.lane.b32.xlu0 %v216, 126
        %v274 = vpop.permute.xlu0 %273
        %275 = vrot.lane.b32.xlu0 %v217, 126
        %v276 = vpop.permute.xlu0 %275
        %277 = vrot.lane.b32.xlu0 %v218, 126
        %v278 = vpop.permute.xlu0 %277
        %vm279 = vcmask 1046528
        %v280 = vrot.slane %v207, 1
        %v281 = vrot.slane %v208, 1
        %v282 = vsel %vm279, %v280, %v281
        %v283 = vrot.slane %v209, 1
        %v284 = vsel %vm279, %v281, %v283
        %v285 = vrot.slane %v210, 1
        %v286 = vrot.slane %v211, 1
        %v287 = vsel %vm279, %v285, %v286
        %v288 = vrot.slane %v212, 1
        %v289 = vsel %vm279, %v286, %v288
        %v290 = vrot.slane %v213, 1
        %v291 = vrot.slane %v214, 1
        %v292 = vsel %vm279, %v290, %v291
        %v293 = vrot.slane %v215, 1
        %v294 = vsel %vm279, %v291, %v293
        %v295 = vrot.slane %v216, 1
        %v296 = vrot.slane %v217, 1
        %v297 = vsel %vm279, %v295, %v296
        %v298 = vrot.slane %v218, 1
        %v299 = vsel %vm279, %v296, %v298
        %300 = vrot.lane.b32.xlu0 %v282, 127
        %v301 = vpop.permute.xlu0 %300
        %302 = vrot.lane.b32.xlu0 %v284, 127
        %v303 = vpop.permute.xlu0 %302
        %304 = vrot.lane.b32.xlu0 %v283, 127
        %v305 = vpop.permute.xlu0 %304
        %306 = vrot.lane.b32.xlu0 %v287, 127
        %v307 = vpop.permute.xlu0 %306
        %308 = vrot.lane.b32.xlu0 %v289, 127
        %v309 = vpop.permute.xlu0 %308
        %310 = vrot.lane.b32.xlu0 %v288, 127
        %v311 = vpop.permute.xlu0 %310
        %312 = vrot.lane.b32.xlu0 %v292, 127
        %v313 = vpop.permute.xlu0 %312
        %314 = vrot.lane.b32.xlu0 %v294, 127
        %v315 = vpop.permute.xlu0 %314
        %316 = vrot.lane.b32.xlu0 %v293, 127
        %v317 = vpop.permute.xlu0 %316
        %318 = vrot.lane.b32.xlu0 %v297, 127
        %v319 = vpop.permute.xlu0 %318
        %320 = vrot.lane.b32.xlu0 %v299, 127
        %v321 = vpop.permute.xlu0 %320
        %322 = vrot.lane.b32.xlu0 %v298, 127
        %v323 = vpop.permute.xlu0 %322
        %324 = vrot.lane.b32.xlu0 %v282, 126
        %v325 = vpop.permute.xlu0 %324
        %326 = vrot.lane.b32.xlu0 %v284, 126
        %v327 = vpop.permute.xlu0 %326
        %328 = vrot.lane.b32.xlu0 %v283, 126
        %v329 = vpop.permute.xlu0 %328
        %330 = vrot.lane.b32.xlu0 %v287, 126
        %v331 = vpop.permute.xlu0 %330
        %332 = vrot.lane.b32.xlu0 %v289, 126
        %v333 = vpop.permute.xlu0 %332
        %334 = vrot.lane.b32.xlu0 %v288, 126
        %v335 = vpop.permute.xlu0 %334
        %336 = vrot.lane.b32.xlu0 %v292, 126
        %v337 = vpop.permute.xlu0 %336
        %338 = vrot.lane.b32.xlu0 %v294, 126
        %v339 = vpop.permute.xlu0 %338
        %340 = vrot.lane.b32.xlu0 %v293, 126
        %v341 = vpop.permute.xlu0 %340
        %342 = vrot.lane.b32.xlu0 %v297, 126
        %v343 = vpop.permute.xlu0 %342
        %344 = vrot.lane.b32.xlu0 %v299, 126
        %v345 = vpop.permute.xlu0 %344
        %346 = vrot.lane.b32.xlu0 %v298, 126
        %v347 = vpop.permute.xlu0 %346
        %vm348 = vcmask 1045504
        %v349 = vrot.slane %v207, 2
        %v350 = vrot.slane %v208, 2
        %v351 = vsel %vm348, %v349, %v350
        %v352 = vrot.slane %v209, 2
        %v353 = vsel %vm348, %v350, %v352
        %v354 = vrot.slane %v210, 2
        %v355 = vrot.slane %v211, 2
        %v356 = vsel %vm348, %v354, %v355
        %v357 = vrot.slane %v212, 2
        %v358 = vsel %vm348, %v355, %v357
        %v359 = vrot.slane %v213, 2
        %v360 = vrot.slane %v214, 2
        %v361 = vsel %vm348, %v359, %v360
        %v362 = vrot.slane %v215, 2
        %v363 = vsel %vm348, %v360, %v362
        %v364 = vrot.slane %v216, 2
        %v365 = vrot.slane %v217, 2
        %v366 = vsel %vm348, %v364, %v365
        %v367 = vrot.slane %v218, 2
        %v368 = vsel %vm348, %v365, %v367
        %369 = vrot.lane.b32.xlu0 %v351, 127
        %v370 = vpop.permute.xlu0 %369
        %371 = vrot.lane.b32.xlu0 %v353, 127
        %v372 = vpop.permute.xlu0 %371
        %373 = vrot.lane.b32.xlu0 %v352, 127
        %v374 = vpop.permute.xlu0 %373
        %375 = vrot.lane.b32.xlu0 %v356, 127
        %v376 = vpop.permute.xlu0 %375
        %377 = vrot.lane.b32.xlu0 %v358, 127
        %v378 = vpop.permute.xlu0 %377
        %379 = vrot.lane.b32.xlu0 %v357, 127
        %v380 = vpop.permute.xlu0 %379
        %381 = vrot.lane.b32.xlu0 %v361, 127
        %v382 = vpop.permute.xlu0 %381
        %383 = vrot.lane.b32.xlu0 %v363, 127
        %v384 = vpop.permute.xlu0 %383
        %385 = vrot.lane.b32.xlu0 %v362, 127
        %v386 = vpop.permute.xlu0 %385
        %387 = vrot.lane.b32.xlu0 %v366, 127
        %v388 = vpop.permute.xlu0 %387
        %389 = vrot.lane.b32.xlu0 %v368, 127
        %v390 = vpop.permute.xlu0 %389
        %391 = vrot.lane.b32.xlu0 %v367, 127
        %v392 = vpop.permute.xlu0 %391
        %393 = vrot.lane.b32.xlu0 %v351, 126
        %v394 = vpop.permute.xlu0 %393
        %395 = vrot.lane.b32.xlu0 %v353, 126
        %v396 = vpop.permute.xlu0 %395
        %397 = vrot.lane.b32.xlu0 %v352, 126
        %v398 = vpop.permute.xlu0 %397
        %399 = vrot.lane.b32.xlu0 %v356, 126
        %v400 = vpop.permute.xlu0 %399
        %401 = vrot.lane.b32.xlu0 %v358, 126
        %v402 = vpop.permute.xlu0 %401
        %403 = vrot.lane.b32.xlu0 %v357, 126
        %v404 = vpop.permute.xlu0 %403
        %405 = vrot.lane.b32.xlu0 %v361, 126
        %v406 = vpop.permute.xlu0 %405
        %407 = vrot.lane.b32.xlu0 %v363, 126
        %v408 = vpop.permute.xlu0 %407
        %409 = vrot.lane.b32.xlu0 %v362, 126
        %v410 = vpop.permute.xlu0 %409
        %411 = vrot.lane.b32.xlu0 %v366, 126
        %v412 = vpop.permute.xlu0 %411
        %413 = vrot.lane.b32.xlu0 %v368, 126
        %v414 = vpop.permute.xlu0 %413
        %415 = vrot.lane.b32.xlu0 %v367, 126
        %v416 = vpop.permute.xlu0 %415
        %vm417 = vcmask 1040384
        %v418 = vrot.slane %v207, 7
        %v419 = vrot.slane %v208, 7
        %v420 = vsel %vm417, %v418, %v419
        %v421 = vrot.slane %v209, 7
        %v422 = vsel %vm417, %v419, %v421
        %v423 = vrot.slane %v210, 7
        %v424 = vrot.slane %v211, 7
        %v425 = vsel %vm417, %v423, %v424
        %v426 = vrot.slane %v212, 7
        %v427 = vsel %vm417, %v424, %v426
        %v428 = vrot.slane %v213, 7
        %v429 = vrot.slane %v214, 7
        %v430 = vsel %vm417, %v428, %v429
        %v431 = vrot.slane %v215, 7
        %v432 = vsel %vm417, %v429, %v431
        %v433 = vrot.slane %v216, 7
        %v434 = vrot.slane %v217, 7
        %v435 = vsel %vm417, %v433, %v434
        %v436 = vrot.slane %v218, 7
        %v437 = vsel %vm417, %v434, %v436
        %438 = vrot.lane.b32.xlu0 %v418, 1
        %v439 = vpop.permute.xlu0 %438
        %440 = vrot.lane.b32.xlu0 %v420, 1
        %v441 = vpop.permute.xlu0 %440
        %442 = vrot.lane.b32.xlu0 %v422, 1
        %v443 = vpop.permute.xlu0 %442
        %444 = vrot.lane.b32.xlu0 %v423, 1
        %v445 = vpop.permute.xlu0 %444
        %446 = vrot.lane.b32.xlu0 %v425, 1
        %v447 = vpop.permute.xlu0 %446
        %448 = vrot.lane.b32.xlu0 %v427, 1
        %v449 = vpop.permute.xlu0 %448
        %450 = vrot.lane.b32.xlu0 %v428, 1
        %v451 = vpop.permute.xlu0 %450
        %452 = vrot.lane.b32.xlu0 %v430, 1
        %v453 = vpop.permute.xlu0 %452
        %454 = vrot.lane.b32.xlu0 %v432, 1
        %v455 = vpop.permute.xlu0 %454
        %456 = vrot.lane.b32.xlu0 %v433, 1
        %v457 = vpop.permute.xlu0 %456
        %458 = vrot.lane.b32.xlu0 %v435, 1
        %v459 = vpop.permute.xlu0 %458
        %460 = vrot.lane.b32.xlu0 %v437, 1
        %v461 = vpop.permute.xlu0 %460
        %462 = vrot.lane.b32.xlu0 %v418, 127
        %v463 = vpop.permute.xlu0 %462
        %464 = vrot.lane.b32.xlu0 %v420, 127
        %v465 = vpop.permute.xlu0 %464
        %466 = vrot.lane.b32.xlu0 %v422, 127
        %v467 = vpop.permute.xlu0 %466
        %468 = vrot.lane.b32.xlu0 %v423, 127
        %v469 = vpop.permute.xlu0 %468
        %470 = vrot.lane.b32.xlu0 %v425, 127
        %v471 = vpop.permute.xlu0 %470
        %472 = vrot.lane.b32.xlu0 %v427, 127
        %v473 = vpop.permute.xlu0 %472
        %474 = vrot.lane.b32.xlu0 %v428, 127
        %v475 = vpop.permute.xlu0 %474
        %476 = vrot.lane.b32.xlu0 %v430, 127
        %v477 = vpop.permute.xlu0 %476
        %478 = vrot.lane.b32.xlu0 %v432, 127
        %v479 = vpop.permute.xlu0 %478
        %480 = vrot.lane.b32.xlu0 %v433, 127
        %v481 = vpop.permute.xlu0 %480
        %482 = vrot.lane.b32.xlu0 %v435, 127
        %v483 = vpop.permute.xlu0 %482
        %484 = vrot.lane.b32.xlu0 %v437, 127
        %v485 = vpop.permute.xlu0 %484
        %486 = vrot.lane.b32.xlu0 %v418, 125
        %v487 = vpop.permute.xlu0 %486
        %488 = vrot.lane.b32.xlu0 %v420, 125
        %v489 = vpop.permute.xlu0 %488
        %490 = vrot.lane.b32.xlu0 %v422, 125
        %v491 = vpop.permute.xlu0 %490
        %492 = vrot.lane.b32.xlu0 %v423, 125
        %v493 = vpop.permute.xlu0 %492
        %494 = vrot.lane.b32.xlu0 %v425, 125
        %v495 = vpop.permute.xlu0 %494
        %496 = vrot.lane.b32.xlu0 %v427, 125
        %v497 = vpop.permute.xlu0 %496
        %498 = vrot.lane.b32.xlu0 %v428, 125
        %v499 = vpop.permute.xlu0 %498
        %500 = vrot.lane.b32.xlu0 %v430, 125
        %v501 = vpop.permute.xlu0 %500
        %502 = vrot.lane.b32.xlu0 %v432, 125
        %v503 = vpop.permute.xlu0 %502
        %504 = vrot.lane.b32.xlu0 %v433, 125
        %v505 = vpop.permute.xlu0 %504
        %506 = vrot.lane.b32.xlu0 %v435, 125
        %v507 = vpop.permute.xlu0 %506
        %508 = vrot.lane.b32.xlu0 %v437, 125
        %v509 = vpop.permute.xlu0 %508
        %510 = vrot.lane.b32.xlu0 %v282, 1
        %v511 = vpop.permute.xlu0 %510
        %512 = vrot.lane.b32.xlu0 %v284, 1
        %v513 = vpop.permute.xlu0 %512
        %514 = vrot.lane.b32.xlu0 %v283, 1
        %v515 = vpop.permute.xlu0 %514
        %516 = vrot.lane.b32.xlu0 %v287, 1
        %v517 = vpop.permute.xlu0 %516
        %518 = vrot.lane.b32.xlu0 %v289, 1
        %v519 = vpop.permute.xlu0 %518
        %520 = vrot.lane.b32.xlu0 %v288, 1
        %v521 = vpop.permute.xlu0 %520
        %522 = vrot.lane.b32.xlu0 %v292, 1
        %v523 = vpop.permute.xlu0 %522
        %524 = vrot.lane.b32.xlu0 %v294, 1
        %v525 = vpop.permute.xlu0 %524
        %526 = vrot.lane.b32.xlu0 %v293, 1
        %v527 = vpop.permute.xlu0 %526
        %528 = vrot.lane.b32.xlu0 %v297, 1
        %v529 = vpop.permute.xlu0 %528
        %530 = vrot.lane.b32.xlu0 %v299, 1
        %v531 = vpop.permute.xlu0 %530
        %532 = vrot.lane.b32.xlu0 %v298, 1
        %v533 = vpop.permute.xlu0 %532
        %534 = vrot.lane.b32.xlu0 %v282, 125
        %v535 = vpop.permute.xlu0 %534
        %536 = vrot.lane.b32.xlu0 %v284, 125
        %v537 = vpop.permute.xlu0 %536
        %538 = vrot.lane.b32.xlu0 %v283, 125
        %v539 = vpop.permute.xlu0 %538
        %540 = vrot.lane.b32.xlu0 %v287, 125
        %v541 = vpop.permute.xlu0 %540
        %542 = vrot.lane.b32.xlu0 %v289, 125
        %v543 = vpop.permute.xlu0 %542
        %544 = vrot.lane.b32.xlu0 %v288, 125
        %v545 = vpop.permute.xlu0 %544
        %546 = vrot.lane.b32.xlu0 %v292, 125
        %v547 = vpop.permute.xlu0 %546
        %548 = vrot.lane.b32.xlu0 %v294, 125
        %v549 = vpop.permute.xlu0 %548
        %550 = vrot.lane.b32.xlu0 %v293, 125
        %v551 = vpop.permute.xlu0 %550
        %552 = vrot.lane.b32.xlu0 %v297, 125
        %v553 = vpop.permute.xlu0 %552
        %554 = vrot.lane.b32.xlu0 %v299, 125
        %v555 = vpop.permute.xlu0 %554
        %556 = vrot.lane.b32.xlu0 %v298, 125
        %v557 = vpop.permute.xlu0 %556
        %vm558 = vcmask 1044480
        %v559 = vrot.slane %v207, 3
        %v560 = vrot.slane %v208, 3
        %v561 = vsel %vm558, %v559, %v560
        %v562 = vrot.slane %v209, 3
        %v563 = vsel %vm558, %v560, %v562
        %v564 = vrot.slane %v210, 3
        %v565 = vrot.slane %v211, 3
        %v566 = vsel %vm558, %v564, %v565
        %v567 = vrot.slane %v212, 3
        %v568 = vsel %vm558, %v565, %v567
        %v569 = vrot.slane %v213, 3
        %v570 = vrot.slane %v214, 3
        %v571 = vsel %vm558, %v569, %v570
        %v572 = vrot.slane %v215, 3
        %v573 = vsel %vm558, %v570, %v572
        %v574 = vrot.slane %v216, 3
        %v575 = vrot.slane %v217, 3
        %v576 = vsel %vm558, %v574, %v575
        %v577 = vrot.slane %v218, 3
        %v578 = vsel %vm558, %v575, %v577
        %579 = vrot.lane.b32.xlu0 %v561, 1
        %v580 = vpop.permute.xlu0 %579
        %581 = vrot.lane.b32.xlu0 %v563, 1
        %v582 = vpop.permute.xlu0 %581
        %583 = vrot.lane.b32.xlu0 %v562, 1
        %v584 = vpop.permute.xlu0 %583
        %585 = vrot.lane.b32.xlu0 %v566, 1
        %v586 = vpop.permute.xlu0 %585
        %587 = vrot.lane.b32.xlu0 %v568, 1
        %v588 = vpop.permute.xlu0 %587
        %589 = vrot.lane.b32.xlu0 %v567, 1
        %v590 = vpop.permute.xlu0 %589
        %591 = vrot.lane.b32.xlu0 %v571, 1
        %v592 = vpop.permute.xlu0 %591
        %593 = vrot.lane.b32.xlu0 %v573, 1
        %v594 = vpop.permute.xlu0 %593
        %595 = vrot.lane.b32.xlu0 %v572, 1
        %v596 = vpop.permute.xlu0 %595
        %597 = vrot.lane.b32.xlu0 %v576, 1
        %v598 = vpop.permute.xlu0 %597
        %599 = vrot.lane.b32.xlu0 %v578, 1
        %v600 = vpop.permute.xlu0 %599
        %601 = vrot.lane.b32.xlu0 %v577, 1
        %v602 = vpop.permute.xlu0 %601
        %603 = vrot.lane.b32.xlu0 %v559, 3
        %v604 = vpop.permute.xlu0 %603
        %605 = vrot.lane.b32.xlu0 %v561, 3
        %v606 = vpop.permute.xlu0 %605
        %607 = vrot.lane.b32.xlu0 %v563, 3
        %v608 = vpop.permute.xlu0 %607
        %609 = vrot.lane.b32.xlu0 %v564, 3
        %v610 = vpop.permute.xlu0 %609
        %611 = vrot.lane.b32.xlu0 %v566, 3
        %v612 = vpop.permute.xlu0 %611
        %613 = vrot.lane.b32.xlu0 %v568, 3
        %v614 = vpop.permute.xlu0 %613
        %615 = vrot.lane.b32.xlu0 %v569, 3
        %v616 = vpop.permute.xlu0 %615
        %617 = vrot.lane.b32.xlu0 %v571, 3
        %v618 = vpop.permute.xlu0 %617
        %619 = vrot.lane.b32.xlu0 %v573, 3
        %v620 = vpop.permute.xlu0 %619
        %621 = vrot.lane.b32.xlu0 %v574, 3
        %v622 = vpop.permute.xlu0 %621
        %623 = vrot.lane.b32.xlu0 %v576, 3
        %v624 = vpop.permute.xlu0 %623
        %625 = vrot.lane.b32.xlu0 %v578, 3
        %v626 = vpop.permute.xlu0 %625
        %627 = vrot.lane.b32.xlu0 %v559, 125
        %v628 = vpop.permute.xlu0 %627
        %629 = vrot.lane.b32.xlu0 %v561, 125
        %v630 = vpop.permute.xlu0 %629
        %631 = vrot.lane.b32.xlu0 %v563, 125
        %v632 = vpop.permute.xlu0 %631
        %633 = vrot.lane.b32.xlu0 %v564, 125
        %v634 = vpop.permute.xlu0 %633
        %635 = vrot.lane.b32.xlu0 %v566, 125
        %v636 = vpop.permute.xlu0 %635
        %637 = vrot.lane.b32.xlu0 %v568, 125
        %v638 = vpop.permute.xlu0 %637
        %639 = vrot.lane.b32.xlu0 %v569, 125
        %v640 = vpop.permute.xlu0 %639
        %641 = vrot.lane.b32.xlu0 %v571, 125
        %v642 = vpop.permute.xlu0 %641
        %643 = vrot.lane.b32.xlu0 %v573, 125
        %v644 = vpop.permute.xlu0 %643
        %645 = vrot.lane.b32.xlu0 %v574, 125
        %v646 = vpop.permute.xlu0 %645
        %647 = vrot.lane.b32.xlu0 %v576, 125
        %v648 = vpop.permute.xlu0 %647
        %649 = vrot.lane.b32.xlu0 %v578, 125
        %v650 = vpop.permute.xlu0 %649
        %vm651 = vcmask 1041408
        %v652 = vrot.slane %v207, 6
        %v653 = vrot.slane %v208, 6
        %v654 = vsel %vm651, %v652, %v653
        %v655 = vrot.slane %v209, 6
        %v656 = vsel %vm651, %v653, %v655
        %v657 = vrot.slane %v210, 6
        %v658 = vrot.slane %v211, 6
        %v659 = vsel %vm651, %v657, %v658
        %v660 = vrot.slane %v212, 6
        %v661 = vsel %vm651, %v658, %v660
        %v662 = vrot.slane %v213, 6
        %v663 = vrot.slane %v214, 6
        %v664 = vsel %vm651, %v662, %v663
        %v665 = vrot.slane %v215, 6
        %v666 = vsel %vm651, %v663, %v665
        %v667 = vrot.slane %v216, 6
        %v668 = vrot.slane %v217, 6
        %v669 = vsel %vm651, %v667, %v668
        %v670 = vrot.slane %v218, 6
        %v671 = vsel %vm651, %v668, %v670
        %672 = vrot.lane.b32.xlu0 %v652, 3
        %v673 = vpop.permute.xlu0 %672
        %674 = vrot.lane.b32.xlu0 %v654, 3
        %v675 = vpop.permute.xlu0 %674
        %676 = vrot.lane.b32.xlu0 %v656, 3
        %v677 = vpop.permute.xlu0 %676
        %678 = vrot.lane.b32.xlu0 %v657, 3
        %v679 = vpop.permute.xlu0 %678
        %680 = vrot.lane.b32.xlu0 %v659, 3
        %v681 = vpop.permute.xlu0 %680
        %682 = vrot.lane.b32.xlu0 %v661, 3
        %v683 = vpop.permute.xlu0 %682
        %684 = vrot.lane.b32.xlu0 %v662, 3
        %v685 = vpop.permute.xlu0 %684
        %686 = vrot.lane.b32.xlu0 %v664, 3
        %v687 = vpop.permute.xlu0 %686
        %688 = vrot.lane.b32.xlu0 %v666, 3
        %v689 = vpop.permute.xlu0 %688
        %690 = vrot.lane.b32.xlu0 %v667, 3
        %v691 = vpop.permute.xlu0 %690
        %692 = vrot.lane.b32.xlu0 %v669, 3
        %v693 = vpop.permute.xlu0 %692
        %694 = vrot.lane.b32.xlu0 %v671, 3
        %v695 = vpop.permute.xlu0 %694
        %696 = vrot.lane.b32.xlu0 %v652, 125
        %v697 = vpop.permute.xlu0 %696
        %698 = vrot.lane.b32.xlu0 %v654, 125
        %v699 = vpop.permute.xlu0 %698
        %700 = vrot.lane.b32.xlu0 %v656, 125
        %v701 = vpop.permute.xlu0 %700
        %702 = vrot.lane.b32.xlu0 %v657, 125
        %v703 = vpop.permute.xlu0 %702
        %704 = vrot.lane.b32.xlu0 %v659, 125
        %v705 = vpop.permute.xlu0 %704
        %706 = vrot.lane.b32.xlu0 %v661, 125
        %v707 = vpop.permute.xlu0 %706
        %708 = vrot.lane.b32.xlu0 %v662, 125
        %v709 = vpop.permute.xlu0 %708
        %710 = vrot.lane.b32.xlu0 %v664, 125
        %v711 = vpop.permute.xlu0 %710
        %712 = vrot.lane.b32.xlu0 %v666, 125
        %v713 = vpop.permute.xlu0 %712
        %714 = vrot.lane.b32.xlu0 %v667, 125
        %v715 = vpop.permute.xlu0 %714
        %716 = vrot.lane.b32.xlu0 %v669, 125
        %v717 = vpop.permute.xlu0 %716
        %718 = vrot.lane.b32.xlu0 %v671, 125
        %v719 = vpop.permute.xlu0 %718
        %720 = vrot.lane.b32.xlu0 %v282, 3
        %v721 = vpop.permute.xlu0 %720
        %722 = vrot.lane.b32.xlu0 %v284, 3
        %v723 = vpop.permute.xlu0 %722
        %724 = vrot.lane.b32.xlu0 %v283, 3
        %v725 = vpop.permute.xlu0 %724
        %726 = vrot.lane.b32.xlu0 %v287, 3
        %v727 = vpop.permute.xlu0 %726
        %728 = vrot.lane.b32.xlu0 %v289, 3
        %v729 = vpop.permute.xlu0 %728
        %730 = vrot.lane.b32.xlu0 %v288, 3
        %v731 = vpop.permute.xlu0 %730
        %732 = vrot.lane.b32.xlu0 %v292, 3
        %v733 = vpop.permute.xlu0 %732
        %734 = vrot.lane.b32.xlu0 %v294, 3
        %v735 = vpop.permute.xlu0 %734
        %736 = vrot.lane.b32.xlu0 %v293, 3
        %v737 = vpop.permute.xlu0 %736
        %738 = vrot.lane.b32.xlu0 %v297, 3
        %v739 = vpop.permute.xlu0 %738
        %740 = vrot.lane.b32.xlu0 %v299, 3
        %v741 = vpop.permute.xlu0 %740
        %742 = vrot.lane.b32.xlu0 %v298, 3
        %v743 = vpop.permute.xlu0 %742
        %744 = vrot.lane.b32.xlu0 %v349, 4
        %v745 = vpop.permute.xlu0 %744
        %746 = vrot.lane.b32.xlu0 %v351, 4
        %v747 = vpop.permute.xlu0 %746
        %748 = vrot.lane.b32.xlu0 %v350, 4
        %v749 = vpop.permute.xlu0 %748
        %750 = vrot.lane.b32.xlu0 %v354, 4
        %v751 = vpop.permute.xlu0 %750
        %752 = vrot.lane.b32.xlu0 %v356, 4
        %v753 = vpop.permute.xlu0 %752
        %754 = vrot.lane.b32.xlu0 %v355, 4
        %v755 = vpop.permute.xlu0 %754
        %756 = vrot.lane.b32.xlu0 %v359, 4
        %v757 = vpop.permute.xlu0 %756
        %758 = vrot.lane.b32.xlu0 %v361, 4
        %v759 = vpop.permute.xlu0 %758
        %760 = vrot.lane.b32.xlu0 %v360, 4
        %v761 = vpop.permute.xlu0 %760
        %762 = vrot.lane.b32.xlu0 %v364, 4
        %v763 = vpop.permute.xlu0 %762
        %764 = vrot.lane.b32.xlu0 %v366, 4
        %v765 = vpop.permute.xlu0 %764
        %766 = vrot.lane.b32.xlu0 %v365, 4
        %v767 = vpop.permute.xlu0 %766
        %768 = vrot.lane.b32.xlu0 %v349, 124
        %v769 = vpop.permute.xlu0 %768
        %770 = vrot.lane.b32.xlu0 %v351, 124
        %v771 = vpop.permute.xlu0 %770
        %772 = vrot.lane.b32.xlu0 %v350, 124
        %v773 = vpop.permute.xlu0 %772
        %774 = vrot.lane.b32.xlu0 %v354, 124
        %v775 = vpop.permute.xlu0 %774
        %776 = vrot.lane.b32.xlu0 %v356, 124
        %v777 = vpop.permute.xlu0 %776
        %778 = vrot.lane.b32.xlu0 %v355, 124
        %v779 = vpop.permute.xlu0 %778
        %780 = vrot.lane.b32.xlu0 %v359, 124
        %v781 = vpop.permute.xlu0 %780
        %782 = vrot.lane.b32.xlu0 %v361, 124
        %v783 = vpop.permute.xlu0 %782
        %784 = vrot.lane.b32.xlu0 %v360, 124
        %v785 = vpop.permute.xlu0 %784
        %786 = vrot.lane.b32.xlu0 %v364, 124
        %v787 = vpop.permute.xlu0 %786
        %788 = vrot.lane.b32.xlu0 %v366, 124
        %v789 = vpop.permute.xlu0 %788
        %790 = vrot.lane.b32.xlu0 %v365, 124
        %v791 = vpop.permute.xlu0 %790
        %792 = vrot.lane.b32.xlu0 %v652, 4
        %v793 = vpop.permute.xlu0 %792
        %794 = vrot.lane.b32.xlu0 %v654, 4
        %v795 = vpop.permute.xlu0 %794
        %796 = vrot.lane.b32.xlu0 %v656, 4
        %v797 = vpop.permute.xlu0 %796
        %798 = vrot.lane.b32.xlu0 %v657, 4
        %v799 = vpop.permute.xlu0 %798
        %800 = vrot.lane.b32.xlu0 %v659, 4
        %v801 = vpop.permute.xlu0 %800
        %802 = vrot.lane.b32.xlu0 %v661, 4
        %v803 = vpop.permute.xlu0 %802
        %804 = vrot.lane.b32.xlu0 %v662, 4
        %v805 = vpop.permute.xlu0 %804
        %806 = vrot.lane.b32.xlu0 %v664, 4
        %v807 = vpop.permute.xlu0 %806
        %808 = vrot.lane.b32.xlu0 %v666, 4
        %v809 = vpop.permute.xlu0 %808
        %810 = vrot.lane.b32.xlu0 %v667, 4
        %v811 = vpop.permute.xlu0 %810
        %812 = vrot.lane.b32.xlu0 %v669, 4
        %v813 = vpop.permute.xlu0 %812
        %814 = vrot.lane.b32.xlu0 %v671, 4
        %v815 = vpop.permute.xlu0 %814
        %vm816 = vcmask 1043456
        %v817 = vrot.slane %v208, 4
        %v818 = vrot.slane %v209, 4
        %v819 = vsel %vm816, %v817, %v818
        %v820 = vrot.slane %v211, 4
        %v821 = vrot.slane %v212, 4
        %v822 = vsel %vm816, %v820, %v821
        %v823 = vrot.slane %v214, 4
        %v824 = vrot.slane %v215, 4
        %v825 = vsel %vm816, %v823, %v824
        %v826 = vrot.slane %v217, 4
        %v827 = vrot.slane %v218, 4
        %v828 = vsel %vm816, %v826, %v827
        %829 = vrot.lane.b32.xlu0 %v817, 8
        %v830 = vpop.permute.xlu0 %829
        %831 = vrot.lane.b32.xlu0 %v819, 8
        %v832 = vpop.permute.xlu0 %831
        %833 = vrot.lane.b32.xlu0 %v818, 8
        %v834 = vpop.permute.xlu0 %833
        %835 = vrot.lane.b32.xlu0 %v820, 8
        %v836 = vpop.permute.xlu0 %835
        %837 = vrot.lane.b32.xlu0 %v822, 8
        %v838 = vpop.permute.xlu0 %837
        %839 = vrot.lane.b32.xlu0 %v821, 8
        %v840 = vpop.permute.xlu0 %839
        %841 = vrot.lane.b32.xlu0 %v823, 8
        %v842 = vpop.permute.xlu0 %841
        %843 = vrot.lane.b32.xlu0 %v825, 8
        %v844 = vpop.permute.xlu0 %843
        %845 = vrot.lane.b32.xlu0 %v824, 8
        %v846 = vpop.permute.xlu0 %845
        %847 = vrot.lane.b32.xlu0 %v826, 8
        %v848 = vpop.permute.xlu0 %847
        %849 = vrot.lane.b32.xlu0 %v828, 8
        %v850 = vpop.permute.xlu0 %849
        %851 = vrot.lane.b32.xlu0 %v827, 8
        %v852 = vpop.permute.xlu0 %851
        %853 = vrot.lane.b32.xlu0 %v817, 4
        %v854 = vpop.permute.xlu0 %853
        %855 = vrot.lane.b32.xlu0 %v819, 4
        %v856 = vpop.permute.xlu0 %855
        %857 = vrot.lane.b32.xlu0 %v818, 4
        %v858 = vpop.permute.xlu0 %857
        %859 = vrot.lane.b32.xlu0 %v820, 4
        %v860 = vpop.permute.xlu0 %859
        %861 = vrot.lane.b32.xlu0 %v822, 4
        %v862 = vpop.permute.xlu0 %861
        %863 = vrot.lane.b32.xlu0 %v821, 4
        %v864 = vpop.permute.xlu0 %863
        %865 = vrot.lane.b32.xlu0 %v823, 4
        %v866 = vpop.permute.xlu0 %865
        %867 = vrot.lane.b32.xlu0 %v825, 4
        %v868 = vpop.permute.xlu0 %867
        %869 = vrot.lane.b32.xlu0 %v824, 4
        %v870 = vpop.permute.xlu0 %869
        %871 = vrot.lane.b32.xlu0 %v826, 4
        %v872 = vpop.permute.xlu0 %871
        %873 = vrot.lane.b32.xlu0 %v828, 4
        %v874 = vpop.permute.xlu0 %873
        %875 = vrot.lane.b32.xlu0 %v827, 4
        %v876 = vpop.permute.xlu0 %875
        %v877 = vrot.slane %v256, 3
        %v878 = vrot.slane %v258, 3
        %v879 = vsel %vm558, %v877, %v878
        %v880 = vrot.slane %v260, 3
        %v881 = vsel %vm558, %v878, %v880
        %v882 = vrot.slane %v262, 3
        %v883 = vrot.slane %v264, 3
        %v884 = vsel %vm558, %v882, %v883
        %v885 = vrot.slane %v266, 3
        %v886 = vsel %vm558, %v883, %v885
        %v887 = vrot.slane %v268, 3
        %v888 = vrot.slane %v270, 3
        %v889 = vsel %vm558, %v887, %v888
        %v890 = vrot.slane %v272, 3
        %v891 = vsel %vm558, %v888, %v890
        %v892 = vrot.slane %v274, 3
        %v893 = vrot.slane %v276, 3
        %v894 = vsel %vm558, %v892, %v893
        %v895 = vrot.slane %v278, 3
        %v896 = vsel %vm558, %v893, %v895
        %v897 = vrot.slane %v604, 3
        %v898 = vrot.slane %v606, 3
        %v899 = vsel %vm558, %v897, %v898
        %v900 = vrot.slane %v608, 3
        %v901 = vsel %vm558, %v898, %v900
        %v902 = vrot.slane %v610, 3
        %v903 = vrot.slane %v612, 3
        %v904 = vsel %vm558, %v902, %v903
        %v905 = vrot.slane %v614, 3
        %v906 = vsel %vm558, %v903, %v905
        %v907 = vrot.slane %v616, 3
        %v908 = vrot.slane %v618, 3
        %v909 = vsel %vm558, %v907, %v908
        %v910 = vrot.slane %v620, 3
        %v911 = vsel %vm558, %v908, %v910
        %v912 = vrot.slane %v622, 3
        %v913 = vrot.slane %v624, 3
        %v914 = vsel %vm558, %v912, %v913
        %v915 = vrot.slane %v626, 3
        %v916 = vsel %vm558, %v913, %v915
        %v917 = vrot.slane %v559, 3
        %v918 = vrot.slane %v561, 3
        %v919 = vsel %vm558, %v917, %v918
        %v920 = vrot.slane %v563, 3
        %v921 = vsel %vm558, %v918, %v920
        %v922 = vrot.slane %v564, 3
        %v923 = vrot.slane %v566, 3
        %v924 = vsel %vm558, %v922, %v923
        %v925 = vrot.slane %v568, 3
        %v926 = vsel %vm558, %v923, %v925
        %v927 = vrot.slane %v569, 3
        %v928 = vrot.slane %v571, 3
        %v929 = vsel %vm558, %v927, %v928
        %v930 = vrot.slane %v573, 3
        %v931 = vsel %vm558, %v928, %v930
        %v932 = vrot.slane %v574, 3
        %v933 = vrot.slane %v576, 3
        %v934 = vsel %vm558, %v932, %v933
        %v935 = vrot.slane %v578, 3
        %v936 = vsel %vm558, %v933, %v935
        %v937 = vrot.slane %v628, 3
        %v938 = vrot.slane %v630, 3
        %v939 = vsel %vm558, %v937, %v938
        %v940 = vrot.slane %v632, 3
        %v941 = vsel %vm558, %v938, %v940
        %v942 = vrot.slane %v634, 3
        %v943 = vrot.slane %v636, 3
        %v944 = vsel %vm558, %v942, %v943
        %v945 = vrot.slane %v638, 3
        %v946 = vsel %vm558, %v943, %v945
        %v947 = vrot.slane %v640, 3
        %v948 = vrot.slane %v642, 3
        %v949 = vsel %vm558, %v947, %v948
        %v950 = vrot.slane %v644, 3
        %v951 = vsel %vm558, %v948, %v950
        %v952 = vrot.slane %v646, 3
        %v953 = vrot.slane %v648, 3
        %v954 = vsel %vm558, %v952, %v953
        %v955 = vrot.slane %v650, 3
        %v956 = vsel %vm558, %v953, %v955
        %v957 = vrot.slane %v673, 3
        %v958 = vrot.slane %v675, 3
        %v959 = vsel %vm558, %v957, %v958
        %v960 = vrot.slane %v677, 3
        %v961 = vsel %vm558, %v958, %v960
        %v962 = vrot.slane %v679, 3
        %v963 = vrot.slane %v681, 3
        %v964 = vsel %vm558, %v962, %v963
        %v965 = vrot.slane %v683, 3
        %v966 = vsel %vm558, %v963, %v965
        %v967 = vrot.slane %v685, 3
        %v968 = vrot.slane %v687, 3
        %v969 = vsel %vm558, %v967, %v968
        %v970 = vrot.slane %v689, 3
        %v971 = vsel %vm558, %v968, %v970
        %v972 = vrot.slane %v691, 3
        %v973 = vrot.slane %v693, 3
        %v974 = vsel %vm558, %v972, %v973
        %v975 = vrot.slane %v695, 3
        %v976 = vsel %vm558, %v973, %v975
        %v977 = vrot.slane %v652, 3
        %v978 = vrot.slane %v654, 3
        %v979 = vsel %vm558, %v977, %v978
        %v980 = vrot.slane %v656, 3
        %v981 = vsel %vm558, %v978, %v980
        %v982 = vrot.slane %v657, 3
        %v983 = vrot.slane %v659, 3
        %v984 = vsel %vm558, %v982, %v983
        %v985 = vrot.slane %v661, 3
        %v986 = vsel %vm558, %v983, %v985
        %v987 = vrot.slane %v662, 3
        %v988 = vrot.slane %v664, 3
        %v989 = vsel %vm558, %v987, %v988
        %v990 = vrot.slane %v666, 3
        %v991 = vsel %vm558, %v988, %v990
        %v992 = vrot.slane %v667, 3
        %v993 = vrot.slane %v669, 3
        %v994 = vsel %vm558, %v992, %v993
        %v995 = vrot.slane %v671, 3
        %v996 = vsel %vm558, %v993, %v995
        %v997 = vrot.slane %v697, 3
        %v998 = vrot.slane %v699, 3
        %v999 = vsel %vm558, %v997, %v998
        %v1000 = vrot.slane %v701, 3
        %v1001 = vsel %vm558, %v998, %v1000
        %v1002 = vrot.slane %v703, 3
        %v1003 = vrot.slane %v705, 3
        %v1004 = vsel %vm558, %v1002, %v1003
        %v1005 = vrot.slane %v707, 3
        %v1006 = vsel %vm558, %v1003, %v1005
        %v1007 = vrot.slane %v709, 3
        %v1008 = vrot.slane %v711, 3
        %v1009 = vsel %vm558, %v1007, %v1008
        %v1010 = vrot.slane %v713, 3
        %v1011 = vsel %vm558, %v1008, %v1010
        %v1012 = vrot.slane %v715, 3
        %v1013 = vrot.slane %v717, 3
        %v1014 = vsel %vm558, %v1012, %v1013
        %v1015 = vrot.slane %v719, 3
        %v1016 = vsel %vm558, %v1013, %v1015
        %v1017 = vrot.slane %v721, 3
        %v1018 = vrot.slane %v723, 3
        %v1019 = vsel %vm558, %v1017, %v1018
        %v1020 = vrot.slane %v725, 3
        %v1021 = vsel %vm558, %v1018, %v1020
        %v1022 = vrot.slane %v727, 3
        %v1023 = vrot.slane %v729, 3
        %v1024 = vsel %vm558, %v1022, %v1023
        %v1025 = vrot.slane %v731, 3
        %v1026 = vsel %vm558, %v1023, %v1025
        %v1027 = vrot.slane %v733, 3
        %v1028 = vrot.slane %v735, 3
        %v1029 = vsel %vm558, %v1027, %v1028
        %v1030 = vrot.slane %v737, 3
        %v1031 = vsel %vm558, %v1028, %v1030
        %v1032 = vrot.slane %v739, 3
        %v1033 = vrot.slane %v741, 3
        %v1034 = vsel %vm558, %v1032, %v1033
        %v1035 = vrot.slane %v743, 3
        %v1036 = vsel %vm558, %v1033, %v1035
        %v1037 = vrot.slane %v282, 3
        %v1038 = vrot.slane %v284, 3
        %v1039 = vsel %vm558, %v1037, %v1038
        %v1040 = vrot.slane %v283, 3
        %v1041 = vsel %vm558, %v1038, %v1040
        %v1042 = vrot.slane %v287, 3
        %v1043 = vrot.slane %v289, 3
        %v1044 = vsel %vm558, %v1042, %v1043
        %v1045 = vrot.slane %v288, 3
        %v1046 = vsel %vm558, %v1043, %v1045
        %v1047 = vrot.slane %v292, 3
        %v1048 = vrot.slane %v294, 3
        %v1049 = vsel %vm558, %v1047, %v1048
        %v1050 = vrot.slane %v293, 3
        %v1051 = vsel %vm558, %v1048, %v1050
        %v1052 = vrot.slane %v297, 3
        %v1053 = vrot.slane %v299, 3
        %v1054 = vsel %vm558, %v1052, %v1053
        %v1055 = vrot.slane %v298, 3
        %v1056 = vsel %vm558, %v1053, %v1055
        %v1057 = vrot.slane %v535, 3
        %v1058 = vrot.slane %v537, 3
        %v1059 = vsel %vm558, %v1057, %v1058
        %v1060 = vrot.slane %v539, 3
        %v1061 = vsel %vm558, %v1058, %v1060
        %v1062 = vrot.slane %v541, 3
        %v1063 = vrot.slane %v543, 3
        %v1064 = vsel %vm558, %v1062, %v1063
        %v1065 = vrot.slane %v545, 3
        %v1066 = vsel %vm558, %v1063, %v1065
        %v1067 = vrot.slane %v547, 3
        %v1068 = vrot.slane %v549, 3
        %v1069 = vsel %vm558, %v1067, %v1068
        %v1070 = vrot.slane %v551, 3
        %v1071 = vsel %vm558, %v1068, %v1070
        %v1072 = vrot.slane %v553, 3
        %v1073 = vrot.slane %v555, 3
        %v1074 = vsel %vm558, %v1072, %v1073
        %v1075 = vrot.slane %v557, 3
        %v1076 = vsel %vm558, %v1073, %v1075
        %v1077 = vrot.slane %v745, 3
        %v1078 = vrot.slane %v747, 3
        %v1079 = vsel %vm558, %v1077, %v1078
        %v1080 = vrot.slane %v749, 3
        %v1081 = vsel %vm558, %v1078, %v1080
        %v1082 = vrot.slane %v751, 3
        %v1083 = vrot.slane %v753, 3
        %v1084 = vsel %vm558, %v1082, %v1083
        %v1085 = vrot.slane %v755, 3
        %v1086 = vsel %vm558, %v1083, %v1085
        %v1087 = vrot.slane %v757, 3
        %v1088 = vrot.slane %v759, 3
        %v1089 = vsel %vm558, %v1087, %v1088
        %v1090 = vrot.slane %v761, 3
        %v1091 = vsel %vm558, %v1088, %v1090
        %v1092 = vrot.slane %v763, 3
        %v1093 = vrot.slane %v765, 3
        %v1094 = vsel %vm558, %v1092, %v1093
        %v1095 = vrot.slane %v767, 3
        %v1096 = vsel %vm558, %v1093, %v1095
        %v1097 = vrot.slane %v349, 3
        %v1098 = vrot.slane %v351, 3
        %v1099 = vsel %vm558, %v1097, %v1098
        %v1100 = vrot.slane %v350, 3
        %v1101 = vsel %vm558, %v1098, %v1100
        %v1102 = vrot.slane %v354, 3
        %v1103 = vrot.slane %v356, 3
        %v1104 = vsel %vm558, %v1102, %v1103
        %v1105 = vrot.slane %v355, 3
        %v1106 = vsel %vm558, %v1103, %v1105
        %v1107 = vrot.slane %v359, 3
        %v1108 = vrot.slane %v361, 3
        %v1109 = vsel %vm558, %v1107, %v1108
        %v1110 = vrot.slane %v360, 3
        %v1111 = vsel %vm558, %v1108, %v1110
        %v1112 = vrot.slane %v364, 3
        %v1113 = vrot.slane %v366, 3
        %v1114 = vsel %vm558, %v1112, %v1113
        %v1115 = vrot.slane %v365, 3
        %v1116 = vsel %vm558, %v1113, %v1115
        %v1117 = vrot.slane %v769, 3
        %v1118 = vrot.slane %v771, 3
        %v1119 = vsel %vm558, %v1117, %v1118
        %v1120 = vrot.slane %v773, 3
        %v1121 = vsel %vm558, %v1118, %v1120
        %v1122 = vrot.slane %v775, 3
        %v1123 = vrot.slane %v777, 3
        %v1124 = vsel %vm558, %v1122, %v1123
        %v1125 = vrot.slane %v779, 3
        %v1126 = vsel %vm558, %v1123, %v1125
        %v1127 = vrot.slane %v781, 3
        %v1128 = vrot.slane %v783, 3
        %v1129 = vsel %vm558, %v1127, %v1128
        %v1130 = vrot.slane %v785, 3
        %v1131 = vsel %vm558, %v1128, %v1130
        %v1132 = vrot.slane %v787, 3
        %v1133 = vrot.slane %v789, 3
        %v1134 = vsel %vm558, %v1132, %v1133
        %v1135 = vrot.slane %v791, 3
        %v1136 = vsel %vm558, %v1133, %v1135
        %v1137 = vrot.slane %v793, 3
        %v1138 = vrot.slane %v795, 3
        %v1139 = vsel %vm558, %v1137, %v1138
        %v1140 = vrot.slane %v797, 3
        %v1141 = vsel %vm558, %v1138, %v1140
        %v1142 = vrot.slane %v799, 3
        %v1143 = vrot.slane %v801, 3
        %v1144 = vsel %vm558, %v1142, %v1143
        %v1145 = vrot.slane %v803, 3
        %v1146 = vsel %vm558, %v1143, %v1145
        %v1147 = vrot.slane %v805, 3
        %v1148 = vrot.slane %v807, 3
        %v1149 = vsel %vm558, %v1147, %v1148
        %v1150 = vrot.slane %v809, 3
        %v1151 = vsel %vm558, %v1148, %v1150
        %v1152 = vrot.slane %v811, 3
        %v1153 = vrot.slane %v813, 3
        %v1154 = vsel %vm558, %v1152, %v1153
        %v1155 = vrot.slane %v815, 3
        %v1156 = vsel %vm558, %v1153, %v1155
        %1157 = vrot.lane.b32.xlu0 %v561, 127
        %v1158 = vpop.permute.xlu0 %1157
        %1159 = vrot.lane.b32.xlu0 %v563, 127
        %v1160 = vpop.permute.xlu0 %1159
        %1161 = vrot.lane.b32.xlu0 %v562, 127
        %v1162 = vpop.permute.xlu0 %1161
        %1163 = vrot.lane.b32.xlu0 %v566, 127
        %v1164 = vpop.permute.xlu0 %1163
        %1165 = vrot.lane.b32.xlu0 %v568, 127
        %v1166 = vpop.permute.xlu0 %1165
        %1167 = vrot.lane.b32.xlu0 %v567, 127
        %v1168 = vpop.permute.xlu0 %1167
        %1169 = vrot.lane.b32.xlu0 %v571, 127
        %v1170 = vpop.permute.xlu0 %1169
        %1171 = vrot.lane.b32.xlu0 %v573, 127
        %v1172 = vpop.permute.xlu0 %1171
        %1173 = vrot.lane.b32.xlu0 %v572, 127
        %v1174 = vpop.permute.xlu0 %1173
        %1175 = vrot.lane.b32.xlu0 %v576, 127
        %v1176 = vpop.permute.xlu0 %1175
        %1177 = vrot.lane.b32.xlu0 %v578, 127
        %v1178 = vpop.permute.xlu0 %1177
        %1179 = vrot.lane.b32.xlu0 %v577, 127
        %v1180 = vpop.permute.xlu0 %1179
        %1181 = vrot.lane.b32.xlu0 %v879, 127
        %v1182 = vpop.permute.xlu0 %1181
        %1183 = vrot.lane.b32.xlu0 %v881, 127
        %v1184 = vpop.permute.xlu0 %1183
        %1185 = vrot.lane.b32.xlu0 %v880, 127
        %v1186 = vpop.permute.xlu0 %1185
        %1187 = vrot.lane.b32.xlu0 %v884, 127
        %v1188 = vpop.permute.xlu0 %1187
        %1189 = vrot.lane.b32.xlu0 %v886, 127
        %v1190 = vpop.permute.xlu0 %1189
        %1191 = vrot.lane.b32.xlu0 %v885, 127
        %v1192 = vpop.permute.xlu0 %1191
        %1193 = vrot.lane.b32.xlu0 %v889, 127
        %v1194 = vpop.permute.xlu0 %1193
        %1195 = vrot.lane.b32.xlu0 %v891, 127
        %v1196 = vpop.permute.xlu0 %1195
        %1197 = vrot.lane.b32.xlu0 %v890, 127
        %v1198 = vpop.permute.xlu0 %1197
        %1199 = vrot.lane.b32.xlu0 %v894, 127
        %v1200 = vpop.permute.xlu0 %1199
        %1201 = vrot.lane.b32.xlu0 %v896, 127
        %v1202 = vpop.permute.xlu0 %1201
        %1203 = vrot.lane.b32.xlu0 %v895, 127
        %v1204 = vpop.permute.xlu0 %1203
        %1205 = vrot.lane.b32.xlu0 %v899, 127
        %v1206 = vpop.permute.xlu0 %1205
        %1207 = vrot.lane.b32.xlu0 %v901, 127
        %v1208 = vpop.permute.xlu0 %1207
        %1209 = vrot.lane.b32.xlu0 %v900, 127
        %v1210 = vpop.permute.xlu0 %1209
        %1211 = vrot.lane.b32.xlu0 %v904, 127
        %v1212 = vpop.permute.xlu0 %1211
        %1213 = vrot.lane.b32.xlu0 %v906, 127
        %v1214 = vpop.permute.xlu0 %1213
        %1215 = vrot.lane.b32.xlu0 %v905, 127
        %v1216 = vpop.permute.xlu0 %1215
        %1217 = vrot.lane.b32.xlu0 %v909, 127
        %v1218 = vpop.permute.xlu0 %1217
        %1219 = vrot.lane.b32.xlu0 %v911, 127
        %v1220 = vpop.permute.xlu0 %1219
        %1221 = vrot.lane.b32.xlu0 %v910, 127
        %v1222 = vpop.permute.xlu0 %1221
        %1223 = vrot.lane.b32.xlu0 %v914, 127
        %v1224 = vpop.permute.xlu0 %1223
        %1225 = vrot.lane.b32.xlu0 %v916, 127
        %v1226 = vpop.permute.xlu0 %1225
        %1227 = vrot.lane.b32.xlu0 %v915, 127
        %v1228 = vpop.permute.xlu0 %1227
        %1229 = vrot.lane.b32.xlu0 %v919, 127
        %v1230 = vpop.permute.xlu0 %1229
        %1231 = vrot.lane.b32.xlu0 %v921, 127
        %v1232 = vpop.permute.xlu0 %1231
        %1233 = vrot.lane.b32.xlu0 %v920, 127
        %v1234 = vpop.permute.xlu0 %1233
        %1235 = vrot.lane.b32.xlu0 %v924, 127
        %v1236 = vpop.permute.xlu0 %1235
        %1237 = vrot.lane.b32.xlu0 %v926, 127
        %v1238 = vpop.permute.xlu0 %1237
        %1239 = vrot.lane.b32.xlu0 %v925, 127
        %v1240 = vpop.permute.xlu0 %1239
        %1241 = vrot.lane.b32.xlu0 %v929, 127
        %v1242 = vpop.permute.xlu0 %1241
        %1243 = vrot.lane.b32.xlu0 %v931, 127
        %v1244 = vpop.permute.xlu0 %1243
        %1245 = vrot.lane.b32.xlu0 %v930, 127
        %v1246 = vpop.permute.xlu0 %1245
        %1247 = vrot.lane.b32.xlu0 %v934, 127
        %v1248 = vpop.permute.xlu0 %1247
        %1249 = vrot.lane.b32.xlu0 %v936, 127
        %v1250 = vpop.permute.xlu0 %1249
        %1251 = vrot.lane.b32.xlu0 %v935, 127
        %v1252 = vpop.permute.xlu0 %1251
        %1253 = vrot.lane.b32.xlu0 %v939, 127
        %v1254 = vpop.permute.xlu0 %1253
        %1255 = vrot.lane.b32.xlu0 %v941, 127
        %v1256 = vpop.permute.xlu0 %1255
        %1257 = vrot.lane.b32.xlu0 %v940, 127
        %v1258 = vpop.permute.xlu0 %1257
        %1259 = vrot.lane.b32.xlu0 %v944, 127
        %v1260 = vpop.permute.xlu0 %1259
        %1261 = vrot.lane.b32.xlu0 %v946, 127
        %v1262 = vpop.permute.xlu0 %1261
        %1263 = vrot.lane.b32.xlu0 %v945, 127
        %v1264 = vpop.permute.xlu0 %1263
        %1265 = vrot.lane.b32.xlu0 %v949, 127
        %v1266 = vpop.permute.xlu0 %1265
        %1267 = vrot.lane.b32.xlu0 %v951, 127
        %v1268 = vpop.permute.xlu0 %1267
        %1269 = vrot.lane.b32.xlu0 %v950, 127
        %v1270 = vpop.permute.xlu0 %1269
        %1271 = vrot.lane.b32.xlu0 %v954, 127
        %v1272 = vpop.permute.xlu0 %1271
        %1273 = vrot.lane.b32.xlu0 %v956, 127
        %v1274 = vpop.permute.xlu0 %1273
        %1275 = vrot.lane.b32.xlu0 %v955, 127
        %v1276 = vpop.permute.xlu0 %1275
        %1277 = vrot.lane.b32.xlu0 %v959, 127
        %v1278 = vpop.permute.xlu0 %1277
        %1279 = vrot.lane.b32.xlu0 %v961, 127
        %v1280 = vpop.permute.xlu0 %1279
        %1281 = vrot.lane.b32.xlu0 %v960, 127
        %v1282 = vpop.permute.xlu0 %1281
        %1283 = vrot.lane.b32.xlu0 %v964, 127
        %v1284 = vpop.permute.xlu0 %1283
        %1285 = vrot.lane.b32.xlu0 %v966, 127
        %v1286 = vpop.permute.xlu0 %1285
        %1287 = vrot.lane.b32.xlu0 %v965, 127
        %v1288 = vpop.permute.xlu0 %1287
        %1289 = vrot.lane.b32.xlu0 %v969, 127
        %v1290 = vpop.permute.xlu0 %1289
        %1291 = vrot.lane.b32.xlu0 %v971, 127
        %v1292 = vpop.permute.xlu0 %1291
        %1293 = vrot.lane.b32.xlu0 %v970, 127
        %v1294 = vpop.permute.xlu0 %1293
        %1295 = vrot.lane.b32.xlu0 %v974, 127
        %v1296 = vpop.permute.xlu0 %1295
        %1297 = vrot.lane.b32.xlu0 %v976, 127
        %v1298 = vpop.permute.xlu0 %1297
        %1299 = vrot.lane.b32.xlu0 %v975, 127
        %v1300 = vpop.permute.xlu0 %1299
        %1301 = vrot.lane.b32.xlu0 %v979, 127
        %v1302 = vpop.permute.xlu0 %1301
        %1303 = vrot.lane.b32.xlu0 %v981, 127
        %v1304 = vpop.permute.xlu0 %1303
        %1305 = vrot.lane.b32.xlu0 %v980, 127
        %v1306 = vpop.permute.xlu0 %1305
        %1307 = vrot.lane.b32.xlu0 %v984, 127
        %v1308 = vpop.permute.xlu0 %1307
        %1309 = vrot.lane.b32.xlu0 %v986, 127
        %v1310 = vpop.permute.xlu0 %1309
        %1311 = vrot.lane.b32.xlu0 %v985, 127
        %v1312 = vpop.permute.xlu0 %1311
        %1313 = vrot.lane.b32.xlu0 %v989, 127
        %v1314 = vpop.permute.xlu0 %1313
        %1315 = vrot.lane.b32.xlu0 %v991, 127
        %v1316 = vpop.permute.xlu0 %1315
        %1317 = vrot.lane.b32.xlu0 %v990, 127
        %v1318 = vpop.permute.xlu0 %1317
        %1319 = vrot.lane.b32.xlu0 %v994, 127
        %v1320 = vpop.permute.xlu0 %1319
        %1321 = vrot.lane.b32.xlu0 %v996, 127
        %v1322 = vpop.permute.xlu0 %1321
        %1323 = vrot.lane.b32.xlu0 %v995, 127
        %v1324 = vpop.permute.xlu0 %1323
        %1325 = vrot.lane.b32.xlu0 %v999, 127
        %v1326 = vpop.permute.xlu0 %1325
        %1327 = vrot.lane.b32.xlu0 %v1001, 127
        %v1328 = vpop.permute.xlu0 %1327
        %1329 = vrot.lane.b32.xlu0 %v1000, 127
        %v1330 = vpop.permute.xlu0 %1329
        %1331 = vrot.lane.b32.xlu0 %v1004, 127
        %v1332 = vpop.permute.xlu0 %1331
        %1333 = vrot.lane.b32.xlu0 %v1006, 127
        %v1334 = vpop.permute.xlu0 %1333
        %1335 = vrot.lane.b32.xlu0 %v1005, 127
        %v1336 = vpop.permute.xlu0 %1335
        %1337 = vrot.lane.b32.xlu0 %v1009, 127
        %v1338 = vpop.permute.xlu0 %1337
        %1339 = vrot.lane.b32.xlu0 %v1011, 127
        %v1340 = vpop.permute.xlu0 %1339
        %1341 = vrot.lane.b32.xlu0 %v1010, 127
        %v1342 = vpop.permute.xlu0 %1341
        %1343 = vrot.lane.b32.xlu0 %v1014, 127
        %v1344 = vpop.permute.xlu0 %1343
        %1345 = vrot.lane.b32.xlu0 %v1016, 127
        %v1346 = vpop.permute.xlu0 %1345
        %1347 = vrot.lane.b32.xlu0 %v1015, 127
        %v1348 = vpop.permute.xlu0 %1347
        %1349 = vrot.lane.b32.xlu0 %v1019, 127
        %v1350 = vpop.permute.xlu0 %1349
        %1351 = vrot.lane.b32.xlu0 %v1021, 127
        %v1352 = vpop.permute.xlu0 %1351
        %1353 = vrot.lane.b32.xlu0 %v1020, 127
        %v1354 = vpop.permute.xlu0 %1353
        %1355 = vrot.lane.b32.xlu0 %v1024, 127
        %v1356 = vpop.permute.xlu0 %1355
        %1357 = vrot.lane.b32.xlu0 %v1026, 127
        %v1358 = vpop.permute.xlu0 %1357
        %1359 = vrot.lane.b32.xlu0 %v1025, 127
        %v1360 = vpop.permute.xlu0 %1359
        %1361 = vrot.lane.b32.xlu0 %v1029, 127
        %v1362 = vpop.permute.xlu0 %1361
        %1363 = vrot.lane.b32.xlu0 %v1031, 127
        %v1364 = vpop.permute.xlu0 %1363
        %1365 = vrot.lane.b32.xlu0 %v1030, 127
        %v1366 = vpop.permute.xlu0 %1365
        %1367 = vrot.lane.b32.xlu0 %v1034, 127
        %v1368 = vpop.permute.xlu0 %1367
        %1369 = vrot.lane.b32.xlu0 %v1036, 127
        %v1370 = vpop.permute.xlu0 %1369
        %1371 = vrot.lane.b32.xlu0 %v1035, 127
        %v1372 = vpop.permute.xlu0 %1371
        %1373 = vrot.lane.b32.xlu0 %v1039, 127
        %v1374 = vpop.permute.xlu0 %1373
        %1375 = vrot.lane.b32.xlu0 %v1041, 127
        %v1376 = vpop.permute.xlu0 %1375
        %1377 = vrot.lane.b32.xlu0 %v1040, 127
        %v1378 = vpop.permute.xlu0 %1377
        %1379 = vrot.lane.b32.xlu0 %v1044, 127
        %v1380 = vpop.permute.xlu0 %1379
        %1381 = vrot.lane.b32.xlu0 %v1046, 127
        %v1382 = vpop.permute.xlu0 %1381
        %1383 = vrot.lane.b32.xlu0 %v1045, 127
        %v1384 = vpop.permute.xlu0 %1383
        %1385 = vrot.lane.b32.xlu0 %v1049, 127
        %v1386 = vpop.permute.xlu0 %1385
        %1387 = vrot.lane.b32.xlu0 %v1051, 127
        %v1388 = vpop.permute.xlu0 %1387
        %1389 = vrot.lane.b32.xlu0 %v1050, 127
        %v1390 = vpop.permute.xlu0 %1389
        %1391 = vrot.lane.b32.xlu0 %v1054, 127
        %v1392 = vpop.permute.xlu0 %1391
        %1393 = vrot.lane.b32.xlu0 %v1056, 127
        %v1394 = vpop.permute.xlu0 %1393
        %1395 = vrot.lane.b32.xlu0 %v1055, 127
        %v1396 = vpop.permute.xlu0 %1395
        %1397 = vrot.lane.b32.xlu0 %v1059, 127
        %v1398 = vpop.permute.xlu0 %1397
        %1399 = vrot.lane.b32.xlu0 %v1061, 127
        %v1400 = vpop.permute.xlu0 %1399
        %1401 = vrot.lane.b32.xlu0 %v1060, 127
        %v1402 = vpop.permute.xlu0 %1401
        %1403 = vrot.lane.b32.xlu0 %v1064, 127
        %v1404 = vpop.permute.xlu0 %1403
        %1405 = vrot.lane.b32.xlu0 %v1066, 127
        %v1406 = vpop.permute.xlu0 %1405
        %1407 = vrot.lane.b32.xlu0 %v1065, 127
        %v1408 = vpop.permute.xlu0 %1407
        %1409 = vrot.lane.b32.xlu0 %v1069, 127
        %v1410 = vpop.permute.xlu0 %1409
        %1411 = vrot.lane.b32.xlu0 %v1071, 127
        %v1412 = vpop.permute.xlu0 %1411
        %1413 = vrot.lane.b32.xlu0 %v1070, 127
        %v1414 = vpop.permute.xlu0 %1413
        %1415 = vrot.lane.b32.xlu0 %v1074, 127
        %v1416 = vpop.permute.xlu0 %1415
        %1417 = vrot.lane.b32.xlu0 %v1076, 127
        %v1418 = vpop.permute.xlu0 %1417
        %1419 = vrot.lane.b32.xlu0 %v1075, 127
        %v1420 = vpop.permute.xlu0 %1419
        %1421 = vrot.lane.b32.xlu0 %v1079, 127
        %v1422 = vpop.permute.xlu0 %1421
        %1423 = vrot.lane.b32.xlu0 %v1081, 127
        %v1424 = vpop.permute.xlu0 %1423
        %1425 = vrot.lane.b32.xlu0 %v1080, 127
        %v1426 = vpop.permute.xlu0 %1425
        %1427 = vrot.lane.b32.xlu0 %v1084, 127
        %v1428 = vpop.permute.xlu0 %1427
        %1429 = vrot.lane.b32.xlu0 %v1086, 127
        %v1430 = vpop.permute.xlu0 %1429
        %1431 = vrot.lane.b32.xlu0 %v1085, 127
        %v1432 = vpop.permute.xlu0 %1431
        %1433 = vrot.lane.b32.xlu0 %v1089, 127
        %v1434 = vpop.permute.xlu0 %1433
        %1435 = vrot.lane.b32.xlu0 %v1091, 127
        %v1436 = vpop.permute.xlu0 %1435
        %1437 = vrot.lane.b32.xlu0 %v1090, 127
        %v1438 = vpop.permute.xlu0 %1437
        %1439 = vrot.lane.b32.xlu0 %v1094, 127
        %v1440 = vpop.permute.xlu0 %1439
        %1441 = vrot.lane.b32.xlu0 %v1096, 127
        %v1442 = vpop.permute.xlu0 %1441
        %1443 = vrot.lane.b32.xlu0 %v1095, 127
        %v1444 = vpop.permute.xlu0 %1443
        %1445 = vrot.lane.b32.xlu0 %v1099, 127
        %v1446 = vpop.permute.xlu0 %1445
        %1447 = vrot.lane.b32.xlu0 %v1101, 127
        %v1448 = vpop.permute.xlu0 %1447
        %1449 = vrot.lane.b32.xlu0 %v1100, 127
        %v1450 = vpop.permute.xlu0 %1449
        %1451 = vrot.lane.b32.xlu0 %v1104, 127
        %v1452 = vpop.permute.xlu0 %1451
        %1453 = vrot.lane.b32.xlu0 %v1106, 127
        %v1454 = vpop.permute.xlu0 %1453
        %1455 = vrot.lane.b32.xlu0 %v1105, 127
        %v1456 = vpop.permute.xlu0 %1455
        %1457 = vrot.lane.b32.xlu0 %v1109, 127
        %v1458 = vpop.permute.xlu0 %1457
        %1459 = vrot.lane.b32.xlu0 %v1111, 127
        %v1460 = vpop.permute.xlu0 %1459
        %1461 = vrot.lane.b32.xlu0 %v1110, 127
        %v1462 = vpop.permute.xlu0 %1461
        %1463 = vrot.lane.b32.xlu0 %v1114, 127
        %v1464 = vpop.permute.xlu0 %1463
        %1465 = vrot.lane.b32.xlu0 %v1116, 127
        %v1466 = vpop.permute.xlu0 %1465
        %1467 = vrot.lane.b32.xlu0 %v1115, 127
        %v1468 = vpop.permute.xlu0 %1467
        %1469 = vrot.lane.b32.xlu0 %v1119, 127
        %v1470 = vpop.permute.xlu0 %1469
        %1471 = vrot.lane.b32.xlu0 %v1121, 127
        %v1472 = vpop.permute.xlu0 %1471
        %1473 = vrot.lane.b32.xlu0 %v1120, 127
        %v1474 = vpop.permute.xlu0 %1473
        %1475 = vrot.lane.b32.xlu0 %v1124, 127
        %v1476 = vpop.permute.xlu0 %1475
        %1477 = vrot.lane.b32.xlu0 %v1126, 127
        %v1478 = vpop.permute.xlu0 %1477
        %1479 = vrot.lane.b32.xlu0 %v1125, 127
        %v1480 = vpop.permute.xlu0 %1479
        %1481 = vrot.lane.b32.xlu0 %v1129, 127
        %v1482 = vpop.permute.xlu0 %1481
        %1483 = vrot.lane.b32.xlu0 %v1131, 127
        %v1484 = vpop.permute.xlu0 %1483
        %1485 = vrot.lane.b32.xlu0 %v1130, 127
        %v1486 = vpop.permute.xlu0 %1485
        %1487 = vrot.lane.b32.xlu0 %v1134, 127
        %v1488 = vpop.permute.xlu0 %1487
        %1489 = vrot.lane.b32.xlu0 %v1136, 127
        %v1490 = vpop.permute.xlu0 %1489
        %1491 = vrot.lane.b32.xlu0 %v1135, 127
        %v1492 = vpop.permute.xlu0 %1491
        %1493 = vrot.lane.b32.xlu0 %v1139, 127
        %v1494 = vpop.permute.xlu0 %1493
        %1495 = vrot.lane.b32.xlu0 %v1141, 127
        %v1496 = vpop.permute.xlu0 %1495
        %1497 = vrot.lane.b32.xlu0 %v1140, 127
        %v1498 = vpop.permute.xlu0 %1497
        %1499 = vrot.lane.b32.xlu0 %v1144, 127
        %v1500 = vpop.permute.xlu0 %1499
        %1501 = vrot.lane.b32.xlu0 %v1146, 127
        %v1502 = vpop.permute.xlu0 %1501
        %1503 = vrot.lane.b32.xlu0 %v1145, 127
        %v1504 = vpop.permute.xlu0 %1503
        %1505 = vrot.lane.b32.xlu0 %v1149, 127
        %v1506 = vpop.permute.xlu0 %1505
        %1507 = vrot.lane.b32.xlu0 %v1151, 127
        %v1508 = vpop.permute.xlu0 %1507
        %1509 = vrot.lane.b32.xlu0 %v1150, 127
        %v1510 = vpop.permute.xlu0 %1509
        %1511 = vrot.lane.b32.xlu0 %v1154, 127
        %v1512 = vpop.permute.xlu0 %1511
        %1513 = vrot.lane.b32.xlu0 %v1156, 127
        %v1514 = vpop.permute.xlu0 %1513
        %1515 = vrot.lane.b32.xlu0 %v1155, 127
        %v1516 = vpop.permute.xlu0 %1515
        %v1517 = vrot.slane %v830, 1
        %v1518 = vrot.slane %v832, 1
        %v1519 = vsel %vm279, %v1517, %v1518
        %v1520 = vrot.slane %v834, 1
        %v1521 = vsel %vm279, %v1518, %v1520
        %v1522 = vrot.slane %v836, 1
        %v1523 = vrot.slane %v838, 1
        %v1524 = vsel %vm279, %v1522, %v1523
        %v1525 = vrot.slane %v840, 1
        %v1526 = vsel %vm279, %v1523, %v1525
        %v1527 = vrot.slane %v842, 1
        %v1528 = vrot.slane %v844, 1
        %v1529 = vsel %vm279, %v1527, %v1528
        %v1530 = vrot.slane %v846, 1
        %v1531 = vsel %vm279, %v1528, %v1530
        %v1532 = vrot.slane %v848, 1
        %v1533 = vrot.slane %v850, 1
        %v1534 = vsel %vm279, %v1532, %v1533
        %v1535 = vrot.slane %v852, 1
        %v1536 = vsel %vm279, %v1533, %v1535
        %v1537 = vrot.slane %v854, 1
        %v1538 = vrot.slane %v856, 1
        %v1539 = vsel %vm279, %v1537, %v1538
        %v1540 = vrot.slane %v858, 1
        %v1541 = vsel %vm279, %v1538, %v1540
        %v1542 = vrot.slane %v860, 1
        %v1543 = vrot.slane %v862, 1
        %v1544 = vsel %vm279, %v1542, %v1543
        %v1545 = vrot.slane %v864, 1
        %v1546 = vsel %vm279, %v1543, %v1545
        %v1547 = vrot.slane %v866, 1
        %v1548 = vrot.slane %v868, 1
        %v1549 = vsel %vm279, %v1547, %v1548
        %v1550 = vrot.slane %v870, 1
        %v1551 = vsel %vm279, %v1548, %v1550
        %v1552 = vrot.slane %v872, 1
        %v1553 = vrot.slane %v874, 1
        %v1554 = vsel %vm279, %v1552, %v1553
        %v1555 = vrot.slane %v876, 1
        %v1556 = vsel %vm279, %v1553, %v1555
        %v1557 = vrot.slane %v817, 1
        %v1558 = vrot.slane %v819, 1
        %v1559 = vsel %vm279, %v1557, %v1558
        %v1560 = vrot.slane %v818, 1
        %v1561 = vsel %vm279, %v1558, %v1560
        %v1562 = vrot.slane %v820, 1
        %v1563 = vrot.slane %v822, 1
        %v1564 = vsel %vm279, %v1562, %v1563
        %v1565 = vrot.slane %v821, 1
        %v1566 = vsel %vm279, %v1563, %v1565
        %v1567 = vrot.slane %v823, 1
        %v1568 = vrot.slane %v825, 1
        %v1569 = vsel %vm279, %v1567, %v1568
        %v1570 = vrot.slane %v824, 1
        %v1571 = vsel %vm279, %v1568, %v1570
        %v1572 = vrot.slane %v826, 1
        %v1573 = vrot.slane %v828, 1
        %v1574 = vsel %vm279, %v1572, %v1573
        %v1575 = vrot.slane %v827, 1
        %v1576 = vsel %vm279, %v1573, %v1575
        %1577 = vrot.lane.b32.xlu0 %v282, 123
        %v1578 = vpop.permute.xlu0 %1577
        %1579 = vrot.lane.b32.xlu0 %v284, 123
        %v1580 = vpop.permute.xlu0 %1579
        %1581 = vrot.lane.b32.xlu0 %v283, 123
        %v1582 = vpop.permute.xlu0 %1581
        %1583 = vrot.lane.b32.xlu0 %v287, 123
        %v1584 = vpop.permute.xlu0 %1583
        %1585 = vrot.lane.b32.xlu0 %v289, 123
        %v1586 = vpop.permute.xlu0 %1585
        %1587 = vrot.lane.b32.xlu0 %v288, 123
        %v1588 = vpop.permute.xlu0 %1587
        %1589 = vrot.lane.b32.xlu0 %v292, 123
        %v1590 = vpop.permute.xlu0 %1589
        %1591 = vrot.lane.b32.xlu0 %v294, 123
        %v1592 = vpop.permute.xlu0 %1591
        %1593 = vrot.lane.b32.xlu0 %v293, 123
        %v1594 = vpop.permute.xlu0 %1593
        %1595 = vrot.lane.b32.xlu0 %v297, 123
        %v1596 = vpop.permute.xlu0 %1595
        %1597 = vrot.lane.b32.xlu0 %v299, 123
        %v1598 = vpop.permute.xlu0 %1597
        %1599 = vrot.lane.b32.xlu0 %v298, 123
        %v1600 = vpop.permute.xlu0 %1599
        %1601 = vrot.lane.b32.xlu0 %v1519, 123
        %v1602 = vpop.permute.xlu0 %1601
        %1603 = vrot.lane.b32.xlu0 %v1521, 123
        %v1604 = vpop.permute.xlu0 %1603
        %1605 = vrot.lane.b32.xlu0 %v1520, 123
        %v1606 = vpop.permute.xlu0 %1605
        %1607 = vrot.lane.b32.xlu0 %v1524, 123
        %v1608 = vpop.permute.xlu0 %1607
        %1609 = vrot.lane.b32.xlu0 %v1526, 123
        %v1610 = vpop.permute.xlu0 %1609
        %1611 = vrot.lane.b32.xlu0 %v1525, 123
        %v1612 = vpop.permute.xlu0 %1611
        %1613 = vrot.lane.b32.xlu0 %v1529, 123
        %v1614 = vpop.permute.xlu0 %1613
        %1615 = vrot.lane.b32.xlu0 %v1531, 123
        %v1616 = vpop.permute.xlu0 %1615
        %1617 = vrot.lane.b32.xlu0 %v1530, 123
        %v1618 = vpop.permute.xlu0 %1617
        %1619 = vrot.lane.b32.xlu0 %v1534, 123
        %v1620 = vpop.permute.xlu0 %1619
        %1621 = vrot.lane.b32.xlu0 %v1536, 123
        %v1622 = vpop.permute.xlu0 %1621
        %1623 = vrot.lane.b32.xlu0 %v1535, 123
        %v1624 = vpop.permute.xlu0 %1623
        %1625 = vrot.lane.b32.xlu0 %v1539, 123
        %v1626 = vpop.permute.xlu0 %1625
        %1627 = vrot.lane.b32.xlu0 %v1541, 123
        %v1628 = vpop.permute.xlu0 %1627
        %1629 = vrot.lane.b32.xlu0 %v1540, 123
        %v1630 = vpop.permute.xlu0 %1629
        %1631 = vrot.lane.b32.xlu0 %v1544, 123
        %v1632 = vpop.permute.xlu0 %1631
        %1633 = vrot.lane.b32.xlu0 %v1546, 123
        %v1634 = vpop.permute.xlu0 %1633
        %1635 = vrot.lane.b32.xlu0 %v1545, 123
        %v1636 = vpop.permute.xlu0 %1635
        %1637 = vrot.lane.b32.xlu0 %v1549, 123
        %v1638 = vpop.permute.xlu0 %1637
        %1639 = vrot.lane.b32.xlu0 %v1551, 123
        %v1640 = vpop.permute.xlu0 %1639
        %1641 = vrot.lane.b32.xlu0 %v1550, 123
        %v1642 = vpop.permute.xlu0 %1641
        %1643 = vrot.lane.b32.xlu0 %v1554, 123
        %v1644 = vpop.permute.xlu0 %1643
        %1645 = vrot.lane.b32.xlu0 %v1556, 123
        %v1646 = vpop.permute.xlu0 %1645
        %1647 = vrot.lane.b32.xlu0 %v1555, 123
        %v1648 = vpop.permute.xlu0 %1647
        %1649 = vrot.lane.b32.xlu0 %v1559, 123
        %v1650 = vpop.permute.xlu0 %1649
        %1651 = vrot.lane.b32.xlu0 %v1561, 123
        %v1652 = vpop.permute.xlu0 %1651
        %1653 = vrot.lane.b32.xlu0 %v1560, 123
        %v1654 = vpop.permute.xlu0 %1653
        %1655 = vrot.lane.b32.xlu0 %v1564, 123
        %v1656 = vpop.permute.xlu0 %1655
        %1657 = vrot.lane.b32.xlu0 %v1566, 123
        %v1658 = vpop.permute.xlu0 %1657
        %1659 = vrot.lane.b32.xlu0 %v1565, 123
        %v1660 = vpop.permute.xlu0 %1659
        %1661 = vrot.lane.b32.xlu0 %v1569, 123
        %v1662 = vpop.permute.xlu0 %1661
        %1663 = vrot.lane.b32.xlu0 %v1571, 123
        %v1664 = vpop.permute.xlu0 %1663
        %1665 = vrot.lane.b32.xlu0 %v1570, 123
        %v1666 = vpop.permute.xlu0 %1665
        %1667 = vrot.lane.b32.xlu0 %v1574, 123
        %v1668 = vpop.permute.xlu0 %1667
        %1669 = vrot.lane.b32.xlu0 %v1576, 123
        %v1670 = vpop.permute.xlu0 %1669
        %1671 = vrot.lane.b32.xlu0 %v1575, 123
        %v1672 = vpop.permute.xlu0 %1671
        %v1673 = vrot.slane %v232, 3
        %v1674 = vrot.slane %v234, 3
        %v1675 = vsel %vm558, %v1673, %v1674
        %v1676 = vrot.slane %v236, 3
        %v1677 = vsel %vm558, %v1674, %v1676
        %v1678 = vrot.slane %v238, 3
        %v1679 = vrot.slane %v240, 3
        %v1680 = vsel %vm558, %v1678, %v1679
        %v1681 = vrot.slane %v242, 3
        %v1682 = vsel %vm558, %v1679, %v1681
        %v1683 = vrot.slane %v244, 3
        %v1684 = vrot.slane %v246, 3
        %v1685 = vsel %vm558, %v1683, %v1684
        %v1686 = vrot.slane %v248, 3
        %v1687 = vsel %vm558, %v1684, %v1686
        %v1688 = vrot.slane %v250, 3
        %v1689 = vrot.slane %v252, 3
        %v1690 = vsel %vm558, %v1688, %v1689
        %v1691 = vrot.slane %v254, 3
        %v1692 = vsel %vm558, %v1689, %v1691
        %v1693 = vrot.slane %v301, 3
        %v1694 = vrot.slane %v303, 3
        %v1695 = vsel %vm558, %v1693, %v1694
        %v1696 = vrot.slane %v305, 3
        %v1697 = vsel %vm558, %v1694, %v1696
        %v1698 = vrot.slane %v307, 3
        %v1699 = vrot.slane %v309, 3
        %v1700 = vsel %vm558, %v1698, %v1699
        %v1701 = vrot.slane %v311, 3
        %v1702 = vsel %vm558, %v1699, %v1701
        %v1703 = vrot.slane %v313, 3
        %v1704 = vrot.slane %v315, 3
        %v1705 = vsel %vm558, %v1703, %v1704
        %v1706 = vrot.slane %v317, 3
        %v1707 = vsel %vm558, %v1704, %v1706
        %v1708 = vrot.slane %v319, 3
        %v1709 = vrot.slane %v321, 3
        %v1710 = vsel %vm558, %v1708, %v1709
        %v1711 = vrot.slane %v323, 3
        %v1712 = vsel %vm558, %v1709, %v1711
        %v1713 = vrot.slane %v325, 3
        %v1714 = vrot.slane %v327, 3
        %v1715 = vsel %vm558, %v1713, %v1714
        %v1716 = vrot.slane %v329, 3
        %v1717 = vsel %vm558, %v1714, %v1716
        %v1718 = vrot.slane %v331, 3
        %v1719 = vrot.slane %v333, 3
        %v1720 = vsel %vm558, %v1718, %v1719
        %v1721 = vrot.slane %v335, 3
        %v1722 = vsel %vm558, %v1719, %v1721
        %v1723 = vrot.slane %v337, 3
        %v1724 = vrot.slane %v339, 3
        %v1725 = vsel %vm558, %v1723, %v1724
        %v1726 = vrot.slane %v341, 3
        %v1727 = vsel %vm558, %v1724, %v1726
        %v1728 = vrot.slane %v343, 3
        %v1729 = vrot.slane %v345, 3
        %v1730 = vsel %vm558, %v1728, %v1729
        %v1731 = vrot.slane %v347, 3
        %v1732 = vsel %vm558, %v1729, %v1731
        %v1733 = vrot.slane %v353, 3
        %v1734 = vsel %vm558, %v1098, %v1733
        %v1735 = vrot.slane %v352, 3
        %v1736 = vsel %vm558, %v1733, %v1735
        %v1737 = vrot.slane %v358, 3
        %v1738 = vsel %vm558, %v1103, %v1737
        %v1739 = vrot.slane %v357, 3
        %v1740 = vsel %vm558, %v1737, %v1739
        %v1741 = vrot.slane %v363, 3
        %v1742 = vsel %vm558, %v1108, %v1741
        %v1743 = vrot.slane %v362, 3
        %v1744 = vsel %vm558, %v1741, %v1743
        %v1745 = vrot.slane %v368, 3
        %v1746 = vsel %vm558, %v1113, %v1745
        %v1747 = vrot.slane %v367, 3
        %v1748 = vsel %vm558, %v1745, %v1747
        %v1749 = vrot.slane %v370, 3
        %v1750 = vrot.slane %v372, 3
        %v1751 = vsel %vm558, %v1749, %v1750
        %v1752 = vrot.slane %v374, 3
        %v1753 = vsel %vm558, %v1750, %v1752
        %v1754 = vrot.slane %v376, 3
        %v1755 = vrot.slane %v378, 3
        %v1756 = vsel %vm558, %v1754, %v1755
        %v1757 = vrot.slane %v380, 3
        %v1758 = vsel %vm558, %v1755, %v1757
        %v1759 = vrot.slane %v382, 3
        %v1760 = vrot.slane %v384, 3
        %v1761 = vsel %vm558, %v1759, %v1760
        %v1762 = vrot.slane %v386, 3
        %v1763 = vsel %vm558, %v1760, %v1762
        %v1764 = vrot.slane %v388, 3
        %v1765 = vrot.slane %v390, 3
        %v1766 = vsel %vm558, %v1764, %v1765
        %v1767 = vrot.slane %v392, 3
        %v1768 = vsel %vm558, %v1765, %v1767
        %v1769 = vrot.slane %v394, 3
        %v1770 = vrot.slane %v396, 3
        %v1771 = vsel %vm558, %v1769, %v1770
        %v1772 = vrot.slane %v398, 3
        %v1773 = vsel %vm558, %v1770, %v1772
        %v1774 = vrot.slane %v400, 3
        %v1775 = vrot.slane %v402, 3
        %v1776 = vsel %vm558, %v1774, %v1775
        %v1777 = vrot.slane %v404, 3
        %v1778 = vsel %vm558, %v1775, %v1777
        %v1779 = vrot.slane %v406, 3
        %v1780 = vrot.slane %v408, 3
        %v1781 = vsel %vm558, %v1779, %v1780
        %v1782 = vrot.slane %v410, 3
        %v1783 = vsel %vm558, %v1780, %v1782
        %v1784 = vrot.slane %v412, 3
        %v1785 = vrot.slane %v414, 3
        %v1786 = vsel %vm558, %v1784, %v1785
        %v1787 = vrot.slane %v416, 3
        %v1788 = vsel %vm558, %v1785, %v1787
        %v1789 = vrot.slane %v439, 3
        %v1790 = vrot.slane %v441, 3
        %v1791 = vsel %vm558, %v1789, %v1790
        %v1792 = vrot.slane %v443, 3
        %v1793 = vsel %vm558, %v1790, %v1792
        %v1794 = vrot.slane %v445, 3
        %v1795 = vrot.slane %v447, 3
        %v1796 = vsel %vm558, %v1794, %v1795
        %v1797 = vrot.slane %v449, 3
        %v1798 = vsel %vm558, %v1795, %v1797
        %v1799 = vrot.slane %v451, 3
        %v1800 = vrot.slane %v453, 3
        %v1801 = vsel %vm558, %v1799, %v1800
        %v1802 = vrot.slane %v455, 3
        %v1803 = vsel %vm558, %v1800, %v1802
        %v1804 = vrot.slane %v457, 3
        %v1805 = vrot.slane %v459, 3
        %v1806 = vsel %vm558, %v1804, %v1805
        %v1807 = vrot.slane %v461, 3
        %v1808 = vsel %vm558, %v1805, %v1807
        %v1809 = vrot.slane %v463, 3
        %v1810 = vrot.slane %v465, 3
        %v1811 = vsel %vm558, %v1809, %v1810
        %v1812 = vrot.slane %v467, 3
        %v1813 = vsel %vm558, %v1810, %v1812
        %v1814 = vrot.slane %v469, 3
        %v1815 = vrot.slane %v471, 3
        %v1816 = vsel %vm558, %v1814, %v1815
        %v1817 = vrot.slane %v473, 3
        %v1818 = vsel %vm558, %v1815, %v1817
        %v1819 = vrot.slane %v475, 3
        %v1820 = vrot.slane %v477, 3
        %v1821 = vsel %vm558, %v1819, %v1820
        %v1822 = vrot.slane %v479, 3
        %v1823 = vsel %vm558, %v1820, %v1822
        %v1824 = vrot.slane %v481, 3
        %v1825 = vrot.slane %v483, 3
        %v1826 = vsel %vm558, %v1824, %v1825
        %v1827 = vrot.slane %v485, 3
        %v1828 = vsel %vm558, %v1825, %v1827
        %v1829 = vrot.slane %v487, 3
        %v1830 = vrot.slane %v489, 3
        %v1831 = vsel %vm558, %v1829, %v1830
        %v1832 = vrot.slane %v491, 3
        %v1833 = vsel %vm558, %v1830, %v1832
        %v1834 = vrot.slane %v493, 3
        %v1835 = vrot.slane %v495, 3
        %v1836 = vsel %vm558, %v1834, %v1835
        %v1837 = vrot.slane %v497, 3
        %v1838 = vsel %vm558, %v1835, %v1837
        %v1839 = vrot.slane %v499, 3
        %v1840 = vrot.slane %v501, 3
        %v1841 = vsel %vm558, %v1839, %v1840
        %v1842 = vrot.slane %v503, 3
        %v1843 = vsel %vm558, %v1840, %v1842
        %v1844 = vrot.slane %v505, 3
        %v1845 = vrot.slane %v507, 3
        %v1846 = vsel %vm558, %v1844, %v1845
        %v1847 = vrot.slane %v509, 3
        %v1848 = vsel %vm558, %v1845, %v1847
        %v1849 = vrot.slane %v511, 3
        %v1850 = vrot.slane %v513, 3
        %v1851 = vsel %vm558, %v1849, %v1850
        %v1852 = vrot.slane %v515, 3
        %v1853 = vsel %vm558, %v1850, %v1852
        %v1854 = vrot.slane %v517, 3
        %v1855 = vrot.slane %v519, 3
        %v1856 = vsel %vm558, %v1854, %v1855
        %v1857 = vrot.slane %v521, 3
        %v1858 = vsel %vm558, %v1855, %v1857
        %v1859 = vrot.slane %v523, 3
        %v1860 = vrot.slane %v525, 3
        %v1861 = vsel %vm558, %v1859, %v1860
        %v1862 = vrot.slane %v527, 3
        %v1863 = vsel %vm558, %v1860, %v1862
        %v1864 = vrot.slane %v529, 3
        %v1865 = vrot.slane %v531, 3
        %v1866 = vsel %vm558, %v1864, %v1865
        %v1867 = vrot.slane %v533, 3
        %v1868 = vsel %vm558, %v1865, %v1867
        %v1869 = vrot.slane %v580, 3
        %v1870 = vrot.slane %v582, 3
        %v1871 = vsel %vm558, %v1869, %v1870
        %v1872 = vrot.slane %v584, 3
        %v1873 = vsel %vm558, %v1870, %v1872
        %v1874 = vrot.slane %v586, 3
        %v1875 = vrot.slane %v588, 3
        %v1876 = vsel %vm558, %v1874, %v1875
        %v1877 = vrot.slane %v590, 3
        %v1878 = vsel %vm558, %v1875, %v1877
        %v1879 = vrot.slane %v592, 3
        %v1880 = vrot.slane %v594, 3
        %v1881 = vsel %vm558, %v1879, %v1880
        %v1882 = vrot.slane %v596, 3
        %v1883 = vsel %vm558, %v1880, %v1882
        %v1884 = vrot.slane %v598, 3
        %v1885 = vrot.slane %v600, 3
        %v1886 = vsel %vm558, %v1884, %v1885
        %v1887 = vrot.slane %v602, 3
        %v1888 = vsel %vm558, %v1885, %v1887
        %v1889 = vrot.slane %v1158, 3
        %v1890 = vrot.slane %v1160, 3
        %v1891 = vsel %vm558, %v1889, %v1890
        %v1892 = vrot.slane %v1162, 3
        %v1893 = vsel %vm558, %v1890, %v1892
        %v1894 = vrot.slane %v1164, 3
        %v1895 = vrot.slane %v1166, 3
        %v1896 = vsel %vm558, %v1894, %v1895
        %v1897 = vrot.slane %v1168, 3
        %v1898 = vsel %vm558, %v1895, %v1897
        %v1899 = vrot.slane %v1170, 3
        %v1900 = vrot.slane %v1172, 3
        %v1901 = vsel %vm558, %v1899, %v1900
        %v1902 = vrot.slane %v1174, 3
        %v1903 = vsel %vm558, %v1900, %v1902
        %v1904 = vrot.slane %v1176, 3
        %v1905 = vrot.slane %v1178, 3
        %v1906 = vsel %vm558, %v1904, %v1905
        %v1907 = vrot.slane %v1180, 3
        %v1908 = vsel %vm558, %v1905, %v1907
        %v1909 = vrot.slane %v1182, 3
        %v1910 = vrot.slane %v1184, 3
        %v1911 = vsel %vm558, %v1909, %v1910
        %v1912 = vrot.slane %v1186, 3
        %v1913 = vsel %vm558, %v1910, %v1912
        %v1914 = vrot.slane %v1188, 3
        %v1915 = vrot.slane %v1190, 3
        %v1916 = vsel %vm558, %v1914, %v1915
        %v1917 = vrot.slane %v1192, 3
        %v1918 = vsel %vm558, %v1915, %v1917
        %v1919 = vrot.slane %v1194, 3
        %v1920 = vrot.slane %v1196, 3
        %v1921 = vsel %vm558, %v1919, %v1920
        %v1922 = vrot.slane %v1198, 3
        %v1923 = vsel %vm558, %v1920, %v1922
        %v1924 = vrot.slane %v1200, 3
        %v1925 = vrot.slane %v1202, 3
        %v1926 = vsel %vm558, %v1924, %v1925
        %v1927 = vrot.slane %v1204, 3
        %v1928 = vsel %vm558, %v1925, %v1927
        %v1929 = vrot.slane %v1206, 3
        %v1930 = vrot.slane %v1208, 3
        %v1931 = vsel %vm558, %v1929, %v1930
        %v1932 = vrot.slane %v1210, 3
        %v1933 = vsel %vm558, %v1930, %v1932
        %v1934 = vrot.slane %v1212, 3
        %v1935 = vrot.slane %v1214, 3
        %v1936 = vsel %vm558, %v1934, %v1935
        %v1937 = vrot.slane %v1216, 3
        %v1938 = vsel %vm558, %v1935, %v1937
        %v1939 = vrot.slane %v1218, 3
        %v1940 = vrot.slane %v1220, 3
        %v1941 = vsel %vm558, %v1939, %v1940
        %v1942 = vrot.slane %v1222, 3
        %v1943 = vsel %vm558, %v1940, %v1942
        %v1944 = vrot.slane %v1224, 3
        %v1945 = vrot.slane %v1226, 3
        %v1946 = vsel %vm558, %v1944, %v1945
        %v1947 = vrot.slane %v1228, 3
        %v1948 = vsel %vm558, %v1945, %v1947
        %v1949 = vrot.slane %v1230, 3
        %v1950 = vrot.slane %v1232, 3
        %v1951 = vsel %vm558, %v1949, %v1950
        %v1952 = vrot.slane %v1234, 3
        %v1953 = vsel %vm558, %v1950, %v1952
        %v1954 = vrot.slane %v1236, 3
        %v1955 = vrot.slane %v1238, 3
        %v1956 = vsel %vm558, %v1954, %v1955
        %v1957 = vrot.slane %v1240, 3
        %v1958 = vsel %vm558, %v1955, %v1957
        %v1959 = vrot.slane %v1242, 3
        %v1960 = vrot.slane %v1244, 3
        %v1961 = vsel %vm558, %v1959, %v1960
        %v1962 = vrot.slane %v1246, 3
        %v1963 = vsel %vm558, %v1960, %v1962
        %v1964 = vrot.slane %v1248, 3
        %v1965 = vrot.slane %v1250, 3
        %v1966 = vsel %vm558, %v1964, %v1965
        %v1967 = vrot.slane %v1252, 3
        %v1968 = vsel %vm558, %v1965, %v1967
        %v1969 = vrot.slane %v1254, 3
        %v1970 = vrot.slane %v1256, 3
        %v1971 = vsel %vm558, %v1969, %v1970
        %v1972 = vrot.slane %v1258, 3
        %v1973 = vsel %vm558, %v1970, %v1972
        %v1974 = vrot.slane %v1260, 3
        %v1975 = vrot.slane %v1262, 3
        %v1976 = vsel %vm558, %v1974, %v1975
        %v1977 = vrot.slane %v1264, 3
        %v1978 = vsel %vm558, %v1975, %v1977
        %v1979 = vrot.slane %v1266, 3
        %v1980 = vrot.slane %v1268, 3
        %v1981 = vsel %vm558, %v1979, %v1980
        %v1982 = vrot.slane %v1270, 3
        %v1983 = vsel %vm558, %v1980, %v1982
        %v1984 = vrot.slane %v1272, 3
        %v1985 = vrot.slane %v1274, 3
        %v1986 = vsel %vm558, %v1984, %v1985
        %v1987 = vrot.slane %v1276, 3
        %v1988 = vsel %vm558, %v1985, %v1987
        %v1989 = vrot.slane %v1278, 3
        %v1990 = vrot.slane %v1280, 3
        %v1991 = vsel %vm558, %v1989, %v1990
        %v1992 = vrot.slane %v1282, 3
        %v1993 = vsel %vm558, %v1990, %v1992
        %v1994 = vrot.slane %v1284, 3
        %v1995 = vrot.slane %v1286, 3
        %v1996 = vsel %vm558, %v1994, %v1995
        %v1997 = vrot.slane %v1288, 3
        %v1998 = vsel %vm558, %v1995, %v1997
        %v1999 = vrot.slane %v1290, 3
        %v2000 = vrot.slane %v1292, 3
        %v2001 = vsel %vm558, %v1999, %v2000
        %v2002 = vrot.slane %v1294, 3
        %v2003 = vsel %vm558, %v2000, %v2002
        %v2004 = vrot.slane %v1296, 3
        %v2005 = vrot.slane %v1298, 3
        %v2006 = vsel %vm558, %v2004, %v2005
        %v2007 = vrot.slane %v1300, 3
        %v2008 = vsel %vm558, %v2005, %v2007
        %v2009 = vrot.slane %v1302, 3
        %v2010 = vrot.slane %v1304, 3
        %v2011 = vsel %vm558, %v2009, %v2010
        %v2012 = vrot.slane %v1306, 3
        %v2013 = vsel %vm558, %v2010, %v2012
        %v2014 = vrot.slane %v1308, 3
        %v2015 = vrot.slane %v1310, 3
        %v2016 = vsel %vm558, %v2014, %v2015
        %v2017 = vrot.slane %v1312, 3
        %v2018 = vsel %vm558, %v2015, %v2017
        %v2019 = vrot.slane %v1314, 3
        %v2020 = vrot.slane %v1316, 3
        %v2021 = vsel %vm558, %v2019, %v2020
        %v2022 = vrot.slane %v1318, 3
        %v2023 = vsel %vm558, %v2020, %v2022
        %v2024 = vrot.slane %v1320, 3
        %v2025 = vrot.slane %v1322, 3
        %v2026 = vsel %vm558, %v2024, %v2025
        %v2027 = vrot.slane %v1324, 3
        %v2028 = vsel %vm558, %v2025, %v2027
        %v2029 = vrot.slane %v1326, 3
        %v2030 = vrot.slane %v1328, 3
        %v2031 = vsel %vm558, %v2029, %v2030
        %v2032 = vrot.slane %v1330, 3
        %v2033 = vsel %vm558, %v2030, %v2032
        %v2034 = vrot.slane %v1332, 3
        %v2035 = vrot.slane %v1334, 3
        %v2036 = vsel %vm558, %v2034, %v2035
        %v2037 = vrot.slane %v1336, 3
        %v2038 = vsel %vm558, %v2035, %v2037
        %v2039 = vrot.slane %v1338, 3
        %v2040 = vrot.slane %v1340, 3
        %v2041 = vsel %vm558, %v2039, %v2040
        %v2042 = vrot.slane %v1342, 3
        %v2043 = vsel %vm558, %v2040, %v2042
        %v2044 = vrot.slane %v1344, 3
        %v2045 = vrot.slane %v1346, 3
        %v2046 = vsel %vm558, %v2044, %v2045
        %v2047 = vrot.slane %v1348, 3
        %v2048 = vsel %vm558, %v2045, %v2047
        %v2049 = vrot.slane %v1350, 3
        %v2050 = vrot.slane %v1352, 3
        %v2051 = vsel %vm558, %v2049, %v2050
        %v2052 = vrot.slane %v1354, 3
        %v2053 = vsel %vm558, %v2050, %v2052
        %v2054 = vrot.slane %v1356, 3
        %v2055 = vrot.slane %v1358, 3
        %v2056 = vsel %vm558, %v2054, %v2055
        %v2057 = vrot.slane %v1360, 3
        %v2058 = vsel %vm558, %v2055, %v2057
        %v2059 = vrot.slane %v1362, 3
        %v2060 = vrot.slane %v1364, 3
        %v2061 = vsel %vm558, %v2059, %v2060
        %v2062 = vrot.slane %v1366, 3
        %v2063 = vsel %vm558, %v2060, %v2062
        %v2064 = vrot.slane %v1368, 3
        %v2065 = vrot.slane %v1370, 3
        %v2066 = vsel %vm558, %v2064, %v2065
        %v2067 = vrot.slane %v1372, 3
        %v2068 = vsel %vm558, %v2065, %v2067
        %v2069 = vrot.slane %v1374, 3
        %v2070 = vrot.slane %v1376, 3
        %v2071 = vsel %vm558, %v2069, %v2070
        %v2072 = vrot.slane %v1378, 3
        %v2073 = vsel %vm558, %v2070, %v2072
        %v2074 = vrot.slane %v1380, 3
        %v2075 = vrot.slane %v1382, 3
        %v2076 = vsel %vm558, %v2074, %v2075
        %v2077 = vrot.slane %v1384, 3
        %v2078 = vsel %vm558, %v2075, %v2077
        %v2079 = vrot.slane %v1386, 3
        %v2080 = vrot.slane %v1388, 3
        %v2081 = vsel %vm558, %v2079, %v2080
        %v2082 = vrot.slane %v1390, 3
        %v2083 = vsel %vm558, %v2080, %v2082
        %v2084 = vrot.slane %v1392, 3
        %v2085 = vrot.slane %v1394, 3
        %v2086 = vsel %vm558, %v2084, %v2085
        %v2087 = vrot.slane %v1396, 3
        %v2088 = vsel %vm558, %v2085, %v2087
        %v2089 = vrot.slane %v1398, 3
        %v2090 = vrot.slane %v1400, 3
        %v2091 = vsel %vm558, %v2089, %v2090
        %v2092 = vrot.slane %v1402, 3
        %v2093 = vsel %vm558, %v2090, %v2092
        %v2094 = vrot.slane %v1404, 3
        %v2095 = vrot.slane %v1406, 3
        %v2096 = vsel %vm558, %v2094, %v2095
        %v2097 = vrot.slane %v1408, 3
        %v2098 = vsel %vm558, %v2095, %v2097
        %v2099 = vrot.slane %v1410, 3
        %v2100 = vrot.slane %v1412, 3
        %v2101 = vsel %vm558, %v2099, %v2100
        %v2102 = vrot.slane %v1414, 3
        %v2103 = vsel %vm558, %v2100, %v2102
        %v2104 = vrot.slane %v1416, 3
        %v2105 = vrot.slane %v1418, 3
        %v2106 = vsel %vm558, %v2104, %v2105
        %v2107 = vrot.slane %v1420, 3
        %v2108 = vsel %vm558, %v2105, %v2107
        %v2109 = vrot.slane %v1422, 3
        %v2110 = vrot.slane %v1424, 3
        %v2111 = vsel %vm558, %v2109, %v2110
        %v2112 = vrot.slane %v1426, 3
        %v2113 = vsel %vm558, %v2110, %v2112
        %v2114 = vrot.slane %v1428, 3
        %v2115 = vrot.slane %v1430, 3
        %v2116 = vsel %vm558, %v2114, %v2115
        %v2117 = vrot.slane %v1432, 3
        %v2118 = vsel %vm558, %v2115, %v2117
        %v2119 = vrot.slane %v1434, 3
        %v2120 = vrot.slane %v1436, 3
        %v2121 = vsel %vm558, %v2119, %v2120
        %v2122 = vrot.slane %v1438, 3
        %v2123 = vsel %vm558, %v2120, %v2122
        %v2124 = vrot.slane %v1440, 3
        %v2125 = vrot.slane %v1442, 3
        %v2126 = vsel %vm558, %v2124, %v2125
        %v2127 = vrot.slane %v1444, 3
        %v2128 = vsel %vm558, %v2125, %v2127
        %v2129 = vrot.slane %v1446, 3
        %v2130 = vrot.slane %v1448, 3
        %v2131 = vsel %vm558, %v2129, %v2130
        %v2132 = vrot.slane %v1450, 3
        %v2133 = vsel %vm558, %v2130, %v2132
        %v2134 = vrot.slane %v1452, 3
        %v2135 = vrot.slane %v1454, 3
        %v2136 = vsel %vm558, %v2134, %v2135
        %v2137 = vrot.slane %v1456, 3
        %v2138 = vsel %vm558, %v2135, %v2137
        %v2139 = vrot.slane %v1458, 3
        %v2140 = vrot.slane %v1460, 3
        %v2141 = vsel %vm558, %v2139, %v2140
        %v2142 = vrot.slane %v1462, 3
        %v2143 = vsel %vm558, %v2140, %v2142
        %v2144 = vrot.slane %v1464, 3
        %v2145 = vrot.slane %v1466, 3
        %v2146 = vsel %vm558, %v2144, %v2145
        %v2147 = vrot.slane %v1468, 3
        %v2148 = vsel %vm558, %v2145, %v2147
        %v2149 = vrot.slane %v1470, 3
        %v2150 = vrot.slane %v1472, 3
        %v2151 = vsel %vm558, %v2149, %v2150
        %v2152 = vrot.slane %v1474, 3
        %v2153 = vsel %vm558, %v2150, %v2152
        %v2154 = vrot.slane %v1476, 3
        %v2155 = vrot.slane %v1478, 3
        %v2156 = vsel %vm558, %v2154, %v2155
        %v2157 = vrot.slane %v1480, 3
        %v2158 = vsel %vm558, %v2155, %v2157
        %v2159 = vrot.slane %v1482, 3
        %v2160 = vrot.slane %v1484, 3
        %v2161 = vsel %vm558, %v2159, %v2160
        %v2162 = vrot.slane %v1486, 3
        %v2163 = vsel %vm558, %v2160, %v2162
        %v2164 = vrot.slane %v1488, 3
        %v2165 = vrot.slane %v1490, 3
        %v2166 = vsel %vm558, %v2164, %v2165
        %v2167 = vrot.slane %v1492, 3
        %v2168 = vsel %vm558, %v2165, %v2167
        %v2169 = vrot.slane %v1494, 3
        %v2170 = vrot.slane %v1496, 3
        %v2171 = vsel %vm558, %v2169, %v2170
        %v2172 = vrot.slane %v1498, 3
        %v2173 = vsel %vm558, %v2170, %v2172
        %v2174 = vrot.slane %v1500, 3
        %v2175 = vrot.slane %v1502, 3
        %v2176 = vsel %vm558, %v2174, %v2175
        %v2177 = vrot.slane %v1504, 3
        %v2178 = vsel %vm558, %v2175, %v2177
        %v2179 = vrot.slane %v1506, 3
        %v2180 = vrot.slane %v1508, 3
        %v2181 = vsel %vm558, %v2179, %v2180
        %v2182 = vrot.slane %v1510, 3
        %v2183 = vsel %vm558, %v2180, %v2182
        %v2184 = vrot.slane %v1512, 3
        %v2185 = vrot.slane %v1514, 3
        %v2186 = vsel %vm558, %v2184, %v2185
        %v2187 = vrot.slane %v1516, 3
        %v2188 = vsel %vm558, %v2185, %v2187
        %v2189 = vrot.slane %v1578, 3
        %v2190 = vrot.slane %v1580, 3
        %v2191 = vsel %vm558, %v2189, %v2190
        %v2192 = vrot.slane %v1582, 3
        %v2193 = vsel %vm558, %v2190, %v2192
        %v2194 = vrot.slane %v1584, 3
        %v2195 = vrot.slane %v1586, 3
        %v2196 = vsel %vm558, %v2194, %v2195
        %v2197 = vrot.slane %v1588, 3
        %v2198 = vsel %vm558, %v2195, %v2197
        %v2199 = vrot.slane %v1590, 3
        %v2200 = vrot.slane %v1592, 3
        %v2201 = vsel %vm558, %v2199, %v2200
        %v2202 = vrot.slane %v1594, 3
        %v2203 = vsel %vm558, %v2200, %v2202
        %v2204 = vrot.slane %v1596, 3
        %v2205 = vrot.slane %v1598, 3
        %v2206 = vsel %vm558, %v2204, %v2205
        %v2207 = vrot.slane %v1600, 3
        %v2208 = vsel %vm558, %v2205, %v2207
        %v2209 = vrot.slane %v1602, 3
        %v2210 = vrot.slane %v1604, 3
        %v2211 = vsel %vm558, %v2209, %v2210
        %v2212 = vrot.slane %v1606, 3
        %v2213 = vsel %vm558, %v2210, %v2212
        %v2214 = vrot.slane %v1608, 3
        %v2215 = vrot.slane %v1610, 3
        %v2216 = vsel %vm558, %v2214, %v2215
        %v2217 = vrot.slane %v1612, 3
        %v2218 = vsel %vm558, %v2215, %v2217
        %v2219 = vrot.slane %v1614, 3
        %v2220 = vrot.slane %v1616, 3
        %v2221 = vsel %vm558, %v2219, %v2220
        %v2222 = vrot.slane %v1618, 3
        %v2223 = vsel %vm558, %v2220, %v2222
        %v2224 = vrot.slane %v1620, 3
        %v2225 = vrot.slane %v1622, 3
        %v2226 = vsel %vm558, %v2224, %v2225
        %v2227 = vrot.slane %v1624, 3
        %v2228 = vsel %vm558, %v2225, %v2227
        %v2229 = vrot.slane %v1626, 3
        %v2230 = vrot.slane %v1628, 3
        %v2231 = vsel %vm558, %v2229, %v2230
        %v2232 = vrot.slane %v1630, 3
        %v2233 = vsel %vm558, %v2230, %v2232
        %v2234 = vrot.slane %v1632, 3
        %v2235 = vrot.slane %v1634, 3
        %v2236 = vsel %vm558, %v2234, %v2235
        %v2237 = vrot.slane %v1636, 3
        %v2238 = vsel %vm558, %v2235, %v2237
        %v2239 = vrot.slane %v1638, 3
        %v2240 = vrot.slane %v1640, 3
        %v2241 = vsel %vm558, %v2239, %v2240
        %v2242 = vrot.slane %v1642, 3
        %v2243 = vsel %vm558, %v2240, %v2242
        %v2244 = vrot.slane %v1644, 3
        %v2245 = vrot.slane %v1646, 3
        %v2246 = vsel %vm558, %v2244, %v2245
        %v2247 = vrot.slane %v1648, 3
        %v2248 = vsel %vm558, %v2245, %v2247
        %v2249 = vrot.slane %v1650, 3
        %v2250 = vrot.slane %v1652, 3
        %v2251 = vsel %vm558, %v2249, %v2250
        %v2252 = vrot.slane %v1654, 3
        %v2253 = vsel %vm558, %v2250, %v2252
        %v2254 = vrot.slane %v1656, 3
        %v2255 = vrot.slane %v1658, 3
        %v2256 = vsel %vm558, %v2254, %v2255
        %v2257 = vrot.slane %v1660, 3
        %v2258 = vsel %vm558, %v2255, %v2257
        %v2259 = vrot.slane %v1662, 3
        %v2260 = vrot.slane %v1664, 3
        %v2261 = vsel %vm558, %v2259, %v2260
        %v2262 = vrot.slane %v1666, 3
        %v2263 = vsel %vm558, %v2260, %v2262
        %v2264 = vrot.slane %v1668, 3
        %v2265 = vrot.slane %v1670, 3
        %v2266 = vsel %vm558, %v2264, %v2265
        %v2267 = vrot.slane %v1672, 3
        %v2268 = vsel %vm558, %v2265, %v2267
        %2269 = vrot.lane.b32.xlu0 %v1675, 125
        %v2270 = vpop.permute.xlu0 %2269
        %2271 = vrot.lane.b32.xlu0 %v1677, 125
        %v2272 = vpop.permute.xlu0 %2271
        %2273 = vrot.lane.b32.xlu0 %v1680, 125
        %v2274 = vpop.permute.xlu0 %2273
        %2275 = vrot.lane.b32.xlu0 %v1682, 125
        %v2276 = vpop.permute.xlu0 %2275
        %2277 = vrot.lane.b32.xlu0 %v1685, 125
        %v2278 = vpop.permute.xlu0 %2277
        %2279 = vrot.lane.b32.xlu0 %v1687, 125
        %v2280 = vpop.permute.xlu0 %2279
        %2281 = vrot.lane.b32.xlu0 %v1690, 125
        %v2282 = vpop.permute.xlu0 %2281
        %2283 = vrot.lane.b32.xlu0 %v1692, 125
        %v2284 = vpop.permute.xlu0 %2283
        %2285 = vrot.lane.b32.xlu0 %v879, 125
        %v2286 = vpop.permute.xlu0 %2285
        %2287 = vrot.lane.b32.xlu0 %v881, 125
        %v2288 = vpop.permute.xlu0 %2287
        %2289 = vrot.lane.b32.xlu0 %v884, 125
        %v2290 = vpop.permute.xlu0 %2289
        %2291 = vrot.lane.b32.xlu0 %v886, 125
        %v2292 = vpop.permute.xlu0 %2291
        %2293 = vrot.lane.b32.xlu0 %v889, 125
        %v2294 = vpop.permute.xlu0 %2293
        %2295 = vrot.lane.b32.xlu0 %v891, 125
        %v2296 = vpop.permute.xlu0 %2295
        %2297 = vrot.lane.b32.xlu0 %v894, 125
        %v2298 = vpop.permute.xlu0 %2297
        %2299 = vrot.lane.b32.xlu0 %v896, 125
        %v2300 = vpop.permute.xlu0 %2299
        %2301 = vrot.lane.b32.xlu0 %v1039, 125
        %v2302 = vpop.permute.xlu0 %2301
        %2303 = vrot.lane.b32.xlu0 %v1041, 125
        %v2304 = vpop.permute.xlu0 %2303
        %2305 = vrot.lane.b32.xlu0 %v1044, 125
        %v2306 = vpop.permute.xlu0 %2305
        %2307 = vrot.lane.b32.xlu0 %v1046, 125
        %v2308 = vpop.permute.xlu0 %2307
        %2309 = vrot.lane.b32.xlu0 %v1049, 125
        %v2310 = vpop.permute.xlu0 %2309
        %2311 = vrot.lane.b32.xlu0 %v1051, 125
        %v2312 = vpop.permute.xlu0 %2311
        %2313 = vrot.lane.b32.xlu0 %v1054, 125
        %v2314 = vpop.permute.xlu0 %2313
        %2315 = vrot.lane.b32.xlu0 %v1056, 125
        %v2316 = vpop.permute.xlu0 %2315
        %2317 = vrot.lane.b32.xlu0 %v1695, 125
        %v2318 = vpop.permute.xlu0 %2317
        %2319 = vrot.lane.b32.xlu0 %v1697, 125
        %v2320 = vpop.permute.xlu0 %2319
        %2321 = vrot.lane.b32.xlu0 %v1700, 125
        %v2322 = vpop.permute.xlu0 %2321
        %2323 = vrot.lane.b32.xlu0 %v1702, 125
        %v2324 = vpop.permute.xlu0 %2323
        %2325 = vrot.lane.b32.xlu0 %v1705, 125
        %v2326 = vpop.permute.xlu0 %2325
        %2327 = vrot.lane.b32.xlu0 %v1707, 125
        %v2328 = vpop.permute.xlu0 %2327
        %2329 = vrot.lane.b32.xlu0 %v1710, 125
        %v2330 = vpop.permute.xlu0 %2329
        %2331 = vrot.lane.b32.xlu0 %v1712, 125
        %v2332 = vpop.permute.xlu0 %2331
        %2333 = vrot.lane.b32.xlu0 %v1715, 125
        %v2334 = vpop.permute.xlu0 %2333
        %2335 = vrot.lane.b32.xlu0 %v1717, 125
        %v2336 = vpop.permute.xlu0 %2335
        %2337 = vrot.lane.b32.xlu0 %v1720, 125
        %v2338 = vpop.permute.xlu0 %2337
        %2339 = vrot.lane.b32.xlu0 %v1722, 125
        %v2340 = vpop.permute.xlu0 %2339
        %2341 = vrot.lane.b32.xlu0 %v1725, 125
        %v2342 = vpop.permute.xlu0 %2341
        %2343 = vrot.lane.b32.xlu0 %v1727, 125
        %v2344 = vpop.permute.xlu0 %2343
        %2345 = vrot.lane.b32.xlu0 %v1730, 125
        %v2346 = vpop.permute.xlu0 %2345
        %2347 = vrot.lane.b32.xlu0 %v1732, 125
        %v2348 = vpop.permute.xlu0 %2347
        %2349 = vrot.lane.b32.xlu0 %v1734, 125
        %v2350 = vpop.permute.xlu0 %2349
        %2351 = vrot.lane.b32.xlu0 %v1736, 125
        %v2352 = vpop.permute.xlu0 %2351
        %2353 = vrot.lane.b32.xlu0 %v1738, 125
        %v2354 = vpop.permute.xlu0 %2353
        %2355 = vrot.lane.b32.xlu0 %v1740, 125
        %v2356 = vpop.permute.xlu0 %2355
        %2357 = vrot.lane.b32.xlu0 %v1742, 125
        %v2358 = vpop.permute.xlu0 %2357
        %2359 = vrot.lane.b32.xlu0 %v1744, 125
        %v2360 = vpop.permute.xlu0 %2359
        %2361 = vrot.lane.b32.xlu0 %v1746, 125
        %v2362 = vpop.permute.xlu0 %2361
        %2363 = vrot.lane.b32.xlu0 %v1748, 125
        %v2364 = vpop.permute.xlu0 %2363
        %2365 = vrot.lane.b32.xlu0 %v1751, 125
        %v2366 = vpop.permute.xlu0 %2365
        %2367 = vrot.lane.b32.xlu0 %v1753, 125
        %v2368 = vpop.permute.xlu0 %2367
        %2369 = vrot.lane.b32.xlu0 %v1756, 125
        %v2370 = vpop.permute.xlu0 %2369
        %2371 = vrot.lane.b32.xlu0 %v1758, 125
        %v2372 = vpop.permute.xlu0 %2371
        %2373 = vrot.lane.b32.xlu0 %v1761, 125
        %v2374 = vpop.permute.xlu0 %2373
        %2375 = vrot.lane.b32.xlu0 %v1763, 125
        %v2376 = vpop.permute.xlu0 %2375
        %2377 = vrot.lane.b32.xlu0 %v1766, 125
        %v2378 = vpop.permute.xlu0 %2377
        %2379 = vrot.lane.b32.xlu0 %v1768, 125
        %v2380 = vpop.permute.xlu0 %2379
        %2381 = vrot.lane.b32.xlu0 %v1771, 125
        %v2382 = vpop.permute.xlu0 %2381
        %2383 = vrot.lane.b32.xlu0 %v1773, 125
        %v2384 = vpop.permute.xlu0 %2383
        %2385 = vrot.lane.b32.xlu0 %v1776, 125
        %v2386 = vpop.permute.xlu0 %2385
        %2387 = vrot.lane.b32.xlu0 %v1778, 125
        %v2388 = vpop.permute.xlu0 %2387
        %2389 = vrot.lane.b32.xlu0 %v1781, 125
        %v2390 = vpop.permute.xlu0 %2389
        %2391 = vrot.lane.b32.xlu0 %v1783, 125
        %v2392 = vpop.permute.xlu0 %2391
        %2393 = vrot.lane.b32.xlu0 %v1786, 125
        %v2394 = vpop.permute.xlu0 %2393
        %2395 = vrot.lane.b32.xlu0 %v1788, 125
        %v2396 = vpop.permute.xlu0 %2395
        %2397 = vrot.lane.b32.xlu0 %v1791, 125
        %v2398 = vpop.permute.xlu0 %2397
        %2399 = vrot.lane.b32.xlu0 %v1793, 125
        %v2400 = vpop.permute.xlu0 %2399
        %2401 = vrot.lane.b32.xlu0 %v1796, 125
        %v2402 = vpop.permute.xlu0 %2401
        %2403 = vrot.lane.b32.xlu0 %v1798, 125
        %v2404 = vpop.permute.xlu0 %2403
        %2405 = vrot.lane.b32.xlu0 %v1801, 125
        %v2406 = vpop.permute.xlu0 %2405
        %2407 = vrot.lane.b32.xlu0 %v1803, 125
        %v2408 = vpop.permute.xlu0 %2407
        %2409 = vrot.lane.b32.xlu0 %v1806, 125
        %v2410 = vpop.permute.xlu0 %2409
        %2411 = vrot.lane.b32.xlu0 %v1808, 125
        %v2412 = vpop.permute.xlu0 %2411
        %2413 = vrot.lane.b32.xlu0 %v1811, 125
        %v2414 = vpop.permute.xlu0 %2413
        %2415 = vrot.lane.b32.xlu0 %v1813, 125
        %v2416 = vpop.permute.xlu0 %2415
        %2417 = vrot.lane.b32.xlu0 %v1816, 125
        %v2418 = vpop.permute.xlu0 %2417
        %2419 = vrot.lane.b32.xlu0 %v1818, 125
        %v2420 = vpop.permute.xlu0 %2419
        %2421 = vrot.lane.b32.xlu0 %v1821, 125
        %v2422 = vpop.permute.xlu0 %2421
        %2423 = vrot.lane.b32.xlu0 %v1823, 125
        %v2424 = vpop.permute.xlu0 %2423
        %2425 = vrot.lane.b32.xlu0 %v1826, 125
        %v2426 = vpop.permute.xlu0 %2425
        %2427 = vrot.lane.b32.xlu0 %v1828, 125
        %v2428 = vpop.permute.xlu0 %2427
        %2429 = vrot.lane.b32.xlu0 %v1831, 125
        %v2430 = vpop.permute.xlu0 %2429
        %2431 = vrot.lane.b32.xlu0 %v1833, 125
        %v2432 = vpop.permute.xlu0 %2431
        %2433 = vrot.lane.b32.xlu0 %v1836, 125
        %v2434 = vpop.permute.xlu0 %2433
        %2435 = vrot.lane.b32.xlu0 %v1838, 125
        %v2436 = vpop.permute.xlu0 %2435
        %2437 = vrot.lane.b32.xlu0 %v1841, 125
        %v2438 = vpop.permute.xlu0 %2437
        %2439 = vrot.lane.b32.xlu0 %v1843, 125
        %v2440 = vpop.permute.xlu0 %2439
        %2441 = vrot.lane.b32.xlu0 %v1846, 125
        %v2442 = vpop.permute.xlu0 %2441
        %2443 = vrot.lane.b32.xlu0 %v1848, 125
        %v2444 = vpop.permute.xlu0 %2443
        %2445 = vrot.lane.b32.xlu0 %v1851, 125
        %v2446 = vpop.permute.xlu0 %2445
        %2447 = vrot.lane.b32.xlu0 %v1853, 125
        %v2448 = vpop.permute.xlu0 %2447
        %2449 = vrot.lane.b32.xlu0 %v1856, 125
        %v2450 = vpop.permute.xlu0 %2449
        %2451 = vrot.lane.b32.xlu0 %v1858, 125
        %v2452 = vpop.permute.xlu0 %2451
        %2453 = vrot.lane.b32.xlu0 %v1861, 125
        %v2454 = vpop.permute.xlu0 %2453
        %2455 = vrot.lane.b32.xlu0 %v1863, 125
        %v2456 = vpop.permute.xlu0 %2455
        %2457 = vrot.lane.b32.xlu0 %v1866, 125
        %v2458 = vpop.permute.xlu0 %2457
        %2459 = vrot.lane.b32.xlu0 %v1868, 125
        %v2460 = vpop.permute.xlu0 %2459
        %2461 = vrot.lane.b32.xlu0 %v1059, 125
        %v2462 = vpop.permute.xlu0 %2461
        %2463 = vrot.lane.b32.xlu0 %v1061, 125
        %v2464 = vpop.permute.xlu0 %2463
        %2465 = vrot.lane.b32.xlu0 %v1064, 125
        %v2466 = vpop.permute.xlu0 %2465
        %2467 = vrot.lane.b32.xlu0 %v1066, 125
        %v2468 = vpop.permute.xlu0 %2467
        %2469 = vrot.lane.b32.xlu0 %v1069, 125
        %v2470 = vpop.permute.xlu0 %2469
        %2471 = vrot.lane.b32.xlu0 %v1071, 125
        %v2472 = vpop.permute.xlu0 %2471
        %2473 = vrot.lane.b32.xlu0 %v1074, 125
        %v2474 = vpop.permute.xlu0 %2473
        %2475 = vrot.lane.b32.xlu0 %v1076, 125
        %v2476 = vpop.permute.xlu0 %2475
        %2477 = vrot.lane.b32.xlu0 %v1871, 125
        %v2478 = vpop.permute.xlu0 %2477
        %2479 = vrot.lane.b32.xlu0 %v1873, 125
        %v2480 = vpop.permute.xlu0 %2479
        %2481 = vrot.lane.b32.xlu0 %v1876, 125
        %v2482 = vpop.permute.xlu0 %2481
        %2483 = vrot.lane.b32.xlu0 %v1878, 125
        %v2484 = vpop.permute.xlu0 %2483
        %2485 = vrot.lane.b32.xlu0 %v1881, 125
        %v2486 = vpop.permute.xlu0 %2485
        %2487 = vrot.lane.b32.xlu0 %v1883, 125
        %v2488 = vpop.permute.xlu0 %2487
        %2489 = vrot.lane.b32.xlu0 %v1886, 125
        %v2490 = vpop.permute.xlu0 %2489
        %2491 = vrot.lane.b32.xlu0 %v1888, 125
        %v2492 = vpop.permute.xlu0 %2491
        %2493 = vrot.lane.b32.xlu0 %v1891, 125
        %v2494 = vpop.permute.xlu0 %2493
        %2495 = vrot.lane.b32.xlu0 %v1893, 125
        %v2496 = vpop.permute.xlu0 %2495
        %2497 = vrot.lane.b32.xlu0 %v1896, 125
        %v2498 = vpop.permute.xlu0 %2497
        %2499 = vrot.lane.b32.xlu0 %v1898, 125
        %v2500 = vpop.permute.xlu0 %2499
        %2501 = vrot.lane.b32.xlu0 %v1901, 125
        %v2502 = vpop.permute.xlu0 %2501
        %2503 = vrot.lane.b32.xlu0 %v1903, 125
        %v2504 = vpop.permute.xlu0 %2503
        %2505 = vrot.lane.b32.xlu0 %v1906, 125
        %v2506 = vpop.permute.xlu0 %2505
        %2507 = vrot.lane.b32.xlu0 %v1908, 125
        %v2508 = vpop.permute.xlu0 %2507
        %2509 = vrot.lane.b32.xlu0 %v1911, 125
        %v2510 = vpop.permute.xlu0 %2509
        %2511 = vrot.lane.b32.xlu0 %v1913, 125
        %v2512 = vpop.permute.xlu0 %2511
        %2513 = vrot.lane.b32.xlu0 %v1916, 125
        %v2514 = vpop.permute.xlu0 %2513
        %2515 = vrot.lane.b32.xlu0 %v1918, 125
        %v2516 = vpop.permute.xlu0 %2515
        %2517 = vrot.lane.b32.xlu0 %v1921, 125
        %v2518 = vpop.permute.xlu0 %2517
        %2519 = vrot.lane.b32.xlu0 %v1923, 125
        %v2520 = vpop.permute.xlu0 %2519
        %2521 = vrot.lane.b32.xlu0 %v1926, 125
        %v2522 = vpop.permute.xlu0 %2521
        %2523 = vrot.lane.b32.xlu0 %v1928, 125
        %v2524 = vpop.permute.xlu0 %2523
        %2525 = vrot.lane.b32.xlu0 %v1931, 125
        %v2526 = vpop.permute.xlu0 %2525
        %2527 = vrot.lane.b32.xlu0 %v1933, 125
        %v2528 = vpop.permute.xlu0 %2527
        %2529 = vrot.lane.b32.xlu0 %v1936, 125
        %v2530 = vpop.permute.xlu0 %2529
        %2531 = vrot.lane.b32.xlu0 %v1938, 125
        %v2532 = vpop.permute.xlu0 %2531
        %2533 = vrot.lane.b32.xlu0 %v1941, 125
        %v2534 = vpop.permute.xlu0 %2533
        %2535 = vrot.lane.b32.xlu0 %v1943, 125
        %v2536 = vpop.permute.xlu0 %2535
        %2537 = vrot.lane.b32.xlu0 %v1946, 125
        %v2538 = vpop.permute.xlu0 %2537
        %2539 = vrot.lane.b32.xlu0 %v1948, 125
        %v2540 = vpop.permute.xlu0 %2539
        %2541 = vrot.lane.b32.xlu0 %v1951, 125
        %v2542 = vpop.permute.xlu0 %2541
        %2543 = vrot.lane.b32.xlu0 %v1953, 125
        %v2544 = vpop.permute.xlu0 %2543
        %2545 = vrot.lane.b32.xlu0 %v1956, 125
        %v2546 = vpop.permute.xlu0 %2545
        %2547 = vrot.lane.b32.xlu0 %v1958, 125
        %v2548 = vpop.permute.xlu0 %2547
        %2549 = vrot.lane.b32.xlu0 %v1961, 125
        %v2550 = vpop.permute.xlu0 %2549
        %2551 = vrot.lane.b32.xlu0 %v1963, 125
        %v2552 = vpop.permute.xlu0 %2551
        %2553 = vrot.lane.b32.xlu0 %v1966, 125
        %v2554 = vpop.permute.xlu0 %2553
        %2555 = vrot.lane.b32.xlu0 %v1968, 125
        %v2556 = vpop.permute.xlu0 %2555
        %2557 = vrot.lane.b32.xlu0 %v1971, 125
        %v2558 = vpop.permute.xlu0 %2557
        %2559 = vrot.lane.b32.xlu0 %v1973, 125
        %v2560 = vpop.permute.xlu0 %2559
        %2561 = vrot.lane.b32.xlu0 %v1976, 125
        %v2562 = vpop.permute.xlu0 %2561
        %2563 = vrot.lane.b32.xlu0 %v1978, 125
        %v2564 = vpop.permute.xlu0 %2563
        %2565 = vrot.lane.b32.xlu0 %v1981, 125
        %v2566 = vpop.permute.xlu0 %2565
        %2567 = vrot.lane.b32.xlu0 %v1983, 125
        %v2568 = vpop.permute.xlu0 %2567
        %2569 = vrot.lane.b32.xlu0 %v1986, 125
        %v2570 = vpop.permute.xlu0 %2569
        %2571 = vrot.lane.b32.xlu0 %v1988, 125
        %v2572 = vpop.permute.xlu0 %2571
        %2573 = vrot.lane.b32.xlu0 %v1991, 125
        %v2574 = vpop.permute.xlu0 %2573
        %2575 = vrot.lane.b32.xlu0 %v1993, 125
        %v2576 = vpop.permute.xlu0 %2575
        %2577 = vrot.lane.b32.xlu0 %v1996, 125
        %v2578 = vpop.permute.xlu0 %2577
        %2579 = vrot.lane.b32.xlu0 %v1998, 125
        %v2580 = vpop.permute.xlu0 %2579
        %2581 = vrot.lane.b32.xlu0 %v2001, 125
        %v2582 = vpop.permute.xlu0 %2581
        %2583 = vrot.lane.b32.xlu0 %v2003, 125
        %v2584 = vpop.permute.xlu0 %2583
        %2585 = vrot.lane.b32.xlu0 %v2006, 125
        %v2586 = vpop.permute.xlu0 %2585
        %2587 = vrot.lane.b32.xlu0 %v2008, 125
        %v2588 = vpop.permute.xlu0 %2587
        %2589 = vrot.lane.b32.xlu0 %v2011, 125
        %v2590 = vpop.permute.xlu0 %2589
        %2591 = vrot.lane.b32.xlu0 %v2013, 125
        %v2592 = vpop.permute.xlu0 %2591
        %2593 = vrot.lane.b32.xlu0 %v2016, 125
        %v2594 = vpop.permute.xlu0 %2593
        %2595 = vrot.lane.b32.xlu0 %v2018, 125
        %v2596 = vpop.permute.xlu0 %2595
        %2597 = vrot.lane.b32.xlu0 %v2021, 125
        %v2598 = vpop.permute.xlu0 %2597
        %2599 = vrot.lane.b32.xlu0 %v2023, 125
        %v2600 = vpop.permute.xlu0 %2599
        %2601 = vrot.lane.b32.xlu0 %v2026, 125
        %v2602 = vpop.permute.xlu0 %2601
        %2603 = vrot.lane.b32.xlu0 %v2028, 125
        %v2604 = vpop.permute.xlu0 %2603
        %2605 = vrot.lane.b32.xlu0 %v2031, 125
        %v2606 = vpop.permute.xlu0 %2605
        %2607 = vrot.lane.b32.xlu0 %v2033, 125
        %v2608 = vpop.permute.xlu0 %2607
        %2609 = vrot.lane.b32.xlu0 %v2036, 125
        %v2610 = vpop.permute.xlu0 %2609
        %2611 = vrot.lane.b32.xlu0 %v2038, 125
        %v2612 = vpop.permute.xlu0 %2611
        %2613 = vrot.lane.b32.xlu0 %v2041, 125
        %v2614 = vpop.permute.xlu0 %2613
        %2615 = vrot.lane.b32.xlu0 %v2043, 125
        %v2616 = vpop.permute.xlu0 %2615
        %2617 = vrot.lane.b32.xlu0 %v2046, 125
        %v2618 = vpop.permute.xlu0 %2617
        %2619 = vrot.lane.b32.xlu0 %v2048, 125
        %v2620 = vpop.permute.xlu0 %2619
        %2621 = vrot.lane.b32.xlu0 %v2051, 125
        %v2622 = vpop.permute.xlu0 %2621
        %2623 = vrot.lane.b32.xlu0 %v2053, 125
        %v2624 = vpop.permute.xlu0 %2623
        %2625 = vrot.lane.b32.xlu0 %v2056, 125
        %v2626 = vpop.permute.xlu0 %2625
        %2627 = vrot.lane.b32.xlu0 %v2058, 125
        %v2628 = vpop.permute.xlu0 %2627
        %2629 = vrot.lane.b32.xlu0 %v2061, 125
        %v2630 = vpop.permute.xlu0 %2629
        %2631 = vrot.lane.b32.xlu0 %v2063, 125
        %v2632 = vpop.permute.xlu0 %2631
        %2633 = vrot.lane.b32.xlu0 %v2066, 125
        %v2634 = vpop.permute.xlu0 %2633
        %2635 = vrot.lane.b32.xlu0 %v2068, 125
        %v2636 = vpop.permute.xlu0 %2635
        %2637 = vrot.lane.b32.xlu0 %v2071, 125
        %v2638 = vpop.permute.xlu0 %2637
        %2639 = vrot.lane.b32.xlu0 %v2073, 125
        %v2640 = vpop.permute.xlu0 %2639
        %2641 = vrot.lane.b32.xlu0 %v2076, 125
        %v2642 = vpop.permute.xlu0 %2641
        %2643 = vrot.lane.b32.xlu0 %v2078, 125
        %v2644 = vpop.permute.xlu0 %2643
        %2645 = vrot.lane.b32.xlu0 %v2081, 125
        %v2646 = vpop.permute.xlu0 %2645
        %2647 = vrot.lane.b32.xlu0 %v2083, 125
        %v2648 = vpop.permute.xlu0 %2647
        %2649 = vrot.lane.b32.xlu0 %v2086, 125
        %v2650 = vpop.permute.xlu0 %2649
        %2651 = vrot.lane.b32.xlu0 %v2088, 125
        %v2652 = vpop.permute.xlu0 %2651
        %2653 = vrot.lane.b32.xlu0 %v2091, 125
        %v2654 = vpop.permute.xlu0 %2653
        %2655 = vrot.lane.b32.xlu0 %v2093, 125
        %v2656 = vpop.permute.xlu0 %2655
        %2657 = vrot.lane.b32.xlu0 %v2096, 125
        %v2658 = vpop.permute.xlu0 %2657
        %2659 = vrot.lane.b32.xlu0 %v2098, 125
        %v2660 = vpop.permute.xlu0 %2659
        %2661 = vrot.lane.b32.xlu0 %v2101, 125
        %v2662 = vpop.permute.xlu0 %2661
        %2663 = vrot.lane.b32.xlu0 %v2103, 125
        %v2664 = vpop.permute.xlu0 %2663
        %2665 = vrot.lane.b32.xlu0 %v2106, 125
        %v2666 = vpop.permute.xlu0 %2665
        %2667 = vrot.lane.b32.xlu0 %v2108, 125
        %v2668 = vpop.permute.xlu0 %2667
        %2669 = vrot.lane.b32.xlu0 %v2111, 125
        %v2670 = vpop.permute.xlu0 %2669
        %2671 = vrot.lane.b32.xlu0 %v2113, 125
        %v2672 = vpop.permute.xlu0 %2671
        %2673 = vrot.lane.b32.xlu0 %v2116, 125
        %v2674 = vpop.permute.xlu0 %2673
        %2675 = vrot.lane.b32.xlu0 %v2118, 125
        %v2676 = vpop.permute.xlu0 %2675
        %2677 = vrot.lane.b32.xlu0 %v2121, 125
        %v2678 = vpop.permute.xlu0 %2677
        %2679 = vrot.lane.b32.xlu0 %v2123, 125
        %v2680 = vpop.permute.xlu0 %2679
        %2681 = vrot.lane.b32.xlu0 %v2126, 125
        %v2682 = vpop.permute.xlu0 %2681
        %2683 = vrot.lane.b32.xlu0 %v2128, 125
        %v2684 = vpop.permute.xlu0 %2683
        %2685 = vrot.lane.b32.xlu0 %v2131, 125
        %v2686 = vpop.permute.xlu0 %2685
        %2687 = vrot.lane.b32.xlu0 %v2133, 125
        %v2688 = vpop.permute.xlu0 %2687
        %2689 = vrot.lane.b32.xlu0 %v2136, 125
        %v2690 = vpop.permute.xlu0 %2689
        %2691 = vrot.lane.b32.xlu0 %v2138, 125
        %v2692 = vpop.permute.xlu0 %2691
        %2693 = vrot.lane.b32.xlu0 %v2141, 125
        %v2694 = vpop.permute.xlu0 %2693
        %2695 = vrot.lane.b32.xlu0 %v2143, 125
        %v2696 = vpop.permute.xlu0 %2695
        %2697 = vrot.lane.b32.xlu0 %v2146, 125
        %v2698 = vpop.permute.xlu0 %2697
        %2699 = vrot.lane.b32.xlu0 %v2148, 125
        %v2700 = vpop.permute.xlu0 %2699
        %2701 = vrot.lane.b32.xlu0 %v2151, 125
        %v2702 = vpop.permute.xlu0 %2701
        %2703 = vrot.lane.b32.xlu0 %v2153, 125
        %v2704 = vpop.permute.xlu0 %2703
        %2705 = vrot.lane.b32.xlu0 %v2156, 125
        %v2706 = vpop.permute.xlu0 %2705
        %2707 = vrot.lane.b32.xlu0 %v2158, 125
        %v2708 = vpop.permute.xlu0 %2707
        %2709 = vrot.lane.b32.xlu0 %v2161, 125
        %v2710 = vpop.permute.xlu0 %2709
        %2711 = vrot.lane.b32.xlu0 %v2163, 125
        %v2712 = vpop.permute.xlu0 %2711
        %2713 = vrot.lane.b32.xlu0 %v2166, 125
        %v2714 = vpop.permute.xlu0 %2713
        %2715 = vrot.lane.b32.xlu0 %v2168, 125
        %v2716 = vpop.permute.xlu0 %2715
        %2717 = vrot.lane.b32.xlu0 %v2171, 125
        %v2718 = vpop.permute.xlu0 %2717
        %2719 = vrot.lane.b32.xlu0 %v2173, 125
        %v2720 = vpop.permute.xlu0 %2719
        %2721 = vrot.lane.b32.xlu0 %v2176, 125
        %v2722 = vpop.permute.xlu0 %2721
        %2723 = vrot.lane.b32.xlu0 %v2178, 125
        %v2724 = vpop.permute.xlu0 %2723
        %2725 = vrot.lane.b32.xlu0 %v2181, 125
        %v2726 = vpop.permute.xlu0 %2725
        %2727 = vrot.lane.b32.xlu0 %v2183, 125
        %v2728 = vpop.permute.xlu0 %2727
        %2729 = vrot.lane.b32.xlu0 %v2186, 125
        %v2730 = vpop.permute.xlu0 %2729
        %2731 = vrot.lane.b32.xlu0 %v2188, 125
        %v2732 = vpop.permute.xlu0 %2731
        %2733 = vrot.lane.b32.xlu0 %v2191, 125
        %v2734 = vpop.permute.xlu0 %2733
        %2735 = vrot.lane.b32.xlu0 %v2193, 125
        %v2736 = vpop.permute.xlu0 %2735
        %2737 = vrot.lane.b32.xlu0 %v2196, 125
        %v2738 = vpop.permute.xlu0 %2737
        %2739 = vrot.lane.b32.xlu0 %v2198, 125
        %v2740 = vpop.permute.xlu0 %2739
        %2741 = vrot.lane.b32.xlu0 %v2201, 125
        %v2742 = vpop.permute.xlu0 %2741
        %2743 = vrot.lane.b32.xlu0 %v2203, 125
        %v2744 = vpop.permute.xlu0 %2743
        %2745 = vrot.lane.b32.xlu0 %v2206, 125
        %v2746 = vpop.permute.xlu0 %2745
        %2747 = vrot.lane.b32.xlu0 %v2208, 125
        %v2748 = vpop.permute.xlu0 %2747
        %2749 = vrot.lane.b32.xlu0 %v2211, 125
        %v2750 = vpop.permute.xlu0 %2749
        %2751 = vrot.lane.b32.xlu0 %v2213, 125
        %v2752 = vpop.permute.xlu0 %2751
        %2753 = vrot.lane.b32.xlu0 %v2216, 125
        %v2754 = vpop.permute.xlu0 %2753
        %2755 = vrot.lane.b32.xlu0 %v2218, 125
        %v2756 = vpop.permute.xlu0 %2755
        %2757 = vrot.lane.b32.xlu0 %v2221, 125
        %v2758 = vpop.permute.xlu0 %2757
        %2759 = vrot.lane.b32.xlu0 %v2223, 125
        %v2760 = vpop.permute.xlu0 %2759
        %2761 = vrot.lane.b32.xlu0 %v2226, 125
        %v2762 = vpop.permute.xlu0 %2761
        %2763 = vrot.lane.b32.xlu0 %v2228, 125
        %v2764 = vpop.permute.xlu0 %2763
        %2765 = vrot.lane.b32.xlu0 %v2231, 125
        %v2766 = vpop.permute.xlu0 %2765
        %2767 = vrot.lane.b32.xlu0 %v2233, 125
        %v2768 = vpop.permute.xlu0 %2767
        %2769 = vrot.lane.b32.xlu0 %v2236, 125
        %v2770 = vpop.permute.xlu0 %2769
        %2771 = vrot.lane.b32.xlu0 %v2238, 125
        %v2772 = vpop.permute.xlu0 %2771
        %2773 = vrot.lane.b32.xlu0 %v2241, 125
        %v2774 = vpop.permute.xlu0 %2773
        %2775 = vrot.lane.b32.xlu0 %v2243, 125
        %v2776 = vpop.permute.xlu0 %2775
        %2777 = vrot.lane.b32.xlu0 %v2246, 125
        %v2778 = vpop.permute.xlu0 %2777
        %2779 = vrot.lane.b32.xlu0 %v2248, 125
        %v2780 = vpop.permute.xlu0 %2779
        %2781 = vrot.lane.b32.xlu0 %v2251, 125
        %v2782 = vpop.permute.xlu0 %2781
        %2783 = vrot.lane.b32.xlu0 %v2253, 125
        %v2784 = vpop.permute.xlu0 %2783
        %2785 = vrot.lane.b32.xlu0 %v2256, 125
        %v2786 = vpop.permute.xlu0 %2785
        %2787 = vrot.lane.b32.xlu0 %v2258, 125
        %v2788 = vpop.permute.xlu0 %2787
        %2789 = vrot.lane.b32.xlu0 %v2261, 125
        %v2790 = vpop.permute.xlu0 %2789
        %2791 = vrot.lane.b32.xlu0 %v2263, 125
        %v2792 = vpop.permute.xlu0 %2791
        %2793 = vrot.lane.b32.xlu0 %v2266, 125
        %v2794 = vpop.permute.xlu0 %2793
        %2795 = vrot.lane.b32.xlu0 %v2268, 125
        %v2796 = vpop.permute.xlu0 %2795
        %v3069 = vcombine.low %v630, %v642
        %v3070 = vcombine.high %v630, %v642
        %v3072 = vunpack.c.l.s4 1983009808
        %v3073 = vunpack.c.0.s8 %v3072
        %v3074 = vlaneseq
        %v3075 = vshrl.u32 %v3074, 7
        %v3076 = vsub.s32 %v3073, %v3075
        %v3077 = vrot.slane %v3069, %v3076
        %v3079 = vunpack.c.l.s4 1983009808
        %v3080 = vunpack.c.0.s8 %v3079
        %v3081 = vlaneseq
        %v3082 = vshrl.u32 %v3081, 7
        %v3083 = vsub.s32 %v3080, %v3082
        %v3084 = vrot.slane %v3070, %v3083
        %v3085 = vcombine.low %v636, %v648
        %v3086 = vcombine.high %v636, %v648
        %v3088 = vunpack.c.l.s4 1983009808
        %v3089 = vunpack.c.0.s8 %v3088
        %v3090 = vlaneseq
        %v3091 = vshrl.u32 %v3090, 7
        %v3092 = vsub.s32 %v3089, %v3091
        %v3093 = vrot.slane %v3085, %v3092
        %v3095 = vunpack.c.l.s4 1983009808
        %v3096 = vunpack.c.0.s8 %v3095
        %v3097 = vlaneseq
        %v3098 = vshrl.u32 %v3097, 7
        %v3099 = vsub.s32 %v3096, %v3098
        %v3100 = vrot.slane %v3086, %v3099
        %v3101 = vcombine.low %v2270, %v2278
        %v3102 = vcombine.high %v2270, %v2278
        %v3104 = vunpack.c.l.s4 1983009808
        %v3105 = vunpack.c.0.s8 %v3104
        %v3106 = vlaneseq
        %v3107 = vshrl.u32 %v3106, 7
        %v3108 = vsub.s32 %v3105, %v3107
        %v3109 = vrot.slane %v3101, %v3108
        %v3111 = vunpack.c.l.s4 1983009808
        %v3112 = vunpack.c.0.s8 %v3111
        %v3113 = vlaneseq
        %v3114 = vshrl.u32 %v3113, 7
        %v3115 = vsub.s32 %v3112, %v3114
        %v3116 = vrot.slane %v3102, %v3115
        %v3117 = vcombine.low %v2274, %v2282
        %v3118 = vcombine.high %v2274, %v2282
        %v3120 = vunpack.c.l.s4 1983009808
        %v3121 = vunpack.c.0.s8 %v3120
        %v3122 = vlaneseq
        %v3123 = vshrl.u32 %v3122, 7
        %v3124 = vsub.s32 %v3121, %v3123
        %v3125 = vrot.slane %v3117, %v3124
        %v3127 = vunpack.c.l.s4 1983009808
        %v3128 = vunpack.c.0.s8 %v3127
        %v3129 = vlaneseq
        %v3130 = vshrl.u32 %v3129, 7
        %v3131 = vsub.s32 %v3128, %v3130
        %v3132 = vrot.slane %v3118, %v3131
        %v3133 = vcombine.low %v3077, %v3093
        %v3134 = vcombine.high %v3077, %v3093
        %v3136 = vunpack.c.l.s4 1934713408
        %v3137 = vunpack.c.0.s8 %v3136
        %v3138 = vlaneseq
        %v3139 = vshrl.u32 %v3138, 7
        %v3140 = vsub.s32 %v3137, %v3139
        %v3141 = vrot.slane %v3133, %v3140
        %v3143 = vunpack.c.l.s4 1934713408
        %v3144 = vunpack.c.0.s8 %v3143
        %v3145 = vlaneseq
        %v3146 = vshrl.u32 %v3145, 7
        %v3147 = vsub.s32 %v3144, %v3146
        %v3148 = vrot.slane %v3134, %v3147
        %v3149 = vcombine.low %v3084, %v3100
        %v3150 = vcombine.high %v3084, %v3100
        %v3152 = vunpack.c.l.s4 1934713408
        %v3153 = vunpack.c.0.s8 %v3152
        %v3154 = vlaneseq
        %v3155 = vshrl.u32 %v3154, 7
        %v3156 = vsub.s32 %v3153, %v3155
        %v3157 = vrot.slane %v3149, %v3156
        %v3159 = vunpack.c.l.s4 1934713408
        %v3160 = vunpack.c.0.s8 %v3159
        %v3161 = vlaneseq
        %v3162 = vshrl.u32 %v3161, 7
        %v3163 = vsub.s32 %v3160, %v3162
        %v3164 = vrot.slane %v3150, %v3163
        %v3165 = vcombine.low %v3109, %v3125
        %v3166 = vcombine.high %v3109, %v3125
        %v3168 = vunpack.c.l.s4 1934713408
        %v3169 = vunpack.c.0.s8 %v3168
        %v3170 = vlaneseq
        %v3171 = vshrl.u32 %v3170, 7
        %v3172 = vsub.s32 %v3169, %v3171
        %v3173 = vrot.slane %v3165, %v3172
        %v3175 = vunpack.c.l.s4 1934713408
        %v3176 = vunpack.c.0.s8 %v3175
        %v3177 = vlaneseq
        %v3178 = vshrl.u32 %v3177, 7
        %v3179 = vsub.s32 %v3176, %v3178
        %v3180 = vrot.slane %v3166, %v3179
        %v3181 = vcombine.low %v3116, %v3132
        %v3182 = vcombine.high %v3116, %v3132
        %v3184 = vunpack.c.l.s4 1934713408
        %v3185 = vunpack.c.0.s8 %v3184
        %v3186 = vlaneseq
        %v3187 = vshrl.u32 %v3186, 7
        %v3188 = vsub.s32 %v3185, %v3187
        %v3189 = vrot.slane %v3181, %v3188
        %v3191 = vunpack.c.l.s4 1934713408
        %v3192 = vunpack.c.0.s8 %v3191
        %v3193 = vlaneseq
        %v3194 = vshrl.u32 %v3193, 7
        %v3195 = vsub.s32 %v3192, %v3194
        %v3196 = vrot.slane %v3182, %v3195
        %v3197 = vcombine.low %v3141, %v3173
        %v3198 = vcombine.high %v3141, %v3173
        %v3199 = vcombine.low %v3148, %v3180
        %v3200 = vcombine.high %v3148, %v3180
        %v3201 = vcombine.low %v3157, %v3189
        %v3202 = vcombine.high %v3157, %v3189
        %v3203 = vcombine.low %v3164, %v3196
        %v3204 = vcombine.high %v3164, %v3196
        %v3205 = vcombine.low %v2286, %v2294
        %v3206 = vcombine.high %v2286, %v2294
        %v3208 = vunpack.c.l.s4 1983009808
        %v3209 = vunpack.c.0.s8 %v3208
        %v3210 = vlaneseq
        %v3211 = vshrl.u32 %v3210, 7
        %v3212 = vsub.s32 %v3209, %v3211
        %v3213 = vrot.slane %v3205, %v3212
        %v3215 = vunpack.c.l.s4 1983009808
        %v3216 = vunpack.c.0.s8 %v3215
        %v3217 = vlaneseq
        %v3218 = vshrl.u32 %v3217, 7
        %v3219 = vsub.s32 %v3216, %v3218
        %v3220 = vrot.slane %v3206, %v3219
        %v3221 = vcombine.low %v2290, %v2298
        %v3222 = vcombine.high %v2290, %v2298
        %v3224 = vunpack.c.l.s4 1983009808
        %v3225 = vunpack.c.0.s8 %v3224
        %v3226 = vlaneseq
        %v3227 = vshrl.u32 %v3226, 7
        %v3228 = vsub.s32 %v3225, %v3227
        %v3229 = vrot.slane %v3221, %v3228
        %v3231 = vunpack.c.l.s4 1983009808
        %v3232 = vunpack.c.0.s8 %v3231
        %v3233 = vlaneseq
        %v3234 = vshrl.u32 %v3233, 7
        %v3235 = vsub.s32 %v3232, %v3234
        %v3236 = vrot.slane %v3222, %v3235
        %v3237 = vcombine.low %v2302, %v2310
        %v3238 = vcombine.high %v2302, %v2310
        %v3240 = vunpack.c.l.s4 1983009808
        %v3241 = vunpack.c.0.s8 %v3240
        %v3242 = vlaneseq
        %v3243 = vshrl.u32 %v3242, 7
        %v3244 = vsub.s32 %v3241, %v3243
        %v3245 = vrot.slane %v3237, %v3244
        %v3247 = vunpack.c.l.s4 1983009808
        %v3248 = vunpack.c.0.s8 %v3247
        %v3249 = vlaneseq
        %v3250 = vshrl.u32 %v3249, 7
        %v3251 = vsub.s32 %v3248, %v3250
        %v3252 = vrot.slane %v3238, %v3251
        %v3253 = vcombine.low %v2306, %v2314
        %v3254 = vcombine.high %v2306, %v2314
        %v3256 = vunpack.c.l.s4 1983009808
        %v3257 = vunpack.c.0.s8 %v3256
        %v3258 = vlaneseq
        %v3259 = vshrl.u32 %v3258, 7
        %v3260 = vsub.s32 %v3257, %v3259
        %v3261 = vrot.slane %v3253, %v3260
        %v3263 = vunpack.c.l.s4 1983009808
        %v3264 = vunpack.c.0.s8 %v3263
        %v3265 = vlaneseq
        %v3266 = vshrl.u32 %v3265, 7
        %v3267 = vsub.s32 %v3264, %v3266
        %v3268 = vrot.slane %v3254, %v3267
        %v3269 = vcombine.low %v3213, %v3229
        %v3270 = vcombine.high %v3213, %v3229
        %v3272 = vunpack.c.l.s4 1934713408
        %v3273 = vunpack.c.0.s8 %v3272
        %v3274 = vlaneseq
        %v3275 = vshrl.u32 %v3274, 7
        %v3276 = vsub.s32 %v3273, %v3275
        %v3277 = vrot.slane %v3269, %v3276
        %v3279 = vunpack.c.l.s4 1934713408
        %v3280 = vunpack.c.0.s8 %v3279
        %v3281 = vlaneseq
        %v3282 = vshrl.u32 %v3281, 7
        %v3283 = vsub.s32 %v3280, %v3282
        %v3284 = vrot.slane %v3270, %v3283
        %v3285 = vcombine.low %v3220, %v3236
        %v3286 = vcombine.high %v3220, %v3236
        %v3288 = vunpack.c.l.s4 1934713408
        %v3289 = vunpack.c.0.s8 %v3288
        %v3290 = vlaneseq
        %v3291 = vshrl.u32 %v3290, 7
        %v3292 = vsub.s32 %v3289, %v3291
        %v3293 = vrot.slane %v3285, %v3292
        %v3295 = vunpack.c.l.s4 1934713408
        %v3296 = vunpack.c.0.s8 %v3295
        %v3297 = vlaneseq
        %v3298 = vshrl.u32 %v3297, 7
        %v3299 = vsub.s32 %v3296, %v3298
        %v3300 = vrot.slane %v3286, %v3299
        %v3301 = vcombine.low %v3245, %v3261
        %v3302 = vcombine.high %v3245, %v3261
        %v3304 = vunpack.c.l.s4 1934713408
        %v3305 = vunpack.c.0.s8 %v3304
        %v3306 = vlaneseq
        %v3307 = vshrl.u32 %v3306, 7
        %v3308 = vsub.s32 %v3305, %v3307
        %v3309 = vrot.slane %v3301, %v3308
        %v3311 = vunpack.c.l.s4 1934713408
        %v3312 = vunpack.c.0.s8 %v3311
        %v3313 = vlaneseq
        %v3314 = vshrl.u32 %v3313, 7
        %v3315 = vsub.s32 %v3312, %v3314
        %v3316 = vrot.slane %v3302, %v3315
        %v3317 = vcombine.low %v3252, %v3268
        %v3318 = vcombine.high %v3252, %v3268
        %v3320 = vunpack.c.l.s4 1934713408
        %v3321 = vunpack.c.0.s8 %v3320
        %v3322 = vlaneseq
        %v3323 = vshrl.u32 %v3322, 7
        %v3324 = vsub.s32 %v3321, %v3323
        %v3325 = vrot.slane %v3317, %v3324
        %v3327 = vunpack.c.l.s4 1934713408
        %v3328 = vunpack.c.0.s8 %v3327
        %v3329 = vlaneseq
        %v3330 = vshrl.u32 %v3329, 7
        %v3331 = vsub.s32 %v3328, %v3330
        %v3332 = vrot.slane %v3318, %v3331
        %v3333 = vcombine.low %v3277, %v3309
        %v3334 = vcombine.high %v3277, %v3309
        %v3335 = vcombine.low %v3284, %v3316
        %v3336 = vcombine.high %v3284, %v3316
        %v3337 = vcombine.low %v3293, %v3325
        %v3338 = vcombine.high %v3293, %v3325
        %v3339 = vcombine.low %v3300, %v3332
        %v3340 = vcombine.high %v3300, %v3332
        %v3341 = vcombine.low %v2318, %v2326
        %v3342 = vcombine.high %v2318, %v2326
        %v3344 = vunpack.c.l.s4 1983009808
        %v3345 = vunpack.c.0.s8 %v3344
        %v3346 = vlaneseq
        %v3347 = vshrl.u32 %v3346, 7
        %v3348 = vsub.s32 %v3345, %v3347
        %v3349 = vrot.slane %v3341, %v3348
        %v3351 = vunpack.c.l.s4 1983009808
        %v3352 = vunpack.c.0.s8 %v3351
        %v3353 = vlaneseq
        %v3354 = vshrl.u32 %v3353, 7
        %v3355 = vsub.s32 %v3352, %v3354
        %v3356 = vrot.slane %v3342, %v3355
        %v3357 = vcombine.low %v2322, %v2330
        %v3358 = vcombine.high %v2322, %v2330
        %v3360 = vunpack.c.l.s4 1983009808
        %v3361 = vunpack.c.0.s8 %v3360
        %v3362 = vlaneseq
        %v3363 = vshrl.u32 %v3362, 7
        %v3364 = vsub.s32 %v3361, %v3363
        %v3365 = vrot.slane %v3357, %v3364
        %v3367 = vunpack.c.l.s4 1983009808
        %v3368 = vunpack.c.0.s8 %v3367
        %v3369 = vlaneseq
        %v3370 = vshrl.u32 %v3369, 7
        %v3371 = vsub.s32 %v3368, %v3370
        %v3372 = vrot.slane %v3358, %v3371
        %v3373 = vcombine.low %v2334, %v2342
        %v3374 = vcombine.high %v2334, %v2342
        %v3376 = vunpack.c.l.s4 1983009808
        %v3377 = vunpack.c.0.s8 %v3376
        %v3378 = vlaneseq
        %v3379 = vshrl.u32 %v3378, 7
        %v3380 = vsub.s32 %v3377, %v3379
        %v3381 = vrot.slane %v3373, %v3380
        %v3383 = vunpack.c.l.s4 1983009808
        %v3384 = vunpack.c.0.s8 %v3383
        %v3385 = vlaneseq
        %v3386 = vshrl.u32 %v3385, 7
        %v3387 = vsub.s32 %v3384, %v3386
        %v3388 = vrot.slane %v3374, %v3387
        %v3389 = vcombine.low %v2338, %v2346
        %v3390 = vcombine.high %v2338, %v2346
        %v3392 = vunpack.c.l.s4 1983009808
        %v3393 = vunpack.c.0.s8 %v3392
        %v3394 = vlaneseq
        %v3395 = vshrl.u32 %v3394, 7
        %v3396 = vsub.s32 %v3393, %v3395
        %v3397 = vrot.slane %v3389, %v3396
        %v3399 = vunpack.c.l.s4 1983009808
        %v3400 = vunpack.c.0.s8 %v3399
        %v3401 = vlaneseq
        %v3402 = vshrl.u32 %v3401, 7
        %v3403 = vsub.s32 %v3400, %v3402
        %v3404 = vrot.slane %v3390, %v3403
        %v3405 = vcombine.low %v3349, %v3365
        %v3406 = vcombine.high %v3349, %v3365
        %v3408 = vunpack.c.l.s4 1934713408
        %v3409 = vunpack.c.0.s8 %v3408
        %v3410 = vlaneseq
        %v3411 = vshrl.u32 %v3410, 7
        %v3412 = vsub.s32 %v3409, %v3411
        %v3413 = vrot.slane %v3405, %v3412
        %v3415 = vunpack.c.l.s4 1934713408
        %v3416 = vunpack.c.0.s8 %v3415
        %v3417 = vlaneseq
        %v3418 = vshrl.u32 %v3417, 7
        %v3419 = vsub.s32 %v3416, %v3418
        %v3420 = vrot.slane %v3406, %v3419
        %v3421 = vcombine.low %v3356, %v3372
        %v3422 = vcombine.high %v3356, %v3372
        %v3424 = vunpack.c.l.s4 1934713408
        %v3425 = vunpack.c.0.s8 %v3424
        %v3426 = vlaneseq
        %v3427 = vshrl.u32 %v3426, 7
        %v3428 = vsub.s32 %v3425, %v3427
        %v3429 = vrot.slane %v3421, %v3428
        %v3431 = vunpack.c.l.s4 1934713408
        %v3432 = vunpack.c.0.s8 %v3431
        %v3433 = vlaneseq
        %v3434 = vshrl.u32 %v3433, 7
        %v3435 = vsub.s32 %v3432, %v3434
        %v3436 = vrot.slane %v3422, %v3435
        %v3437 = vcombine.low %v3381, %v3397
        %v3438 = vcombine.high %v3381, %v3397
        %v3440 = vunpack.c.l.s4 1934713408
        %v3441 = vunpack.c.0.s8 %v3440
        %v3442 = vlaneseq
        %v3443 = vshrl.u32 %v3442, 7
        %v3444 = vsub.s32 %v3441, %v3443
        %v3445 = vrot.slane %v3437, %v3444
        %v3447 = vunpack.c.l.s4 1934713408
        %v3448 = vunpack.c.0.s8 %v3447
        %v3449 = vlaneseq
        %v3450 = vshrl.u32 %v3449, 7
        %v3451 = vsub.s32 %v3448, %v3450
        %v3452 = vrot.slane %v3438, %v3451
        %v3453 = vcombine.low %v3388, %v3404
        %v3454 = vcombine.high %v3388, %v3404
        %v3456 = vunpack.c.l.s4 1934713408
        %v3457 = vunpack.c.0.s8 %v3456
        %v3458 = vlaneseq
        %v3459 = vshrl.u32 %v3458, 7
        %v3460 = vsub.s32 %v3457, %v3459
        %v3461 = vrot.slane %v3453, %v3460
        %v3463 = vunpack.c.l.s4 1934713408
        %v3464 = vunpack.c.0.s8 %v3463
        %v3465 = vlaneseq
        %v3466 = vshrl.u32 %v3465, 7
        %v3467 = vsub.s32 %v3464, %v3466
        %v3468 = vrot.slane %v3454, %v3467
        %v3469 = vcombine.low %v3413, %v3445
        %v3470 = vcombine.high %v3413, %v3445
        %v3471 = vcombine.low %v3420, %v3452
        %v3472 = vcombine.high %v3420, %v3452
        %v3473 = vcombine.low %v3429, %v3461
        %v3474 = vcombine.high %v3429, %v3461
        %v3475 = vcombine.low %v3436, %v3468
        %v3476 = vcombine.high %v3436, %v3468
        %v3477 = vcombine.low %v2350, %v2358
        %v3478 = vcombine.high %v2350, %v2358
        %v3480 = vunpack.c.l.s4 1983009808
        %v3481 = vunpack.c.0.s8 %v3480
        %v3482 = vlaneseq
        %v3483 = vshrl.u32 %v3482, 7
        %v3484 = vsub.s32 %v3481, %v3483
        %v3485 = vrot.slane %v3477, %v3484
        %v3487 = vunpack.c.l.s4 1983009808
        %v3488 = vunpack.c.0.s8 %v3487
        %v3489 = vlaneseq
        %v3490 = vshrl.u32 %v3489, 7
        %v3491 = vsub.s32 %v3488, %v3490
        %v3492 = vrot.slane %v3478, %v3491
        %v3493 = vcombine.low %v2354, %v2362
        %v3494 = vcombine.high %v2354, %v2362
        %v3496 = vunpack.c.l.s4 1983009808
        %v3497 = vunpack.c.0.s8 %v3496
        %v3498 = vlaneseq
        %v3499 = vshrl.u32 %v3498, 7
        %v3500 = vsub.s32 %v3497, %v3499
        %v3501 = vrot.slane %v3493, %v3500
        %v3503 = vunpack.c.l.s4 1983009808
        %v3504 = vunpack.c.0.s8 %v3503
        %v3505 = vlaneseq
        %v3506 = vshrl.u32 %v3505, 7
        %v3507 = vsub.s32 %v3504, %v3506
        %v3508 = vrot.slane %v3494, %v3507
        %v3509 = vcombine.low %v2366, %v2374
        %v3510 = vcombine.high %v2366, %v2374
        %v3512 = vunpack.c.l.s4 1983009808
        %v3513 = vunpack.c.0.s8 %v3512
        %v3514 = vlaneseq
        %v3515 = vshrl.u32 %v3514, 7
        %v3516 = vsub.s32 %v3513, %v3515
        %v3517 = vrot.slane %v3509, %v3516
        %v3519 = vunpack.c.l.s4 1983009808
        %v3520 = vunpack.c.0.s8 %v3519
        %v3521 = vlaneseq
        %v3522 = vshrl.u32 %v3521, 7
        %v3523 = vsub.s32 %v3520, %v3522
        %v3524 = vrot.slane %v3510, %v3523
        %v3525 = vcombine.low %v2370, %v2378
        %v3526 = vcombine.high %v2370, %v2378
        %v3528 = vunpack.c.l.s4 1983009808
        %v3529 = vunpack.c.0.s8 %v3528
        %v3530 = vlaneseq
        %v3531 = vshrl.u32 %v3530, 7
        %v3532 = vsub.s32 %v3529, %v3531
        %v3533 = vrot.slane %v3525, %v3532
        %v3535 = vunpack.c.l.s4 1983009808
        %v3536 = vunpack.c.0.s8 %v3535
        %v3537 = vlaneseq
        %v3538 = vshrl.u32 %v3537, 7
        %v3539 = vsub.s32 %v3536, %v3538
        %v3540 = vrot.slane %v3526, %v3539
        %v3541 = vcombine.low %v3485, %v3501
        %v3542 = vcombine.high %v3485, %v3501
        %v3544 = vunpack.c.l.s4 1934713408
        %v3545 = vunpack.c.0.s8 %v3544
        %v3546 = vlaneseq
        %v3547 = vshrl.u32 %v3546, 7
        %v3548 = vsub.s32 %v3545, %v3547
        %v3549 = vrot.slane %v3541, %v3548
        %v3551 = vunpack.c.l.s4 1934713408
        %v3552 = vunpack.c.0.s8 %v3551
        %v3553 = vlaneseq
        %v3554 = vshrl.u32 %v3553, 7
        %v3555 = vsub.s32 %v3552, %v3554
        %v3556 = vrot.slane %v3542, %v3555
        %v3557 = vcombine.low %v3492, %v3508
        %v3558 = vcombine.high %v3492, %v3508
        %v3560 = vunpack.c.l.s4 1934713408
        %v3561 = vunpack.c.0.s8 %v3560
        %v3562 = vlaneseq
        %v3563 = vshrl.u32 %v3562, 7
        %v3564 = vsub.s32 %v3561, %v3563
        %v3565 = vrot.slane %v3557, %v3564
        %v3567 = vunpack.c.l.s4 1934713408
        %v3568 = vunpack.c.0.s8 %v3567
        %v3569 = vlaneseq
        %v3570 = vshrl.u32 %v3569, 7
        %v3571 = vsub.s32 %v3568, %v3570
        %v3572 = vrot.slane %v3558, %v3571
        %v3573 = vcombine.low %v3517, %v3533
        %v3574 = vcombine.high %v3517, %v3533
        %v3576 = vunpack.c.l.s4 1934713408
        %v3577 = vunpack.c.0.s8 %v3576
        %v3578 = vlaneseq
        %v3579 = vshrl.u32 %v3578, 7
        %v3580 = vsub.s32 %v3577, %v3579
        %v3581 = vrot.slane %v3573, %v3580
        %v3583 = vunpack.c.l.s4 1934713408
        %v3584 = vunpack.c.0.s8 %v3583
        %v3585 = vlaneseq
        %v3586 = vshrl.u32 %v3585, 7
        %v3587 = vsub.s32 %v3584, %v3586
        %v3588 = vrot.slane %v3574, %v3587
        %v3589 = vcombine.low %v3524, %v3540
        %v3590 = vcombine.high %v3524, %v3540
        %v3592 = vunpack.c.l.s4 1934713408
        %v3593 = vunpack.c.0.s8 %v3592
        %v3594 = vlaneseq
        %v3595 = vshrl.u32 %v3594, 7
        %v3596 = vsub.s32 %v3593, %v3595
        %v3597 = vrot.slane %v3589, %v3596
        %v3599 = vunpack.c.l.s4 1934713408
        %v3600 = vunpack.c.0.s8 %v3599
        %v3601 = vlaneseq
        %v3602 = vshrl.u32 %v3601, 7
        %v3603 = vsub.s32 %v3600, %v3602
        %v3604 = vrot.slane %v3590, %v3603
        %v3605 = vcombine.low %v3549, %v3581
        %v3606 = vcombine.high %v3549, %v3581
        %v3607 = vcombine.low %v3556, %v3588
        %v3608 = vcombine.high %v3556, %v3588
        %v3609 = vcombine.low %v3565, %v3597
        %v3610 = vcombine.high %v3565, %v3597
        %v3611 = vcombine.low %v3572, %v3604
        %v3612 = vcombine.high %v3572, %v3604
        %v3613 = vcombine.low %v2382, %v2390
        %v3614 = vcombine.high %v2382, %v2390
        %v3616 = vunpack.c.l.s4 1983009808
        %v3617 = vunpack.c.0.s8 %v3616
        %v3618 = vlaneseq
        %v3619 = vshrl.u32 %v3618, 7
        %v3620 = vsub.s32 %v3617, %v3619
        %v3621 = vrot.slane %v3613, %v3620
        %v3623 = vunpack.c.l.s4 1983009808
        %v3624 = vunpack.c.0.s8 %v3623
        %v3625 = vlaneseq
        %v3626 = vshrl.u32 %v3625, 7
        %v3627 = vsub.s32 %v3624, %v3626
        %v3628 = vrot.slane %v3614, %v3627
        %v3629 = vcombine.low %v2386, %v2394
        %v3630 = vcombine.high %v2386, %v2394
        %v3632 = vunpack.c.l.s4 1983009808
        %v3633 = vunpack.c.0.s8 %v3632
        %v3634 = vlaneseq
        %v3635 = vshrl.u32 %v3634, 7
        %v3636 = vsub.s32 %v3633, %v3635
        %v3637 = vrot.slane %v3629, %v3636
        %v3639 = vunpack.c.l.s4 1983009808
        %v3640 = vunpack.c.0.s8 %v3639
        %v3641 = vlaneseq
        %v3642 = vshrl.u32 %v3641, 7
        %v3643 = vsub.s32 %v3640, %v3642
        %v3644 = vrot.slane %v3630, %v3643
        %v3645 = vcombine.low %v2398, %v2406
        %v3646 = vcombine.high %v2398, %v2406
        %v3648 = vunpack.c.l.s4 1983009808
        %v3649 = vunpack.c.0.s8 %v3648
        %v3650 = vlaneseq
        %v3651 = vshrl.u32 %v3650, 7
        %v3652 = vsub.s32 %v3649, %v3651
        %v3653 = vrot.slane %v3645, %v3652
        %v3655 = vunpack.c.l.s4 1983009808
        %v3656 = vunpack.c.0.s8 %v3655
        %v3657 = vlaneseq
        %v3658 = vshrl.u32 %v3657, 7
        %v3659 = vsub.s32 %v3656, %v3658
        %v3660 = vrot.slane %v3646, %v3659
        %v3661 = vcombine.low %v2402, %v2410
        %v3662 = vcombine.high %v2402, %v2410
        %v3664 = vunpack.c.l.s4 1983009808
        %v3665 = vunpack.c.0.s8 %v3664
        %v3666 = vlaneseq
        %v3667 = vshrl.u32 %v3666, 7
        %v3668 = vsub.s32 %v3665, %v3667
        %v3669 = vrot.slane %v3661, %v3668
        %v3671 = vunpack.c.l.s4 1983009808
        %v3672 = vunpack.c.0.s8 %v3671
        %v3673 = vlaneseq
        %v3674 = vshrl.u32 %v3673, 7
        %v3675 = vsub.s32 %v3672, %v3674
        %v3676 = vrot.slane %v3662, %v3675
        %v3677 = vcombine.low %v3621, %v3637
        %v3678 = vcombine.high %v3621, %v3637
        %v3680 = vunpack.c.l.s4 1934713408
        %v3681 = vunpack.c.0.s8 %v3680
        %v3682 = vlaneseq
        %v3683 = vshrl.u32 %v3682, 7
        %v3684 = vsub.s32 %v3681, %v3683
        %v3685 = vrot.slane %v3677, %v3684
        %v3687 = vunpack.c.l.s4 1934713408
        %v3688 = vunpack.c.0.s8 %v3687
        %v3689 = vlaneseq
        %v3690 = vshrl.u32 %v3689, 7
        %v3691 = vsub.s32 %v3688, %v3690
        %v3692 = vrot.slane %v3678, %v3691
        %v3693 = vcombine.low %v3628, %v3644
        %v3694 = vcombine.high %v3628, %v3644
        %v3696 = vunpack.c.l.s4 1934713408
        %v3697 = vunpack.c.0.s8 %v3696
        %v3698 = vlaneseq
        %v3699 = vshrl.u32 %v3698, 7
        %v3700 = vsub.s32 %v3697, %v3699
        %v3701 = vrot.slane %v3693, %v3700
        %v3703 = vunpack.c.l.s4 1934713408
        %v3704 = vunpack.c.0.s8 %v3703
        %v3705 = vlaneseq
        %v3706 = vshrl.u32 %v3705, 7
        %v3707 = vsub.s32 %v3704, %v3706
        %v3708 = vrot.slane %v3694, %v3707
        %v3709 = vcombine.low %v3653, %v3669
        %v3710 = vcombine.high %v3653, %v3669
        %v3712 = vunpack.c.l.s4 1934713408
        %v3713 = vunpack.c.0.s8 %v3712
        %v3714 = vlaneseq
        %v3715 = vshrl.u32 %v3714, 7
        %v3716 = vsub.s32 %v3713, %v3715
        %v3717 = vrot.slane %v3709, %v3716
        %v3719 = vunpack.c.l.s4 1934713408
        %v3720 = vunpack.c.0.s8 %v3719
        %v3721 = vlaneseq
        %v3722 = vshrl.u32 %v3721, 7
        %v3723 = vsub.s32 %v3720, %v3722
        %v3724 = vrot.slane %v3710, %v3723
        %v3725 = vcombine.low %v3660, %v3676
        %v3726 = vcombine.high %v3660, %v3676
        %v3728 = vunpack.c.l.s4 1934713408
        %v3729 = vunpack.c.0.s8 %v3728
        %v3730 = vlaneseq
        %v3731 = vshrl.u32 %v3730, 7
        %v3732 = vsub.s32 %v3729, %v3731
        %v3733 = vrot.slane %v3725, %v3732
        %v3735 = vunpack.c.l.s4 1934713408
        %v3736 = vunpack.c.0.s8 %v3735
        %v3737 = vlaneseq
        %v3738 = vshrl.u32 %v3737, 7
        %v3739 = vsub.s32 %v3736, %v3738
        %v3740 = vrot.slane %v3726, %v3739
        %v3741 = vcombine.low %v3685, %v3717
        %v3742 = vcombine.high %v3685, %v3717
        %v3743 = vcombine.low %v3692, %v3724
        %v3744 = vcombine.high %v3692, %v3724
        %v3745 = vcombine.low %v3701, %v3733
        %v3746 = vcombine.high %v3701, %v3733
        %v3747 = vcombine.low %v3708, %v3740
        %v3748 = vcombine.high %v3708, %v3740
        %v3749 = vcombine.low %v2414, %v2422
        %v3750 = vcombine.high %v2414, %v2422
        %v3752 = vunpack.c.l.s4 1983009808
        %v3753 = vunpack.c.0.s8 %v3752
        %v3754 = vlaneseq
        %v3755 = vshrl.u32 %v3754, 7
        %v3756 = vsub.s32 %v3753, %v3755
        %v3757 = vrot.slane %v3749, %v3756
        %v3759 = vunpack.c.l.s4 1983009808
        %v3760 = vunpack.c.0.s8 %v3759
        %v3761 = vlaneseq
        %v3762 = vshrl.u32 %v3761, 7
        %v3763 = vsub.s32 %v3760, %v3762
        %v3764 = vrot.slane %v3750, %v3763
        %v3765 = vcombine.low %v2418, %v2426
        %v3766 = vcombine.high %v2418, %v2426
        %v3768 = vunpack.c.l.s4 1983009808
        %v3769 = vunpack.c.0.s8 %v3768
        %v3770 = vlaneseq
        %v3771 = vshrl.u32 %v3770, 7
        %v3772 = vsub.s32 %v3769, %v3771
        %v3773 = vrot.slane %v3765, %v3772
        %v3775 = vunpack.c.l.s4 1983009808
        %v3776 = vunpack.c.0.s8 %v3775
        %v3777 = vlaneseq
        %v3778 = vshrl.u32 %v3777, 7
        %v3779 = vsub.s32 %v3776, %v3778
        %v3780 = vrot.slane %v3766, %v3779
        %v3781 = vcombine.low %v2430, %v2438
        %v3782 = vcombine.high %v2430, %v2438
        %v3784 = vunpack.c.l.s4 1983009808
        %v3785 = vunpack.c.0.s8 %v3784
        %v3786 = vlaneseq
        %v3787 = vshrl.u32 %v3786, 7
        %v3788 = vsub.s32 %v3785, %v3787
        %v3789 = vrot.slane %v3781, %v3788
        %v3791 = vunpack.c.l.s4 1983009808
        %v3792 = vunpack.c.0.s8 %v3791
        %v3793 = vlaneseq
        %v3794 = vshrl.u32 %v3793, 7
        %v3795 = vsub.s32 %v3792, %v3794
        %v3796 = vrot.slane %v3782, %v3795
        %v3797 = vcombine.low %v2434, %v2442
        %v3798 = vcombine.high %v2434, %v2442
        %v3800 = vunpack.c.l.s4 1983009808
        %v3801 = vunpack.c.0.s8 %v3800
        %v3802 = vlaneseq
        %v3803 = vshrl.u32 %v3802, 7
        %v3804 = vsub.s32 %v3801, %v3803
        %v3805 = vrot.slane %v3797, %v3804
        %v3807 = vunpack.c.l.s4 1983009808
        %v3808 = vunpack.c.0.s8 %v3807
        %v3809 = vlaneseq
        %v3810 = vshrl.u32 %v3809, 7
        %v3811 = vsub.s32 %v3808, %v3810
        %v3812 = vrot.slane %v3798, %v3811
        %v3813 = vcombine.low %v3757, %v3773
        %v3814 = vcombine.high %v3757, %v3773
        %v3816 = vunpack.c.l.s4 1934713408
        %v3817 = vunpack.c.0.s8 %v3816
        %v3818 = vlaneseq
        %v3819 = vshrl.u32 %v3818, 7
        %v3820 = vsub.s32 %v3817, %v3819
        %v3821 = vrot.slane %v3813, %v3820
        %v3823 = vunpack.c.l.s4 1934713408
        %v3824 = vunpack.c.0.s8 %v3823
        %v3825 = vlaneseq
        %v3826 = vshrl.u32 %v3825, 7
        %v3827 = vsub.s32 %v3824, %v3826
        %v3828 = vrot.slane %v3814, %v3827
        %v3829 = vcombine.low %v3764, %v3780
        %v3830 = vcombine.high %v3764, %v3780
        %v3832 = vunpack.c.l.s4 1934713408
        %v3833 = vunpack.c.0.s8 %v3832
        %v3834 = vlaneseq
        %v3835 = vshrl.u32 %v3834, 7
        %v3836 = vsub.s32 %v3833, %v3835
        %v3837 = vrot.slane %v3829, %v3836
        %v3839 = vunpack.c.l.s4 1934713408
        %v3840 = vunpack.c.0.s8 %v3839
        %v3841 = vlaneseq
        %v3842 = vshrl.u32 %v3841, 7
        %v3843 = vsub.s32 %v3840, %v3842
        %v3844 = vrot.slane %v3830, %v3843
        %v3845 = vcombine.low %v3789, %v3805
        %v3846 = vcombine.high %v3789, %v3805
        %v3848 = vunpack.c.l.s4 1934713408
        %v3849 = vunpack.c.0.s8 %v3848
        %v3850 = vlaneseq
        %v3851 = vshrl.u32 %v3850, 7
        %v3852 = vsub.s32 %v3849, %v3851
        %v3853 = vrot.slane %v3845, %v3852
        %v3855 = vunpack.c.l.s4 1934713408
        %v3856 = vunpack.c.0.s8 %v3855
        %v3857 = vlaneseq
        %v3858 = vshrl.u32 %v3857, 7
        %v3859 = vsub.s32 %v3856, %v3858
        %v3860 = vrot.slane %v3846, %v3859
        %v3861 = vcombine.low %v3796, %v3812
        %v3862 = vcombine.high %v3796, %v3812
        %v3864 = vunpack.c.l.s4 1934713408
        %v3865 = vunpack.c.0.s8 %v3864
        %v3866 = vlaneseq
        %v3867 = vshrl.u32 %v3866, 7
        %v3868 = vsub.s32 %v3865, %v3867
        %v3869 = vrot.slane %v3861, %v3868
        %v3871 = vunpack.c.l.s4 1934713408
        %v3872 = vunpack.c.0.s8 %v3871
        %v3873 = vlaneseq
        %v3874 = vshrl.u32 %v3873, 7
        %v3875 = vsub.s32 %v3872, %v3874
        %v3876 = vrot.slane %v3862, %v3875
        %v3877 = vcombine.low %v3821, %v3853
        %v3878 = vcombine.high %v3821, %v3853
        %v3879 = vcombine.low %v3828, %v3860
        %v3880 = vcombine.high %v3828, %v3860
        %v3881 = vcombine.low %v3837, %v3869
        %v3882 = vcombine.high %v3837, %v3869
        %v3883 = vcombine.low %v3844, %v3876
        %v3884 = vcombine.high %v3844, %v3876
        %v3885 = vcombine.low %v2446, %v2454
        %v3886 = vcombine.high %v2446, %v2454
        %v3888 = vunpack.c.l.s4 1983009808
        %v3889 = vunpack.c.0.s8 %v3888
        %v3890 = vlaneseq
        %v3891 = vshrl.u32 %v3890, 7
        %v3892 = vsub.s32 %v3889, %v3891
        %v3893 = vrot.slane %v3885, %v3892
        %v3895 = vunpack.c.l.s4 1983009808
        %v3896 = vunpack.c.0.s8 %v3895
        %v3897 = vlaneseq
        %v3898 = vshrl.u32 %v3897, 7
        %v3899 = vsub.s32 %v3896, %v3898
        %v3900 = vrot.slane %v3886, %v3899
        %v3901 = vcombine.low %v2450, %v2458
        %v3902 = vcombine.high %v2450, %v2458
        %v3904 = vunpack.c.l.s4 1983009808
        %v3905 = vunpack.c.0.s8 %v3904
        %v3906 = vlaneseq
        %v3907 = vshrl.u32 %v3906, 7
        %v3908 = vsub.s32 %v3905, %v3907
        %v3909 = vrot.slane %v3901, %v3908
        %v3911 = vunpack.c.l.s4 1983009808
        %v3912 = vunpack.c.0.s8 %v3911
        %v3913 = vlaneseq
        %v3914 = vshrl.u32 %v3913, 7
        %v3915 = vsub.s32 %v3912, %v3914
        %v3916 = vrot.slane %v3902, %v3915
        %v3917 = vcombine.low %v3893, %v3909
        %v3918 = vcombine.high %v3893, %v3909
        %v3920 = vunpack.c.l.s4 1934713408
        %v3921 = vunpack.c.0.s8 %v3920
        %v3922 = vlaneseq
        %v3923 = vshrl.u32 %v3922, 7
        %v3924 = vsub.s32 %v3921, %v3923
        %v3925 = vrot.slane %v3917, %v3924
        %v3927 = vunpack.c.l.s4 1934713408
        %v3928 = vunpack.c.0.s8 %v3927
        %v3929 = vlaneseq
        %v3930 = vshrl.u32 %v3929, 7
        %v3931 = vsub.s32 %v3928, %v3930
        %v3932 = vrot.slane %v3918, %v3931
        %v3933 = vcombine.low %v3900, %v3916
        %v3934 = vcombine.high %v3900, %v3916
        %v3936 = vunpack.c.l.s4 1934713408
        %v3937 = vunpack.c.0.s8 %v3936
        %v3938 = vlaneseq
        %v3939 = vshrl.u32 %v3938, 7
        %v3940 = vsub.s32 %v3937, %v3939
        %v3941 = vrot.slane %v3933, %v3940
        %v3943 = vunpack.c.l.s4 1934713408
        %v3944 = vunpack.c.0.s8 %v3943
        %v3945 = vlaneseq
        %v3946 = vshrl.u32 %v3945, 7
        %v3947 = vsub.s32 %v3944, %v3946
        %v3948 = vrot.slane %v3934, %v3947
        %v3949 = vcombine.low %v3925, %v3413
        %v3950 = vcombine.high %v3925, %v3413
        %v3951 = vcombine.low %v3932, %v3420
        %v3952 = vcombine.high %v3932, %v3420
        %v3953 = vcombine.low %v3941, %v3429
        %v3954 = vcombine.high %v3941, %v3429
        %v3955 = vcombine.low %v3948, %v3436
        %v3956 = vcombine.high %v3948, %v3436
        %v3957 = vcombine.low %v2462, %v2470
        %v3958 = vcombine.high %v2462, %v2470
        %v3960 = vunpack.c.l.s4 1983009808
        %v3961 = vunpack.c.0.s8 %v3960
        %v3962 = vlaneseq
        %v3963 = vshrl.u32 %v3962, 7
        %v3964 = vsub.s32 %v3961, %v3963
        %v3965 = vrot.slane %v3957, %v3964
        %v3967 = vunpack.c.l.s4 1983009808
        %v3968 = vunpack.c.0.s8 %v3967
        %v3969 = vlaneseq
        %v3970 = vshrl.u32 %v3969, 7
        %v3971 = vsub.s32 %v3968, %v3970
        %v3972 = vrot.slane %v3958, %v3971
        %v3973 = vcombine.low %v2466, %v2474
        %v3974 = vcombine.high %v2466, %v2474
        %v3976 = vunpack.c.l.s4 1983009808
        %v3977 = vunpack.c.0.s8 %v3976
        %v3978 = vlaneseq
        %v3979 = vshrl.u32 %v3978, 7
        %v3980 = vsub.s32 %v3977, %v3979
        %v3981 = vrot.slane %v3973, %v3980
        %v3983 = vunpack.c.l.s4 1983009808
        %v3984 = vunpack.c.0.s8 %v3983
        %v3985 = vlaneseq
        %v3986 = vshrl.u32 %v3985, 7
        %v3987 = vsub.s32 %v3984, %v3986
        %v3988 = vrot.slane %v3974, %v3987
        %v3989 = vcombine.low %v2478, %v2486
        %v3990 = vcombine.high %v2478, %v2486
        %v3992 = vunpack.c.l.s4 1983009808
        %v3993 = vunpack.c.0.s8 %v3992
        %v3994 = vlaneseq
        %v3995 = vshrl.u32 %v3994, 7
        %v3996 = vsub.s32 %v3993, %v3995
        %v3997 = vrot.slane %v3989, %v3996
        %v3999 = vunpack.c.l.s4 1983009808
        %v4000 = vunpack.c.0.s8 %v3999
        %v4001 = vlaneseq
        %v4002 = vshrl.u32 %v4001, 7
        %v4003 = vsub.s32 %v4000, %v4002
        %v4004 = vrot.slane %v3990, %v4003
        %v4005 = vcombine.low %v2482, %v2490
        %v4006 = vcombine.high %v2482, %v2490
        %v4008 = vunpack.c.l.s4 1983009808
        %v4009 = vunpack.c.0.s8 %v4008
        %v4010 = vlaneseq
        %v4011 = vshrl.u32 %v4010, 7
        %v4012 = vsub.s32 %v4009, %v4011
        %v4013 = vrot.slane %v4005, %v4012
        %v4015 = vunpack.c.l.s4 1983009808
        %v4016 = vunpack.c.0.s8 %v4015
        %v4017 = vlaneseq
        %v4018 = vshrl.u32 %v4017, 7
        %v4019 = vsub.s32 %v4016, %v4018
        %v4020 = vrot.slane %v4006, %v4019
        %v4021 = vcombine.low %v3965, %v3981
        %v4022 = vcombine.high %v3965, %v3981
        %v4024 = vunpack.c.l.s4 1934713408
        %v4025 = vunpack.c.0.s8 %v4024
        %v4026 = vlaneseq
        %v4027 = vshrl.u32 %v4026, 7
        %v4028 = vsub.s32 %v4025, %v4027
        %v4029 = vrot.slane %v4021, %v4028
        %v4031 = vunpack.c.l.s4 1934713408
        %v4032 = vunpack.c.0.s8 %v4031
        %v4033 = vlaneseq
        %v4034 = vshrl.u32 %v4033, 7
        %v4035 = vsub.s32 %v4032, %v4034
        %v4036 = vrot.slane %v4022, %v4035
        %v4037 = vcombine.low %v3972, %v3988
        %v4038 = vcombine.high %v3972, %v3988
        %v4040 = vunpack.c.l.s4 1934713408
        %v4041 = vunpack.c.0.s8 %v4040
        %v4042 = vlaneseq
        %v4043 = vshrl.u32 %v4042, 7
        %v4044 = vsub.s32 %v4041, %v4043
        %v4045 = vrot.slane %v4037, %v4044
        %v4047 = vunpack.c.l.s4 1934713408
        %v4048 = vunpack.c.0.s8 %v4047
        %v4049 = vlaneseq
        %v4050 = vshrl.u32 %v4049, 7
        %v4051 = vsub.s32 %v4048, %v4050
        %v4052 = vrot.slane %v4038, %v4051
        %v4053 = vcombine.low %v3997, %v4013
        %v4054 = vcombine.high %v3997, %v4013
        %v4056 = vunpack.c.l.s4 1934713408
        %v4057 = vunpack.c.0.s8 %v4056
        %v4058 = vlaneseq
        %v4059 = vshrl.u32 %v4058, 7
        %v4060 = vsub.s32 %v4057, %v4059
        %v4061 = vrot.slane %v4053, %v4060
        %v4063 = vunpack.c.l.s4 1934713408
        %v4064 = vunpack.c.0.s8 %v4063
        %v4065 = vlaneseq
        %v4066 = vshrl.u32 %v4065, 7
        %v4067 = vsub.s32 %v4064, %v4066
        %v4068 = vrot.slane %v4054, %v4067
        %v4069 = vcombine.low %v4004, %v4020
        %v4070 = vcombine.high %v4004, %v4020
        %v4072 = vunpack.c.l.s4 1934713408
        %v4073 = vunpack.c.0.s8 %v4072
        %v4074 = vlaneseq
        %v4075 = vshrl.u32 %v4074, 7
        %v4076 = vsub.s32 %v4073, %v4075
        %v4077 = vrot.slane %v4069, %v4076
        %v4079 = vunpack.c.l.s4 1934713408
        %v4080 = vunpack.c.0.s8 %v4079
        %v4081 = vlaneseq
        %v4082 = vshrl.u32 %v4081, 7
        %v4083 = vsub.s32 %v4080, %v4082
        %v4084 = vrot.slane %v4070, %v4083
        %v4085 = vcombine.low %v4029, %v4061
        %v4086 = vcombine.high %v4029, %v4061
        %v4087 = vcombine.low %v4036, %v4068
        %v4088 = vcombine.high %v4036, %v4068
        %v4089 = vcombine.low %v4045, %v4077
        %v4090 = vcombine.high %v4045, %v4077
        %v4091 = vcombine.low %v4052, %v4084
        %v4092 = vcombine.high %v4052, %v4084
        %v4093 = vcombine.low %v2494, %v2502
        %v4094 = vcombine.high %v2494, %v2502
        %v4096 = vunpack.c.l.s4 1983009808
        %v4097 = vunpack.c.0.s8 %v4096
        %v4098 = vlaneseq
        %v4099 = vshrl.u32 %v4098, 7
        %v4100 = vsub.s32 %v4097, %v4099
        %v4101 = vrot.slane %v4093, %v4100
        %v4103 = vunpack.c.l.s4 1983009808
        %v4104 = vunpack.c.0.s8 %v4103
        %v4105 = vlaneseq
        %v4106 = vshrl.u32 %v4105, 7
        %v4107 = vsub.s32 %v4104, %v4106
        %v4108 = vrot.slane %v4094, %v4107
        %v4109 = vcombine.low %v2498, %v2506
        %v4110 = vcombine.high %v2498, %v2506
        %v4112 = vunpack.c.l.s4 1983009808
        %v4113 = vunpack.c.0.s8 %v4112
        %v4114 = vlaneseq
        %v4115 = vshrl.u32 %v4114, 7
        %v4116 = vsub.s32 %v4113, %v4115
        %v4117 = vrot.slane %v4109, %v4116
        %v4119 = vunpack.c.l.s4 1983009808
        %v4120 = vunpack.c.0.s8 %v4119
        %v4121 = vlaneseq
        %v4122 = vshrl.u32 %v4121, 7
        %v4123 = vsub.s32 %v4120, %v4122
        %v4124 = vrot.slane %v4110, %v4123
        %v4125 = vcombine.low %v2510, %v2518
        %v4126 = vcombine.high %v2510, %v2518
        %v4128 = vunpack.c.l.s4 1983009808
        %v4129 = vunpack.c.0.s8 %v4128
        %v4130 = vlaneseq
        %v4131 = vshrl.u32 %v4130, 7
        %v4132 = vsub.s32 %v4129, %v4131
        %v4133 = vrot.slane %v4125, %v4132
        %v4135 = vunpack.c.l.s4 1983009808
        %v4136 = vunpack.c.0.s8 %v4135
        %v4137 = vlaneseq
        %v4138 = vshrl.u32 %v4137, 7
        %v4139 = vsub.s32 %v4136, %v4138
        %v4140 = vrot.slane %v4126, %v4139
        %v4141 = vcombine.low %v2514, %v2522
        %v4142 = vcombine.high %v2514, %v2522
        %v4144 = vunpack.c.l.s4 1983009808
        %v4145 = vunpack.c.0.s8 %v4144
        %v4146 = vlaneseq
        %v4147 = vshrl.u32 %v4146, 7
        %v4148 = vsub.s32 %v4145, %v4147
        %v4149 = vrot.slane %v4141, %v4148
        %v4151 = vunpack.c.l.s4 1983009808
        %v4152 = vunpack.c.0.s8 %v4151
        %v4153 = vlaneseq
        %v4154 = vshrl.u32 %v4153, 7
        %v4155 = vsub.s32 %v4152, %v4154
        %v4156 = vrot.slane %v4142, %v4155
        %v4157 = vcombine.low %v4101, %v4117
        %v4158 = vcombine.high %v4101, %v4117
        %v4160 = vunpack.c.l.s4 1934713408
        %v4161 = vunpack.c.0.s8 %v4160
        %v4162 = vlaneseq
        %v4163 = vshrl.u32 %v4162, 7
        %v4164 = vsub.s32 %v4161, %v4163
        %v4165 = vrot.slane %v4157, %v4164
        %v4167 = vunpack.c.l.s4 1934713408
        %v4168 = vunpack.c.0.s8 %v4167
        %v4169 = vlaneseq
        %v4170 = vshrl.u32 %v4169, 7
        %v4171 = vsub.s32 %v4168, %v4170
        %v4172 = vrot.slane %v4158, %v4171
        %v4173 = vcombine.low %v4108, %v4124
        %v4174 = vcombine.high %v4108, %v4124
        %v4176 = vunpack.c.l.s4 1934713408
        %v4177 = vunpack.c.0.s8 %v4176
        %v4178 = vlaneseq
        %v4179 = vshrl.u32 %v4178, 7
        %v4180 = vsub.s32 %v4177, %v4179
        %v4181 = vrot.slane %v4173, %v4180
        %v4183 = vunpack.c.l.s4 1934713408
        %v4184 = vunpack.c.0.s8 %v4183
        %v4185 = vlaneseq
        %v4186 = vshrl.u32 %v4185, 7
        %v4187 = vsub.s32 %v4184, %v4186
        %v4188 = vrot.slane %v4174, %v4187
        %v4189 = vcombine.low %v4133, %v4149
        %v4190 = vcombine.high %v4133, %v4149
        %v4192 = vunpack.c.l.s4 1934713408
        %v4193 = vunpack.c.0.s8 %v4192
        %v4194 = vlaneseq
        %v4195 = vshrl.u32 %v4194, 7
        %v4196 = vsub.s32 %v4193, %v4195
        %v4197 = vrot.slane %v4189, %v4196
        %v4199 = vunpack.c.l.s4 1934713408
        %v4200 = vunpack.c.0.s8 %v4199
        %v4201 = vlaneseq
        %v4202 = vshrl.u32 %v4201, 7
        %v4203 = vsub.s32 %v4200, %v4202
        %v4204 = vrot.slane %v4190, %v4203
        %v4205 = vcombine.low %v4140, %v4156
        %v4206 = vcombine.high %v4140, %v4156
        %v4208 = vunpack.c.l.s4 1934713408
        %v4209 = vunpack.c.0.s8 %v4208
        %v4210 = vlaneseq
        %v4211 = vshrl.u32 %v4210, 7
        %v4212 = vsub.s32 %v4209, %v4211
        %v4213 = vrot.slane %v4205, %v4212
        %v4215 = vunpack.c.l.s4 1934713408
        %v4216 = vunpack.c.0.s8 %v4215
        %v4217 = vlaneseq
        %v4218 = vshrl.u32 %v4217, 7
        %v4219 = vsub.s32 %v4216, %v4218
        %v4220 = vrot.slane %v4206, %v4219
        %v4221 = vcombine.low %v4165, %v4197
        %v4222 = vcombine.high %v4165, %v4197
        %v4223 = vcombine.low %v4172, %v4204
        %v4224 = vcombine.high %v4172, %v4204
        %v4225 = vcombine.low %v4181, %v4213
        %v4226 = vcombine.high %v4181, %v4213
        %v4227 = vcombine.low %v4188, %v4220
        %v4228 = vcombine.high %v4188, %v4220
        %v4229 = vcombine.low %v2526, %v2534
        %v4230 = vcombine.high %v2526, %v2534
        %v4232 = vunpack.c.l.s4 1983009808
        %v4233 = vunpack.c.0.s8 %v4232
        %v4234 = vlaneseq
        %v4235 = vshrl.u32 %v4234, 7
        %v4236 = vsub.s32 %v4233, %v4235
        %v4237 = vrot.slane %v4229, %v4236
        %v4239 = vunpack.c.l.s4 1983009808
        %v4240 = vunpack.c.0.s8 %v4239
        %v4241 = vlaneseq
        %v4242 = vshrl.u32 %v4241, 7
        %v4243 = vsub.s32 %v4240, %v4242
        %v4244 = vrot.slane %v4230, %v4243
        %v4245 = vcombine.low %v2530, %v2538
        %v4246 = vcombine.high %v2530, %v2538
        %v4248 = vunpack.c.l.s4 1983009808
        %v4249 = vunpack.c.0.s8 %v4248
        %v4250 = vlaneseq
        %v4251 = vshrl.u32 %v4250, 7
        %v4252 = vsub.s32 %v4249, %v4251
        %v4253 = vrot.slane %v4245, %v4252
        %v4255 = vunpack.c.l.s4 1983009808
        %v4256 = vunpack.c.0.s8 %v4255
        %v4257 = vlaneseq
        %v4258 = vshrl.u32 %v4257, 7
        %v4259 = vsub.s32 %v4256, %v4258
        %v4260 = vrot.slane %v4246, %v4259
        %v4261 = vcombine.low %v2542, %v2550
        %v4262 = vcombine.high %v2542, %v2550
        %v4264 = vunpack.c.l.s4 1983009808
        %v4265 = vunpack.c.0.s8 %v4264
        %v4266 = vlaneseq
        %v4267 = vshrl.u32 %v4266, 7
        %v4268 = vsub.s32 %v4265, %v4267
        %v4269 = vrot.slane %v4261, %v4268
        %v4271 = vunpack.c.l.s4 1983009808
        %v4272 = vunpack.c.0.s8 %v4271
        %v4273 = vlaneseq
        %v4274 = vshrl.u32 %v4273, 7
        %v4275 = vsub.s32 %v4272, %v4274
        %v4276 = vrot.slane %v4262, %v4275
        %v4277 = vcombine.low %v2546, %v2554
        %v4278 = vcombine.high %v2546, %v2554
        %v4280 = vunpack.c.l.s4 1983009808
        %v4281 = vunpack.c.0.s8 %v4280
        %v4282 = vlaneseq
        %v4283 = vshrl.u32 %v4282, 7
        %v4284 = vsub.s32 %v4281, %v4283
        %v4285 = vrot.slane %v4277, %v4284
        %v4287 = vunpack.c.l.s4 1983009808
        %v4288 = vunpack.c.0.s8 %v4287
        %v4289 = vlaneseq
        %v4290 = vshrl.u32 %v4289, 7
        %v4291 = vsub.s32 %v4288, %v4290
        %v4292 = vrot.slane %v4278, %v4291
        %v4293 = vcombine.low %v4237, %v4253
        %v4294 = vcombine.high %v4237, %v4253
        %v4296 = vunpack.c.l.s4 1934713408
        %v4297 = vunpack.c.0.s8 %v4296
        %v4298 = vlaneseq
        %v4299 = vshrl.u32 %v4298, 7
        %v4300 = vsub.s32 %v4297, %v4299
        %v4301 = vrot.slane %v4293, %v4300
        %v4303 = vunpack.c.l.s4 1934713408
        %v4304 = vunpack.c.0.s8 %v4303
        %v4305 = vlaneseq
        %v4306 = vshrl.u32 %v4305, 7
        %v4307 = vsub.s32 %v4304, %v4306
        %v4308 = vrot.slane %v4294, %v4307
        %v4309 = vcombine.low %v4244, %v4260
        %v4310 = vcombine.high %v4244, %v4260
        %v4312 = vunpack.c.l.s4 1934713408
        %v4313 = vunpack.c.0.s8 %v4312
        %v4314 = vlaneseq
        %v4315 = vshrl.u32 %v4314, 7
        %v4316 = vsub.s32 %v4313, %v4315
        %v4317 = vrot.slane %v4309, %v4316
        %v4319 = vunpack.c.l.s4 1934713408
        %v4320 = vunpack.c.0.s8 %v4319
        %v4321 = vlaneseq
        %v4322 = vshrl.u32 %v4321, 7
        %v4323 = vsub.s32 %v4320, %v4322
        %v4324 = vrot.slane %v4310, %v4323
        %v4325 = vcombine.low %v4269, %v4285
        %v4326 = vcombine.high %v4269, %v4285
        %v4328 = vunpack.c.l.s4 1934713408
        %v4329 = vunpack.c.0.s8 %v4328
        %v4330 = vlaneseq
        %v4331 = vshrl.u32 %v4330, 7
        %v4332 = vsub.s32 %v4329, %v4331
        %v4333 = vrot.slane %v4325, %v4332
        %v4335 = vunpack.c.l.s4 1934713408
        %v4336 = vunpack.c.0.s8 %v4335
        %v4337 = vlaneseq
        %v4338 = vshrl.u32 %v4337, 7
        %v4339 = vsub.s32 %v4336, %v4338
        %v4340 = vrot.slane %v4326, %v4339
        %v4341 = vcombine.low %v4276, %v4292
        %v4342 = vcombine.high %v4276, %v4292
        %v4344 = vunpack.c.l.s4 1934713408
        %v4345 = vunpack.c.0.s8 %v4344
        %v4346 = vlaneseq
        %v4347 = vshrl.u32 %v4346, 7
        %v4348 = vsub.s32 %v4345, %v4347
        %v4349 = vrot.slane %v4341, %v4348
        %v4351 = vunpack.c.l.s4 1934713408
        %v4352 = vunpack.c.0.s8 %v4351
        %v4353 = vlaneseq
        %v4354 = vshrl.u32 %v4353, 7
        %v4355 = vsub.s32 %v4352, %v4354
        %v4356 = vrot.slane %v4342, %v4355
        %v4357 = vcombine.low %v4301, %v4333
        %v4358 = vcombine.high %v4301, %v4333
        %v4359 = vcombine.low %v4308, %v4340
        %v4360 = vcombine.high %v4308, %v4340
        %v4361 = vcombine.low %v4317, %v4349
        %v4362 = vcombine.high %v4317, %v4349
        %v4363 = vcombine.low %v4324, %v4356
        %v4364 = vcombine.high %v4324, %v4356
        %v4365 = vcombine.low %v2558, %v2566
        %v4366 = vcombine.high %v2558, %v2566
        %v4368 = vunpack.c.l.s4 1983009808
        %v4369 = vunpack.c.0.s8 %v4368
        %v4370 = vlaneseq
        %v4371 = vshrl.u32 %v4370, 7
        %v4372 = vsub.s32 %v4369, %v4371
        %v4373 = vrot.slane %v4365, %v4372
        %v4375 = vunpack.c.l.s4 1983009808
        %v4376 = vunpack.c.0.s8 %v4375
        %v4377 = vlaneseq
        %v4378 = vshrl.u32 %v4377, 7
        %v4379 = vsub.s32 %v4376, %v4378
        %v4380 = vrot.slane %v4366, %v4379
        %v4381 = vcombine.low %v2562, %v2570
        %v4382 = vcombine.high %v2562, %v2570
        %v4384 = vunpack.c.l.s4 1983009808
        %v4385 = vunpack.c.0.s8 %v4384
        %v4386 = vlaneseq
        %v4387 = vshrl.u32 %v4386, 7
        %v4388 = vsub.s32 %v4385, %v4387
        %v4389 = vrot.slane %v4381, %v4388
        %v4391 = vunpack.c.l.s4 1983009808
        %v4392 = vunpack.c.0.s8 %v4391
        %v4393 = vlaneseq
        %v4394 = vshrl.u32 %v4393, 7
        %v4395 = vsub.s32 %v4392, %v4394
        %v4396 = vrot.slane %v4382, %v4395
        %v4397 = vcombine.low %v2574, %v2582
        %v4398 = vcombine.high %v2574, %v2582
        %v4400 = vunpack.c.l.s4 1983009808
        %v4401 = vunpack.c.0.s8 %v4400
        %v4402 = vlaneseq
        %v4403 = vshrl.u32 %v4402, 7
        %v4404 = vsub.s32 %v4401, %v4403
        %v4405 = vrot.slane %v4397, %v4404
        %v4407 = vunpack.c.l.s4 1983009808
        %v4408 = vunpack.c.0.s8 %v4407
        %v4409 = vlaneseq
        %v4410 = vshrl.u32 %v4409, 7
        %v4411 = vsub.s32 %v4408, %v4410
        %v4412 = vrot.slane %v4398, %v4411
        %v4413 = vcombine.low %v2578, %v2586
        %v4414 = vcombine.high %v2578, %v2586
        %v4416 = vunpack.c.l.s4 1983009808
        %v4417 = vunpack.c.0.s8 %v4416
        %v4418 = vlaneseq
        %v4419 = vshrl.u32 %v4418, 7
        %v4420 = vsub.s32 %v4417, %v4419
        %v4421 = vrot.slane %v4413, %v4420
        %v4423 = vunpack.c.l.s4 1983009808
        %v4424 = vunpack.c.0.s8 %v4423
        %v4425 = vlaneseq
        %v4426 = vshrl.u32 %v4425, 7
        %v4427 = vsub.s32 %v4424, %v4426
        %v4428 = vrot.slane %v4414, %v4427
        %v4429 = vcombine.low %v4373, %v4389
        %v4430 = vcombine.high %v4373, %v4389
        %v4432 = vunpack.c.l.s4 1934713408
        %v4433 = vunpack.c.0.s8 %v4432
        %v4434 = vlaneseq
        %v4435 = vshrl.u32 %v4434, 7
        %v4436 = vsub.s32 %v4433, %v4435
        %v4437 = vrot.slane %v4429, %v4436
        %v4439 = vunpack.c.l.s4 1934713408
        %v4440 = vunpack.c.0.s8 %v4439
        %v4441 = vlaneseq
        %v4442 = vshrl.u32 %v4441, 7
        %v4443 = vsub.s32 %v4440, %v4442
        %v4444 = vrot.slane %v4430, %v4443
        %v4445 = vcombine.low %v4380, %v4396
        %v4446 = vcombine.high %v4380, %v4396
        %v4448 = vunpack.c.l.s4 1934713408
        %v4449 = vunpack.c.0.s8 %v4448
        %v4450 = vlaneseq
        %v4451 = vshrl.u32 %v4450, 7
        %v4452 = vsub.s32 %v4449, %v4451
        %v4453 = vrot.slane %v4445, %v4452
        %v4455 = vunpack.c.l.s4 1934713408
        %v4456 = vunpack.c.0.s8 %v4455
        %v4457 = vlaneseq
        %v4458 = vshrl.u32 %v4457, 7
        %v4459 = vsub.s32 %v4456, %v4458
        %v4460 = vrot.slane %v4446, %v4459
        %v4461 = vcombine.low %v4405, %v4421
        %v4462 = vcombine.high %v4405, %v4421
        %v4464 = vunpack.c.l.s4 1934713408
        %v4465 = vunpack.c.0.s8 %v4464
        %v4466 = vlaneseq
        %v4467 = vshrl.u32 %v4466, 7
        %v4468 = vsub.s32 %v4465, %v4467
        %v4469 = vrot.slane %v4461, %v4468
        %v4471 = vunpack.c.l.s4 1934713408
        %v4472 = vunpack.c.0.s8 %v4471
        %v4473 = vlaneseq
        %v4474 = vshrl.u32 %v4473, 7
        %v4475 = vsub.s32 %v4472, %v4474
        %v4476 = vrot.slane %v4462, %v4475
        %v4477 = vcombine.low %v4412, %v4428
        %v4478 = vcombine.high %v4412, %v4428
        %v4480 = vunpack.c.l.s4 1934713408
        %v4481 = vunpack.c.0.s8 %v4480
        %v4482 = vlaneseq
        %v4483 = vshrl.u32 %v4482, 7
        %v4484 = vsub.s32 %v4481, %v4483
        %v4485 = vrot.slane %v4477, %v4484
        %v4487 = vunpack.c.l.s4 1934713408
        %v4488 = vunpack.c.0.s8 %v4487
        %v4489 = vlaneseq
        %v4490 = vshrl.u32 %v4489, 7
        %v4491 = vsub.s32 %v4488, %v4490
        %v4492 = vrot.slane %v4478, %v4491
        %v4493 = vcombine.low %v4437, %v4469
        %v4494 = vcombine.high %v4437, %v4469
        %v4495 = vcombine.low %v4444, %v4476
        %v4496 = vcombine.high %v4444, %v4476
        %v4497 = vcombine.low %v4453, %v4485
        %v4498 = vcombine.high %v4453, %v4485
        %v4499 = vcombine.low %v4460, %v4492
        %v4500 = vcombine.high %v4460, %v4492
        %v4501 = vcombine.low %v2590, %v2598
        %v4502 = vcombine.high %v2590, %v2598
        %v4504 = vunpack.c.l.s4 1983009808
        %v4505 = vunpack.c.0.s8 %v4504
        %v4506 = vlaneseq
        %v4507 = vshrl.u32 %v4506, 7
        %v4508 = vsub.s32 %v4505, %v4507
        %v4509 = vrot.slane %v4501, %v4508
        %v4511 = vunpack.c.l.s4 1983009808
        %v4512 = vunpack.c.0.s8 %v4511
        %v4513 = vlaneseq
        %v4514 = vshrl.u32 %v4513, 7
        %v4515 = vsub.s32 %v4512, %v4514
        %v4516 = vrot.slane %v4502, %v4515
        %v4517 = vcombine.low %v2594, %v2602
        %v4518 = vcombine.high %v2594, %v2602
        %v4520 = vunpack.c.l.s4 1983009808
        %v4521 = vunpack.c.0.s8 %v4520
        %v4522 = vlaneseq
        %v4523 = vshrl.u32 %v4522, 7
        %v4524 = vsub.s32 %v4521, %v4523
        %v4525 = vrot.slane %v4517, %v4524
        %v4527 = vunpack.c.l.s4 1983009808
        %v4528 = vunpack.c.0.s8 %v4527
        %v4529 = vlaneseq
        %v4530 = vshrl.u32 %v4529, 7
        %v4531 = vsub.s32 %v4528, %v4530
        %v4532 = vrot.slane %v4518, %v4531
        %v4533 = vcombine.low %v2606, %v2614
        %v4534 = vcombine.high %v2606, %v2614
        %v4536 = vunpack.c.l.s4 1983009808
        %v4537 = vunpack.c.0.s8 %v4536
        %v4538 = vlaneseq
        %v4539 = vshrl.u32 %v4538, 7
        %v4540 = vsub.s32 %v4537, %v4539
        %v4541 = vrot.slane %v4533, %v4540
        %v4543 = vunpack.c.l.s4 1983009808
        %v4544 = vunpack.c.0.s8 %v4543
        %v4545 = vlaneseq
        %v4546 = vshrl.u32 %v4545, 7
        %v4547 = vsub.s32 %v4544, %v4546
        %v4548 = vrot.slane %v4534, %v4547
        %v4549 = vcombine.low %v2610, %v2618
        %v4550 = vcombine.high %v2610, %v2618
        %v4552 = vunpack.c.l.s4 1983009808
        %v4553 = vunpack.c.0.s8 %v4552
        %v4554 = vlaneseq
        %v4555 = vshrl.u32 %v4554, 7
        %v4556 = vsub.s32 %v4553, %v4555
        %v4557 = vrot.slane %v4549, %v4556
        %v4559 = vunpack.c.l.s4 1983009808
        %v4560 = vunpack.c.0.s8 %v4559
        %v4561 = vlaneseq
        %v4562 = vshrl.u32 %v4561, 7
        %v4563 = vsub.s32 %v4560, %v4562
        %v4564 = vrot.slane %v4550, %v4563
        %v4565 = vcombine.low %v4509, %v4525
        %v4566 = vcombine.high %v4509, %v4525
        %v4568 = vunpack.c.l.s4 1934713408
        %v4569 = vunpack.c.0.s8 %v4568
        %v4570 = vlaneseq
        %v4571 = vshrl.u32 %v4570, 7
        %v4572 = vsub.s32 %v4569, %v4571
        %v4573 = vrot.slane %v4565, %v4572
        %v4575 = vunpack.c.l.s4 1934713408
        %v4576 = vunpack.c.0.s8 %v4575
        %v4577 = vlaneseq
        %v4578 = vshrl.u32 %v4577, 7
        %v4579 = vsub.s32 %v4576, %v4578
        %v4580 = vrot.slane %v4566, %v4579
        %v4581 = vcombine.low %v4516, %v4532
        %v4582 = vcombine.high %v4516, %v4532
        %v4584 = vunpack.c.l.s4 1934713408
        %v4585 = vunpack.c.0.s8 %v4584
        %v4586 = vlaneseq
        %v4587 = vshrl.u32 %v4586, 7
        %v4588 = vsub.s32 %v4585, %v4587
        %v4589 = vrot.slane %v4581, %v4588
        %v4591 = vunpack.c.l.s4 1934713408
        %v4592 = vunpack.c.0.s8 %v4591
        %v4593 = vlaneseq
        %v4594 = vshrl.u32 %v4593, 7
        %v4595 = vsub.s32 %v4592, %v4594
        %v4596 = vrot.slane %v4582, %v4595
        %v4597 = vcombine.low %v4541, %v4557
        %v4598 = vcombine.high %v4541, %v4557
        %v4600 = vunpack.c.l.s4 1934713408
        %v4601 = vunpack.c.0.s8 %v4600
        %v4602 = vlaneseq
        %v4603 = vshrl.u32 %v4602, 7
        %v4604 = vsub.s32 %v4601, %v4603
        %v4605 = vrot.slane %v4597, %v4604
        %v4607 = vunpack.c.l.s4 1934713408
        %v4608 = vunpack.c.0.s8 %v4607
        %v4609 = vlaneseq
        %v4610 = vshrl.u32 %v4609, 7
        %v4611 = vsub.s32 %v4608, %v4610
        %v4612 = vrot.slane %v4598, %v4611
        %v4613 = vcombine.low %v4548, %v4564
        %v4614 = vcombine.high %v4548, %v4564
        %v4616 = vunpack.c.l.s4 1934713408
        %v4617 = vunpack.c.0.s8 %v4616
        %v4618 = vlaneseq
        %v4619 = vshrl.u32 %v4618, 7
        %v4620 = vsub.s32 %v4617, %v4619
        %v4621 = vrot.slane %v4613, %v4620
        %v4623 = vunpack.c.l.s4 1934713408
        %v4624 = vunpack.c.0.s8 %v4623
        %v4625 = vlaneseq
        %v4626 = vshrl.u32 %v4625, 7
        %v4627 = vsub.s32 %v4624, %v4626
        %v4628 = vrot.slane %v4614, %v4627
        %v4629 = vcombine.low %v4573, %v4605
        %v4630 = vcombine.high %v4573, %v4605
        %v4631 = vcombine.low %v4580, %v4612
        %v4632 = vcombine.high %v4580, %v4612
        %v4633 = vcombine.low %v4589, %v4621
        %v4634 = vcombine.high %v4589, %v4621
        %v4635 = vcombine.low %v4596, %v4628
        %v4636 = vcombine.high %v4596, %v4628
        %v4637 = vcombine.low %v2622, %v2630
        %v4638 = vcombine.high %v2622, %v2630
        %v4640 = vunpack.c.l.s4 1983009808
        %v4641 = vunpack.c.0.s8 %v4640
        %v4642 = vlaneseq
        %v4643 = vshrl.u32 %v4642, 7
        %v4644 = vsub.s32 %v4641, %v4643
        %v4645 = vrot.slane %v4637, %v4644
        %v4647 = vunpack.c.l.s4 1983009808
        %v4648 = vunpack.c.0.s8 %v4647
        %v4649 = vlaneseq
        %v4650 = vshrl.u32 %v4649, 7
        %v4651 = vsub.s32 %v4648, %v4650
        %v4652 = vrot.slane %v4638, %v4651
        %v4653 = vcombine.low %v2626, %v2634
        %v4654 = vcombine.high %v2626, %v2634
        %v4656 = vunpack.c.l.s4 1983009808
        %v4657 = vunpack.c.0.s8 %v4656
        %v4658 = vlaneseq
        %v4659 = vshrl.u32 %v4658, 7
        %v4660 = vsub.s32 %v4657, %v4659
        %v4661 = vrot.slane %v4653, %v4660
        %v4663 = vunpack.c.l.s4 1983009808
        %v4664 = vunpack.c.0.s8 %v4663
        %v4665 = vlaneseq
        %v4666 = vshrl.u32 %v4665, 7
        %v4667 = vsub.s32 %v4664, %v4666
        %v4668 = vrot.slane %v4654, %v4667
        %v4669 = vcombine.low %v2638, %v2646
        %v4670 = vcombine.high %v2638, %v2646
        %v4672 = vunpack.c.l.s4 1983009808
        %v4673 = vunpack.c.0.s8 %v4672
        %v4674 = vlaneseq
        %v4675 = vshrl.u32 %v4674, 7
        %v4676 = vsub.s32 %v4673, %v4675
        %v4677 = vrot.slane %v4669, %v4676
        %v4679 = vunpack.c.l.s4 1983009808
        %v4680 = vunpack.c.0.s8 %v4679
        %v4681 = vlaneseq
        %v4682 = vshrl.u32 %v4681, 7
        %v4683 = vsub.s32 %v4680, %v4682
        %v4684 = vrot.slane %v4670, %v4683
        %v4685 = vcombine.low %v2642, %v2650
        %v4686 = vcombine.high %v2642, %v2650
        %v4688 = vunpack.c.l.s4 1983009808
        %v4689 = vunpack.c.0.s8 %v4688
        %v4690 = vlaneseq
        %v4691 = vshrl.u32 %v4690, 7
        %v4692 = vsub.s32 %v4689, %v4691
        %v4693 = vrot.slane %v4685, %v4692
        %v4695 = vunpack.c.l.s4 1983009808
        %v4696 = vunpack.c.0.s8 %v4695
        %v4697 = vlaneseq
        %v4698 = vshrl.u32 %v4697, 7
        %v4699 = vsub.s32 %v4696, %v4698
        %v4700 = vrot.slane %v4686, %v4699
        %v4701 = vcombine.low %v4645, %v4661
        %v4702 = vcombine.high %v4645, %v4661
        %v4704 = vunpack.c.l.s4 1934713408
        %v4705 = vunpack.c.0.s8 %v4704
        %v4706 = vlaneseq
        %v4707 = vshrl.u32 %v4706, 7
        %v4708 = vsub.s32 %v4705, %v4707
        %v4709 = vrot.slane %v4701, %v4708
        %v4711 = vunpack.c.l.s4 1934713408
        %v4712 = vunpack.c.0.s8 %v4711
        %v4713 = vlaneseq
        %v4714 = vshrl.u32 %v4713, 7
        %v4715 = vsub.s32 %v4712, %v4714
        %v4716 = vrot.slane %v4702, %v4715
        %v4717 = vcombine.low %v4652, %v4668
        %v4718 = vcombine.high %v4652, %v4668
        %v4720 = vunpack.c.l.s4 1934713408
        %v4721 = vunpack.c.0.s8 %v4720
        %v4722 = vlaneseq
        %v4723 = vshrl.u32 %v4722, 7
        %v4724 = vsub.s32 %v4721, %v4723
        %v4725 = vrot.slane %v4717, %v4724
        %v4727 = vunpack.c.l.s4 1934713408
        %v4728 = vunpack.c.0.s8 %v4727
        %v4729 = vlaneseq
        %v4730 = vshrl.u32 %v4729, 7
        %v4731 = vsub.s32 %v4728, %v4730
        %v4732 = vrot.slane %v4718, %v4731
        %v4733 = vcombine.low %v4677, %v4693
        %v4734 = vcombine.high %v4677, %v4693
        %v4736 = vunpack.c.l.s4 1934713408
        %v4737 = vunpack.c.0.s8 %v4736
        %v4738 = vlaneseq
        %v4739 = vshrl.u32 %v4738, 7
        %v4740 = vsub.s32 %v4737, %v4739
        %v4741 = vrot.slane %v4733, %v4740
        %v4743 = vunpack.c.l.s4 1934713408
        %v4744 = vunpack.c.0.s8 %v4743
        %v4745 = vlaneseq
        %v4746 = vshrl.u32 %v4745, 7
        %v4747 = vsub.s32 %v4744, %v4746
        %v4748 = vrot.slane %v4734, %v4747
        %v4749 = vcombine.low %v4684, %v4700
        %v4750 = vcombine.high %v4684, %v4700
        %v4752 = vunpack.c.l.s4 1934713408
        %v4753 = vunpack.c.0.s8 %v4752
        %v4754 = vlaneseq
        %v4755 = vshrl.u32 %v4754, 7
        %v4756 = vsub.s32 %v4753, %v4755
        %v4757 = vrot.slane %v4749, %v4756
        %v4759 = vunpack.c.l.s4 1934713408
        %v4760 = vunpack.c.0.s8 %v4759
        %v4761 = vlaneseq
        %v4762 = vshrl.u32 %v4761, 7
        %v4763 = vsub.s32 %v4760, %v4762
        %v4764 = vrot.slane %v4750, %v4763
        %v4765 = vcombine.low %v4709, %v4741
        %v4766 = vcombine.high %v4709, %v4741
        %v4767 = vcombine.low %v4716, %v4748
        %v4768 = vcombine.high %v4716, %v4748
        %v4769 = vcombine.low %v4725, %v4757
        %v4770 = vcombine.high %v4725, %v4757
        %v4771 = vcombine.low %v4732, %v4764
        %v4772 = vcombine.high %v4732, %v4764
        %v4773 = vcombine.low %v2654, %v2662
        %v4774 = vcombine.high %v2654, %v2662
        %v4776 = vunpack.c.l.s4 1983009808
        %v4777 = vunpack.c.0.s8 %v4776
        %v4778 = vlaneseq
        %v4779 = vshrl.u32 %v4778, 7
        %v4780 = vsub.s32 %v4777, %v4779
        %v4781 = vrot.slane %v4773, %v4780
        %v4783 = vunpack.c.l.s4 1983009808
        %v4784 = vunpack.c.0.s8 %v4783
        %v4785 = vlaneseq
        %v4786 = vshrl.u32 %v4785, 7
        %v4787 = vsub.s32 %v4784, %v4786
        %v4788 = vrot.slane %v4774, %v4787
        %v4789 = vcombine.low %v2658, %v2666
        %v4790 = vcombine.high %v2658, %v2666
        %v4792 = vunpack.c.l.s4 1983009808
        %v4793 = vunpack.c.0.s8 %v4792
        %v4794 = vlaneseq
        %v4795 = vshrl.u32 %v4794, 7
        %v4796 = vsub.s32 %v4793, %v4795
        %v4797 = vrot.slane %v4789, %v4796
        %v4799 = vunpack.c.l.s4 1983009808
        %v4800 = vunpack.c.0.s8 %v4799
        %v4801 = vlaneseq
        %v4802 = vshrl.u32 %v4801, 7
        %v4803 = vsub.s32 %v4800, %v4802
        %v4804 = vrot.slane %v4790, %v4803
        %v4805 = vcombine.low %v2670, %v2678
        %v4806 = vcombine.high %v2670, %v2678
        %v4808 = vunpack.c.l.s4 1983009808
        %v4809 = vunpack.c.0.s8 %v4808
        %v4810 = vlaneseq
        %v4811 = vshrl.u32 %v4810, 7
        %v4812 = vsub.s32 %v4809, %v4811
        %v4813 = vrot.slane %v4805, %v4812
        %v4815 = vunpack.c.l.s4 1983009808
        %v4816 = vunpack.c.0.s8 %v4815
        %v4817 = vlaneseq
        %v4818 = vshrl.u32 %v4817, 7
        %v4819 = vsub.s32 %v4816, %v4818
        %v4820 = vrot.slane %v4806, %v4819
        %v4821 = vcombine.low %v2674, %v2682
        %v4822 = vcombine.high %v2674, %v2682
        %v4824 = vunpack.c.l.s4 1983009808
        %v4825 = vunpack.c.0.s8 %v4824
        %v4826 = vlaneseq
        %v4827 = vshrl.u32 %v4826, 7
        %v4828 = vsub.s32 %v4825, %v4827
        %v4829 = vrot.slane %v4821, %v4828
        %v4831 = vunpack.c.l.s4 1983009808
        %v4832 = vunpack.c.0.s8 %v4831
        %v4833 = vlaneseq
        %v4834 = vshrl.u32 %v4833, 7
        %v4835 = vsub.s32 %v4832, %v4834
        %v4836 = vrot.slane %v4822, %v4835
        %v4837 = vcombine.low %v4781, %v4797
        %v4838 = vcombine.high %v4781, %v4797
        %v4840 = vunpack.c.l.s4 1934713408
        %v4841 = vunpack.c.0.s8 %v4840
        %v4842 = vlaneseq
        %v4843 = vshrl.u32 %v4842, 7
        %v4844 = vsub.s32 %v4841, %v4843
        %v4845 = vrot.slane %v4837, %v4844
        %v4847 = vunpack.c.l.s4 1934713408
        %v4848 = vunpack.c.0.s8 %v4847
        %v4849 = vlaneseq
        %v4850 = vshrl.u32 %v4849, 7
        %v4851 = vsub.s32 %v4848, %v4850
        %v4852 = vrot.slane %v4838, %v4851
        %v4853 = vcombine.low %v4788, %v4804
        %v4854 = vcombine.high %v4788, %v4804
        %v4856 = vunpack.c.l.s4 1934713408
        %v4857 = vunpack.c.0.s8 %v4856
        %v4858 = vlaneseq
        %v4859 = vshrl.u32 %v4858, 7
        %v4860 = vsub.s32 %v4857, %v4859
        %v4861 = vrot.slane %v4853, %v4860
        %v4863 = vunpack.c.l.s4 1934713408
        %v4864 = vunpack.c.0.s8 %v4863
        %v4865 = vlaneseq
        %v4866 = vshrl.u32 %v4865, 7
        %v4867 = vsub.s32 %v4864, %v4866
        %v4868 = vrot.slane %v4854, %v4867
        %v4869 = vcombine.low %v4813, %v4829
        %v4870 = vcombine.high %v4813, %v4829
        %v4872 = vunpack.c.l.s4 1934713408
        %v4873 = vunpack.c.0.s8 %v4872
        %v4874 = vlaneseq
        %v4875 = vshrl.u32 %v4874, 7
        %v4876 = vsub.s32 %v4873, %v4875
        %v4877 = vrot.slane %v4869, %v4876
        %v4879 = vunpack.c.l.s4 1934713408
        %v4880 = vunpack.c.0.s8 %v4879
        %v4881 = vlaneseq
        %v4882 = vshrl.u32 %v4881, 7
        %v4883 = vsub.s32 %v4880, %v4882
        %v4884 = vrot.slane %v4870, %v4883
        %v4885 = vcombine.low %v4820, %v4836
        %v4886 = vcombine.high %v4820, %v4836
        %v4888 = vunpack.c.l.s4 1934713408
        %v4889 = vunpack.c.0.s8 %v4888
        %v4890 = vlaneseq
        %v4891 = vshrl.u32 %v4890, 7
        %v4892 = vsub.s32 %v4889, %v4891
        %v4893 = vrot.slane %v4885, %v4892
        %v4895 = vunpack.c.l.s4 1934713408
        %v4896 = vunpack.c.0.s8 %v4895
        %v4897 = vlaneseq
        %v4898 = vshrl.u32 %v4897, 7
        %v4899 = vsub.s32 %v4896, %v4898
        %v4900 = vrot.slane %v4886, %v4899
        %v4901 = vcombine.low %v4845, %v4877
        %v4902 = vcombine.high %v4845, %v4877
        %v4903 = vcombine.low %v4852, %v4884
        %v4904 = vcombine.high %v4852, %v4884
        %v4905 = vcombine.low %v4861, %v4893
        %v4906 = vcombine.high %v4861, %v4893
        %v4907 = vcombine.low %v4868, %v4900
        %v4908 = vcombine.high %v4868, %v4900
        %v4909 = vcombine.low %v2686, %v2694
        %v4910 = vcombine.high %v2686, %v2694
        %v4912 = vunpack.c.l.s4 1983009808
        %v4913 = vunpack.c.0.s8 %v4912
        %v4914 = vlaneseq
        %v4915 = vshrl.u32 %v4914, 7
        %v4916 = vsub.s32 %v4913, %v4915
        %v4917 = vrot.slane %v4909, %v4916
        %v4919 = vunpack.c.l.s4 1983009808
        %v4920 = vunpack.c.0.s8 %v4919
        %v4921 = vlaneseq
        %v4922 = vshrl.u32 %v4921, 7
        %v4923 = vsub.s32 %v4920, %v4922
        %v4924 = vrot.slane %v4910, %v4923
        %v4925 = vcombine.low %v2690, %v2698
        %v4926 = vcombine.high %v2690, %v2698
        %v4928 = vunpack.c.l.s4 1983009808
        %v4929 = vunpack.c.0.s8 %v4928
        %v4930 = vlaneseq
        %v4931 = vshrl.u32 %v4930, 7
        %v4932 = vsub.s32 %v4929, %v4931
        %v4933 = vrot.slane %v4925, %v4932
        %v4935 = vunpack.c.l.s4 1983009808
        %v4936 = vunpack.c.0.s8 %v4935
        %v4937 = vlaneseq
        %v4938 = vshrl.u32 %v4937, 7
        %v4939 = vsub.s32 %v4936, %v4938
        %v4940 = vrot.slane %v4926, %v4939
        %v4941 = vcombine.low %v2702, %v2710
        %v4942 = vcombine.high %v2702, %v2710
        %v4944 = vunpack.c.l.s4 1983009808
        %v4945 = vunpack.c.0.s8 %v4944
        %v4946 = vlaneseq
        %v4947 = vshrl.u32 %v4946, 7
        %v4948 = vsub.s32 %v4945, %v4947
        %v4949 = vrot.slane %v4941, %v4948
        %v4951 = vunpack.c.l.s4 1983009808
        %v4952 = vunpack.c.0.s8 %v4951
        %v4953 = vlaneseq
        %v4954 = vshrl.u32 %v4953, 7
        %v4955 = vsub.s32 %v4952, %v4954
        %v4956 = vrot.slane %v4942, %v4955
        %v4957 = vcombine.low %v2706, %v2714
        %v4958 = vcombine.high %v2706, %v2714
        %v4960 = vunpack.c.l.s4 1983009808
        %v4961 = vunpack.c.0.s8 %v4960
        %v4962 = vlaneseq
        %v4963 = vshrl.u32 %v4962, 7
        %v4964 = vsub.s32 %v4961, %v4963
        %v4965 = vrot.slane %v4957, %v4964
        %v4967 = vunpack.c.l.s4 1983009808
        %v4968 = vunpack.c.0.s8 %v4967
        %v4969 = vlaneseq
        %v4970 = vshrl.u32 %v4969, 7
        %v4971 = vsub.s32 %v4968, %v4970
        %v4972 = vrot.slane %v4958, %v4971
        %v4973 = vcombine.low %v4917, %v4933
        %v4974 = vcombine.high %v4917, %v4933
        %v4976 = vunpack.c.l.s4 1934713408
        %v4977 = vunpack.c.0.s8 %v4976
        %v4978 = vlaneseq
        %v4979 = vshrl.u32 %v4978, 7
        %v4980 = vsub.s32 %v4977, %v4979
        %v4981 = vrot.slane %v4973, %v4980
        %v4983 = vunpack.c.l.s4 1934713408
        %v4984 = vunpack.c.0.s8 %v4983
        %v4985 = vlaneseq
        %v4986 = vshrl.u32 %v4985, 7
        %v4987 = vsub.s32 %v4984, %v4986
        %v4988 = vrot.slane %v4974, %v4987
        %v4989 = vcombine.low %v4924, %v4940
        %v4990 = vcombine.high %v4924, %v4940
        %v4992 = vunpack.c.l.s4 1934713408
        %v4993 = vunpack.c.0.s8 %v4992
        %v4994 = vlaneseq
        %v4995 = vshrl.u32 %v4994, 7
        %v4996 = vsub.s32 %v4993, %v4995
        %v4997 = vrot.slane %v4989, %v4996
        %v4999 = vunpack.c.l.s4 1934713408
        %v5000 = vunpack.c.0.s8 %v4999
        %v5001 = vlaneseq
        %v5002 = vshrl.u32 %v5001, 7
        %v5003 = vsub.s32 %v5000, %v5002
        %v5004 = vrot.slane %v4990, %v5003
        %v5005 = vcombine.low %v4949, %v4965
        %v5006 = vcombine.high %v4949, %v4965
        %v5008 = vunpack.c.l.s4 1934713408
        %v5009 = vunpack.c.0.s8 %v5008
        %v5010 = vlaneseq
        %v5011 = vshrl.u32 %v5010, 7
        %v5012 = vsub.s32 %v5009, %v5011
        %v5013 = vrot.slane %v5005, %v5012
        %v5015 = vunpack.c.l.s4 1934713408
        %v5016 = vunpack.c.0.s8 %v5015
        %v5017 = vlaneseq
        %v5018 = vshrl.u32 %v5017, 7
        %v5019 = vsub.s32 %v5016, %v5018
        %v5020 = vrot.slane %v5006, %v5019
        %v5021 = vcombine.low %v4956, %v4972
        %v5022 = vcombine.high %v4956, %v4972
        %v5024 = vunpack.c.l.s4 1934713408
        %v5025 = vunpack.c.0.s8 %v5024
        %v5026 = vlaneseq
        %v5027 = vshrl.u32 %v5026, 7
        %v5028 = vsub.s32 %v5025, %v5027
        %v5029 = vrot.slane %v5021, %v5028
        %v5031 = vunpack.c.l.s4 1934713408
        %v5032 = vunpack.c.0.s8 %v5031
        %v5033 = vlaneseq
        %v5034 = vshrl.u32 %v5033, 7
        %v5035 = vsub.s32 %v5032, %v5034
        %v5036 = vrot.slane %v5022, %v5035
        %v5037 = vcombine.low %v4981, %v5013
        %v5038 = vcombine.high %v4981, %v5013
        %v5039 = vcombine.low %v4988, %v5020
        %v5040 = vcombine.high %v4988, %v5020
        %v5041 = vcombine.low %v4997, %v5029
        %v5042 = vcombine.high %v4997, %v5029
        %v5043 = vcombine.low %v5004, %v5036
        %v5044 = vcombine.high %v5004, %v5036
        %v5045 = vcombine.low %v2718, %v2726
        %v5046 = vcombine.high %v2718, %v2726
        %v5048 = vunpack.c.l.s4 1983009808
        %v5049 = vunpack.c.0.s8 %v5048
        %v5050 = vlaneseq
        %v5051 = vshrl.u32 %v5050, 7
        %v5052 = vsub.s32 %v5049, %v5051
        %v5053 = vrot.slane %v5045, %v5052
        %v5055 = vunpack.c.l.s4 1983009808
        %v5056 = vunpack.c.0.s8 %v5055
        %v5057 = vlaneseq
        %v5058 = vshrl.u32 %v5057, 7
        %v5059 = vsub.s32 %v5056, %v5058
        %v5060 = vrot.slane %v5046, %v5059
        %v5061 = vcombine.low %v2722, %v2730
        %v5062 = vcombine.high %v2722, %v2730
        %v5064 = vunpack.c.l.s4 1983009808
        %v5065 = vunpack.c.0.s8 %v5064
        %v5066 = vlaneseq
        %v5067 = vshrl.u32 %v5066, 7
        %v5068 = vsub.s32 %v5065, %v5067
        %v5069 = vrot.slane %v5061, %v5068
        %v5071 = vunpack.c.l.s4 1983009808
        %v5072 = vunpack.c.0.s8 %v5071
        %v5073 = vlaneseq
        %v5074 = vshrl.u32 %v5073, 7
        %v5075 = vsub.s32 %v5072, %v5074
        %v5076 = vrot.slane %v5062, %v5075
        %v5077 = vcombine.low %v5053, %v5069
        %v5078 = vcombine.high %v5053, %v5069
        %v5080 = vunpack.c.l.s4 1934713408
        %v5081 = vunpack.c.0.s8 %v5080
        %v5082 = vlaneseq
        %v5083 = vshrl.u32 %v5082, 7
        %v5084 = vsub.s32 %v5081, %v5083
        %v5085 = vrot.slane %v5077, %v5084
        %v5087 = vunpack.c.l.s4 1934713408
        %v5088 = vunpack.c.0.s8 %v5087
        %v5089 = vlaneseq
        %v5090 = vshrl.u32 %v5089, 7
        %v5091 = vsub.s32 %v5088, %v5090
        %v5092 = vrot.slane %v5078, %v5091
        %v5093 = vcombine.low %v5060, %v5076
        %v5094 = vcombine.high %v5060, %v5076
        %v5096 = vunpack.c.l.s4 1934713408
        %v5097 = vunpack.c.0.s8 %v5096
        %v5098 = vlaneseq
        %v5099 = vshrl.u32 %v5098, 7
        %v5100 = vsub.s32 %v5097, %v5099
        %v5101 = vrot.slane %v5093, %v5100
        %v5103 = vunpack.c.l.s4 1934713408
        %v5104 = vunpack.c.0.s8 %v5103
        %v5105 = vlaneseq
        %v5106 = vshrl.u32 %v5105, 7
        %v5107 = vsub.s32 %v5104, %v5106
        %v5108 = vrot.slane %v5094, %v5107
        %v5109 = vcombine.low %v5085, %v4573
        %v5110 = vcombine.high %v5085, %v4573
        %v5111 = vcombine.low %v5092, %v4580
        %v5112 = vcombine.high %v5092, %v4580
        %v5113 = vcombine.low %v5101, %v4589
        %v5114 = vcombine.high %v5101, %v4589
        %v5115 = vcombine.low %v5108, %v4596
        %v5116 = vcombine.high %v5108, %v4596
        %v5117 = vcombine.low %v2734, %v2742
        %v5118 = vcombine.high %v2734, %v2742
        %v5120 = vunpack.c.l.s4 1983009808
        %v5121 = vunpack.c.0.s8 %v5120
        %v5122 = vlaneseq
        %v5123 = vshrl.u32 %v5122, 7
        %v5124 = vsub.s32 %v5121, %v5123
        %v5125 = vrot.slane %v5117, %v5124
        %v5127 = vunpack.c.l.s4 1983009808
        %v5128 = vunpack.c.0.s8 %v5127
        %v5129 = vlaneseq
        %v5130 = vshrl.u32 %v5129, 7
        %v5131 = vsub.s32 %v5128, %v5130
        %v5132 = vrot.slane %v5118, %v5131
        %v5133 = vcombine.low %v2738, %v2746
        %v5134 = vcombine.high %v2738, %v2746
        %v5136 = vunpack.c.l.s4 1983009808
        %v5137 = vunpack.c.0.s8 %v5136
        %v5138 = vlaneseq
        %v5139 = vshrl.u32 %v5138, 7
        %v5140 = vsub.s32 %v5137, %v5139
        %v5141 = vrot.slane %v5133, %v5140
        %v5143 = vunpack.c.l.s4 1983009808
        %v5144 = vunpack.c.0.s8 %v5143
        %v5145 = vlaneseq
        %v5146 = vshrl.u32 %v5145, 7
        %v5147 = vsub.s32 %v5144, %v5146
        %v5148 = vrot.slane %v5134, %v5147
        %v5149 = vcombine.low %v2750, %v2758
        %v5150 = vcombine.high %v2750, %v2758
        %v5152 = vunpack.c.l.s4 1983009808
        %v5153 = vunpack.c.0.s8 %v5152
        %v5154 = vlaneseq
        %v5155 = vshrl.u32 %v5154, 7
        %v5156 = vsub.s32 %v5153, %v5155
        %v5157 = vrot.slane %v5149, %v5156
        %v5159 = vunpack.c.l.s4 1983009808
        %v5160 = vunpack.c.0.s8 %v5159
        %v5161 = vlaneseq
        %v5162 = vshrl.u32 %v5161, 7
        %v5163 = vsub.s32 %v5160, %v5162
        %v5164 = vrot.slane %v5150, %v5163
        %v5165 = vcombine.low %v2754, %v2762
        %v5166 = vcombine.high %v2754, %v2762
        %v5168 = vunpack.c.l.s4 1983009808
        %v5169 = vunpack.c.0.s8 %v5168
        %v5170 = vlaneseq
        %v5171 = vshrl.u32 %v5170, 7
        %v5172 = vsub.s32 %v5169, %v5171
        %v5173 = vrot.slane %v5165, %v5172
        %v5175 = vunpack.c.l.s4 1983009808
        %v5176 = vunpack.c.0.s8 %v5175
        %v5177 = vlaneseq
        %v5178 = vshrl.u32 %v5177, 7
        %v5179 = vsub.s32 %v5176, %v5178
        %v5180 = vrot.slane %v5166, %v5179
        %v5181 = vcombine.low %v5125, %v5141
        %v5182 = vcombine.high %v5125, %v5141
        %v5184 = vunpack.c.l.s4 1934713408
        %v5185 = vunpack.c.0.s8 %v5184
        %v5186 = vlaneseq
        %v5187 = vshrl.u32 %v5186, 7
        %v5188 = vsub.s32 %v5185, %v5187
        %v5189 = vrot.slane %v5181, %v5188
        %v5191 = vunpack.c.l.s4 1934713408
        %v5192 = vunpack.c.0.s8 %v5191
        %v5193 = vlaneseq
        %v5194 = vshrl.u32 %v5193, 7
        %v5195 = vsub.s32 %v5192, %v5194
        %v5196 = vrot.slane %v5182, %v5195
        %v5197 = vcombine.low %v5132, %v5148
        %v5198 = vcombine.high %v5132, %v5148
        %v5200 = vunpack.c.l.s4 1934713408
        %v5201 = vunpack.c.0.s8 %v5200
        %v5202 = vlaneseq
        %v5203 = vshrl.u32 %v5202, 7
        %v5204 = vsub.s32 %v5201, %v5203
        %v5205 = vrot.slane %v5197, %v5204
        %v5207 = vunpack.c.l.s4 1934713408
        %v5208 = vunpack.c.0.s8 %v5207
        %v5209 = vlaneseq
        %v5210 = vshrl.u32 %v5209, 7
        %v5211 = vsub.s32 %v5208, %v5210
        %v5212 = vrot.slane %v5198, %v5211
        %v5213 = vcombine.low %v5157, %v5173
        %v5214 = vcombine.high %v5157, %v5173
        %v5216 = vunpack.c.l.s4 1934713408
        %v5217 = vunpack.c.0.s8 %v5216
        %v5218 = vlaneseq
        %v5219 = vshrl.u32 %v5218, 7
        %v5220 = vsub.s32 %v5217, %v5219
        %v5221 = vrot.slane %v5213, %v5220
        %v5223 = vunpack.c.l.s4 1934713408
        %v5224 = vunpack.c.0.s8 %v5223
        %v5225 = vlaneseq
        %v5226 = vshrl.u32 %v5225, 7
        %v5227 = vsub.s32 %v5224, %v5226
        %v5228 = vrot.slane %v5214, %v5227
        %v5229 = vcombine.low %v5164, %v5180
        %v5230 = vcombine.high %v5164, %v5180
        %v5232 = vunpack.c.l.s4 1934713408
        %v5233 = vunpack.c.0.s8 %v5232
        %v5234 = vlaneseq
        %v5235 = vshrl.u32 %v5234, 7
        %v5236 = vsub.s32 %v5233, %v5235
        %v5237 = vrot.slane %v5229, %v5236
        %v5239 = vunpack.c.l.s4 1934713408
        %v5240 = vunpack.c.0.s8 %v5239
        %v5241 = vlaneseq
        %v5242 = vshrl.u32 %v5241, 7
        %v5243 = vsub.s32 %v5240, %v5242
        %v5244 = vrot.slane %v5230, %v5243
        %v5245 = vcombine.low %v5189, %v5221
        %v5246 = vcombine.high %v5189, %v5221
        %v5247 = vcombine.low %v5196, %v5228
        %v5248 = vcombine.high %v5196, %v5228
        %v5249 = vcombine.low %v5205, %v5237
        %v5250 = vcombine.high %v5205, %v5237
        %v5251 = vcombine.low %v5212, %v5244
        %v5252 = vcombine.high %v5212, %v5244
        %v5253 = vcombine.low %v2766, %v2774
        %v5254 = vcombine.high %v2766, %v2774
        %v5256 = vunpack.c.l.s4 1983009808
        %v5257 = vunpack.c.0.s8 %v5256
        %v5258 = vlaneseq
        %v5259 = vshrl.u32 %v5258, 7
        %v5260 = vsub.s32 %v5257, %v5259
        %v5261 = vrot.slane %v5253, %v5260
        %v5263 = vunpack.c.l.s4 1983009808
        %v5264 = vunpack.c.0.s8 %v5263
        %v5265 = vlaneseq
        %v5266 = vshrl.u32 %v5265, 7
        %v5267 = vsub.s32 %v5264, %v5266
        %v5268 = vrot.slane %v5254, %v5267
        %v5269 = vcombine.low %v2770, %v2778
        %v5270 = vcombine.high %v2770, %v2778
        %v5272 = vunpack.c.l.s4 1983009808
        %v5273 = vunpack.c.0.s8 %v5272
        %v5274 = vlaneseq
        %v5275 = vshrl.u32 %v5274, 7
        %v5276 = vsub.s32 %v5273, %v5275
        %v5277 = vrot.slane %v5269, %v5276
        %v5279 = vunpack.c.l.s4 1983009808
        %v5280 = vunpack.c.0.s8 %v5279
        %v5281 = vlaneseq
        %v5282 = vshrl.u32 %v5281, 7
        %v5283 = vsub.s32 %v5280, %v5282
        %v5284 = vrot.slane %v5270, %v5283
        %v5285 = vcombine.low %v2782, %v2790
        %v5286 = vcombine.high %v2782, %v2790
        %v5288 = vunpack.c.l.s4 1983009808
        %v5289 = vunpack.c.0.s8 %v5288
        %v5290 = vlaneseq
        %v5291 = vshrl.u32 %v5290, 7
        %v5292 = vsub.s32 %v5289, %v5291
        %v5293 = vrot.slane %v5285, %v5292
        %v5295 = vunpack.c.l.s4 1983009808
        %v5296 = vunpack.c.0.s8 %v5295
        %v5297 = vlaneseq
        %v5298 = vshrl.u32 %v5297, 7
        %v5299 = vsub.s32 %v5296, %v5298
        %v5300 = vrot.slane %v5286, %v5299
        %v5301 = vcombine.low %v2786, %v2794
        %v5302 = vcombine.high %v2786, %v2794
        %v5304 = vunpack.c.l.s4 1983009808
        %v5305 = vunpack.c.0.s8 %v5304
        %v5306 = vlaneseq
        %v5307 = vshrl.u32 %v5306, 7
        %v5308 = vsub.s32 %v5305, %v5307
        %v5309 = vrot.slane %v5301, %v5308
        %v5311 = vunpack.c.l.s4 1983009808
        %v5312 = vunpack.c.0.s8 %v5311
        %v5313 = vlaneseq
        %v5314 = vshrl.u32 %v5313, 7
        %v5315 = vsub.s32 %v5312, %v5314
        %v5316 = vrot.slane %v5302, %v5315
        %v5317 = vcombine.low %v5261, %v5277
        %v5318 = vcombine.high %v5261, %v5277
        %v5320 = vunpack.c.l.s4 1934713408
        %v5321 = vunpack.c.0.s8 %v5320
        %v5322 = vlaneseq
        %v5323 = vshrl.u32 %v5322, 7
        %v5324 = vsub.s32 %v5321, %v5323
        %v5325 = vrot.slane %v5317, %v5324
        %v5327 = vunpack.c.l.s4 1934713408
        %v5328 = vunpack.c.0.s8 %v5327
        %v5329 = vlaneseq
        %v5330 = vshrl.u32 %v5329, 7
        %v5331 = vsub.s32 %v5328, %v5330
        %v5332 = vrot.slane %v5318, %v5331
        %v5333 = vcombine.low %v5268, %v5284
        %v5334 = vcombine.high %v5268, %v5284
        %v5336 = vunpack.c.l.s4 1934713408
        %v5337 = vunpack.c.0.s8 %v5336
        %v5338 = vlaneseq
        %v5339 = vshrl.u32 %v5338, 7
        %v5340 = vsub.s32 %v5337, %v5339
        %v5341 = vrot.slane %v5333, %v5340
        %v5343 = vunpack.c.l.s4 1934713408
        %v5344 = vunpack.c.0.s8 %v5343
        %v5345 = vlaneseq
        %v5346 = vshrl.u32 %v5345, 7
        %v5347 = vsub.s32 %v5344, %v5346
        %v5348 = vrot.slane %v5334, %v5347
        %v5349 = vcombine.low %v5293, %v5309
        %v5350 = vcombine.high %v5293, %v5309
        %v5352 = vunpack.c.l.s4 1934713408
        %v5353 = vunpack.c.0.s8 %v5352
        %v5354 = vlaneseq
        %v5355 = vshrl.u32 %v5354, 7
        %v5356 = vsub.s32 %v5353, %v5355
        %v5357 = vrot.slane %v5349, %v5356
        %v5359 = vunpack.c.l.s4 1934713408
        %v5360 = vunpack.c.0.s8 %v5359
        %v5361 = vlaneseq
        %v5362 = vshrl.u32 %v5361, 7
        %v5363 = vsub.s32 %v5360, %v5362
        %v5364 = vrot.slane %v5350, %v5363
        %v5365 = vcombine.low %v5300, %v5316
        %v5366 = vcombine.high %v5300, %v5316
        %v5368 = vunpack.c.l.s4 1934713408
        %v5369 = vunpack.c.0.s8 %v5368
        %v5370 = vlaneseq
        %v5371 = vshrl.u32 %v5370, 7
        %v5372 = vsub.s32 %v5369, %v5371
        %v5373 = vrot.slane %v5365, %v5372
        %v5375 = vunpack.c.l.s4 1934713408
        %v5376 = vunpack.c.0.s8 %v5375
        %v5377 = vlaneseq
        %v5378 = vshrl.u32 %v5377, 7
        %v5379 = vsub.s32 %v5376, %v5378
        %v5380 = vrot.slane %v5366, %v5379
        %v5381 = vcombine.low %v5325, %v5357
        %v5382 = vcombine.high %v5325, %v5357
        %v5383 = vcombine.low %v5332, %v5364
        %v5384 = vcombine.high %v5332, %v5364
        %v5385 = vcombine.low %v5341, %v5373
        %v5386 = vcombine.high %v5341, %v5373
        %v5387 = vcombine.low %v5348, %v5380
        %v5388 = vcombine.high %v5348, %v5380
        %v5389 = vcombine.low %v632, %v644
        %v5390 = vcombine.high %v632, %v644
        %v5392 = vunpack.c.l.s4 1983009808
        %v5393 = vunpack.c.0.s8 %v5392
        %v5394 = vlaneseq
        %v5395 = vshrl.u32 %v5394, 7
        %v5396 = vsub.s32 %v5393, %v5395
        %v5397 = vrot.slane %v5389, %v5396
        %v5399 = vunpack.c.l.s4 1983009808
        %v5400 = vunpack.c.0.s8 %v5399
        %v5401 = vlaneseq
        %v5402 = vshrl.u32 %v5401, 7
        %v5403 = vsub.s32 %v5400, %v5402
        %v5404 = vrot.slane %v5390, %v5403
        %v5405 = vcombine.low %v638, %v650
        %v5406 = vcombine.high %v638, %v650
        %v5408 = vunpack.c.l.s4 1983009808
        %v5409 = vunpack.c.0.s8 %v5408
        %v5410 = vlaneseq
        %v5411 = vshrl.u32 %v5410, 7
        %v5412 = vsub.s32 %v5409, %v5411
        %v5413 = vrot.slane %v5405, %v5412
        %v5415 = vunpack.c.l.s4 1983009808
        %v5416 = vunpack.c.0.s8 %v5415
        %v5417 = vlaneseq
        %v5418 = vshrl.u32 %v5417, 7
        %v5419 = vsub.s32 %v5416, %v5418
        %v5420 = vrot.slane %v5406, %v5419
        %v5421 = vcombine.low %v2272, %v2280
        %v5422 = vcombine.high %v2272, %v2280
        %v5424 = vunpack.c.l.s4 1983009808
        %v5425 = vunpack.c.0.s8 %v5424
        %v5426 = vlaneseq
        %v5427 = vshrl.u32 %v5426, 7
        %v5428 = vsub.s32 %v5425, %v5427
        %v5429 = vrot.slane %v5421, %v5428
        %v5431 = vunpack.c.l.s4 1983009808
        %v5432 = vunpack.c.0.s8 %v5431
        %v5433 = vlaneseq
        %v5434 = vshrl.u32 %v5433, 7
        %v5435 = vsub.s32 %v5432, %v5434
        %v5436 = vrot.slane %v5422, %v5435
        %v5437 = vcombine.low %v2276, %v2284
        %v5438 = vcombine.high %v2276, %v2284
        %v5440 = vunpack.c.l.s4 1983009808
        %v5441 = vunpack.c.0.s8 %v5440
        %v5442 = vlaneseq
        %v5443 = vshrl.u32 %v5442, 7
        %v5444 = vsub.s32 %v5441, %v5443
        %v5445 = vrot.slane %v5437, %v5444
        %v5447 = vunpack.c.l.s4 1983009808
        %v5448 = vunpack.c.0.s8 %v5447
        %v5449 = vlaneseq
        %v5450 = vshrl.u32 %v5449, 7
        %v5451 = vsub.s32 %v5448, %v5450
        %v5452 = vrot.slane %v5438, %v5451
        %v5453 = vcombine.low %v5397, %v5413
        %v5454 = vcombine.high %v5397, %v5413
        %v5456 = vunpack.c.l.s4 1934713408
        %v5457 = vunpack.c.0.s8 %v5456
        %v5458 = vlaneseq
        %v5459 = vshrl.u32 %v5458, 7
        %v5460 = vsub.s32 %v5457, %v5459
        %v5461 = vrot.slane %v5453, %v5460
        %v5463 = vunpack.c.l.s4 1934713408
        %v5464 = vunpack.c.0.s8 %v5463
        %v5465 = vlaneseq
        %v5466 = vshrl.u32 %v5465, 7
        %v5467 = vsub.s32 %v5464, %v5466
        %v5468 = vrot.slane %v5454, %v5467
        %v5469 = vcombine.low %v5404, %v5420
        %v5470 = vcombine.high %v5404, %v5420
        %v5472 = vunpack.c.l.s4 1934713408
        %v5473 = vunpack.c.0.s8 %v5472
        %v5474 = vlaneseq
        %v5475 = vshrl.u32 %v5474, 7
        %v5476 = vsub.s32 %v5473, %v5475
        %v5477 = vrot.slane %v5469, %v5476
        %v5479 = vunpack.c.l.s4 1934713408
        %v5480 = vunpack.c.0.s8 %v5479
        %v5481 = vlaneseq
        %v5482 = vshrl.u32 %v5481, 7
        %v5483 = vsub.s32 %v5480, %v5482
        %v5484 = vrot.slane %v5470, %v5483
        %v5485 = vcombine.low %v5429, %v5445
        %v5486 = vcombine.high %v5429, %v5445
        %v5488 = vunpack.c.l.s4 1934713408
        %v5489 = vunpack.c.0.s8 %v5488
        %v5490 = vlaneseq
        %v5491 = vshrl.u32 %v5490, 7
        %v5492 = vsub.s32 %v5489, %v5491
        %v5493 = vrot.slane %v5485, %v5492
        %v5495 = vunpack.c.l.s4 1934713408
        %v5496 = vunpack.c.0.s8 %v5495
        %v5497 = vlaneseq
        %v5498 = vshrl.u32 %v5497, 7
        %v5499 = vsub.s32 %v5496, %v5498
        %v5500 = vrot.slane %v5486, %v5499
        %v5501 = vcombine.low %v5436, %v5452
        %v5502 = vcombine.high %v5436, %v5452
        %v5504 = vunpack.c.l.s4 1934713408
        %v5505 = vunpack.c.0.s8 %v5504
        %v5506 = vlaneseq
        %v5507 = vshrl.u32 %v5506, 7
        %v5508 = vsub.s32 %v5505, %v5507
        %v5509 = vrot.slane %v5501, %v5508
        %v5511 = vunpack.c.l.s4 1934713408
        %v5512 = vunpack.c.0.s8 %v5511
        %v5513 = vlaneseq
        %v5514 = vshrl.u32 %v5513, 7
        %v5515 = vsub.s32 %v5512, %v5514
        %v5516 = vrot.slane %v5502, %v5515
        %v5517 = vcombine.low %v5461, %v5493
        %v5518 = vcombine.high %v5461, %v5493
        %v5519 = vcombine.low %v5468, %v5500
        %v5520 = vcombine.high %v5468, %v5500
        %v5521 = vcombine.low %v5477, %v5509
        %v5522 = vcombine.high %v5477, %v5509
        %v5523 = vcombine.low %v5484, %v5516
        %v5524 = vcombine.high %v5484, %v5516
        %v5525 = vcombine.low %v2288, %v2296
        %v5526 = vcombine.high %v2288, %v2296
        %v5528 = vunpack.c.l.s4 1983009808
        %v5529 = vunpack.c.0.s8 %v5528
        %v5530 = vlaneseq
        %v5531 = vshrl.u32 %v5530, 7
        %v5532 = vsub.s32 %v5529, %v5531
        %v5533 = vrot.slane %v5525, %v5532
        %v5535 = vunpack.c.l.s4 1983009808
        %v5536 = vunpack.c.0.s8 %v5535
        %v5537 = vlaneseq
        %v5538 = vshrl.u32 %v5537, 7
        %v5539 = vsub.s32 %v5536, %v5538
        %v5540 = vrot.slane %v5526, %v5539
        %v5541 = vcombine.low %v2292, %v2300
        %v5542 = vcombine.high %v2292, %v2300
        %v5544 = vunpack.c.l.s4 1983009808
        %v5545 = vunpack.c.0.s8 %v5544
        %v5546 = vlaneseq
        %v5547 = vshrl.u32 %v5546, 7
        %v5548 = vsub.s32 %v5545, %v5547
        %v5549 = vrot.slane %v5541, %v5548
        %v5551 = vunpack.c.l.s4 1983009808
        %v5552 = vunpack.c.0.s8 %v5551
        %v5553 = vlaneseq
        %v5554 = vshrl.u32 %v5553, 7
        %v5555 = vsub.s32 %v5552, %v5554
        %v5556 = vrot.slane %v5542, %v5555
        %v5557 = vcombine.low %v2304, %v2312
        %v5558 = vcombine.high %v2304, %v2312
        %v5560 = vunpack.c.l.s4 1983009808
        %v5561 = vunpack.c.0.s8 %v5560
        %v5562 = vlaneseq
        %v5563 = vshrl.u32 %v5562, 7
        %v5564 = vsub.s32 %v5561, %v5563
        %v5565 = vrot.slane %v5557, %v5564
        %v5567 = vunpack.c.l.s4 1983009808
        %v5568 = vunpack.c.0.s8 %v5567
        %v5569 = vlaneseq
        %v5570 = vshrl.u32 %v5569, 7
        %v5571 = vsub.s32 %v5568, %v5570
        %v5572 = vrot.slane %v5558, %v5571
        %v5573 = vcombine.low %v2308, %v2316
        %v5574 = vcombine.high %v2308, %v2316
        %v5576 = vunpack.c.l.s4 1983009808
        %v5577 = vunpack.c.0.s8 %v5576
        %v5578 = vlaneseq
        %v5579 = vshrl.u32 %v5578, 7
        %v5580 = vsub.s32 %v5577, %v5579
        %v5581 = vrot.slane %v5573, %v5580
        %v5583 = vunpack.c.l.s4 1983009808
        %v5584 = vunpack.c.0.s8 %v5583
        %v5585 = vlaneseq
        %v5586 = vshrl.u32 %v5585, 7
        %v5587 = vsub.s32 %v5584, %v5586
        %v5588 = vrot.slane %v5574, %v5587
        %v5589 = vcombine.low %v5533, %v5549
        %v5590 = vcombine.high %v5533, %v5549
        %v5592 = vunpack.c.l.s4 1934713408
        %v5593 = vunpack.c.0.s8 %v5592
        %v5594 = vlaneseq
        %v5595 = vshrl.u32 %v5594, 7
        %v5596 = vsub.s32 %v5593, %v5595
        %v5597 = vrot.slane %v5589, %v5596
        %v5599 = vunpack.c.l.s4 1934713408
        %v5600 = vunpack.c.0.s8 %v5599
        %v5601 = vlaneseq
        %v5602 = vshrl.u32 %v5601, 7
        %v5603 = vsub.s32 %v5600, %v5602
        %v5604 = vrot.slane %v5590, %v5603
        %v5605 = vcombine.low %v5540, %v5556
        %v5606 = vcombine.high %v5540, %v5556
        %v5608 = vunpack.c.l.s4 1934713408
        %v5609 = vunpack.c.0.s8 %v5608
        %v5610 = vlaneseq
        %v5611 = vshrl.u32 %v5610, 7
        %v5612 = vsub.s32 %v5609, %v5611
        %v5613 = vrot.slane %v5605, %v5612
        %v5615 = vunpack.c.l.s4 1934713408
        %v5616 = vunpack.c.0.s8 %v5615
        %v5617 = vlaneseq
        %v5618 = vshrl.u32 %v5617, 7
        %v5619 = vsub.s32 %v5616, %v5618
        %v5620 = vrot.slane %v5606, %v5619
        %v5621 = vcombine.low %v5565, %v5581
        %v5622 = vcombine.high %v5565, %v5581
        %v5624 = vunpack.c.l.s4 1934713408
        %v5625 = vunpack.c.0.s8 %v5624
        %v5626 = vlaneseq
        %v5627 = vshrl.u32 %v5626, 7
        %v5628 = vsub.s32 %v5625, %v5627
        %v5629 = vrot.slane %v5621, %v5628
        %v5631 = vunpack.c.l.s4 1934713408
        %v5632 = vunpack.c.0.s8 %v5631
        %v5633 = vlaneseq
        %v5634 = vshrl.u32 %v5633, 7
        %v5635 = vsub.s32 %v5632, %v5634
        %v5636 = vrot.slane %v5622, %v5635
        %v5637 = vcombine.low %v5572, %v5588
        %v5638 = vcombine.high %v5572, %v5588
        %v5640 = vunpack.c.l.s4 1934713408
        %v5641 = vunpack.c.0.s8 %v5640
        %v5642 = vlaneseq
        %v5643 = vshrl.u32 %v5642, 7
        %v5644 = vsub.s32 %v5641, %v5643
        %v5645 = vrot.slane %v5637, %v5644
        %v5647 = vunpack.c.l.s4 1934713408
        %v5648 = vunpack.c.0.s8 %v5647
        %v5649 = vlaneseq
        %v5650 = vshrl.u32 %v5649, 7
        %v5651 = vsub.s32 %v5648, %v5650
        %v5652 = vrot.slane %v5638, %v5651
        %v5653 = vcombine.low %v5597, %v5629
        %v5654 = vcombine.high %v5597, %v5629
        %v5655 = vcombine.low %v5604, %v5636
        %v5656 = vcombine.high %v5604, %v5636
        %v5657 = vcombine.low %v5613, %v5645
        %v5658 = vcombine.high %v5613, %v5645
        %v5659 = vcombine.low %v5620, %v5652
        %v5660 = vcombine.high %v5620, %v5652
        %v5661 = vcombine.low %v2320, %v2328
        %v5662 = vcombine.high %v2320, %v2328
        %v5664 = vunpack.c.l.s4 1983009808
        %v5665 = vunpack.c.0.s8 %v5664
        %v5666 = vlaneseq
        %v5667 = vshrl.u32 %v5666, 7
        %v5668 = vsub.s32 %v5665, %v5667
        %v5669 = vrot.slane %v5661, %v5668
        %v5671 = vunpack.c.l.s4 1983009808
        %v5672 = vunpack.c.0.s8 %v5671
        %v5673 = vlaneseq
        %v5674 = vshrl.u32 %v5673, 7
        %v5675 = vsub.s32 %v5672, %v5674
        %v5676 = vrot.slane %v5662, %v5675
        %v5677 = vcombine.low %v2324, %v2332
        %v5678 = vcombine.high %v2324, %v2332
        %v5680 = vunpack.c.l.s4 1983009808
        %v5681 = vunpack.c.0.s8 %v5680
        %v5682 = vlaneseq
        %v5683 = vshrl.u32 %v5682, 7
        %v5684 = vsub.s32 %v5681, %v5683
        %v5685 = vrot.slane %v5677, %v5684
        %v5687 = vunpack.c.l.s4 1983009808
        %v5688 = vunpack.c.0.s8 %v5687
        %v5689 = vlaneseq
        %v5690 = vshrl.u32 %v5689, 7
        %v5691 = vsub.s32 %v5688, %v5690
        %v5692 = vrot.slane %v5678, %v5691
        %v5693 = vcombine.low %v2336, %v2344
        %v5694 = vcombine.high %v2336, %v2344
        %v5696 = vunpack.c.l.s4 1983009808
        %v5697 = vunpack.c.0.s8 %v5696
        %v5698 = vlaneseq
        %v5699 = vshrl.u32 %v5698, 7
        %v5700 = vsub.s32 %v5697, %v5699
        %v5701 = vrot.slane %v5693, %v5700
        %v5703 = vunpack.c.l.s4 1983009808
        %v5704 = vunpack.c.0.s8 %v5703
        %v5705 = vlaneseq
        %v5706 = vshrl.u32 %v5705, 7
        %v5707 = vsub.s32 %v5704, %v5706
        %v5708 = vrot.slane %v5694, %v5707
        %v5709 = vcombine.low %v2340, %v2348
        %v5710 = vcombine.high %v2340, %v2348
        %v5712 = vunpack.c.l.s4 1983009808
        %v5713 = vunpack.c.0.s8 %v5712
        %v5714 = vlaneseq
        %v5715 = vshrl.u32 %v5714, 7
        %v5716 = vsub.s32 %v5713, %v5715
        %v5717 = vrot.slane %v5709, %v5716
        %v5719 = vunpack.c.l.s4 1983009808
        %v5720 = vunpack.c.0.s8 %v5719
        %v5721 = vlaneseq
        %v5722 = vshrl.u32 %v5721, 7
        %v5723 = vsub.s32 %v5720, %v5722
        %v5724 = vrot.slane %v5710, %v5723
        %v5725 = vcombine.low %v5669, %v5685
        %v5726 = vcombine.high %v5669, %v5685
        %v5728 = vunpack.c.l.s4 1934713408
        %v5729 = vunpack.c.0.s8 %v5728
        %v5730 = vlaneseq
        %v5731 = vshrl.u32 %v5730, 7
        %v5732 = vsub.s32 %v5729, %v5731
        %v5733 = vrot.slane %v5725, %v5732
        %v5735 = vunpack.c.l.s4 1934713408
        %v5736 = vunpack.c.0.s8 %v5735
        %v5737 = vlaneseq
        %v5738 = vshrl.u32 %v5737, 7
        %v5739 = vsub.s32 %v5736, %v5738
        %v5740 = vrot.slane %v5726, %v5739
        %v5741 = vcombine.low %v5676, %v5692
        %v5742 = vcombine.high %v5676, %v5692
        %v5744 = vunpack.c.l.s4 1934713408
        %v5745 = vunpack.c.0.s8 %v5744
        %v5746 = vlaneseq
        %v5747 = vshrl.u32 %v5746, 7
        %v5748 = vsub.s32 %v5745, %v5747
        %v5749 = vrot.slane %v5741, %v5748
        %v5751 = vunpack.c.l.s4 1934713408
        %v5752 = vunpack.c.0.s8 %v5751
        %v5753 = vlaneseq
        %v5754 = vshrl.u32 %v5753, 7
        %v5755 = vsub.s32 %v5752, %v5754
        %v5756 = vrot.slane %v5742, %v5755
        %v5757 = vcombine.low %v5701, %v5717
        %v5758 = vcombine.high %v5701, %v5717
        %v5760 = vunpack.c.l.s4 1934713408
        %v5761 = vunpack.c.0.s8 %v5760
        %v5762 = vlaneseq
        %v5763 = vshrl.u32 %v5762, 7
        %v5764 = vsub.s32 %v5761, %v5763
        %v5765 = vrot.slane %v5757, %v5764
        %v5767 = vunpack.c.l.s4 1934713408
        %v5768 = vunpack.c.0.s8 %v5767
        %v5769 = vlaneseq
        %v5770 = vshrl.u32 %v5769, 7
        %v5771 = vsub.s32 %v5768, %v5770
        %v5772 = vrot.slane %v5758, %v5771
        %v5773 = vcombine.low %v5708, %v5724
        %v5774 = vcombine.high %v5708, %v5724
        %v5776 = vunpack.c.l.s4 1934713408
        %v5777 = vunpack.c.0.s8 %v5776
        %v5778 = vlaneseq
        %v5779 = vshrl.u32 %v5778, 7
        %v5780 = vsub.s32 %v5777, %v5779
        %v5781 = vrot.slane %v5773, %v5780
        %v5783 = vunpack.c.l.s4 1934713408
        %v5784 = vunpack.c.0.s8 %v5783
        %v5785 = vlaneseq
        %v5786 = vshrl.u32 %v5785, 7
        %v5787 = vsub.s32 %v5784, %v5786
        %v5788 = vrot.slane %v5774, %v5787
        %v5789 = vcombine.low %v5733, %v5765
        %v5790 = vcombine.high %v5733, %v5765
        %v5791 = vcombine.low %v5740, %v5772
        %v5792 = vcombine.high %v5740, %v5772
        %v5793 = vcombine.low %v5749, %v5781
        %v5794 = vcombine.high %v5749, %v5781
        %v5795 = vcombine.low %v5756, %v5788
        %v5796 = vcombine.high %v5756, %v5788
        %v5797 = vcombine.low %v2352, %v2360
        %v5798 = vcombine.high %v2352, %v2360
        %v5800 = vunpack.c.l.s4 1983009808
        %v5801 = vunpack.c.0.s8 %v5800
        %v5802 = vlaneseq
        %v5803 = vshrl.u32 %v5802, 7
        %v5804 = vsub.s32 %v5801, %v5803
        %v5805 = vrot.slane %v5797, %v5804
        %v5807 = vunpack.c.l.s4 1983009808
        %v5808 = vunpack.c.0.s8 %v5807
        %v5809 = vlaneseq
        %v5810 = vshrl.u32 %v5809, 7
        %v5811 = vsub.s32 %v5808, %v5810
        %v5812 = vrot.slane %v5798, %v5811
        %v5813 = vcombine.low %v2356, %v2364
        %v5814 = vcombine.high %v2356, %v2364
        %v5816 = vunpack.c.l.s4 1983009808
        %v5817 = vunpack.c.0.s8 %v5816
        %v5818 = vlaneseq
        %v5819 = vshrl.u32 %v5818, 7
        %v5820 = vsub.s32 %v5817, %v5819
        %v5821 = vrot.slane %v5813, %v5820
        %v5823 = vunpack.c.l.s4 1983009808
        %v5824 = vunpack.c.0.s8 %v5823
        %v5825 = vlaneseq
        %v5826 = vshrl.u32 %v5825, 7
        %v5827 = vsub.s32 %v5824, %v5826
        %v5828 = vrot.slane %v5814, %v5827
        %v5829 = vcombine.low %v2368, %v2376
        %v5830 = vcombine.high %v2368, %v2376
        %v5832 = vunpack.c.l.s4 1983009808
        %v5833 = vunpack.c.0.s8 %v5832
        %v5834 = vlaneseq
        %v5835 = vshrl.u32 %v5834, 7
        %v5836 = vsub.s32 %v5833, %v5835
        %v5837 = vrot.slane %v5829, %v5836
        %v5839 = vunpack.c.l.s4 1983009808
        %v5840 = vunpack.c.0.s8 %v5839
        %v5841 = vlaneseq
        %v5842 = vshrl.u32 %v5841, 7
        %v5843 = vsub.s32 %v5840, %v5842
        %v5844 = vrot.slane %v5830, %v5843
        %v5845 = vcombine.low %v2372, %v2380
        %v5846 = vcombine.high %v2372, %v2380
        %v5848 = vunpack.c.l.s4 1983009808
        %v5849 = vunpack.c.0.s8 %v5848
        %v5850 = vlaneseq
        %v5851 = vshrl.u32 %v5850, 7
        %v5852 = vsub.s32 %v5849, %v5851
        %v5853 = vrot.slane %v5845, %v5852
        %v5855 = vunpack.c.l.s4 1983009808
        %v5856 = vunpack.c.0.s8 %v5855
        %v5857 = vlaneseq
        %v5858 = vshrl.u32 %v5857, 7
        %v5859 = vsub.s32 %v5856, %v5858
        %v5860 = vrot.slane %v5846, %v5859
        %v5861 = vcombine.low %v5805, %v5821
        %v5862 = vcombine.high %v5805, %v5821
        %v5864 = vunpack.c.l.s4 1934713408
        %v5865 = vunpack.c.0.s8 %v5864
        %v5866 = vlaneseq
        %v5867 = vshrl.u32 %v5866, 7
        %v5868 = vsub.s32 %v5865, %v5867
        %v5869 = vrot.slane %v5861, %v5868
        %v5871 = vunpack.c.l.s4 1934713408
        %v5872 = vunpack.c.0.s8 %v5871
        %v5873 = vlaneseq
        %v5874 = vshrl.u32 %v5873, 7
        %v5875 = vsub.s32 %v5872, %v5874
        %v5876 = vrot.slane %v5862, %v5875
        %v5877 = vcombine.low %v5812, %v5828
        %v5878 = vcombine.high %v5812, %v5828
        %v5880 = vunpack.c.l.s4 1934713408
        %v5881 = vunpack.c.0.s8 %v5880
        %v5882 = vlaneseq
        %v5883 = vshrl.u32 %v5882, 7
        %v5884 = vsub.s32 %v5881, %v5883
        %v5885 = vrot.slane %v5877, %v5884
        %v5887 = vunpack.c.l.s4 1934713408
        %v5888 = vunpack.c.0.s8 %v5887
        %v5889 = vlaneseq
        %v5890 = vshrl.u32 %v5889, 7
        %v5891 = vsub.s32 %v5888, %v5890
        %v5892 = vrot.slane %v5878, %v5891
        %v5893 = vcombine.low %v5837, %v5853
        %v5894 = vcombine.high %v5837, %v5853
        %v5896 = vunpack.c.l.s4 1934713408
        %v5897 = vunpack.c.0.s8 %v5896
        %v5898 = vlaneseq
        %v5899 = vshrl.u32 %v5898, 7
        %v5900 = vsub.s32 %v5897, %v5899
        %v5901 = vrot.slane %v5893, %v5900
        %v5903 = vunpack.c.l.s4 1934713408
        %v5904 = vunpack.c.0.s8 %v5903
        %v5905 = vlaneseq
        %v5906 = vshrl.u32 %v5905, 7
        %v5907 = vsub.s32 %v5904, %v5906
        %v5908 = vrot.slane %v5894, %v5907
        %v5909 = vcombine.low %v5844, %v5860
        %v5910 = vcombine.high %v5844, %v5860
        %v5912 = vunpack.c.l.s4 1934713408
        %v5913 = vunpack.c.0.s8 %v5912
        %v5914 = vlaneseq
        %v5915 = vshrl.u32 %v5914, 7
        %v5916 = vsub.s32 %v5913, %v5915
        %v5917 = vrot.slane %v5909, %v5916
        %v5919 = vunpack.c.l.s4 1934713408
        %v5920 = vunpack.c.0.s8 %v5919
        %v5921 = vlaneseq
        %v5922 = vshrl.u32 %v5921, 7
        %v5923 = vsub.s32 %v5920, %v5922
        %v5924 = vrot.slane %v5910, %v5923
        %v5925 = vcombine.low %v5869, %v5901
        %v5926 = vcombine.high %v5869, %v5901
        %v5927 = vcombine.low %v5876, %v5908
        %v5928 = vcombine.high %v5876, %v5908
        %v5929 = vcombine.low %v5885, %v5917
        %v5930 = vcombine.high %v5885, %v5917
        %v5931 = vcombine.low %v5892, %v5924
        %v5932 = vcombine.high %v5892, %v5924
        %v5933 = vcombine.low %v2384, %v2392
        %v5934 = vcombine.high %v2384, %v2392
        %v5936 = vunpack.c.l.s4 1983009808
        %v5937 = vunpack.c.0.s8 %v5936
        %v5938 = vlaneseq
        %v5939 = vshrl.u32 %v5938, 7
        %v5940 = vsub.s32 %v5937, %v5939
        %v5941 = vrot.slane %v5933, %v5940
        %v5943 = vunpack.c.l.s4 1983009808
        %v5944 = vunpack.c.0.s8 %v5943
        %v5945 = vlaneseq
        %v5946 = vshrl.u32 %v5945, 7
        %v5947 = vsub.s32 %v5944, %v5946
        %v5948 = vrot.slane %v5934, %v5947
        %v5949 = vcombine.low %v2388, %v2396
        %v5950 = vcombine.high %v2388, %v2396
        %v5952 = vunpack.c.l.s4 1983009808
        %v5953 = vunpack.c.0.s8 %v5952
        %v5954 = vlaneseq
        %v5955 = vshrl.u32 %v5954, 7
        %v5956 = vsub.s32 %v5953, %v5955
        %v5957 = vrot.slane %v5949, %v5956
        %v5959 = vunpack.c.l.s4 1983009808
        %v5960 = vunpack.c.0.s8 %v5959
        %v5961 = vlaneseq
        %v5962 = vshrl.u32 %v5961, 7
        %v5963 = vsub.s32 %v5960, %v5962
        %v5964 = vrot.slane %v5950, %v5963
        %v5965 = vcombine.low %v2400, %v2408
        %v5966 = vcombine.high %v2400, %v2408
        %v5968 = vunpack.c.l.s4 1983009808
        %v5969 = vunpack.c.0.s8 %v5968
        %v5970 = vlaneseq
        %v5971 = vshrl.u32 %v5970, 7
        %v5972 = vsub.s32 %v5969, %v5971
        %v5973 = vrot.slane %v5965, %v5972
        %v5975 = vunpack.c.l.s4 1983009808
        %v5976 = vunpack.c.0.s8 %v5975
        %v5977 = vlaneseq
        %v5978 = vshrl.u32 %v5977, 7
        %v5979 = vsub.s32 %v5976, %v5978
        %v5980 = vrot.slane %v5966, %v5979
        %v5981 = vcombine.low %v2404, %v2412
        %v5982 = vcombine.high %v2404, %v2412
        %v5984 = vunpack.c.l.s4 1983009808
        %v5985 = vunpack.c.0.s8 %v5984
        %v5986 = vlaneseq
        %v5987 = vshrl.u32 %v5986, 7
        %v5988 = vsub.s32 %v5985, %v5987
        %v5989 = vrot.slane %v5981, %v5988
        %v5991 = vunpack.c.l.s4 1983009808
        %v5992 = vunpack.c.0.s8 %v5991
        %v5993 = vlaneseq
        %v5994 = vshrl.u32 %v5993, 7
        %v5995 = vsub.s32 %v5992, %v5994
        %v5996 = vrot.slane %v5982, %v5995
        %v5997 = vcombine.low %v5941, %v5957
        %v5998 = vcombine.high %v5941, %v5957
        %v6000 = vunpack.c.l.s4 1934713408
        %v6001 = vunpack.c.0.s8 %v6000
        %v6002 = vlaneseq
        %v6003 = vshrl.u32 %v6002, 7
        %v6004 = vsub.s32 %v6001, %v6003
        %v6005 = vrot.slane %v5997, %v6004
        %v6007 = vunpack.c.l.s4 1934713408
        %v6008 = vunpack.c.0.s8 %v6007
        %v6009 = vlaneseq
        %v6010 = vshrl.u32 %v6009, 7
        %v6011 = vsub.s32 %v6008, %v6010
        %v6012 = vrot.slane %v5998, %v6011
        %v6013 = vcombine.low %v5948, %v5964
        %v6014 = vcombine.high %v5948, %v5964
        %v6016 = vunpack.c.l.s4 1934713408
        %v6017 = vunpack.c.0.s8 %v6016
        %v6018 = vlaneseq
        %v6019 = vshrl.u32 %v6018, 7
        %v6020 = vsub.s32 %v6017, %v6019
        %v6021 = vrot.slane %v6013, %v6020
        %v6023 = vunpack.c.l.s4 1934713408
        %v6024 = vunpack.c.0.s8 %v6023
        %v6025 = vlaneseq
        %v6026 = vshrl.u32 %v6025, 7
        %v6027 = vsub.s32 %v6024, %v6026
        %v6028 = vrot.slane %v6014, %v6027
        %v6029 = vcombine.low %v5973, %v5989
        %v6030 = vcombine.high %v5973, %v5989
        %v6032 = vunpack.c.l.s4 1934713408
        %v6033 = vunpack.c.0.s8 %v6032
        %v6034 = vlaneseq
        %v6035 = vshrl.u32 %v6034, 7
        %v6036 = vsub.s32 %v6033, %v6035
        %v6037 = vrot.slane %v6029, %v6036
        %v6039 = vunpack.c.l.s4 1934713408
        %v6040 = vunpack.c.0.s8 %v6039
        %v6041 = vlaneseq
        %v6042 = vshrl.u32 %v6041, 7
        %v6043 = vsub.s32 %v6040, %v6042
        %v6044 = vrot.slane %v6030, %v6043
        %v6045 = vcombine.low %v5980, %v5996
        %v6046 = vcombine.high %v5980, %v5996
        %v6048 = vunpack.c.l.s4 1934713408
        %v6049 = vunpack.c.0.s8 %v6048
        %v6050 = vlaneseq
        %v6051 = vshrl.u32 %v6050, 7
        %v6052 = vsub.s32 %v6049, %v6051
        %v6053 = vrot.slane %v6045, %v6052
        %v6055 = vunpack.c.l.s4 1934713408
        %v6056 = vunpack.c.0.s8 %v6055
        %v6057 = vlaneseq
        %v6058 = vshrl.u32 %v6057, 7
        %v6059 = vsub.s32 %v6056, %v6058
        %v6060 = vrot.slane %v6046, %v6059
        %v6061 = vcombine.low %v6005, %v6037
        %v6062 = vcombine.high %v6005, %v6037
        %v6063 = vcombine.low %v6012, %v6044
        %v6064 = vcombine.high %v6012, %v6044
        %v6065 = vcombine.low %v6021, %v6053
        %v6066 = vcombine.high %v6021, %v6053
        %v6067 = vcombine.low %v6028, %v6060
        %v6068 = vcombine.high %v6028, %v6060
        %v6069 = vcombine.low %v2416, %v2424
        %v6070 = vcombine.high %v2416, %v2424
        %v6072 = vunpack.c.l.s4 1983009808
        %v6073 = vunpack.c.0.s8 %v6072
        %v6074 = vlaneseq
        %v6075 = vshrl.u32 %v6074, 7
        %v6076 = vsub.s32 %v6073, %v6075
        %v6077 = vrot.slane %v6069, %v6076
        %v6079 = vunpack.c.l.s4 1983009808
        %v6080 = vunpack.c.0.s8 %v6079
        %v6081 = vlaneseq
        %v6082 = vshrl.u32 %v6081, 7
        %v6083 = vsub.s32 %v6080, %v6082
        %v6084 = vrot.slane %v6070, %v6083
        %v6085 = vcombine.low %v2420, %v2428
        %v6086 = vcombine.high %v2420, %v2428
        %v6088 = vunpack.c.l.s4 1983009808
        %v6089 = vunpack.c.0.s8 %v6088
        %v6090 = vlaneseq
        %v6091 = vshrl.u32 %v6090, 7
        %v6092 = vsub.s32 %v6089, %v6091
        %v6093 = vrot.slane %v6085, %v6092
        %v6095 = vunpack.c.l.s4 1983009808
        %v6096 = vunpack.c.0.s8 %v6095
        %v6097 = vlaneseq
        %v6098 = vshrl.u32 %v6097, 7
        %v6099 = vsub.s32 %v6096, %v6098
        %v6100 = vrot.slane %v6086, %v6099
        %v6101 = vcombine.low %v2432, %v2440
        %v6102 = vcombine.high %v2432, %v2440
        %v6104 = vunpack.c.l.s4 1983009808
        %v6105 = vunpack.c.0.s8 %v6104
        %v6106 = vlaneseq
        %v6107 = vshrl.u32 %v6106, 7
        %v6108 = vsub.s32 %v6105, %v6107
        %v6109 = vrot.slane %v6101, %v6108
        %v6111 = vunpack.c.l.s4 1983009808
        %v6112 = vunpack.c.0.s8 %v6111
        %v6113 = vlaneseq
        %v6114 = vshrl.u32 %v6113, 7
        %v6115 = vsub.s32 %v6112, %v6114
        %v6116 = vrot.slane %v6102, %v6115
        %v6117 = vcombine.low %v2436, %v2444
        %v6118 = vcombine.high %v2436, %v2444
        %v6120 = vunpack.c.l.s4 1983009808
        %v6121 = vunpack.c.0.s8 %v6120
        %v6122 = vlaneseq
        %v6123 = vshrl.u32 %v6122, 7
        %v6124 = vsub.s32 %v6121, %v6123
        %v6125 = vrot.slane %v6117, %v6124
        %v6127 = vunpack.c.l.s4 1983009808
        %v6128 = vunpack.c.0.s8 %v6127
        %v6129 = vlaneseq
        %v6130 = vshrl.u32 %v6129, 7
        %v6131 = vsub.s32 %v6128, %v6130
        %v6132 = vrot.slane %v6118, %v6131
        %v6133 = vcombine.low %v6077, %v6093
        %v6134 = vcombine.high %v6077, %v6093
        %v6136 = vunpack.c.l.s4 1934713408
        %v6137 = vunpack.c.0.s8 %v6136
        %v6138 = vlaneseq
        %v6139 = vshrl.u32 %v6138, 7
        %v6140 = vsub.s32 %v6137, %v6139
        %v6141 = vrot.slane %v6133, %v6140
        %v6143 = vunpack.c.l.s4 1934713408
        %v6144 = vunpack.c.0.s8 %v6143
        %v6145 = vlaneseq
        %v6146 = vshrl.u32 %v6145, 7
        %v6147 = vsub.s32 %v6144, %v6146
        %v6148 = vrot.slane %v6134, %v6147
        %v6149 = vcombine.low %v6084, %v6100
        %v6150 = vcombine.high %v6084, %v6100
        %v6152 = vunpack.c.l.s4 1934713408
        %v6153 = vunpack.c.0.s8 %v6152
        %v6154 = vlaneseq
        %v6155 = vshrl.u32 %v6154, 7
        %v6156 = vsub.s32 %v6153, %v6155
        %v6157 = vrot.slane %v6149, %v6156
        %v6159 = vunpack.c.l.s4 1934713408
        %v6160 = vunpack.c.0.s8 %v6159
        %v6161 = vlaneseq
        %v6162 = vshrl.u32 %v6161, 7
        %v6163 = vsub.s32 %v6160, %v6162
        %v6164 = vrot.slane %v6150, %v6163
        %v6165 = vcombine.low %v6109, %v6125
        %v6166 = vcombine.high %v6109, %v6125
        %v6168 = vunpack.c.l.s4 1934713408
        %v6169 = vunpack.c.0.s8 %v6168
        %v6170 = vlaneseq
        %v6171 = vshrl.u32 %v6170, 7
        %v6172 = vsub.s32 %v6169, %v6171
        %v6173 = vrot.slane %v6165, %v6172
        %v6175 = vunpack.c.l.s4 1934713408
        %v6176 = vunpack.c.0.s8 %v6175
        %v6177 = vlaneseq
        %v6178 = vshrl.u32 %v6177, 7
        %v6179 = vsub.s32 %v6176, %v6178
        %v6180 = vrot.slane %v6166, %v6179
        %v6181 = vcombine.low %v6116, %v6132
        %v6182 = vcombine.high %v6116, %v6132
        %v6184 = vunpack.c.l.s4 1934713408
        %v6185 = vunpack.c.0.s8 %v6184
        %v6186 = vlaneseq
        %v6187 = vshrl.u32 %v6186, 7
        %v6188 = vsub.s32 %v6185, %v6187
        %v6189 = vrot.slane %v6181, %v6188
        %v6191 = vunpack.c.l.s4 1934713408
        %v6192 = vunpack.c.0.s8 %v6191
        %v6193 = vlaneseq
        %v6194 = vshrl.u32 %v6193, 7
        %v6195 = vsub.s32 %v6192, %v6194
        %v6196 = vrot.slane %v6182, %v6195
        %v6197 = vcombine.low %v6141, %v6173
        %v6198 = vcombine.high %v6141, %v6173
        %v6199 = vcombine.low %v6148, %v6180
        %v6200 = vcombine.high %v6148, %v6180
        %v6201 = vcombine.low %v6157, %v6189
        %v6202 = vcombine.high %v6157, %v6189
        %v6203 = vcombine.low %v6164, %v6196
        %v6204 = vcombine.high %v6164, %v6196
        %v6205 = vcombine.low %v2448, %v2456
        %v6206 = vcombine.high %v2448, %v2456
        %v6208 = vunpack.c.l.s4 1983009808
        %v6209 = vunpack.c.0.s8 %v6208
        %v6210 = vlaneseq
        %v6211 = vshrl.u32 %v6210, 7
        %v6212 = vsub.s32 %v6209, %v6211
        %v6213 = vrot.slane %v6205, %v6212
        %v6215 = vunpack.c.l.s4 1983009808
        %v6216 = vunpack.c.0.s8 %v6215
        %v6217 = vlaneseq
        %v6218 = vshrl.u32 %v6217, 7
        %v6219 = vsub.s32 %v6216, %v6218
        %v6220 = vrot.slane %v6206, %v6219
        %v6221 = vcombine.low %v2452, %v2460
        %v6222 = vcombine.high %v2452, %v2460
        %v6224 = vunpack.c.l.s4 1983009808
        %v6225 = vunpack.c.0.s8 %v6224
        %v6226 = vlaneseq
        %v6227 = vshrl.u32 %v6226, 7
        %v6228 = vsub.s32 %v6225, %v6227
        %v6229 = vrot.slane %v6221, %v6228
        %v6231 = vunpack.c.l.s4 1983009808
        %v6232 = vunpack.c.0.s8 %v6231
        %v6233 = vlaneseq
        %v6234 = vshrl.u32 %v6233, 7
        %v6235 = vsub.s32 %v6232, %v6234
        %v6236 = vrot.slane %v6222, %v6235
        %v6237 = vcombine.low %v6213, %v6229
        %v6238 = vcombine.high %v6213, %v6229
        %v6240 = vunpack.c.l.s4 1934713408
        %v6241 = vunpack.c.0.s8 %v6240
        %v6242 = vlaneseq
        %v6243 = vshrl.u32 %v6242, 7
        %v6244 = vsub.s32 %v6241, %v6243
        %v6245 = vrot.slane %v6237, %v6244
        %v6247 = vunpack.c.l.s4 1934713408
        %v6248 = vunpack.c.0.s8 %v6247
        %v6249 = vlaneseq
        %v6250 = vshrl.u32 %v6249, 7
        %v6251 = vsub.s32 %v6248, %v6250
        %v6252 = vrot.slane %v6238, %v6251
        %v6253 = vcombine.low %v6220, %v6236
        %v6254 = vcombine.high %v6220, %v6236
        %v6256 = vunpack.c.l.s4 1934713408
        %v6257 = vunpack.c.0.s8 %v6256
        %v6258 = vlaneseq
        %v6259 = vshrl.u32 %v6258, 7
        %v6260 = vsub.s32 %v6257, %v6259
        %v6261 = vrot.slane %v6253, %v6260
        %v6263 = vunpack.c.l.s4 1934713408
        %v6264 = vunpack.c.0.s8 %v6263
        %v6265 = vlaneseq
        %v6266 = vshrl.u32 %v6265, 7
        %v6267 = vsub.s32 %v6264, %v6266
        %v6268 = vrot.slane %v6254, %v6267
        %v6269 = vcombine.low %v6245, %v5733
        %v6270 = vcombine.high %v6245, %v5733
        %v6271 = vcombine.low %v6252, %v5740
        %v6272 = vcombine.high %v6252, %v5740
        %v6273 = vcombine.low %v6261, %v5749
        %v6274 = vcombine.high %v6261, %v5749
        %v6275 = vcombine.low %v6268, %v5756
        %v6276 = vcombine.high %v6268, %v5756
        %v6277 = vcombine.low %v2464, %v2472
        %v6278 = vcombine.high %v2464, %v2472
        %v6280 = vunpack.c.l.s4 1983009808
        %v6281 = vunpack.c.0.s8 %v6280
        %v6282 = vlaneseq
        %v6283 = vshrl.u32 %v6282, 7
        %v6284 = vsub.s32 %v6281, %v6283
        %v6285 = vrot.slane %v6277, %v6284
        %v6287 = vunpack.c.l.s4 1983009808
        %v6288 = vunpack.c.0.s8 %v6287
        %v6289 = vlaneseq
        %v6290 = vshrl.u32 %v6289, 7
        %v6291 = vsub.s32 %v6288, %v6290
        %v6292 = vrot.slane %v6278, %v6291
        %v6293 = vcombine.low %v2468, %v2476
        %v6294 = vcombine.high %v2468, %v2476
        %v6296 = vunpack.c.l.s4 1983009808
        %v6297 = vunpack.c.0.s8 %v6296
        %v6298 = vlaneseq
        %v6299 = vshrl.u32 %v6298, 7
        %v6300 = vsub.s32 %v6297, %v6299
        %v6301 = vrot.slane %v6293, %v6300
        %v6303 = vunpack.c.l.s4 1983009808
        %v6304 = vunpack.c.0.s8 %v6303
        %v6305 = vlaneseq
        %v6306 = vshrl.u32 %v6305, 7
        %v6307 = vsub.s32 %v6304, %v6306
        %v6308 = vrot.slane %v6294, %v6307
        %v6309 = vcombine.low %v2480, %v2488
        %v6310 = vcombine.high %v2480, %v2488
        %v6312 = vunpack.c.l.s4 1983009808
        %v6313 = vunpack.c.0.s8 %v6312
        %v6314 = vlaneseq
        %v6315 = vshrl.u32 %v6314, 7
        %v6316 = vsub.s32 %v6313, %v6315
        %v6317 = vrot.slane %v6309, %v6316
        %v6319 = vunpack.c.l.s4 1983009808
        %v6320 = vunpack.c.0.s8 %v6319
        %v6321 = vlaneseq
        %v6322 = vshrl.u32 %v6321, 7
        %v6323 = vsub.s32 %v6320, %v6322
        %v6324 = vrot.slane %v6310, %v6323
        %v6325 = vcombine.low %v2484, %v2492
        %v6326 = vcombine.high %v2484, %v2492
        %v6328 = vunpack.c.l.s4 1983009808
        %v6329 = vunpack.c.0.s8 %v6328
        %v6330 = vlaneseq
        %v6331 = vshrl.u32 %v6330, 7
        %v6332 = vsub.s32 %v6329, %v6331
        %v6333 = vrot.slane %v6325, %v6332
        %v6335 = vunpack.c.l.s4 1983009808
        %v6336 = vunpack.c.0.s8 %v6335
        %v6337 = vlaneseq
        %v6338 = vshrl.u32 %v6337, 7
        %v6339 = vsub.s32 %v6336, %v6338
        %v6340 = vrot.slane %v6326, %v6339
        %v6341 = vcombine.low %v6285, %v6301
        %v6342 = vcombine.high %v6285, %v6301
        %v6344 = vunpack.c.l.s4 1934713408
        %v6345 = vunpack.c.0.s8 %v6344
        %v6346 = vlaneseq
        %v6347 = vshrl.u32 %v6346, 7
        %v6348 = vsub.s32 %v6345, %v6347
        %v6349 = vrot.slane %v6341, %v6348
        %v6351 = vunpack.c.l.s4 1934713408
        %v6352 = vunpack.c.0.s8 %v6351
        %v6353 = vlaneseq
        %v6354 = vshrl.u32 %v6353, 7
        %v6355 = vsub.s32 %v6352, %v6354
        %v6356 = vrot.slane %v6342, %v6355
        %v6357 = vcombine.low %v6292, %v6308
        %v6358 = vcombine.high %v6292, %v6308
        %v6360 = vunpack.c.l.s4 1934713408
        %v6361 = vunpack.c.0.s8 %v6360
        %v6362 = vlaneseq
        %v6363 = vshrl.u32 %v6362, 7
        %v6364 = vsub.s32 %v6361, %v6363
        %v6365 = vrot.slane %v6357, %v6364
        %v6367 = vunpack.c.l.s4 1934713408
        %v6368 = vunpack.c.0.s8 %v6367
        %v6369 = vlaneseq
        %v6370 = vshrl.u32 %v6369, 7
        %v6371 = vsub.s32 %v6368, %v6370
        %v6372 = vrot.slane %v6358, %v6371
        %v6373 = vcombine.low %v6317, %v6333
        %v6374 = vcombine.high %v6317, %v6333
        %v6376 = vunpack.c.l.s4 1934713408
        %v6377 = vunpack.c.0.s8 %v6376
        %v6378 = vlaneseq
        %v6379 = vshrl.u32 %v6378, 7
        %v6380 = vsub.s32 %v6377, %v6379
        %v6381 = vrot.slane %v6373, %v6380
        %v6383 = vunpack.c.l.s4 1934713408
        %v6384 = vunpack.c.0.s8 %v6383
        %v6385 = vlaneseq
        %v6386 = vshrl.u32 %v6385, 7
        %v6387 = vsub.s32 %v6384, %v6386
        %v6388 = vrot.slane %v6374, %v6387
        %v6389 = vcombine.low %v6324, %v6340
        %v6390 = vcombine.high %v6324, %v6340
        %v6392 = vunpack.c.l.s4 1934713408
        %v6393 = vunpack.c.0.s8 %v6392
        %v6394 = vlaneseq
        %v6395 = vshrl.u32 %v6394, 7
        %v6396 = vsub.s32 %v6393, %v6395
        %v6397 = vrot.slane %v6389, %v6396
        %v6399 = vunpack.c.l.s4 1934713408
        %v6400 = vunpack.c.0.s8 %v6399
        %v6401 = vlaneseq
        %v6402 = vshrl.u32 %v6401, 7
        %v6403 = vsub.s32 %v6400, %v6402
        %v6404 = vrot.slane %v6390, %v6403
        %v6405 = vcombine.low %v6349, %v6381
        %v6406 = vcombine.high %v6349, %v6381
        %v6407 = vcombine.low %v6356, %v6388
        %v6408 = vcombine.high %v6356, %v6388
        %v6409 = vcombine.low %v6365, %v6397
        %v6410 = vcombine.high %v6365, %v6397
        %v6411 = vcombine.low %v6372, %v6404
        %v6412 = vcombine.high %v6372, %v6404
        %v6413 = vcombine.low %v2496, %v2504
        %v6414 = vcombine.high %v2496, %v2504
        %v6416 = vunpack.c.l.s4 1983009808
        %v6417 = vunpack.c.0.s8 %v6416
        %v6418 = vlaneseq
        %v6419 = vshrl.u32 %v6418, 7
        %v6420 = vsub.s32 %v6417, %v6419
        %v6421 = vrot.slane %v6413, %v6420
        %v6423 = vunpack.c.l.s4 1983009808
        %v6424 = vunpack.c.0.s8 %v6423
        %v6425 = vlaneseq
        %v6426 = vshrl.u32 %v6425, 7
        %v6427 = vsub.s32 %v6424, %v6426
        %v6428 = vrot.slane %v6414, %v6427
        %v6429 = vcombine.low %v2500, %v2508
        %v6430 = vcombine.high %v2500, %v2508
        %v6432 = vunpack.c.l.s4 1983009808
        %v6433 = vunpack.c.0.s8 %v6432
        %v6434 = vlaneseq
        %v6435 = vshrl.u32 %v6434, 7
        %v6436 = vsub.s32 %v6433, %v6435
        %v6437 = vrot.slane %v6429, %v6436
        %v6439 = vunpack.c.l.s4 1983009808
        %v6440 = vunpack.c.0.s8 %v6439
        %v6441 = vlaneseq
        %v6442 = vshrl.u32 %v6441, 7
        %v6443 = vsub.s32 %v6440, %v6442
        %v6444 = vrot.slane %v6430, %v6443
        %v6445 = vcombine.low %v2512, %v2520
        %v6446 = vcombine.high %v2512, %v2520
        %v6448 = vunpack.c.l.s4 1983009808
        %v6449 = vunpack.c.0.s8 %v6448
        %v6450 = vlaneseq
        %v6451 = vshrl.u32 %v6450, 7
        %v6452 = vsub.s32 %v6449, %v6451
        %v6453 = vrot.slane %v6445, %v6452
        %v6455 = vunpack.c.l.s4 1983009808
        %v6456 = vunpack.c.0.s8 %v6455
        %v6457 = vlaneseq
        %v6458 = vshrl.u32 %v6457, 7
        %v6459 = vsub.s32 %v6456, %v6458
        %v6460 = vrot.slane %v6446, %v6459
        %v6461 = vcombine.low %v2516, %v2524
        %v6462 = vcombine.high %v2516, %v2524
        %v6464 = vunpack.c.l.s4 1983009808
        %v6465 = vunpack.c.0.s8 %v6464
        %v6466 = vlaneseq
        %v6467 = vshrl.u32 %v6466, 7
        %v6468 = vsub.s32 %v6465, %v6467
        %v6469 = vrot.slane %v6461, %v6468
        %v6471 = vunpack.c.l.s4 1983009808
        %v6472 = vunpack.c.0.s8 %v6471
        %v6473 = vlaneseq
        %v6474 = vshrl.u32 %v6473, 7
        %v6475 = vsub.s32 %v6472, %v6474
        %v6476 = vrot.slane %v6462, %v6475
        %v6477 = vcombine.low %v6421, %v6437
        %v6478 = vcombine.high %v6421, %v6437
        %v6480 = vunpack.c.l.s4 1934713408
        %v6481 = vunpack.c.0.s8 %v6480
        %v6482 = vlaneseq
        %v6483 = vshrl.u32 %v6482, 7
        %v6484 = vsub.s32 %v6481, %v6483
        %v6485 = vrot.slane %v6477, %v6484
        %v6487 = vunpack.c.l.s4 1934713408
        %v6488 = vunpack.c.0.s8 %v6487
        %v6489 = vlaneseq
        %v6490 = vshrl.u32 %v6489, 7
        %v6491 = vsub.s32 %v6488, %v6490
        %v6492 = vrot.slane %v6478, %v6491
        %v6493 = vcombine.low %v6428, %v6444
        %v6494 = vcombine.high %v6428, %v6444
        %v6496 = vunpack.c.l.s4 1934713408
        %v6497 = vunpack.c.0.s8 %v6496
        %v6498 = vlaneseq
        %v6499 = vshrl.u32 %v6498, 7
        %v6500 = vsub.s32 %v6497, %v6499
        %v6501 = vrot.slane %v6493, %v6500
        %v6503 = vunpack.c.l.s4 1934713408
        %v6504 = vunpack.c.0.s8 %v6503
        %v6505 = vlaneseq
        %v6506 = vshrl.u32 %v6505, 7
        %v6507 = vsub.s32 %v6504, %v6506
        %v6508 = vrot.slane %v6494, %v6507
        %v6509 = vcombine.low %v6453, %v6469
        %v6510 = vcombine.high %v6453, %v6469
        %v6512 = vunpack.c.l.s4 1934713408
        %v6513 = vunpack.c.0.s8 %v6512
        %v6514 = vlaneseq
        %v6515 = vshrl.u32 %v6514, 7
        %v6516 = vsub.s32 %v6513, %v6515
        %v6517 = vrot.slane %v6509, %v6516
        %v6519 = vunpack.c.l.s4 1934713408
        %v6520 = vunpack.c.0.s8 %v6519
        %v6521 = vlaneseq
        %v6522 = vshrl.u32 %v6521, 7
        %v6523 = vsub.s32 %v6520, %v6522
        %v6524 = vrot.slane %v6510, %v6523
        %v6525 = vcombine.low %v6460, %v6476
        %v6526 = vcombine.high %v6460, %v6476
        %v6528 = vunpack.c.l.s4 1934713408
        %v6529 = vunpack.c.0.s8 %v6528
        %v6530 = vlaneseq
        %v6531 = vshrl.u32 %v6530, 7
        %v6532 = vsub.s32 %v6529, %v6531
        %v6533 = vrot.slane %v6525, %v6532
        %v6535 = vunpack.c.l.s4 1934713408
        %v6536 = vunpack.c.0.s8 %v6535
        %v6537 = vlaneseq
        %v6538 = vshrl.u32 %v6537, 7
        %v6539 = vsub.s32 %v6536, %v6538
        %v6540 = vrot.slane %v6526, %v6539
        %v6541 = vcombine.low %v6485, %v6517
        %v6542 = vcombine.high %v6485, %v6517
        %v6543 = vcombine.low %v6492, %v6524
        %v6544 = vcombine.high %v6492, %v6524
        %v6545 = vcombine.low %v6501, %v6533
        %v6546 = vcombine.high %v6501, %v6533
        %v6547 = vcombine.low %v6508, %v6540
        %v6548 = vcombine.high %v6508, %v6540
        %v6549 = vcombine.low %v2528, %v2536
        %v6550 = vcombine.high %v2528, %v2536
        %v6552 = vunpack.c.l.s4 1983009808
        %v6553 = vunpack.c.0.s8 %v6552
        %v6554 = vlaneseq
        %v6555 = vshrl.u32 %v6554, 7
        %v6556 = vsub.s32 %v6553, %v6555
        %v6557 = vrot.slane %v6549, %v6556
        %v6559 = vunpack.c.l.s4 1983009808
        %v6560 = vunpack.c.0.s8 %v6559
        %v6561 = vlaneseq
        %v6562 = vshrl.u32 %v6561, 7
        %v6563 = vsub.s32 %v6560, %v6562
        %v6564 = vrot.slane %v6550, %v6563
        %v6565 = vcombine.low %v2532, %v2540
        %v6566 = vcombine.high %v2532, %v2540
        %v6568 = vunpack.c.l.s4 1983009808
        %v6569 = vunpack.c.0.s8 %v6568
        %v6570 = vlaneseq
        %v6571 = vshrl.u32 %v6570, 7
        %v6572 = vsub.s32 %v6569, %v6571
        %v6573 = vrot.slane %v6565, %v6572
        %v6575 = vunpack.c.l.s4 1983009808
        %v6576 = vunpack.c.0.s8 %v6575
        %v6577 = vlaneseq
        %v6578 = vshrl.u32 %v6577, 7
        %v6579 = vsub.s32 %v6576, %v6578
        %v6580 = vrot.slane %v6566, %v6579
        %v6581 = vcombine.low %v2544, %v2552
        %v6582 = vcombine.high %v2544, %v2552
        %v6584 = vunpack.c.l.s4 1983009808
        %v6585 = vunpack.c.0.s8 %v6584
        %v6586 = vlaneseq
        %v6587 = vshrl.u32 %v6586, 7
        %v6588 = vsub.s32 %v6585, %v6587
        %v6589 = vrot.slane %v6581, %v6588
        %v6591 = vunpack.c.l.s4 1983009808
        %v6592 = vunpack.c.0.s8 %v6591
        %v6593 = vlaneseq
        %v6594 = vshrl.u32 %v6593, 7
        %v6595 = vsub.s32 %v6592, %v6594
        %v6596 = vrot.slane %v6582, %v6595
        %v6597 = vcombine.low %v2548, %v2556
        %v6598 = vcombine.high %v2548, %v2556
        %v6600 = vunpack.c.l.s4 1983009808
        %v6601 = vunpack.c.0.s8 %v6600
        %v6602 = vlaneseq
        %v6603 = vshrl.u32 %v6602, 7
        %v6604 = vsub.s32 %v6601, %v6603
        %v6605 = vrot.slane %v6597, %v6604
        %v6607 = vunpack.c.l.s4 1983009808
        %v6608 = vunpack.c.0.s8 %v6607
        %v6609 = vlaneseq
        %v6610 = vshrl.u32 %v6609, 7
        %v6611 = vsub.s32 %v6608, %v6610
        %v6612 = vrot.slane %v6598, %v6611
        %v6613 = vcombine.low %v6557, %v6573
        %v6614 = vcombine.high %v6557, %v6573
        %v6616 = vunpack.c.l.s4 1934713408
        %v6617 = vunpack.c.0.s8 %v6616
        %v6618 = vlaneseq
        %v6619 = vshrl.u32 %v6618, 7
        %v6620 = vsub.s32 %v6617, %v6619
        %v6621 = vrot.slane %v6613, %v6620
        %v6623 = vunpack.c.l.s4 1934713408
        %v6624 = vunpack.c.0.s8 %v6623
        %v6625 = vlaneseq
        %v6626 = vshrl.u32 %v6625, 7
        %v6627 = vsub.s32 %v6624, %v6626
        %v6628 = vrot.slane %v6614, %v6627
        %v6629 = vcombine.low %v6564, %v6580
        %v6630 = vcombine.high %v6564, %v6580
        %v6632 = vunpack.c.l.s4 1934713408
        %v6633 = vunpack.c.0.s8 %v6632
        %v6634 = vlaneseq
        %v6635 = vshrl.u32 %v6634, 7
        %v6636 = vsub.s32 %v6633, %v6635
        %v6637 = vrot.slane %v6629, %v6636
        %v6639 = vunpack.c.l.s4 1934713408
        %v6640 = vunpack.c.0.s8 %v6639
        %v6641 = vlaneseq
        %v6642 = vshrl.u32 %v6641, 7
        %v6643 = vsub.s32 %v6640, %v6642
        %v6644 = vrot.slane %v6630, %v6643
        %v6645 = vcombine.low %v6589, %v6605
        %v6646 = vcombine.high %v6589, %v6605
        %v6648 = vunpack.c.l.s4 1934713408
        %v6649 = vunpack.c.0.s8 %v6648
        %v6650 = vlaneseq
        %v6651 = vshrl.u32 %v6650, 7
        %v6652 = vsub.s32 %v6649, %v6651
        %v6653 = vrot.slane %v6645, %v6652
        %v6655 = vunpack.c.l.s4 1934713408
        %v6656 = vunpack.c.0.s8 %v6655
        %v6657 = vlaneseq
        %v6658 = vshrl.u32 %v6657, 7
        %v6659 = vsub.s32 %v6656, %v6658
        %v6660 = vrot.slane %v6646, %v6659
        %v6661 = vcombine.low %v6596, %v6612
        %v6662 = vcombine.high %v6596, %v6612
        %v6664 = vunpack.c.l.s4 1934713408
        %v6665 = vunpack.c.0.s8 %v6664
        %v6666 = vlaneseq
        %v6667 = vshrl.u32 %v6666, 7
        %v6668 = vsub.s32 %v6665, %v6667
        %v6669 = vrot.slane %v6661, %v6668
        %v6671 = vunpack.c.l.s4 1934713408
        %v6672 = vunpack.c.0.s8 %v6671
        %v6673 = vlaneseq
        %v6674 = vshrl.u32 %v6673, 7
        %v6675 = vsub.s32 %v6672, %v6674
        %v6676 = vrot.slane %v6662, %v6675
        %v6677 = vcombine.low %v6621, %v6653
        %v6678 = vcombine.high %v6621, %v6653
        %v6679 = vcombine.low %v6628, %v6660
        %v6680 = vcombine.high %v6628, %v6660
        %v6681 = vcombine.low %v6637, %v6669
        %v6682 = vcombine.high %v6637, %v6669
        %v6683 = vcombine.low %v6644, %v6676
        %v6684 = vcombine.high %v6644, %v6676
        %v6685 = vcombine.low %v2560, %v2568
        %v6686 = vcombine.high %v2560, %v2568
        %v6688 = vunpack.c.l.s4 1983009808
        %v6689 = vunpack.c.0.s8 %v6688
        %v6690 = vlaneseq
        %v6691 = vshrl.u32 %v6690, 7
        %v6692 = vsub.s32 %v6689, %v6691
        %v6693 = vrot.slane %v6685, %v6692
        %v6695 = vunpack.c.l.s4 1983009808
        %v6696 = vunpack.c.0.s8 %v6695
        %v6697 = vlaneseq
        %v6698 = vshrl.u32 %v6697, 7
        %v6699 = vsub.s32 %v6696, %v6698
        %v6700 = vrot.slane %v6686, %v6699
        %v6701 = vcombine.low %v2564, %v2572
        %v6702 = vcombine.high %v2564, %v2572
        %v6704 = vunpack.c.l.s4 1983009808
        %v6705 = vunpack.c.0.s8 %v6704
        %v6706 = vlaneseq
        %v6707 = vshrl.u32 %v6706, 7
        %v6708 = vsub.s32 %v6705, %v6707
        %v6709 = vrot.slane %v6701, %v6708
        %v6711 = vunpack.c.l.s4 1983009808
        %v6712 = vunpack.c.0.s8 %v6711
        %v6713 = vlaneseq
        %v6714 = vshrl.u32 %v6713, 7
        %v6715 = vsub.s32 %v6712, %v6714
        %v6716 = vrot.slane %v6702, %v6715
        %v6717 = vcombine.low %v2576, %v2584
        %v6718 = vcombine.high %v2576, %v2584
        %v6720 = vunpack.c.l.s4 1983009808
        %v6721 = vunpack.c.0.s8 %v6720
        %v6722 = vlaneseq
        %v6723 = vshrl.u32 %v6722, 7
        %v6724 = vsub.s32 %v6721, %v6723
        %v6725 = vrot.slane %v6717, %v6724
        %v6727 = vunpack.c.l.s4 1983009808
        %v6728 = vunpack.c.0.s8 %v6727
        %v6729 = vlaneseq
        %v6730 = vshrl.u32 %v6729, 7
        %v6731 = vsub.s32 %v6728, %v6730
        %v6732 = vrot.slane %v6718, %v6731
        %v6733 = vcombine.low %v2580, %v2588
        %v6734 = vcombine.high %v2580, %v2588
        %v6736 = vunpack.c.l.s4 1983009808
        %v6737 = vunpack.c.0.s8 %v6736
        %v6738 = vlaneseq
        %v6739 = vshrl.u32 %v6738, 7
        %v6740 = vsub.s32 %v6737, %v6739
        %v6741 = vrot.slane %v6733, %v6740
        %v6743 = vunpack.c.l.s4 1983009808
        %v6744 = vunpack.c.0.s8 %v6743
        %v6745 = vlaneseq
        %v6746 = vshrl.u32 %v6745, 7
        %v6747 = vsub.s32 %v6744, %v6746
        %v6748 = vrot.slane %v6734, %v6747
        %v6749 = vcombine.low %v6693, %v6709
        %v6750 = vcombine.high %v6693, %v6709
        %v6752 = vunpack.c.l.s4 1934713408
        %v6753 = vunpack.c.0.s8 %v6752
        %v6754 = vlaneseq
        %v6755 = vshrl.u32 %v6754, 7
        %v6756 = vsub.s32 %v6753, %v6755
        %v6757 = vrot.slane %v6749, %v6756
        %v6759 = vunpack.c.l.s4 1934713408
        %v6760 = vunpack.c.0.s8 %v6759
        %v6761 = vlaneseq
        %v6762 = vshrl.u32 %v6761, 7
        %v6763 = vsub.s32 %v6760, %v6762
        %v6764 = vrot.slane %v6750, %v6763
        %v6765 = vcombine.low %v6700, %v6716
        %v6766 = vcombine.high %v6700, %v6716
        %v6768 = vunpack.c.l.s4 1934713408
        %v6769 = vunpack.c.0.s8 %v6768
        %v6770 = vlaneseq
        %v6771 = vshrl.u32 %v6770, 7
        %v6772 = vsub.s32 %v6769, %v6771
        %v6773 = vrot.slane %v6765, %v6772
        %v6775 = vunpack.c.l.s4 1934713408
        %v6776 = vunpack.c.0.s8 %v6775
        %v6777 = vlaneseq
        %v6778 = vshrl.u32 %v6777, 7
        %v6779 = vsub.s32 %v6776, %v6778
        %v6780 = vrot.slane %v6766, %v6779
        %v6781 = vcombine.low %v6725, %v6741
        %v6782 = vcombine.high %v6725, %v6741
        %v6784 = vunpack.c.l.s4 1934713408
        %v6785 = vunpack.c.0.s8 %v6784
        %v6786 = vlaneseq
        %v6787 = vshrl.u32 %v6786, 7
        %v6788 = vsub.s32 %v6785, %v6787
        %v6789 = vrot.slane %v6781, %v6788
        %v6791 = vunpack.c.l.s4 1934713408
        %v6792 = vunpack.c.0.s8 %v6791
        %v6793 = vlaneseq
        %v6794 = vshrl.u32 %v6793, 7
        %v6795 = vsub.s32 %v6792, %v6794
        %v6796 = vrot.slane %v6782, %v6795
        %v6797 = vcombine.low %v6732, %v6748
        %v6798 = vcombine.high %v6732, %v6748
        %v6800 = vunpack.c.l.s4 1934713408
        %v6801 = vunpack.c.0.s8 %v6800
        %v6802 = vlaneseq
        %v6803 = vshrl.u32 %v6802, 7
        %v6804 = vsub.s32 %v6801, %v6803
        %v6805 = vrot.slane %v6797, %v6804
        %v6807 = vunpack.c.l.s4 1934713408
        %v6808 = vunpack.c.0.s8 %v6807
        %v6809 = vlaneseq
        %v6810 = vshrl.u32 %v6809, 7
        %v6811 = vsub.s32 %v6808, %v6810
        %v6812 = vrot.slane %v6798, %v6811
        %v6813 = vcombine.low %v6757, %v6789
        %v6814 = vcombine.high %v6757, %v6789
        %v6815 = vcombine.low %v6764, %v6796
        %v6816 = vcombine.high %v6764, %v6796
        %v6817 = vcombine.low %v6773, %v6805
        %v6818 = vcombine.high %v6773, %v6805
        %v6819 = vcombine.low %v6780, %v6812
        %v6820 = vcombine.high %v6780, %v6812
        %v6821 = vcombine.low %v2592, %v2600
        %v6822 = vcombine.high %v2592, %v2600
        %v6824 = vunpack.c.l.s4 1983009808
        %v6825 = vunpack.c.0.s8 %v6824
        %v6826 = vlaneseq
        %v6827 = vshrl.u32 %v6826, 7
        %v6828 = vsub.s32 %v6825, %v6827
        %v6829 = vrot.slane %v6821, %v6828
        %v6831 = vunpack.c.l.s4 1983009808
        %v6832 = vunpack.c.0.s8 %v6831
        %v6833 = vlaneseq
        %v6834 = vshrl.u32 %v6833, 7
        %v6835 = vsub.s32 %v6832, %v6834
        %v6836 = vrot.slane %v6822, %v6835
        %v6837 = vcombine.low %v2596, %v2604
        %v6838 = vcombine.high %v2596, %v2604
        %v6840 = vunpack.c.l.s4 1983009808
        %v6841 = vunpack.c.0.s8 %v6840
        %v6842 = vlaneseq
        %v6843 = vshrl.u32 %v6842, 7
        %v6844 = vsub.s32 %v6841, %v6843
        %v6845 = vrot.slane %v6837, %v6844
        %v6847 = vunpack.c.l.s4 1983009808
        %v6848 = vunpack.c.0.s8 %v6847
        %v6849 = vlaneseq
        %v6850 = vshrl.u32 %v6849, 7
        %v6851 = vsub.s32 %v6848, %v6850
        %v6852 = vrot.slane %v6838, %v6851
        %v6853 = vcombine.low %v2608, %v2616
        %v6854 = vcombine.high %v2608, %v2616
        %v6856 = vunpack.c.l.s4 1983009808
        %v6857 = vunpack.c.0.s8 %v6856
        %v6858 = vlaneseq
        %v6859 = vshrl.u32 %v6858, 7
        %v6860 = vsub.s32 %v6857, %v6859
        %v6861 = vrot.slane %v6853, %v6860
        %v6863 = vunpack.c.l.s4 1983009808
        %v6864 = vunpack.c.0.s8 %v6863
        %v6865 = vlaneseq
        %v6866 = vshrl.u32 %v6865, 7
        %v6867 = vsub.s32 %v6864, %v6866
        %v6868 = vrot.slane %v6854, %v6867
        %v6869 = vcombine.low %v2612, %v2620
        %v6870 = vcombine.high %v2612, %v2620
        %v6872 = vunpack.c.l.s4 1983009808
        %v6873 = vunpack.c.0.s8 %v6872
        %v6874 = vlaneseq
        %v6875 = vshrl.u32 %v6874, 7
        %v6876 = vsub.s32 %v6873, %v6875
        %v6877 = vrot.slane %v6869, %v6876
        %v6879 = vunpack.c.l.s4 1983009808
        %v6880 = vunpack.c.0.s8 %v6879
        %v6881 = vlaneseq
        %v6882 = vshrl.u32 %v6881, 7
        %v6883 = vsub.s32 %v6880, %v6882
        %v6884 = vrot.slane %v6870, %v6883
        %v6885 = vcombine.low %v6829, %v6845
        %v6886 = vcombine.high %v6829, %v6845
        %v6888 = vunpack.c.l.s4 1934713408
        %v6889 = vunpack.c.0.s8 %v6888
        %v6890 = vlaneseq
        %v6891 = vshrl.u32 %v6890, 7
        %v6892 = vsub.s32 %v6889, %v6891
        %v6893 = vrot.slane %v6885, %v6892
        %v6895 = vunpack.c.l.s4 1934713408
        %v6896 = vunpack.c.0.s8 %v6895
        %v6897 = vlaneseq
        %v6898 = vshrl.u32 %v6897, 7
        %v6899 = vsub.s32 %v6896, %v6898
        %v6900 = vrot.slane %v6886, %v6899
        %v6901 = vcombine.low %v6836, %v6852
        %v6902 = vcombine.high %v6836, %v6852
        %v6904 = vunpack.c.l.s4 1934713408
        %v6905 = vunpack.c.0.s8 %v6904
        %v6906 = vlaneseq
        %v6907 = vshrl.u32 %v6906, 7
        %v6908 = vsub.s32 %v6905, %v6907
        %v6909 = vrot.slane %v6901, %v6908
        %v6911 = vunpack.c.l.s4 1934713408
        %v6912 = vunpack.c.0.s8 %v6911
        %v6913 = vlaneseq
        %v6914 = vshrl.u32 %v6913, 7
        %v6915 = vsub.s32 %v6912, %v6914
        %v6916 = vrot.slane %v6902, %v6915
        %v6917 = vcombine.low %v6861, %v6877
        %v6918 = vcombine.high %v6861, %v6877
        %v6920 = vunpack.c.l.s4 1934713408
        %v6921 = vunpack.c.0.s8 %v6920
        %v6922 = vlaneseq
        %v6923 = vshrl.u32 %v6922, 7
        %v6924 = vsub.s32 %v6921, %v6923
        %v6925 = vrot.slane %v6917, %v6924
        %v6927 = vunpack.c.l.s4 1934713408
        %v6928 = vunpack.c.0.s8 %v6927
        %v6929 = vlaneseq
        %v6930 = vshrl.u32 %v6929, 7
        %v6931 = vsub.s32 %v6928, %v6930
        %v6932 = vrot.slane %v6918, %v6931
        %v6933 = vcombine.low %v6868, %v6884
        %v6934 = vcombine.high %v6868, %v6884
        %v6936 = vunpack.c.l.s4 1934713408
        %v6937 = vunpack.c.0.s8 %v6936
        %v6938 = vlaneseq
        %v6939 = vshrl.u32 %v6938, 7
        %v6940 = vsub.s32 %v6937, %v6939
        %v6941 = vrot.slane %v6933, %v6940
        %v6943 = vunpack.c.l.s4 1934713408
        %v6944 = vunpack.c.0.s8 %v6943
        %v6945 = vlaneseq
        %v6946 = vshrl.u32 %v6945, 7
        %v6947 = vsub.s32 %v6944, %v6946
        %v6948 = vrot.slane %v6934, %v6947
        %v6949 = vcombine.low %v6893, %v6925
        %v6950 = vcombine.high %v6893, %v6925
        %v6951 = vcombine.low %v6900, %v6932
        %v6952 = vcombine.high %v6900, %v6932
        %v6953 = vcombine.low %v6909, %v6941
        %v6954 = vcombine.high %v6909, %v6941
        %v6955 = vcombine.low %v6916, %v6948
        %v6956 = vcombine.high %v6916, %v6948
        %v6957 = vcombine.low %v2624, %v2632
        %v6958 = vcombine.high %v2624, %v2632
        %v6960 = vunpack.c.l.s4 1983009808
        %v6961 = vunpack.c.0.s8 %v6960
        %v6962 = vlaneseq
        %v6963 = vshrl.u32 %v6962, 7
        %v6964 = vsub.s32 %v6961, %v6963
        %v6965 = vrot.slane %v6957, %v6964
        %v6967 = vunpack.c.l.s4 1983009808
        %v6968 = vunpack.c.0.s8 %v6967
        %v6969 = vlaneseq
        %v6970 = vshrl.u32 %v6969, 7
        %v6971 = vsub.s32 %v6968, %v6970
        %v6972 = vrot.slane %v6958, %v6971
        %v6973 = vcombine.low %v2628, %v2636
        %v6974 = vcombine.high %v2628, %v2636
        %v6976 = vunpack.c.l.s4 1983009808
        %v6977 = vunpack.c.0.s8 %v6976
        %v6978 = vlaneseq
        %v6979 = vshrl.u32 %v6978, 7
        %v6980 = vsub.s32 %v6977, %v6979
        %v6981 = vrot.slane %v6973, %v6980
        %v6983 = vunpack.c.l.s4 1983009808
        %v6984 = vunpack.c.0.s8 %v6983
        %v6985 = vlaneseq
        %v6986 = vshrl.u32 %v6985, 7
        %v6987 = vsub.s32 %v6984, %v6986
        %v6988 = vrot.slane %v6974, %v6987
        %v6989 = vcombine.low %v2640, %v2648
        %v6990 = vcombine.high %v2640, %v2648
        %v6992 = vunpack.c.l.s4 1983009808
        %v6993 = vunpack.c.0.s8 %v6992
        %v6994 = vlaneseq
        %v6995 = vshrl.u32 %v6994, 7
        %v6996 = vsub.s32 %v6993, %v6995
        %v6997 = vrot.slane %v6989, %v6996
        %v6999 = vunpack.c.l.s4 1983009808
        %v7000 = vunpack.c.0.s8 %v6999
        %v7001 = vlaneseq
        %v7002 = vshrl.u32 %v7001, 7
        %v7003 = vsub.s32 %v7000, %v7002
        %v7004 = vrot.slane %v6990, %v7003
        %v7005 = vcombine.low %v2644, %v2652
        %v7006 = vcombine.high %v2644, %v2652
        %v7008 = vunpack.c.l.s4 1983009808
        %v7009 = vunpack.c.0.s8 %v7008
        %v7010 = vlaneseq
        %v7011 = vshrl.u32 %v7010, 7
        %v7012 = vsub.s32 %v7009, %v7011
        %v7013 = vrot.slane %v7005, %v7012
        %v7015 = vunpack.c.l.s4 1983009808
        %v7016 = vunpack.c.0.s8 %v7015
        %v7017 = vlaneseq
        %v7018 = vshrl.u32 %v7017, 7
        %v7019 = vsub.s32 %v7016, %v7018
        %v7020 = vrot.slane %v7006, %v7019
        %v7021 = vcombine.low %v6965, %v6981
        %v7022 = vcombine.high %v6965, %v6981
        %v7024 = vunpack.c.l.s4 1934713408
        %v7025 = vunpack.c.0.s8 %v7024
        %v7026 = vlaneseq
        %v7027 = vshrl.u32 %v7026, 7
        %v7028 = vsub.s32 %v7025, %v7027
        %v7029 = vrot.slane %v7021, %v7028
        %v7031 = vunpack.c.l.s4 1934713408
        %v7032 = vunpack.c.0.s8 %v7031
        %v7033 = vlaneseq
        %v7034 = vshrl.u32 %v7033, 7
        %v7035 = vsub.s32 %v7032, %v7034
        %v7036 = vrot.slane %v7022, %v7035
        %v7037 = vcombine.low %v6972, %v6988
        %v7038 = vcombine.high %v6972, %v6988
        %v7040 = vunpack.c.l.s4 1934713408
        %v7041 = vunpack.c.0.s8 %v7040
        %v7042 = vlaneseq
        %v7043 = vshrl.u32 %v7042, 7
        %v7044 = vsub.s32 %v7041, %v7043
        %v7045 = vrot.slane %v7037, %v7044
        %v7047 = vunpack.c.l.s4 1934713408
        %v7048 = vunpack.c.0.s8 %v7047
        %v7049 = vlaneseq
        %v7050 = vshrl.u32 %v7049, 7
        %v7051 = vsub.s32 %v7048, %v7050
        %v7052 = vrot.slane %v7038, %v7051
        %v7053 = vcombine.low %v6997, %v7013
        %v7054 = vcombine.high %v6997, %v7013
        %v7056 = vunpack.c.l.s4 1934713408
        %v7057 = vunpack.c.0.s8 %v7056
        %v7058 = vlaneseq
        %v7059 = vshrl.u32 %v7058, 7
        %v7060 = vsub.s32 %v7057, %v7059
        %v7061 = vrot.slane %v7053, %v7060
        %v7063 = vunpack.c.l.s4 1934713408
        %v7064 = vunpack.c.0.s8 %v7063
        %v7065 = vlaneseq
        %v7066 = vshrl.u32 %v7065, 7
        %v7067 = vsub.s32 %v7064, %v7066
        %v7068 = vrot.slane %v7054, %v7067
        %v7069 = vcombine.low %v7004, %v7020
        %v7070 = vcombine.high %v7004, %v7020
        %v7072 = vunpack.c.l.s4 1934713408
        %v7073 = vunpack.c.0.s8 %v7072
        %v7074 = vlaneseq
        %v7075 = vshrl.u32 %v7074, 7
        %v7076 = vsub.s32 %v7073, %v7075
        %v7077 = vrot.slane %v7069, %v7076
        %v7079 = vunpack.c.l.s4 1934713408
        %v7080 = vunpack.c.0.s8 %v7079
        %v7081 = vlaneseq
        %v7082 = vshrl.u32 %v7081, 7
        %v7083 = vsub.s32 %v7080, %v7082
        %v7084 = vrot.slane %v7070, %v7083
        %v7085 = vcombine.low %v7029, %v7061
        %v7086 = vcombine.high %v7029, %v7061
        %v7087 = vcombine.low %v7036, %v7068
        %v7088 = vcombine.high %v7036, %v7068
        %v7089 = vcombine.low %v7045, %v7077
        %v7090 = vcombine.high %v7045, %v7077
        %v7091 = vcombine.low %v7052, %v7084
        %v7092 = vcombine.high %v7052, %v7084
        %v7093 = vcombine.low %v2656, %v2664
        %v7094 = vcombine.high %v2656, %v2664
        %v7096 = vunpack.c.l.s4 1983009808
        %v7097 = vunpack.c.0.s8 %v7096
        %v7098 = vlaneseq
        %v7099 = vshrl.u32 %v7098, 7
        %v7100 = vsub.s32 %v7097, %v7099
        %v7101 = vrot.slane %v7093, %v7100
        %v7103 = vunpack.c.l.s4 1983009808
        %v7104 = vunpack.c.0.s8 %v7103
        %v7105 = vlaneseq
        %v7106 = vshrl.u32 %v7105, 7
        %v7107 = vsub.s32 %v7104, %v7106
        %v7108 = vrot.slane %v7094, %v7107
        %v7109 = vcombine.low %v2660, %v2668
        %v7110 = vcombine.high %v2660, %v2668
        %v7112 = vunpack.c.l.s4 1983009808
        %v7113 = vunpack.c.0.s8 %v7112
        %v7114 = vlaneseq
        %v7115 = vshrl.u32 %v7114, 7
        %v7116 = vsub.s32 %v7113, %v7115
        %v7117 = vrot.slane %v7109, %v7116
        %v7119 = vunpack.c.l.s4 1983009808
        %v7120 = vunpack.c.0.s8 %v7119
        %v7121 = vlaneseq
        %v7122 = vshrl.u32 %v7121, 7
        %v7123 = vsub.s32 %v7120, %v7122
        %v7124 = vrot.slane %v7110, %v7123
        %v7125 = vcombine.low %v2672, %v2680
        %v7126 = vcombine.high %v2672, %v2680
        %v7128 = vunpack.c.l.s4 1983009808
        %v7129 = vunpack.c.0.s8 %v7128
        %v7130 = vlaneseq
        %v7131 = vshrl.u32 %v7130, 7
        %v7132 = vsub.s32 %v7129, %v7131
        %v7133 = vrot.slane %v7125, %v7132
        %v7135 = vunpack.c.l.s4 1983009808
        %v7136 = vunpack.c.0.s8 %v7135
        %v7137 = vlaneseq
        %v7138 = vshrl.u32 %v7137, 7
        %v7139 = vsub.s32 %v7136, %v7138
        %v7140 = vrot.slane %v7126, %v7139
        %v7141 = vcombine.low %v2676, %v2684
        %v7142 = vcombine.high %v2676, %v2684
        %v7144 = vunpack.c.l.s4 1983009808
        %v7145 = vunpack.c.0.s8 %v7144
        %v7146 = vlaneseq
        %v7147 = vshrl.u32 %v7146, 7
        %v7148 = vsub.s32 %v7145, %v7147
        %v7149 = vrot.slane %v7141, %v7148
        %v7151 = vunpack.c.l.s4 1983009808
        %v7152 = vunpack.c.0.s8 %v7151
        %v7153 = vlaneseq
        %v7154 = vshrl.u32 %v7153, 7
        %v7155 = vsub.s32 %v7152, %v7154
        %v7156 = vrot.slane %v7142, %v7155
        %v7157 = vcombine.low %v7101, %v7117
        %v7158 = vcombine.high %v7101, %v7117
        %v7160 = vunpack.c.l.s4 1934713408
        %v7161 = vunpack.c.0.s8 %v7160
        %v7162 = vlaneseq
        %v7163 = vshrl.u32 %v7162, 7
        %v7164 = vsub.s32 %v7161, %v7163
        %v7165 = vrot.slane %v7157, %v7164
        %v7167 = vunpack.c.l.s4 1934713408
        %v7168 = vunpack.c.0.s8 %v7167
        %v7169 = vlaneseq
        %v7170 = vshrl.u32 %v7169, 7
        %v7171 = vsub.s32 %v7168, %v7170
        %v7172 = vrot.slane %v7158, %v7171
        %v7173 = vcombine.low %v7108, %v7124
        %v7174 = vcombine.high %v7108, %v7124
        %v7176 = vunpack.c.l.s4 1934713408
        %v7177 = vunpack.c.0.s8 %v7176
        %v7178 = vlaneseq
        %v7179 = vshrl.u32 %v7178, 7
        %v7180 = vsub.s32 %v7177, %v7179
        %v7181 = vrot.slane %v7173, %v7180
        %v7183 = vunpack.c.l.s4 1934713408
        %v7184 = vunpack.c.0.s8 %v7183
        %v7185 = vlaneseq
        %v7186 = vshrl.u32 %v7185, 7
        %v7187 = vsub.s32 %v7184, %v7186
        %v7188 = vrot.slane %v7174, %v7187
        %v7189 = vcombine.low %v7133, %v7149
        %v7190 = vcombine.high %v7133, %v7149
        %v7192 = vunpack.c.l.s4 1934713408
        %v7193 = vunpack.c.0.s8 %v7192
        %v7194 = vlaneseq
        %v7195 = vshrl.u32 %v7194, 7
        %v7196 = vsub.s32 %v7193, %v7195
        %v7197 = vrot.slane %v7189, %v7196
        %v7199 = vunpack.c.l.s4 1934713408
        %v7200 = vunpack.c.0.s8 %v7199
        %v7201 = vlaneseq
        %v7202 = vshrl.u32 %v7201, 7
        %v7203 = vsub.s32 %v7200, %v7202
        %v7204 = vrot.slane %v7190, %v7203
        %v7205 = vcombine.low %v7140, %v7156
        %v7206 = vcombine.high %v7140, %v7156
        %v7208 = vunpack.c.l.s4 1934713408
        %v7209 = vunpack.c.0.s8 %v7208
        %v7210 = vlaneseq
        %v7211 = vshrl.u32 %v7210, 7
        %v7212 = vsub.s32 %v7209, %v7211
        %v7213 = vrot.slane %v7205, %v7212
        %v7215 = vunpack.c.l.s4 1934713408
        %v7216 = vunpack.c.0.s8 %v7215
        %v7217 = vlaneseq
        %v7218 = vshrl.u32 %v7217, 7
        %v7219 = vsub.s32 %v7216, %v7218
        %v7220 = vrot.slane %v7206, %v7219
        %v7221 = vcombine.low %v7165, %v7197
        %v7222 = vcombine.high %v7165, %v7197
        %v7223 = vcombine.low %v7172, %v7204
        %v7224 = vcombine.high %v7172, %v7204
        %v7225 = vcombine.low %v7181, %v7213
        %v7226 = vcombine.high %v7181, %v7213
        %v7227 = vcombine.low %v7188, %v7220
        %v7228 = vcombine.high %v7188, %v7220
        %v7229 = vcombine.low %v2688, %v2696
        %v7230 = vcombine.high %v2688, %v2696
        %v7232 = vunpack.c.l.s4 1983009808
        %v7233 = vunpack.c.0.s8 %v7232
        %v7234 = vlaneseq
        %v7235 = vshrl.u32 %v7234, 7
        %v7236 = vsub.s32 %v7233, %v7235
        %v7237 = vrot.slane %v7229, %v7236
        %v7239 = vunpack.c.l.s4 1983009808
        %v7240 = vunpack.c.0.s8 %v7239
        %v7241 = vlaneseq
        %v7242 = vshrl.u32 %v7241, 7
        %v7243 = vsub.s32 %v7240, %v7242
        %v7244 = vrot.slane %v7230, %v7243
        %v7245 = vcombine.low %v2692, %v2700
        %v7246 = vcombine.high %v2692, %v2700
        %v7248 = vunpack.c.l.s4 1983009808
        %v7249 = vunpack.c.0.s8 %v7248
        %v7250 = vlaneseq
        %v7251 = vshrl.u32 %v7250, 7
        %v7252 = vsub.s32 %v7249, %v7251
        %v7253 = vrot.slane %v7245, %v7252
        %v7255 = vunpack.c.l.s4 1983009808
        %v7256 = vunpack.c.0.s8 %v7255
        %v7257 = vlaneseq
        %v7258 = vshrl.u32 %v7257, 7
        %v7259 = vsub.s32 %v7256, %v7258
        %v7260 = vrot.slane %v7246, %v7259
        %v7261 = vcombine.low %v2704, %v2712
        %v7262 = vcombine.high %v2704, %v2712
        %v7264 = vunpack.c.l.s4 1983009808
        %v7265 = vunpack.c.0.s8 %v7264
        %v7266 = vlaneseq
        %v7267 = vshrl.u32 %v7266, 7
        %v7268 = vsub.s32 %v7265, %v7267
        %v7269 = vrot.slane %v7261, %v7268
        %v7271 = vunpack.c.l.s4 1983009808
        %v7272 = vunpack.c.0.s8 %v7271
        %v7273 = vlaneseq
        %v7274 = vshrl.u32 %v7273, 7
        %v7275 = vsub.s32 %v7272, %v7274
        %v7276 = vrot.slane %v7262, %v7275
        %v7277 = vcombine.low %v2708, %v2716
        %v7278 = vcombine.high %v2708, %v2716
        %v7280 = vunpack.c.l.s4 1983009808
        %v7281 = vunpack.c.0.s8 %v7280
        %v7282 = vlaneseq
        %v7283 = vshrl.u32 %v7282, 7
        %v7284 = vsub.s32 %v7281, %v7283
        %v7285 = vrot.slane %v7277, %v7284
        %v7287 = vunpack.c.l.s4 1983009808
        %v7288 = vunpack.c.0.s8 %v7287
        %v7289 = vlaneseq
        %v7290 = vshrl.u32 %v7289, 7
        %v7291 = vsub.s32 %v7288, %v7290
        %v7292 = vrot.slane %v7278, %v7291
        %v7293 = vcombine.low %v7237, %v7253
        %v7294 = vcombine.high %v7237, %v7253
        %v7296 = vunpack.c.l.s4 1934713408
        %v7297 = vunpack.c.0.s8 %v7296
        %v7298 = vlaneseq
        %v7299 = vshrl.u32 %v7298, 7
        %v7300 = vsub.s32 %v7297, %v7299
        %v7301 = vrot.slane %v7293, %v7300
        %v7303 = vunpack.c.l.s4 1934713408
        %v7304 = vunpack.c.0.s8 %v7303
        %v7305 = vlaneseq
        %v7306 = vshrl.u32 %v7305, 7
        %v7307 = vsub.s32 %v7304, %v7306
        %v7308 = vrot.slane %v7294, %v7307
        %v7309 = vcombine.low %v7244, %v7260
        %v7310 = vcombine.high %v7244, %v7260
        %v7312 = vunpack.c.l.s4 1934713408
        %v7313 = vunpack.c.0.s8 %v7312
        %v7314 = vlaneseq
        %v7315 = vshrl.u32 %v7314, 7
        %v7316 = vsub.s32 %v7313, %v7315
        %v7317 = vrot.slane %v7309, %v7316
        %v7319 = vunpack.c.l.s4 1934713408
        %v7320 = vunpack.c.0.s8 %v7319
        %v7321 = vlaneseq
        %v7322 = vshrl.u32 %v7321, 7
        %v7323 = vsub.s32 %v7320, %v7322
        %v7324 = vrot.slane %v7310, %v7323
        %v7325 = vcombine.low %v7269, %v7285
        %v7326 = vcombine.high %v7269, %v7285
        %v7328 = vunpack.c.l.s4 1934713408
        %v7329 = vunpack.c.0.s8 %v7328
        %v7330 = vlaneseq
        %v7331 = vshrl.u32 %v7330, 7
        %v7332 = vsub.s32 %v7329, %v7331
        %v7333 = vrot.slane %v7325, %v7332
        %v7335 = vunpack.c.l.s4 1934713408
        %v7336 = vunpack.c.0.s8 %v7335
        %v7337 = vlaneseq
        %v7338 = vshrl.u32 %v7337, 7
        %v7339 = vsub.s32 %v7336, %v7338
        %v7340 = vrot.slane %v7326, %v7339
        %v7341 = vcombine.low %v7276, %v7292
        %v7342 = vcombine.high %v7276, %v7292
        %v7344 = vunpack.c.l.s4 1934713408
        %v7345 = vunpack.c.0.s8 %v7344
        %v7346 = vlaneseq
        %v7347 = vshrl.u32 %v7346, 7
        %v7348 = vsub.s32 %v7345, %v7347
        %v7349 = vrot.slane %v7341, %v7348
        %v7351 = vunpack.c.l.s4 1934713408
        %v7352 = vunpack.c.0.s8 %v7351
        %v7353 = vlaneseq
        %v7354 = vshrl.u32 %v7353, 7
        %v7355 = vsub.s32 %v7352, %v7354
        %v7356 = vrot.slane %v7342, %v7355
        %v7357 = vcombine.low %v7301, %v7333
        %v7358 = vcombine.high %v7301, %v7333
        %v7359 = vcombine.low %v7308, %v7340
        %v7360 = vcombine.high %v7308, %v7340
        %v7361 = vcombine.low %v7317, %v7349
        %v7362 = vcombine.high %v7317, %v7349
        %v7363 = vcombine.low %v7324, %v7356
        %v7364 = vcombine.high %v7324, %v7356
        %v7365 = vcombine.low %v2720, %v2728
        %v7366 = vcombine.high %v2720, %v2728
        %v7368 = vunpack.c.l.s4 1983009808
        %v7369 = vunpack.c.0.s8 %v7368
        %v7370 = vlaneseq
        %v7371 = vshrl.u32 %v7370, 7
        %v7372 = vsub.s32 %v7369, %v7371
        %v7373 = vrot.slane %v7365, %v7372
        %v7375 = vunpack.c.l.s4 1983009808
        %v7376 = vunpack.c.0.s8 %v7375
        %v7377 = vlaneseq
        %v7378 = vshrl.u32 %v7377, 7
        %v7379 = vsub.s32 %v7376, %v7378
        %v7380 = vrot.slane %v7366, %v7379
        %v7381 = vcombine.low %v2724, %v2732
        %v7382 = vcombine.high %v2724, %v2732
        %v7384 = vunpack.c.l.s4 1983009808
        %v7385 = vunpack.c.0.s8 %v7384
        %v7386 = vlaneseq
        %v7387 = vshrl.u32 %v7386, 7
        %v7388 = vsub.s32 %v7385, %v7387
        %v7389 = vrot.slane %v7381, %v7388
        %v7391 = vunpack.c.l.s4 1983009808
        %v7392 = vunpack.c.0.s8 %v7391
        %v7393 = vlaneseq
        %v7394 = vshrl.u32 %v7393, 7
        %v7395 = vsub.s32 %v7392, %v7394
        %v7396 = vrot.slane %v7382, %v7395
        %v7397 = vcombine.low %v7373, %v7389
        %v7398 = vcombine.high %v7373, %v7389
        %v7400 = vunpack.c.l.s4 1934713408
        %v7401 = vunpack.c.0.s8 %v7400
        %v7402 = vlaneseq
        %v7403 = vshrl.u32 %v7402, 7
        %v7404 = vsub.s32 %v7401, %v7403
        %v7405 = vrot.slane %v7397, %v7404
        %v7407 = vunpack.c.l.s4 1934713408
        %v7408 = vunpack.c.0.s8 %v7407
        %v7409 = vlaneseq
        %v7410 = vshrl.u32 %v7409, 7
        %v7411 = vsub.s32 %v7408, %v7410
        %v7412 = vrot.slane %v7398, %v7411
        %v7413 = vcombine.low %v7380, %v7396
        %v7414 = vcombine.high %v7380, %v7396
        %v7416 = vunpack.c.l.s4 1934713408
        %v7417 = vunpack.c.0.s8 %v7416
        %v7418 = vlaneseq
        %v7419 = vshrl.u32 %v7418, 7
        %v7420 = vsub.s32 %v7417, %v7419
        %v7421 = vrot.slane %v7413, %v7420
        %v7423 = vunpack.c.l.s4 1934713408
        %v7424 = vunpack.c.0.s8 %v7423
        %v7425 = vlaneseq
        %v7426 = vshrl.u32 %v7425, 7
        %v7427 = vsub.s32 %v7424, %v7426
        %v7428 = vrot.slane %v7414, %v7427
        %v7429 = vcombine.low %v7405, %v6893
        %v7430 = vcombine.high %v7405, %v6893
        %v7431 = vcombine.low %v7412, %v6900
        %v7432 = vcombine.high %v7412, %v6900
        %v7433 = vcombine.low %v7421, %v6909
        %v7434 = vcombine.high %v7421, %v6909
        %v7435 = vcombine.low %v7428, %v6916
        %v7436 = vcombine.high %v7428, %v6916
        %v7437 = vcombine.low %v2736, %v2744
        %v7438 = vcombine.high %v2736, %v2744
        %v7440 = vunpack.c.l.s4 1983009808
        %v7441 = vunpack.c.0.s8 %v7440
        %v7442 = vlaneseq
        %v7443 = vshrl.u32 %v7442, 7
        %v7444 = vsub.s32 %v7441, %v7443
        %v7445 = vrot.slane %v7437, %v7444
        %v7447 = vunpack.c.l.s4 1983009808
        %v7448 = vunpack.c.0.s8 %v7447
        %v7449 = vlaneseq
        %v7450 = vshrl.u32 %v7449, 7
        %v7451 = vsub.s32 %v7448, %v7450
        %v7452 = vrot.slane %v7438, %v7451
        %v7453 = vcombine.low %v2740, %v2748
        %v7454 = vcombine.high %v2740, %v2748
        %v7456 = vunpack.c.l.s4 1983009808
        %v7457 = vunpack.c.0.s8 %v7456
        %v7458 = vlaneseq
        %v7459 = vshrl.u32 %v7458, 7
        %v7460 = vsub.s32 %v7457, %v7459
        %v7461 = vrot.slane %v7453, %v7460
        %v7463 = vunpack.c.l.s4 1983009808
        %v7464 = vunpack.c.0.s8 %v7463
        %v7465 = vlaneseq
        %v7466 = vshrl.u32 %v7465, 7
        %v7467 = vsub.s32 %v7464, %v7466
        %v7468 = vrot.slane %v7454, %v7467
        %v7469 = vcombine.low %v2752, %v2760
        %v7470 = vcombine.high %v2752, %v2760
        %v7472 = vunpack.c.l.s4 1983009808
        %v7473 = vunpack.c.0.s8 %v7472
        %v7474 = vlaneseq
        %v7475 = vshrl.u32 %v7474, 7
        %v7476 = vsub.s32 %v7473, %v7475
        %v7477 = vrot.slane %v7469, %v7476
        %v7479 = vunpack.c.l.s4 1983009808
        %v7480 = vunpack.c.0.s8 %v7479
        %v7481 = vlaneseq
        %v7482 = vshrl.u32 %v7481, 7
        %v7483 = vsub.s32 %v7480, %v7482
        %v7484 = vrot.slane %v7470, %v7483
        %v7485 = vcombine.low %v2756, %v2764
        %v7486 = vcombine.high %v2756, %v2764
        %v7488 = vunpack.c.l.s4 1983009808
        %v7489 = vunpack.c.0.s8 %v7488
        %v7490 = vlaneseq
        %v7491 = vshrl.u32 %v7490, 7
        %v7492 = vsub.s32 %v7489, %v7491
        %v7493 = vrot.slane %v7485, %v7492
        %v7495 = vunpack.c.l.s4 1983009808
        %v7496 = vunpack.c.0.s8 %v7495
        %v7497 = vlaneseq
        %v7498 = vshrl.u32 %v7497, 7
        %v7499 = vsub.s32 %v7496, %v7498
        %v7500 = vrot.slane %v7486, %v7499
        %v7501 = vcombine.low %v7445, %v7461
        %v7502 = vcombine.high %v7445, %v7461
        %v7504 = vunpack.c.l.s4 1934713408
        %v7505 = vunpack.c.0.s8 %v7504
        %v7506 = vlaneseq
        %v7507 = vshrl.u32 %v7506, 7
        %v7508 = vsub.s32 %v7505, %v7507
        %v7509 = vrot.slane %v7501, %v7508
        %v7511 = vunpack.c.l.s4 1934713408
        %v7512 = vunpack.c.0.s8 %v7511
        %v7513 = vlaneseq
        %v7514 = vshrl.u32 %v7513, 7
        %v7515 = vsub.s32 %v7512, %v7514
        %v7516 = vrot.slane %v7502, %v7515
        %v7517 = vcombine.low %v7452, %v7468
        %v7518 = vcombine.high %v7452, %v7468
        %v7520 = vunpack.c.l.s4 1934713408
        %v7521 = vunpack.c.0.s8 %v7520
        %v7522 = vlaneseq
        %v7523 = vshrl.u32 %v7522, 7
        %v7524 = vsub.s32 %v7521, %v7523
        %v7525 = vrot.slane %v7517, %v7524
        %v7527 = vunpack.c.l.s4 1934713408
        %v7528 = vunpack.c.0.s8 %v7527
        %v7529 = vlaneseq
        %v7530 = vshrl.u32 %v7529, 7
        %v7531 = vsub.s32 %v7528, %v7530
        %v7532 = vrot.slane %v7518, %v7531
        %v7533 = vcombine.low %v7477, %v7493
        %v7534 = vcombine.high %v7477, %v7493
        %v7536 = vunpack.c.l.s4 1934713408
        %v7537 = vunpack.c.0.s8 %v7536
        %v7538 = vlaneseq
        %v7539 = vshrl.u32 %v7538, 7
        %v7540 = vsub.s32 %v7537, %v7539
        %v7541 = vrot.slane %v7533, %v7540
        %v7543 = vunpack.c.l.s4 1934713408
        %v7544 = vunpack.c.0.s8 %v7543
        %v7545 = vlaneseq
        %v7546 = vshrl.u32 %v7545, 7
        %v7547 = vsub.s32 %v7544, %v7546
        %v7548 = vrot.slane %v7534, %v7547
        %v7549 = vcombine.low %v7484, %v7500
        %v7550 = vcombine.high %v7484, %v7500
        %v7552 = vunpack.c.l.s4 1934713408
        %v7553 = vunpack.c.0.s8 %v7552
        %v7554 = vlaneseq
        %v7555 = vshrl.u32 %v7554, 7
        %v7556 = vsub.s32 %v7553, %v7555
        %v7557 = vrot.slane %v7549, %v7556
        %v7559 = vunpack.c.l.s4 1934713408
        %v7560 = vunpack.c.0.s8 %v7559
        %v7561 = vlaneseq
        %v7562 = vshrl.u32 %v7561, 7
        %v7563 = vsub.s32 %v7560, %v7562
        %v7564 = vrot.slane %v7550, %v7563
        %v7565 = vcombine.low %v7509, %v7541
        %v7566 = vcombine.high %v7509, %v7541
        %v7567 = vcombine.low %v7516, %v7548
        %v7568 = vcombine.high %v7516, %v7548
        %v7569 = vcombine.low %v7525, %v7557
        %v7570 = vcombine.high %v7525, %v7557
        %v7571 = vcombine.low %v7532, %v7564
        %v7572 = vcombine.high %v7532, %v7564
        %v7573 = vcombine.low %v2768, %v2776
        %v7574 = vcombine.high %v2768, %v2776
        %v7576 = vunpack.c.l.s4 1983009808
        %v7577 = vunpack.c.0.s8 %v7576
        %v7578 = vlaneseq
        %v7579 = vshrl.u32 %v7578, 7
        %v7580 = vsub.s32 %v7577, %v7579
        %v7581 = vrot.slane %v7573, %v7580
        %v7583 = vunpack.c.l.s4 1983009808
        %v7584 = vunpack.c.0.s8 %v7583
        %v7585 = vlaneseq
        %v7586 = vshrl.u32 %v7585, 7
        %v7587 = vsub.s32 %v7584, %v7586
        %v7588 = vrot.slane %v7574, %v7587
        %v7589 = vcombine.low %v2772, %v2780
        %v7590 = vcombine.high %v2772, %v2780
        %v7592 = vunpack.c.l.s4 1983009808
        %v7593 = vunpack.c.0.s8 %v7592
        %v7594 = vlaneseq
        %v7595 = vshrl.u32 %v7594, 7
        %v7596 = vsub.s32 %v7593, %v7595
        %v7597 = vrot.slane %v7589, %v7596
        %v7599 = vunpack.c.l.s4 1983009808
        %v7600 = vunpack.c.0.s8 %v7599
        %v7601 = vlaneseq
        %v7602 = vshrl.u32 %v7601, 7
        %v7603 = vsub.s32 %v7600, %v7602
        %v7604 = vrot.slane %v7590, %v7603
        %v7605 = vcombine.low %v2784, %v2792
        %v7606 = vcombine.high %v2784, %v2792
        %v7608 = vunpack.c.l.s4 1983009808
        %v7609 = vunpack.c.0.s8 %v7608
        %v7610 = vlaneseq
        %v7611 = vshrl.u32 %v7610, 7
        %v7612 = vsub.s32 %v7609, %v7611
        %v7613 = vrot.slane %v7605, %v7612
        %v7615 = vunpack.c.l.s4 1983009808
        %v7616 = vunpack.c.0.s8 %v7615
        %v7617 = vlaneseq
        %v7618 = vshrl.u32 %v7617, 7
        %v7619 = vsub.s32 %v7616, %v7618
        %v7620 = vrot.slane %v7606, %v7619
        %v7621 = vcombine.low %v2788, %v2796
        %v7622 = vcombine.high %v2788, %v2796
        %v7624 = vunpack.c.l.s4 1983009808
        %v7625 = vunpack.c.0.s8 %v7624
        %v7626 = vlaneseq
        %v7627 = vshrl.u32 %v7626, 7
        %v7628 = vsub.s32 %v7625, %v7627
        %v7629 = vrot.slane %v7621, %v7628
        %v7631 = vunpack.c.l.s4 1983009808
        %v7632 = vunpack.c.0.s8 %v7631
        %v7633 = vlaneseq
        %v7634 = vshrl.u32 %v7633, 7
        %v7635 = vsub.s32 %v7632, %v7634
        %v7636 = vrot.slane %v7622, %v7635
        %v7637 = vcombine.low %v7581, %v7597
        %v7638 = vcombine.high %v7581, %v7597
        %v7640 = vunpack.c.l.s4 1934713408
        %v7641 = vunpack.c.0.s8 %v7640
        %v7642 = vlaneseq
        %v7643 = vshrl.u32 %v7642, 7
        %v7644 = vsub.s32 %v7641, %v7643
        %v7645 = vrot.slane %v7637, %v7644
        %v7647 = vunpack.c.l.s4 1934713408
        %v7648 = vunpack.c.0.s8 %v7647
        %v7649 = vlaneseq
        %v7650 = vshrl.u32 %v7649, 7
        %v7651 = vsub.s32 %v7648, %v7650
        %v7652 = vrot.slane %v7638, %v7651
        %v7653 = vcombine.low %v7588, %v7604
        %v7654 = vcombine.high %v7588, %v7604
        %v7656 = vunpack.c.l.s4 1934713408
        %v7657 = vunpack.c.0.s8 %v7656
        %v7658 = vlaneseq
        %v7659 = vshrl.u32 %v7658, 7
        %v7660 = vsub.s32 %v7657, %v7659
        %v7661 = vrot.slane %v7653, %v7660
        %v7663 = vunpack.c.l.s4 1934713408
        %v7664 = vunpack.c.0.s8 %v7663
        %v7665 = vlaneseq
        %v7666 = vshrl.u32 %v7665, 7
        %v7667 = vsub.s32 %v7664, %v7666
        %v7668 = vrot.slane %v7654, %v7667
        %v7669 = vcombine.low %v7613, %v7629
        %v7670 = vcombine.high %v7613, %v7629
        %v7672 = vunpack.c.l.s4 1934713408
        %v7673 = vunpack.c.0.s8 %v7672
        %v7674 = vlaneseq
        %v7675 = vshrl.u32 %v7674, 7
        %v7676 = vsub.s32 %v7673, %v7675
        %v7677 = vrot.slane %v7669, %v7676
        %v7679 = vunpack.c.l.s4 1934713408
        %v7680 = vunpack.c.0.s8 %v7679
        %v7681 = vlaneseq
        %v7682 = vshrl.u32 %v7681, 7
        %v7683 = vsub.s32 %v7680, %v7682
        %v7684 = vrot.slane %v7670, %v7683
        %v7685 = vcombine.low %v7620, %v7636
        %v7686 = vcombine.high %v7620, %v7636
        %v7688 = vunpack.c.l.s4 1934713408
        %v7689 = vunpack.c.0.s8 %v7688
        %v7690 = vlaneseq
        %v7691 = vshrl.u32 %v7690, 7
        %v7692 = vsub.s32 %v7689, %v7691
        %v7693 = vrot.slane %v7685, %v7692
        %v7695 = vunpack.c.l.s4 1934713408
        %v7696 = vunpack.c.0.s8 %v7695
        %v7697 = vlaneseq
        %v7698 = vshrl.u32 %v7697, 7
        %v7699 = vsub.s32 %v7696, %v7698
        %v7700 = vrot.slane %v7686, %v7699
        %v7701 = vcombine.low %v7645, %v7677
        %v7702 = vcombine.high %v7645, %v7677
        %v7703 = vcombine.low %v7652, %v7684
        %v7704 = vcombine.high %v7652, %v7684
        %v7705 = vcombine.low %v7661, %v7693
        %v7706 = vcombine.high %v7661, %v7693
        %v7707 = vcombine.low %v7668, %v7700
        %v7708 = vcombine.high %v7668, %v7700
        %7727 = vrot.lane.b32.xlu0 %v3198, 16
        %v7728 = vpop.permute.xlu0 %7727
        %7729 = vrot.lane.b32.xlu0 %v3334, 16
        %v7730 = vpop.permute.xlu0 %7729
        %7731 = vrot.lane.b32.xlu0 %v3470, 16
        %v7732 = vpop.permute.xlu0 %7731
        %7733 = vrot.lane.b32.xlu0 %v3606, 16
        %v7734 = vpop.permute.xlu0 %7733
        %7735 = vrot.lane.b32.xlu0 %v3742, 16
        %v7736 = vpop.permute.xlu0 %7735
        %7737 = vrot.lane.b32.xlu0 %v3878, 16
        %v7738 = vpop.permute.xlu0 %7737
        %7739 = vrot.lane.b32.xlu0 %v3950, 16
        %v7740 = vpop.permute.xlu0 %7739
        %7741 = vrot.lane.b32.xlu0 %v4086, 16
        %v7742 = vpop.permute.xlu0 %7741
        %7743 = vrot.lane.b32.xlu0 %v4222, 16
        %v7744 = vpop.permute.xlu0 %7743
        %7745 = vrot.lane.b32.xlu0 %v4358, 16
        %v7746 = vpop.permute.xlu0 %7745
        %7747 = vrot.lane.b32.xlu0 %v4494, 16
        %v7748 = vpop.permute.xlu0 %7747
        %7749 = vrot.lane.b32.xlu0 %v4630, 16
        %v7750 = vpop.permute.xlu0 %7749
        %7751 = vrot.lane.b32.xlu0 %v4766, 16
        %v7752 = vpop.permute.xlu0 %7751
        %7753 = vrot.lane.b32.xlu0 %v4902, 16
        %v7754 = vpop.permute.xlu0 %7753
        %7755 = vrot.lane.b32.xlu0 %v5038, 16
        %v7756 = vpop.permute.xlu0 %7755
        %7757 = vrot.lane.b32.xlu0 %v5110, 16
        %v7758 = vpop.permute.xlu0 %7757
        %7759 = vrot.lane.b32.xlu0 %v5246, 16
        %v7760 = vpop.permute.xlu0 %7759
        %7761 = vrot.lane.b32.xlu0 %v5382, 16
        %v7762 = vpop.permute.xlu0 %7761
        %7799 = vrot.lane.b32.xlu0 %v3199, 32
        %v7800 = vpop.permute.xlu0 %7799
        %7801 = vrot.lane.b32.xlu0 %v3335, 32
        %v7802 = vpop.permute.xlu0 %7801
        %7803 = vrot.lane.b32.xlu0 %v3471, 32
        %v7804 = vpop.permute.xlu0 %7803
        %7805 = vrot.lane.b32.xlu0 %v3607, 32
        %v7806 = vpop.permute.xlu0 %7805
        %7807 = vrot.lane.b32.xlu0 %v3743, 32
        %v7808 = vpop.permute.xlu0 %7807
        %7809 = vrot.lane.b32.xlu0 %v3879, 32
        %v7810 = vpop.permute.xlu0 %7809
        %7811 = vrot.lane.b32.xlu0 %v3951, 32
        %v7812 = vpop.permute.xlu0 %7811
        %7813 = vrot.lane.b32.xlu0 %v4087, 32
        %v7814 = vpop.permute.xlu0 %7813
        %7815 = vrot.lane.b32.xlu0 %v4223, 32
        %v7816 = vpop.permute.xlu0 %7815
        %7817 = vrot.lane.b32.xlu0 %v4359, 32
        %v7818 = vpop.permute.xlu0 %7817
        %7819 = vrot.lane.b32.xlu0 %v4495, 32
        %v7820 = vpop.permute.xlu0 %7819
        %7821 = vrot.lane.b32.xlu0 %v4631, 32
        %v7822 = vpop.permute.xlu0 %7821
        %7823 = vrot.lane.b32.xlu0 %v4767, 32
        %v7824 = vpop.permute.xlu0 %7823
        %7825 = vrot.lane.b32.xlu0 %v4903, 32
        %v7826 = vpop.permute.xlu0 %7825
        %7827 = vrot.lane.b32.xlu0 %v5039, 32
        %v7828 = vpop.permute.xlu0 %7827
        %7829 = vrot.lane.b32.xlu0 %v5111, 32
        %v7830 = vpop.permute.xlu0 %7829
        %7831 = vrot.lane.b32.xlu0 %v5247, 32
        %v7832 = vpop.permute.xlu0 %7831
        %7833 = vrot.lane.b32.xlu0 %v5383, 32
        %v7834 = vpop.permute.xlu0 %7833
        %7871 = vrot.lane.b32.xlu0 %v3200, 48
        %v7872 = vpop.permute.xlu0 %7871
        %7873 = vrot.lane.b32.xlu0 %v3336, 48
        %v7874 = vpop.permute.xlu0 %7873
        %7875 = vrot.lane.b32.xlu0 %v3472, 48
        %v7876 = vpop.permute.xlu0 %7875
        %7877 = vrot.lane.b32.xlu0 %v3608, 48
        %v7878 = vpop.permute.xlu0 %7877
        %7879 = vrot.lane.b32.xlu0 %v3744, 48
        %v7880 = vpop.permute.xlu0 %7879
        %7881 = vrot.lane.b32.xlu0 %v3880, 48
        %v7882 = vpop.permute.xlu0 %7881
        %7883 = vrot.lane.b32.xlu0 %v3952, 48
        %v7884 = vpop.permute.xlu0 %7883
        %7885 = vrot.lane.b32.xlu0 %v4088, 48
        %v7886 = vpop.permute.xlu0 %7885
        %7887 = vrot.lane.b32.xlu0 %v4224, 48
        %v7888 = vpop.permute.xlu0 %7887
        %7889 = vrot.lane.b32.xlu0 %v4360, 48
        %v7890 = vpop.permute.xlu0 %7889
        %7891 = vrot.lane.b32.xlu0 %v4496, 48
        %v7892 = vpop.permute.xlu0 %7891
        %7893 = vrot.lane.b32.xlu0 %v4632, 48
        %v7894 = vpop.permute.xlu0 %7893
        %7895 = vrot.lane.b32.xlu0 %v4768, 48
        %v7896 = vpop.permute.xlu0 %7895
        %7897 = vrot.lane.b32.xlu0 %v4904, 48
        %v7898 = vpop.permute.xlu0 %7897
        %7899 = vrot.lane.b32.xlu0 %v5040, 48
        %v7900 = vpop.permute.xlu0 %7899
        %7901 = vrot.lane.b32.xlu0 %v5112, 48
        %v7902 = vpop.permute.xlu0 %7901
        %7903 = vrot.lane.b32.xlu0 %v5248, 48
        %v7904 = vpop.permute.xlu0 %7903
        %7905 = vrot.lane.b32.xlu0 %v5384, 48
        %v7906 = vpop.permute.xlu0 %7905
        %7943 = vrot.lane.b32.xlu0 %v3201, 64
        %v7944 = vpop.permute.xlu0 %7943
        %7945 = vrot.lane.b32.xlu0 %v3337, 64
        %v7946 = vpop.permute.xlu0 %7945
        %7947 = vrot.lane.b32.xlu0 %v3473, 64
        %v7948 = vpop.permute.xlu0 %7947
        %7949 = vrot.lane.b32.xlu0 %v3609, 64
        %v7950 = vpop.permute.xlu0 %7949
        %7951 = vrot.lane.b32.xlu0 %v3745, 64
        %v7952 = vpop.permute.xlu0 %7951
        %7953 = vrot.lane.b32.xlu0 %v3881, 64
        %v7954 = vpop.permute.xlu0 %7953
        %7955 = vrot.lane.b32.xlu0 %v3953, 64
        %v7956 = vpop.permute.xlu0 %7955
        %7957 = vrot.lane.b32.xlu0 %v4089, 64
        %v7958 = vpop.permute.xlu0 %7957
        %7959 = vrot.lane.b32.xlu0 %v4225, 64
        %v7960 = vpop.permute.xlu0 %7959
        %7961 = vrot.lane.b32.xlu0 %v4361, 64
        %v7962 = vpop.permute.xlu0 %7961
        %7963 = vrot.lane.b32.xlu0 %v4497, 64
        %v7964 = vpop.permute.xlu0 %7963
        %7965 = vrot.lane.b32.xlu0 %v4633, 64
        %v7966 = vpop.permute.xlu0 %7965
        %7967 = vrot.lane.b32.xlu0 %v4769, 64
        %v7968 = vpop.permute.xlu0 %7967
        %7969 = vrot.lane.b32.xlu0 %v4905, 64
        %v7970 = vpop.permute.xlu0 %7969
        %7971 = vrot.lane.b32.xlu0 %v5041, 64
        %v7972 = vpop.permute.xlu0 %7971
        %7973 = vrot.lane.b32.xlu0 %v5113, 64
        %v7974 = vpop.permute.xlu0 %7973
        %7975 = vrot.lane.b32.xlu0 %v5249, 64
        %v7976 = vpop.permute.xlu0 %7975
        %7977 = vrot.lane.b32.xlu0 %v5385, 64
        %v7978 = vpop.permute.xlu0 %7977
        %8015 = vrot.lane.b32.xlu0 %v3202, 80
        %v8016 = vpop.permute.xlu0 %8015
        %8017 = vrot.lane.b32.xlu0 %v3338, 80
        %v8018 = vpop.permute.xlu0 %8017
        %8019 = vrot.lane.b32.xlu0 %v3474, 80
        %v8020 = vpop.permute.xlu0 %8019
        %8021 = vrot.lane.b32.xlu0 %v3610, 80
        %v8022 = vpop.permute.xlu0 %8021
        %8023 = vrot.lane.b32.xlu0 %v3746, 80
        %v8024 = vpop.permute.xlu0 %8023
        %8025 = vrot.lane.b32.xlu0 %v3882, 80
        %v8026 = vpop.permute.xlu0 %8025
        %8027 = vrot.lane.b32.xlu0 %v3954, 80
        %v8028 = vpop.permute.xlu0 %8027
        %8029 = vrot.lane.b32.xlu0 %v4090, 80
        %v8030 = vpop.permute.xlu0 %8029
        %8031 = vrot.lane.b32.xlu0 %v4226, 80
        %v8032 = vpop.permute.xlu0 %8031
        %8033 = vrot.lane.b32.xlu0 %v4362, 80
        %v8034 = vpop.permute.xlu0 %8033
        %8035 = vrot.lane.b32.xlu0 %v4498, 80
        %v8036 = vpop.permute.xlu0 %8035
        %8037 = vrot.lane.b32.xlu0 %v4634, 80
        %v8038 = vpop.permute.xlu0 %8037
        %8039 = vrot.lane.b32.xlu0 %v4770, 80
        %v8040 = vpop.permute.xlu0 %8039
        %8041 = vrot.lane.b32.xlu0 %v4906, 80
        %v8042 = vpop.permute.xlu0 %8041
        %8043 = vrot.lane.b32.xlu0 %v5042, 80
        %v8044 = vpop.permute.xlu0 %8043
        %8045 = vrot.lane.b32.xlu0 %v5114, 80
        %v8046 = vpop.permute.xlu0 %8045
        %8047 = vrot.lane.b32.xlu0 %v5250, 80
        %v8048 = vpop.permute.xlu0 %8047
        %8049 = vrot.lane.b32.xlu0 %v5386, 80
        %v8050 = vpop.permute.xlu0 %8049
        %8087 = vrot.lane.b32.xlu0 %v3203, 96
        %v8088 = vpop.permute.xlu0 %8087
        %8089 = vrot.lane.b32.xlu0 %v3339, 96
        %v8090 = vpop.permute.xlu0 %8089
        %8091 = vrot.lane.b32.xlu0 %v3475, 96
        %v8092 = vpop.permute.xlu0 %8091
        %8093 = vrot.lane.b32.xlu0 %v3611, 96
        %v8094 = vpop.permute.xlu0 %8093
        %8095 = vrot.lane.b32.xlu0 %v3747, 96
        %v8096 = vpop.permute.xlu0 %8095
        %8097 = vrot.lane.b32.xlu0 %v3883, 96
        %v8098 = vpop.permute.xlu0 %8097
        %8099 = vrot.lane.b32.xlu0 %v3955, 96
        %v8100 = vpop.permute.xlu0 %8099
        %8101 = vrot.lane.b32.xlu0 %v4091, 96
        %v8102 = vpop.permute.xlu0 %8101
        %8103 = vrot.lane.b32.xlu0 %v4227, 96
        %v8104 = vpop.permute.xlu0 %8103
        %8105 = vrot.lane.b32.xlu0 %v4363, 96
        %v8106 = vpop.permute.xlu0 %8105
        %8107 = vrot.lane.b32.xlu0 %v4499, 96
        %v8108 = vpop.permute.xlu0 %8107
        %8109 = vrot.lane.b32.xlu0 %v4635, 96
        %v8110 = vpop.permute.xlu0 %8109
        %8111 = vrot.lane.b32.xlu0 %v4771, 96
        %v8112 = vpop.permute.xlu0 %8111
        %8113 = vrot.lane.b32.xlu0 %v4907, 96
        %v8114 = vpop.permute.xlu0 %8113
        %8115 = vrot.lane.b32.xlu0 %v5043, 96
        %v8116 = vpop.permute.xlu0 %8115
        %8117 = vrot.lane.b32.xlu0 %v5115, 96
        %v8118 = vpop.permute.xlu0 %8117
        %8119 = vrot.lane.b32.xlu0 %v5251, 96
        %v8120 = vpop.permute.xlu0 %8119
        %8121 = vrot.lane.b32.xlu0 %v5387, 96
        %v8122 = vpop.permute.xlu0 %8121
        %8159 = vrot.lane.b32.xlu0 %v3204, 112
        %v8160 = vpop.permute.xlu0 %8159
        %8161 = vrot.lane.b32.xlu0 %v3340, 112
        %v8162 = vpop.permute.xlu0 %8161
        %8163 = vrot.lane.b32.xlu0 %v3476, 112
        %v8164 = vpop.permute.xlu0 %8163
        %8165 = vrot.lane.b32.xlu0 %v3612, 112
        %v8166 = vpop.permute.xlu0 %8165
        %8167 = vrot.lane.b32.xlu0 %v3748, 112
        %v8168 = vpop.permute.xlu0 %8167
        %8169 = vrot.lane.b32.xlu0 %v3884, 112
        %v8170 = vpop.permute.xlu0 %8169
        %8171 = vrot.lane.b32.xlu0 %v3956, 112
        %v8172 = vpop.permute.xlu0 %8171
        %8173 = vrot.lane.b32.xlu0 %v4092, 112
        %v8174 = vpop.permute.xlu0 %8173
        %8175 = vrot.lane.b32.xlu0 %v4228, 112
        %v8176 = vpop.permute.xlu0 %8175
        %8177 = vrot.lane.b32.xlu0 %v4364, 112
        %v8178 = vpop.permute.xlu0 %8177
        %8179 = vrot.lane.b32.xlu0 %v4500, 112
        %v8180 = vpop.permute.xlu0 %8179
        %8181 = vrot.lane.b32.xlu0 %v4636, 112
        %v8182 = vpop.permute.xlu0 %8181
        %8183 = vrot.lane.b32.xlu0 %v4772, 112
        %v8184 = vpop.permute.xlu0 %8183
        %8185 = vrot.lane.b32.xlu0 %v4908, 112
        %v8186 = vpop.permute.xlu0 %8185
        %8187 = vrot.lane.b32.xlu0 %v5044, 112
        %v8188 = vpop.permute.xlu0 %8187
        %8189 = vrot.lane.b32.xlu0 %v5116, 112
        %v8190 = vpop.permute.xlu0 %8189
        %8191 = vrot.lane.b32.xlu0 %v5252, 112
        %v8192 = vpop.permute.xlu0 %8191
        %8193 = vrot.lane.b32.xlu0 %v5388, 112
        %v8194 = vpop.permute.xlu0 %8193
        %8231 = vrot.lane.b32.xlu0 %v5518, 16
        %v8232 = vpop.permute.xlu0 %8231
        %8233 = vrot.lane.b32.xlu0 %v5654, 16
        %v8234 = vpop.permute.xlu0 %8233
        %8235 = vrot.lane.b32.xlu0 %v5790, 16
        %v8236 = vpop.permute.xlu0 %8235
        %8237 = vrot.lane.b32.xlu0 %v5926, 16
        %v8238 = vpop.permute.xlu0 %8237
        %8239 = vrot.lane.b32.xlu0 %v6062, 16
        %v8240 = vpop.permute.xlu0 %8239
        %8241 = vrot.lane.b32.xlu0 %v6198, 16
        %v8242 = vpop.permute.xlu0 %8241
        %8243 = vrot.lane.b32.xlu0 %v6270, 16
        %v8244 = vpop.permute.xlu0 %8243
        %8245 = vrot.lane.b32.xlu0 %v6406, 16
        %v8246 = vpop.permute.xlu0 %8245
        %8247 = vrot.lane.b32.xlu0 %v6542, 16
        %v8248 = vpop.permute.xlu0 %8247
        %8249 = vrot.lane.b32.xlu0 %v6678, 16
        %v8250 = vpop.permute.xlu0 %8249
        %8251 = vrot.lane.b32.xlu0 %v6814, 16
        %v8252 = vpop.permute.xlu0 %8251
        %8253 = vrot.lane.b32.xlu0 %v6950, 16
        %v8254 = vpop.permute.xlu0 %8253
        %8255 = vrot.lane.b32.xlu0 %v7086, 16
        %v8256 = vpop.permute.xlu0 %8255
        %8257 = vrot.lane.b32.xlu0 %v7222, 16
        %v8258 = vpop.permute.xlu0 %8257
        %8259 = vrot.lane.b32.xlu0 %v7358, 16
        %v8260 = vpop.permute.xlu0 %8259
        %8261 = vrot.lane.b32.xlu0 %v7430, 16
        %v8262 = vpop.permute.xlu0 %8261
        %8263 = vrot.lane.b32.xlu0 %v7566, 16
        %v8264 = vpop.permute.xlu0 %8263
        %8265 = vrot.lane.b32.xlu0 %v7702, 16
        %v8266 = vpop.permute.xlu0 %8265
        %8303 = vrot.lane.b32.xlu0 %v5519, 32
        %v8304 = vpop.permute.xlu0 %8303
        %8305 = vrot.lane.b32.xlu0 %v5655, 32
        %v8306 = vpop.permute.xlu0 %8305
        %8307 = vrot.lane.b32.xlu0 %v5791, 32
        %v8308 = vpop.permute.xlu0 %8307
        %8309 = vrot.lane.b32.xlu0 %v5927, 32
        %v8310 = vpop.permute.xlu0 %8309
        %8311 = vrot.lane.b32.xlu0 %v6063, 32
        %v8312 = vpop.permute.xlu0 %8311
        %8313 = vrot.lane.b32.xlu0 %v6199, 32
        %v8314 = vpop.permute.xlu0 %8313
        %8315 = vrot.lane.b32.xlu0 %v6271, 32
        %v8316 = vpop.permute.xlu0 %8315
        %8317 = vrot.lane.b32.xlu0 %v6407, 32
        %v8318 = vpop.permute.xlu0 %8317
        %8319 = vrot.lane.b32.xlu0 %v6543, 32
        %v8320 = vpop.permute.xlu0 %8319
        %8321 = vrot.lane.b32.xlu0 %v6679, 32
        %v8322 = vpop.permute.xlu0 %8321
        %8323 = vrot.lane.b32.xlu0 %v6815, 32
        %v8324 = vpop.permute.xlu0 %8323
        %8325 = vrot.lane.b32.xlu0 %v6951, 32
        %v8326 = vpop.permute.xlu0 %8325
        %8327 = vrot.lane.b32.xlu0 %v7087, 32
        %v8328 = vpop.permute.xlu0 %8327
        %8329 = vrot.lane.b32.xlu0 %v7223, 32
        %v8330 = vpop.permute.xlu0 %8329
        %8331 = vrot.lane.b32.xlu0 %v7359, 32
        %v8332 = vpop.permute.xlu0 %8331
        %8333 = vrot.lane.b32.xlu0 %v7431, 32
        %v8334 = vpop.permute.xlu0 %8333
        %8335 = vrot.lane.b32.xlu0 %v7567, 32
        %v8336 = vpop.permute.xlu0 %8335
        %8337 = vrot.lane.b32.xlu0 %v7703, 32
        %v8338 = vpop.permute.xlu0 %8337
        %8375 = vrot.lane.b32.xlu0 %v5520, 48
        %v8376 = vpop.permute.xlu0 %8375
        %8377 = vrot.lane.b32.xlu0 %v5656, 48
        %v8378 = vpop.permute.xlu0 %8377
        %8379 = vrot.lane.b32.xlu0 %v5792, 48
        %v8380 = vpop.permute.xlu0 %8379
        %8381 = vrot.lane.b32.xlu0 %v5928, 48
        %v8382 = vpop.permute.xlu0 %8381
        %8383 = vrot.lane.b32.xlu0 %v6064, 48
        %v8384 = vpop.permute.xlu0 %8383
        %8385 = vrot.lane.b32.xlu0 %v6200, 48
        %v8386 = vpop.permute.xlu0 %8385
        %8387 = vrot.lane.b32.xlu0 %v6272, 48
        %v8388 = vpop.permute.xlu0 %8387
        %8389 = vrot.lane.b32.xlu0 %v6408, 48
        %v8390 = vpop.permute.xlu0 %8389
        %8391 = vrot.lane.b32.xlu0 %v6544, 48
        %v8392 = vpop.permute.xlu0 %8391
        %8393 = vrot.lane.b32.xlu0 %v6680, 48
        %v8394 = vpop.permute.xlu0 %8393
        %8395 = vrot.lane.b32.xlu0 %v6816, 48
        %v8396 = vpop.permute.xlu0 %8395
        %8397 = vrot.lane.b32.xlu0 %v6952, 48
        %v8398 = vpop.permute.xlu0 %8397
        %8399 = vrot.lane.b32.xlu0 %v7088, 48
        %v8400 = vpop.permute.xlu0 %8399
        %8401 = vrot.lane.b32.xlu0 %v7224, 48
        %v8402 = vpop.permute.xlu0 %8401
        %8403 = vrot.lane.b32.xlu0 %v7360, 48
        %v8404 = vpop.permute.xlu0 %8403
        %8405 = vrot.lane.b32.xlu0 %v7432, 48
        %v8406 = vpop.permute.xlu0 %8405
        %8407 = vrot.lane.b32.xlu0 %v7568, 48
        %v8408 = vpop.permute.xlu0 %8407
        %8409 = vrot.lane.b32.xlu0 %v7704, 48
        %v8410 = vpop.permute.xlu0 %8409
        %8447 = vrot.lane.b32.xlu0 %v5521, 64
        %v8448 = vpop.permute.xlu0 %8447
        %8449 = vrot.lane.b32.xlu0 %v5657, 64
        %v8450 = vpop.permute.xlu0 %8449
        %8451 = vrot.lane.b32.xlu0 %v5793, 64
        %v8452 = vpop.permute.xlu0 %8451
        %8453 = vrot.lane.b32.xlu0 %v5929, 64
        %v8454 = vpop.permute.xlu0 %8453
        %8455 = vrot.lane.b32.xlu0 %v6065, 64
        %v8456 = vpop.permute.xlu0 %8455
        %8457 = vrot.lane.b32.xlu0 %v6201, 64
        %v8458 = vpop.permute.xlu0 %8457
        %8459 = vrot.lane.b32.xlu0 %v6273, 64
        %v8460 = vpop.permute.xlu0 %8459
        %8461 = vrot.lane.b32.xlu0 %v6409, 64
        %v8462 = vpop.permute.xlu0 %8461
        %8463 = vrot.lane.b32.xlu0 %v6545, 64
        %v8464 = vpop.permute.xlu0 %8463
        %8465 = vrot.lane.b32.xlu0 %v6681, 64
        %v8466 = vpop.permute.xlu0 %8465
        %8467 = vrot.lane.b32.xlu0 %v6817, 64
        %v8468 = vpop.permute.xlu0 %8467
        %8469 = vrot.lane.b32.xlu0 %v6953, 64
        %v8470 = vpop.permute.xlu0 %8469
        %8471 = vrot.lane.b32.xlu0 %v7089, 64
        %v8472 = vpop.permute.xlu0 %8471
        %8473 = vrot.lane.b32.xlu0 %v7225, 64
        %v8474 = vpop.permute.xlu0 %8473
        %8475 = vrot.lane.b32.xlu0 %v7361, 64
        %v8476 = vpop.permute.xlu0 %8475
        %8477 = vrot.lane.b32.xlu0 %v7433, 64
        %v8478 = vpop.permute.xlu0 %8477
        %8479 = vrot.lane.b32.xlu0 %v7569, 64
        %v8480 = vpop.permute.xlu0 %8479
        %8481 = vrot.lane.b32.xlu0 %v7705, 64
        %v8482 = vpop.permute.xlu0 %8481
        %8519 = vrot.lane.b32.xlu0 %v5522, 80
        %v8520 = vpop.permute.xlu0 %8519
        %8521 = vrot.lane.b32.xlu0 %v5658, 80
        %v8522 = vpop.permute.xlu0 %8521
        %8523 = vrot.lane.b32.xlu0 %v5794, 80
        %v8524 = vpop.permute.xlu0 %8523
        %8525 = vrot.lane.b32.xlu0 %v5930, 80
        %v8526 = vpop.permute.xlu0 %8525
        %8527 = vrot.lane.b32.xlu0 %v6066, 80
        %v8528 = vpop.permute.xlu0 %8527
        %8529 = vrot.lane.b32.xlu0 %v6202, 80
        %v8530 = vpop.permute.xlu0 %8529
        %8531 = vrot.lane.b32.xlu0 %v6274, 80
        %v8532 = vpop.permute.xlu0 %8531
        %8533 = vrot.lane.b32.xlu0 %v6410, 80
        %v8534 = vpop.permute.xlu0 %8533
        %8535 = vrot.lane.b32.xlu0 %v6546, 80
        %v8536 = vpop.permute.xlu0 %8535
        %8537 = vrot.lane.b32.xlu0 %v6682, 80
        %v8538 = vpop.permute.xlu0 %8537
        %8539 = vrot.lane.b32.xlu0 %v6818, 80
        %v8540 = vpop.permute.xlu0 %8539
        %8541 = vrot.lane.b32.xlu0 %v6954, 80
        %v8542 = vpop.permute.xlu0 %8541
        %8543 = vrot.lane.b32.xlu0 %v7090, 80
        %v8544 = vpop.permute.xlu0 %8543
        %8545 = vrot.lane.b32.xlu0 %v7226, 80
        %v8546 = vpop.permute.xlu0 %8545
        %8547 = vrot.lane.b32.xlu0 %v7362, 80
        %v8548 = vpop.permute.xlu0 %8547
        %8549 = vrot.lane.b32.xlu0 %v7434, 80
        %v8550 = vpop.permute.xlu0 %8549
        %8551 = vrot.lane.b32.xlu0 %v7570, 80
        %v8552 = vpop.permute.xlu0 %8551
        %8553 = vrot.lane.b32.xlu0 %v7706, 80
        %v8554 = vpop.permute.xlu0 %8553
        %8591 = vrot.lane.b32.xlu0 %v5523, 96
        %v8592 = vpop.permute.xlu0 %8591
        %8593 = vrot.lane.b32.xlu0 %v5659, 96
        %v8594 = vpop.permute.xlu0 %8593
        %8595 = vrot.lane.b32.xlu0 %v5795, 96
        %v8596 = vpop.permute.xlu0 %8595
        %8597 = vrot.lane.b32.xlu0 %v5931, 96
        %v8598 = vpop.permute.xlu0 %8597
        %8599 = vrot.lane.b32.xlu0 %v6067, 96
        %v8600 = vpop.permute.xlu0 %8599
        %8601 = vrot.lane.b32.xlu0 %v6203, 96
        %v8602 = vpop.permute.xlu0 %8601
        %8603 = vrot.lane.b32.xlu0 %v6275, 96
        %v8604 = vpop.permute.xlu0 %8603
        %8605 = vrot.lane.b32.xlu0 %v6411, 96
        %v8606 = vpop.permute.xlu0 %8605
        %8607 = vrot.lane.b32.xlu0 %v6547, 96
        %v8608 = vpop.permute.xlu0 %8607
        %8609 = vrot.lane.b32.xlu0 %v6683, 96
        %v8610 = vpop.permute.xlu0 %8609
        %8611 = vrot.lane.b32.xlu0 %v6819, 96
        %v8612 = vpop.permute.xlu0 %8611
        %8613 = vrot.lane.b32.xlu0 %v6955, 96
        %v8614 = vpop.permute.xlu0 %8613
        %8615 = vrot.lane.b32.xlu0 %v7091, 96
        %v8616 = vpop.permute.xlu0 %8615
        %8617 = vrot.lane.b32.xlu0 %v7227, 96
        %v8618 = vpop.permute.xlu0 %8617
        %8619 = vrot.lane.b32.xlu0 %v7363, 96
        %v8620 = vpop.permute.xlu0 %8619
        %8621 = vrot.lane.b32.xlu0 %v7435, 96
        %v8622 = vpop.permute.xlu0 %8621
        %8623 = vrot.lane.b32.xlu0 %v7571, 96
        %v8624 = vpop.permute.xlu0 %8623
        %8625 = vrot.lane.b32.xlu0 %v7707, 96
        %v8626 = vpop.permute.xlu0 %8625
        %8663 = vrot.lane.b32.xlu0 %v5524, 112
        %v8664 = vpop.permute.xlu0 %8663
        %8665 = vrot.lane.b32.xlu0 %v5660, 112
        %v8666 = vpop.permute.xlu0 %8665
        %8667 = vrot.lane.b32.xlu0 %v5796, 112
        %v8668 = vpop.permute.xlu0 %8667
        %8669 = vrot.lane.b32.xlu0 %v5932, 112
        %v8670 = vpop.permute.xlu0 %8669
        %8671 = vrot.lane.b32.xlu0 %v6068, 112
        %v8672 = vpop.permute.xlu0 %8671
        %8673 = vrot.lane.b32.xlu0 %v6204, 112
        %v8674 = vpop.permute.xlu0 %8673
        %8675 = vrot.lane.b32.xlu0 %v6276, 112
        %v8676 = vpop.permute.xlu0 %8675
        %8677 = vrot.lane.b32.xlu0 %v6412, 112
        %v8678 = vpop.permute.xlu0 %8677
        %8679 = vrot.lane.b32.xlu0 %v6548, 112
        %v8680 = vpop.permute.xlu0 %8679
        %8681 = vrot.lane.b32.xlu0 %v6684, 112
        %v8682 = vpop.permute.xlu0 %8681
        %8683 = vrot.lane.b32.xlu0 %v6820, 112
        %v8684 = vpop.permute.xlu0 %8683
        %8685 = vrot.lane.b32.xlu0 %v6956, 112
        %v8686 = vpop.permute.xlu0 %8685
        %8687 = vrot.lane.b32.xlu0 %v7092, 112
        %v8688 = vpop.permute.xlu0 %8687
        %8689 = vrot.lane.b32.xlu0 %v7228, 112
        %v8690 = vpop.permute.xlu0 %8689
        %8691 = vrot.lane.b32.xlu0 %v7364, 112
        %v8692 = vpop.permute.xlu0 %8691
        %8693 = vrot.lane.b32.xlu0 %v7436, 112
        %v8694 = vpop.permute.xlu0 %8693
        %8695 = vrot.lane.b32.xlu0 %v7572, 112
        %v8696 = vpop.permute.xlu0 %8695
        %8697 = vrot.lane.b32.xlu0 %v7708, 112
        %v8698 = vpop.permute.xlu0 %8697
        %vm8717 = vcmask 130048
        %v8718 = vsel %vm8717, %v3197, %v7728
        %v8719 = vsel %vm8717, %v3333, %v7730
        %v8720 = vsel %vm8717, %v3469, %v7732
        %v8721 = vsel %vm8717, %v3605, %v7734
        %v8722 = vsel %vm8717, %v3741, %v7736
        %v8723 = vsel %vm8717, %v3877, %v7738
        %v8724 = vsel %vm8717, %v3949, %v7740
        %v8725 = vsel %vm8717, %v4085, %v7742
        %v8726 = vsel %vm8717, %v4221, %v7744
        %v8727 = vsel %vm8717, %v4357, %v7746
        %v8728 = vsel %vm8717, %v4493, %v7748
        %v8729 = vsel %vm8717, %v4629, %v7750
        %v8730 = vsel %vm8717, %v4765, %v7752
        %v8731 = vsel %vm8717, %v4901, %v7754
        %v8732 = vsel %vm8717, %v5037, %v7756
        %v8733 = vsel %vm8717, %v5109, %v7758
        %v8734 = vsel %vm8717, %v5245, %v7760
        %v8735 = vsel %vm8717, %v5381, %v7762
        %vm8736 = vcmask 261120
        %v8737 = vsel %vm8736, %v8718, %v7800
        %v8738 = vsel %vm8736, %v8719, %v7802
        %v8739 = vsel %vm8736, %v8720, %v7804
        %v8740 = vsel %vm8736, %v8721, %v7806
        %v8741 = vsel %vm8736, %v8722, %v7808
        %v8742 = vsel %vm8736, %v8723, %v7810
        %v8743 = vsel %vm8736, %v8724, %v7812
        %v8744 = vsel %vm8736, %v8725, %v7814
        %v8745 = vsel %vm8736, %v8726, %v7816
        %v8746 = vsel %vm8736, %v8727, %v7818
        %v8747 = vsel %vm8736, %v8728, %v7820
        %v8748 = vsel %vm8736, %v8729, %v7822
        %v8749 = vsel %vm8736, %v8730, %v7824
        %v8750 = vsel %vm8736, %v8731, %v7826
        %v8751 = vsel %vm8736, %v8732, %v7828
        %v8752 = vsel %vm8736, %v8733, %v7830
        %v8753 = vsel %vm8736, %v8734, %v7832
        %v8754 = vsel %vm8736, %v8735, %v7834
        %vm8755 = vcmask 392192
        %v8756 = vsel %vm8755, %v8737, %v7872
        %v8757 = vsel %vm8755, %v8738, %v7874
        %v8758 = vsel %vm8755, %v8739, %v7876
        %v8759 = vsel %vm8755, %v8740, %v7878
        %v8760 = vsel %vm8755, %v8741, %v7880
        %v8761 = vsel %vm8755, %v8742, %v7882
        %v8762 = vsel %vm8755, %v8743, %v7884
        %v8763 = vsel %vm8755, %v8744, %v7886
        %v8764 = vsel %vm8755, %v8745, %v7888
        %v8765 = vsel %vm8755, %v8746, %v7890
        %v8766 = vsel %vm8755, %v8747, %v7892
        %v8767 = vsel %vm8755, %v8748, %v7894
        %v8768 = vsel %vm8755, %v8749, %v7896
        %v8769 = vsel %vm8755, %v8750, %v7898
        %v8770 = vsel %vm8755, %v8751, %v7900
        %v8771 = vsel %vm8755, %v8752, %v7902
        %v8772 = vsel %vm8755, %v8753, %v7904
        %v8773 = vsel %vm8755, %v8754, %v7906
        %vm8774 = vcmask 523264
        %v8775 = vsel %vm8774, %v8756, %v7944
        %v8776 = vsel %vm8774, %v8757, %v7946
        %v8777 = vsel %vm8774, %v8758, %v7948
        %v8778 = vsel %vm8774, %v8759, %v7950
        %v8779 = vsel %vm8774, %v8760, %v7952
        %v8780 = vsel %vm8774, %v8761, %v7954
        %v8781 = vsel %vm8774, %v8762, %v7956
        %v8782 = vsel %vm8774, %v8763, %v7958
        %v8783 = vsel %vm8774, %v8764, %v7960
        %v8784 = vsel %vm8774, %v8765, %v7962
        %v8785 = vsel %vm8774, %v8766, %v7964
        %v8786 = vsel %vm8774, %v8767, %v7966
        %v8787 = vsel %vm8774, %v8768, %v7968
        %v8788 = vsel %vm8774, %v8769, %v7970
        %v8789 = vsel %vm8774, %v8770, %v7972
        %v8790 = vsel %vm8774, %v8771, %v7974
        %v8791 = vsel %vm8774, %v8772, %v7976
        %v8792 = vsel %vm8774, %v8773, %v7978
        %vm8793 = vcmask 654336
        %v8794 = vsel %vm8793, %v8775, %v8016
        %v8795 = vsel %vm8793, %v8776, %v8018
        %v8796 = vsel %vm8793, %v8777, %v8020
        %v8797 = vsel %vm8793, %v8778, %v8022
        %v8798 = vsel %vm8793, %v8779, %v8024
        %v8799 = vsel %vm8793, %v8780, %v8026
        %v8800 = vsel %vm8793, %v8781, %v8028
        %v8801 = vsel %vm8793, %v8782, %v8030
        %v8802 = vsel %vm8793, %v8783, %v8032
        %v8803 = vsel %vm8793, %v8784, %v8034
        %v8804 = vsel %vm8793, %v8785, %v8036
        %v8805 = vsel %vm8793, %v8786, %v8038
        %v8806 = vsel %vm8793, %v8787, %v8040
        %v8807 = vsel %vm8793, %v8788, %v8042
        %v8808 = vsel %vm8793, %v8789, %v8044
        %v8809 = vsel %vm8793, %v8790, %v8046
        %v8810 = vsel %vm8793, %v8791, %v8048
        %v8811 = vsel %vm8793, %v8792, %v8050
        %vm8812 = vcmask 785408
        %v8813 = vsel %vm8812, %v8794, %v8088
        %v8814 = vsel %vm8812, %v8795, %v8090
        %v8815 = vsel %vm8812, %v8796, %v8092
        %v8816 = vsel %vm8812, %v8797, %v8094
        %v8817 = vsel %vm8812, %v8798, %v8096
        %v8818 = vsel %vm8812, %v8799, %v8098
        %v8819 = vsel %vm8812, %v8800, %v8100
        %v8820 = vsel %vm8812, %v8801, %v8102
        %v8821 = vsel %vm8812, %v8802, %v8104
        %v8822 = vsel %vm8812, %v8803, %v8106
        %v8823 = vsel %vm8812, %v8804, %v8108
        %v8824 = vsel %vm8812, %v8805, %v8110
        %v8825 = vsel %vm8812, %v8806, %v8112
        %v8826 = vsel %vm8812, %v8807, %v8114
        %v8827 = vsel %vm8812, %v8808, %v8116
        %v8828 = vsel %vm8812, %v8809, %v8118
        %v8829 = vsel %vm8812, %v8810, %v8120
        %v8830 = vsel %vm8812, %v8811, %v8122
        %vm8831 = vcmask 916480
        %v8832 = vsel %vm8831, %v8813, %v8160
        %v8833 = vsel %vm8831, %v8814, %v8162
        %v8834 = vsel %vm8831, %v8815, %v8164
        %v8835 = vsel %vm8831, %v8816, %v8166
        %v8836 = vsel %vm8831, %v8817, %v8168
        %v8837 = vsel %vm8831, %v8818, %v8170
        %v8838 = vsel %vm8831, %v8819, %v8172
        %v8839 = vsel %vm8831, %v8820, %v8174
        %v8840 = vsel %vm8831, %v8821, %v8176
        %v8841 = vsel %vm8831, %v8822, %v8178
        %v8842 = vsel %vm8831, %v8823, %v8180
        %v8843 = vsel %vm8831, %v8824, %v8182
        %v8844 = vsel %vm8831, %v8825, %v8184
        %v8845 = vsel %vm8831, %v8826, %v8186
        %v8846 = vsel %vm8831, %v8827, %v8188
        %v8847 = vsel %vm8831, %v8828, %v8190
        %v8848 = vsel %vm8831, %v8829, %v8192
        %v8849 = vsel %vm8831, %v8830, %v8194
        %v8850 = vsel %vm8717, %v5517, %v8232
        %v8851 = vsel %vm8717, %v5653, %v8234
        %v8852 = vsel %vm8717, %v5789, %v8236
        %v8853 = vsel %vm8717, %v5925, %v8238
        %v8854 = vsel %vm8717, %v6061, %v8240
        %v8855 = vsel %vm8717, %v6197, %v8242
        %v8856 = vsel %vm8717, %v6269, %v8244
        %v8857 = vsel %vm8717, %v6405, %v8246
        %v8858 = vsel %vm8717, %v6541, %v8248
        %v8859 = vsel %vm8717, %v6677, %v8250
        %v8860 = vsel %vm8717, %v6813, %v8252
        %v8861 = vsel %vm8717, %v6949, %v8254
        %v8862 = vsel %vm8717, %v7085, %v8256
        %v8863 = vsel %vm8717, %v7221, %v8258
        %v8864 = vsel %vm8717, %v7357, %v8260
        %v8865 = vsel %vm8717, %v7429, %v8262
        %v8866 = vsel %vm8717, %v7565, %v8264
        %v8867 = vsel %vm8717, %v7701, %v8266
        %v8868 = vsel %vm8736, %v8850, %v8304
        %v8869 = vsel %vm8736, %v8851, %v8306
        %v8870 = vsel %vm8736, %v8852, %v8308
        %v8871 = vsel %vm8736, %v8853, %v8310
        %v8872 = vsel %vm8736, %v8854, %v8312
        %v8873 = vsel %vm8736, %v8855, %v8314
        %v8874 = vsel %vm8736, %v8856, %v8316
        %v8875 = vsel %vm8736, %v8857, %v8318
        %v8876 = vsel %vm8736, %v8858, %v8320
        %v8877 = vsel %vm8736, %v8859, %v8322
        %v8878 = vsel %vm8736, %v8860, %v8324
        %v8879 = vsel %vm8736, %v8861, %v8326
        %v8880 = vsel %vm8736, %v8862, %v8328
        %v8881 = vsel %vm8736, %v8863, %v8330
        %v8882 = vsel %vm8736, %v8864, %v8332
        %v8883 = vsel %vm8736, %v8865, %v8334
        %v8884 = vsel %vm8736, %v8866, %v8336
        %v8885 = vsel %vm8736, %v8867, %v8338
        %v8886 = vsel %vm8755, %v8868, %v8376
        %v8887 = vsel %vm8755, %v8869, %v8378
        %v8888 = vsel %vm8755, %v8870, %v8380
        %v8889 = vsel %vm8755, %v8871, %v8382
        %v8890 = vsel %vm8755, %v8872, %v8384
        %v8891 = vsel %vm8755, %v8873, %v8386
        %v8892 = vsel %vm8755, %v8874, %v8388
        %v8893 = vsel %vm8755, %v8875, %v8390
        %v8894 = vsel %vm8755, %v8876, %v8392
        %v8895 = vsel %vm8755, %v8877, %v8394
        %v8896 = vsel %vm8755, %v8878, %v8396
        %v8897 = vsel %vm8755, %v8879, %v8398
        %v8898 = vsel %vm8755, %v8880, %v8400
        %v8899 = vsel %vm8755, %v8881, %v8402
        %v8900 = vsel %vm8755, %v8882, %v8404
        %v8901 = vsel %vm8755, %v8883, %v8406
        %v8902 = vsel %vm8755, %v8884, %v8408
        %v8903 = vsel %vm8755, %v8885, %v8410
        %v8904 = vsel %vm8774, %v8886, %v8448
        %v8905 = vsel %vm8774, %v8887, %v8450
        %v8906 = vsel %vm8774, %v8888, %v8452
        %v8907 = vsel %vm8774, %v8889, %v8454
        %v8908 = vsel %vm8774, %v8890, %v8456
        %v8909 = vsel %vm8774, %v8891, %v8458
        %v8910 = vsel %vm8774, %v8892, %v8460
        %v8911 = vsel %vm8774, %v8893, %v8462
        %v8912 = vsel %vm8774, %v8894, %v8464
        %v8913 = vsel %vm8774, %v8895, %v8466
        %v8914 = vsel %vm8774, %v8896, %v8468
        %v8915 = vsel %vm8774, %v8897, %v8470
        %v8916 = vsel %vm8774, %v8898, %v8472
        %v8917 = vsel %vm8774, %v8899, %v8474
        %v8918 = vsel %vm8774, %v8900, %v8476
        %v8919 = vsel %vm8774, %v8901, %v8478
        %v8920 = vsel %vm8774, %v8902, %v8480
        %v8921 = vsel %vm8774, %v8903, %v8482
        %v8922 = vsel %vm8793, %v8904, %v8520
        %v8923 = vsel %vm8793, %v8905, %v8522
        %v8924 = vsel %vm8793, %v8906, %v8524
        %v8925 = vsel %vm8793, %v8907, %v8526
        %v8926 = vsel %vm8793, %v8908, %v8528
        %v8927 = vsel %vm8793, %v8909, %v8530
        %v8928 = vsel %vm8793, %v8910, %v8532
        %v8929 = vsel %vm8793, %v8911, %v8534
        %v8930 = vsel %vm8793, %v8912, %v8536
        %v8931 = vsel %vm8793, %v8913, %v8538
        %v8932 = vsel %vm8793, %v8914, %v8540
        %v8933 = vsel %vm8793, %v8915, %v8542
        %v8934 = vsel %vm8793, %v8916, %v8544
        %v8935 = vsel %vm8793, %v8917, %v8546
        %v8936 = vsel %vm8793, %v8918, %v8548
        %v8937 = vsel %vm8793, %v8919, %v8550
        %v8938 = vsel %vm8793, %v8920, %v8552
        %v8939 = vsel %vm8793, %v8921, %v8554
        %v8940 = vsel %vm8812, %v8922, %v8592
        %v8941 = vsel %vm8812, %v8923, %v8594
        %v8942 = vsel %vm8812, %v8924, %v8596
        %v8943 = vsel %vm8812, %v8925, %v8598
        %v8944 = vsel %vm8812, %v8926, %v8600
        %v8945 = vsel %vm8812, %v8927, %v8602
        %v8946 = vsel %vm8812, %v8928, %v8604
        %v8947 = vsel %vm8812, %v8929, %v8606
        %v8948 = vsel %vm8812, %v8930, %v8608
        %v8949 = vsel %vm8812, %v8931, %v8610
        %v8950 = vsel %vm8812, %v8932, %v8612
        %v8951 = vsel %vm8812, %v8933, %v8614
        %v8952 = vsel %vm8812, %v8934, %v8616
        %v8953 = vsel %vm8812, %v8935, %v8618
        %v8954 = vsel %vm8812, %v8936, %v8620
        %v8955 = vsel %vm8812, %v8937, %v8622
        %v8956 = vsel %vm8812, %v8938, %v8624
        %v8957 = vsel %vm8812, %v8939, %v8626
        %v8958 = vsel %vm8831, %v8940, %v8664
        %v8959 = vsel %vm8831, %v8941, %v8666
        %v8960 = vsel %vm8831, %v8942, %v8668
        %v8961 = vsel %vm8831, %v8943, %v8670
        %v8962 = vsel %vm8831, %v8944, %v8672
        %v8963 = vsel %vm8831, %v8945, %v8674
        %v8964 = vsel %vm8831, %v8946, %v8676
        %v8965 = vsel %vm8831, %v8947, %v8678
        %v8966 = vsel %vm8831, %v8948, %v8680
        %v8967 = vsel %vm8831, %v8949, %v8682
        %v8968 = vsel %vm8831, %v8950, %v8684
        %v8969 = vsel %vm8831, %v8951, %v8686
        %v8970 = vsel %vm8831, %v8952, %v8688
        %v8971 = vsel %vm8831, %v8953, %v8690
        %v8972 = vsel %vm8831, %v8954, %v8692
        %v8973 = vsel %vm8831, %v8955, %v8694
        %v8974 = vsel %vm8831, %v8956, %v8696
        %v8975 = vsel %vm8831, %v8957, %v8698
        %v8976 = vpack.c.bf16 %v8833, %v8832
        %v8977 = vpack.c.bf16 %v8959, %v8958
        %v8978 = vpack.c.bf16 %v8835, %v8834
        %v8979 = vpack.c.bf16 %v8961, %v8960
        %v8980 = vpack.c.bf16 %v8837, %v8836
        %v8981 = vpack.c.bf16 %v8963, %v8962
        %v8982 = vpack.c.bf16 %v8839, %v8838
        %v8983 = vpack.c.bf16 %v8965, %v8964
        %v8984 = vpack.c.bf16 %v8841, %v8840
        %v8985 = vpack.c.bf16 %v8967, %v8966
        %v8986 = vpack.c.bf16 %v8843, %v8842
        %v8987 = vpack.c.bf16 %v8969, %v8968
        %v8988 = vpack.c.bf16 %v8845, %v8844
        %v8989 = vpack.c.bf16 %v8971, %v8970
        %v8990 = vpack.c.bf16 %v8847, %v8846
        %v8991 = vpack.c.bf16 %v8973, %v8972
        %v8992 = vpack.c.bf16 %v8849, %v8848
        %v8993 = vpack.c.bf16 %v8975, %v8974
        %v8994 = vld [vmem:[%s1] sm:$0xf]
        %v8995 = vld [vmem:[%s2] sm:$0xf]
        %8997 = vset.pattern.permute.xlu0 0
        %8998 = vperm.xlu0 %8997, %v8995
        %v8999 = vpop.permute.xlu0 %8998
        %v9003 = vunpack.c.l.s4 1983009808
        %v9004 = vunpack.c.0.s8 %v9003
        %v9005 = vlaneseq
        %v9006 = vshrl.u32 %v9005, 7
        %v9007 = vsub.s32 %v9004, %v9006
        %v9008 = vrot.slane %v8994, %v9007
        %v9009 = vcombine.high %v9008, %v9008
        %v9012 = vsel %vm8717, %v9009, 0
        %9014 = vmatprep.subr.bf16.mxu0 %v8977
        %9015 = vmatpush1.bf16.msra.mxu0 %v8976
        %9016 = vmatprep.subr.bf16.mxu0 %v8979
        %9017 = vmatpush1.bf16.msra.mxu0 %v8978
        %9018 = vmatprep.subr.bf16.mxu0 %v8981
        %9019 = vmatpush1.bf16.msra.mxu0 %v8980
        %9020 = vmatprep.subr.bf16.mxu0 %v8983
        %9021 = vmatpush1.bf16.msra.mxu0 %v8982
        %9022 = vmatprep.subr.bf16.mxu0 %v8985
        %9023 = vmatpush1.bf16.msra.mxu0 %v8984
        %9024 = vmatprep.subr.bf16.mxu0 %v8987
        %9025 = vmatpush1.bf16.msra.mxu0 %v8986
        %9026 = vmatprep.subr.bf16.mxu0 %v8989
        %9027 = vmatpush1.bf16.msra.mxu0 %v8988
        %9028 = vmatprep.subr.bf16.mxu0 %v8991
        %9029 = vmatpush1.bf16.msra.mxu0 %v8990
        %9030 = vmatprep.subr.bf16.mxu0 %v8993
        %9031 = vmatpush1.bf16.msra.mxu0 %v8992
        %9032 = vmatprep.subr.bf16.mxu0 0
        %9033 = vmatpush1.bf16.msra.mxu0 0
        %9034 = vmatprep.subr.bf16.mxu0 0
        %9035 = vmatpush1.bf16.msra.mxu0 0
        %9036 = vmatprep.subr.bf16.mxu0 0
        %9037 = vmatpush1.bf16.msra.mxu0 0
        %9038 = vmatprep.subr.bf16.mxu0 0
        %9039 = vmatpush1.bf16.msra.mxu0 0
        %9040 = vmatprep.subr.bf16.mxu0 0
        %9041 = vmatpush1.bf16.msra.mxu0 0
        %9042 = vmatprep.subr.bf16.mxu0 0
        %9043 = vmatpush1.bf16.msra.mxu0 0
        %9044 = vmatprep.subr.bf16.mxu0 0
        %9045 = vmatpush1.bf16.msra.mxu0 0
        %9046 = vmatprep.mubr.bf16.mxu0 %v9012
        %9047 = vmatmul.mubr.bf16.gmra.mrb[0].mxu0 %v9008
        %v9048 = vpop.f32.mrb[0].mxu0
        %v9049 = vadd.f32 %v8999, %v9048
        %v9050 = vpop.f32.mrb[0].mxu0
        %v9051 = vadd.f32 %v8999, %v9050
        %v9052 = vpop.f32.mrb[0].mxu0
        %v9053 = vpop.f32.mrb[0].mxu0
        %9054 = vdwg.mxu0
        %v9057 = vcombine.low %v9049, %v9051
        %9059 = vst [vmem:[%s202] sm:$0xff] %v9057
        %s9060 = sand.u32 %s110, 1
        %s9061 = scalar_lea.sflag [#allocation4], %s9060
        %s9062 = sand.u32 %s110, 1
        %s9063 = smul.addr %s9062, 8
        %s9064 = scalar_lea.vmem [#allocation5], %s9063
        // Predicated region
        $region37: #{tpu_custom_call.1} parent=31 // pred_check
          %p9065 = pneg %p120
        $region38: #{tpu_custom_call.1} parent=31 // pred_check_branch
          %9067 = sbr.rel (%p9065) target = $region40
        $region39: #{tpu_custom_call.1} parent=31 // pred_region
          %s9068 = smul.u32 2, %s25
          %s9070 = ssub.s32 128, 128
          %9071 = vsyncadd %s9061, %s9070
          %s9072 = smul.addr %s24, 2
          %s9073 = sadd.s32 %s9068, %s9072
          %s9074 = smul.addr %s9073, 64
          %s9075 = scalar_lea.hbm %s3, %s9074
          %s9077 = sshll.u32 %s9064, 4
          %s9078 = int_to_ptr.vmem [resolvable:$true] %s9077
          %9080 = dma.vmem_to_hbm [thread:$0]  %s9078, 128, %s9075, %s9061
        $region40: #{tpu_custom_call.1} parent=31 // pred_fallthru
          _
      $region32: #{tpu_custom_call.1} parent=5 // pred_fallthru
        _
      %p9081 = scmp.le.s32.totalorder 2, %s15
      // Predicated region
      $region41: #{tpu_custom_call.1} parent=5 // pred_check
        %p9082 = pneg %p9081
      $region42: #{tpu_custom_call.1} parent=5 // pred_check_branch
        %9084 = sbr.rel (%p9082) target = $region44
      $region43: #{tpu_custom_call.1} parent=5 // pred_region
        %s9085 = ssub.s32 %s15, 2
        // Predicated region
        $region45: #{tpu_custom_call.1} parent=43 // pred_check
          %p9086 = pneg %p126
        $region46: #{tpu_custom_call.1} parent=43 // pred_check_branch
          %9088 = sbr.rel (%p9086) target = $region48
        $region47: #{tpu_custom_call.1} parent=43 // pred_region
          %s9089 = sand.u32 %s111, 1
          %s9090 = scalar_lea.sflag [#allocation4], %s9089
          %s9091 = sand.u32 %s111, 1
          %s9092 = smul.addr %s9091, 8
          %s9093 = scalar_lea.vmem [#allocation5], %s9092
          %9094 = dma.done %s9090, 128
        $region48: #{tpu_custom_call.1} parent=43 // pred_fallthru
          _
      $region44: #{tpu_custom_call.1} parent=5 // pred_fallthru
        _
    $region6: #{tpu_custom_call.1} parent=1 // loop_footer
      %s19 = sadd.s32 1, %s15
    $region7: #{tpu_custom_call.1} parent=1 // loop_footer_branch
      %14 = sbr.rel target = $region3
    $region8: #{tpu_custom_call.1} parent=1 // loop_exit
      _
    %9095 = vsyncpa [#allocation3], 1
    %s9096 = scalar_lea.sflag [#allocation3], 1
    %9097 = vsyncpa %s9096, 1
    %9098 = vsyncpa [#allocation4], 1
    %s9099 = scalar_lea.sflag [#allocation4], 1
    %9100 = vsyncpa %s9099, 1

</llo_original>
